<compile_context>
chip_gen: v5e
topology: v5e:2x2
jax: 0.10.0
libtpu: 0.0.40
codegen_flags: <defaults>
</compile_context>

<pallas_src>
import math

import numpy as np
import jax
import jax.numpy as jnp
from jax.experimental import pallas as pl
from jax.experimental.pallas import tpu as pltpu

DILATIONS = (1, 2, 4, 8, 16)
BN_EPS = 1e-5


def _vmem():
    return pl.BlockSpec(memory_space=pltpu.MemorySpace.VMEM)


def _bn_prelu(y, gamma, beta, alpha):
    # Training-mode BatchNorm (batch mean / biased batch var) fused with PReLU.
    mean = jnp.mean(y, axis=0, keepdims=True)
    var = jnp.mean(jnp.square(y - mean), axis=0, keepdims=True)
    z = (y - mean) * jax.lax.rsqrt(var + BN_EPS) * gamma + beta
    return jnp.where(z > 0.0, z, alpha * z)


# ----------------------------- Pallas kernels ------------------------------

def _matmul_kernel(a_ref, b_ref, o_ref):
    o_ref[...] = jnp.dot(a_ref[...], b_ref[...], preferred_element_type=jnp.float32)


def pallas_matmul(a, b):
    m = a.shape[0]
    n = b.shape[1]
    return pl.pallas_call(
        _matmul_kernel,
        out_shape=jax.ShapeDtypeStruct((m, n), jnp.float32),
        in_specs=[_vmem(), _vmem()],
        out_specs=_vmem(),
    )(a, b)


def _mm_bn_prelu_kernel(a_ref, b_ref, g_ref, be_ref, al_ref, o_ref):
    # fused conv (as matmul) + BatchNorm(batch stats) + PReLU
    y = jnp.dot(a_ref[...], b_ref[...], preferred_element_type=jnp.float32)
    o_ref[...] = _bn_prelu(y, g_ref[...], be_ref[...], al_ref[...])


def pallas_mm_bn_prelu(a, b, gamma, beta, alpha):
    m = a.shape[0]
    c = b.shape[1]
    return pl.pallas_call(
        _mm_bn_prelu_kernel,
        out_shape=jax.ShapeDtypeStruct((m, c), jnp.float32),
        in_specs=[_vmem()] * 5,
        out_specs=_vmem(),
    )(a.astype(jnp.bfloat16), b.astype(jnp.bfloat16),
      gamma.reshape(1, c), beta.reshape(1, c), alpha.reshape(1, c))


def _dual_matmul_kernel(a1_ref, b1_ref, a2_ref, b2_ref, o_ref):
    # 1x1 conv applied to a channel-concat, without building the concat:
    # o = a1 @ b1 + a2 @ b2
    o_ref[...] = (jnp.dot(a1_ref[...], b1_ref[...], preferred_element_type=jnp.float32)
                  + jnp.dot(a2_ref[...], b2_ref[...], preferred_element_type=jnp.float32))


def pallas_dual_matmul(a1, b1, a2, b2):
    m = a1.shape[0]
    n = b1.shape[1]
    return pl.pallas_call(
        _dual_matmul_kernel,
        out_shape=jax.ShapeDtypeStruct((m, n), jnp.float32),
        in_specs=[_vmem()] * 4,
        out_specs=_vmem(),
    )(a1.astype(jnp.bfloat16), b1.astype(jnp.bfloat16),
      a2.astype(jnp.bfloat16), b2.astype(jnp.bfloat16))


def _avgpool_kernel(p_ref, o_ref):
    # 3x3 avg pool, count_include_pad=True -> always divide by 9
    o_ref[...] = jnp.sum(p_ref[...], axis=0) * (1.0 / 9.0)


def pallas_avgpool_sum(patches):
    _, m, c = patches.shape
    return pl.pallas_call(
        _avgpool_kernel,
        out_shape=jax.ShapeDtypeStruct((m, c), jnp.float32),
        in_specs=[_vmem()],
        out_specs=_vmem(),
    )(patches)


def pallas_esp_tail(x_flat, w_fused, masks, taps, pad, residual, gamma, beta, alpha):
    """Fused ESP-block tail.

    5 dilated 3x3 group convs (with hierarchical fusion pre-folded into
    `w_fused`) as shift-and-masked accumulating matmuls over the flattened
    mid-channel activation, then optional residual add, BatchNorm (batch
    stats) and PReLU -- all before a single lane-dense (M, out_c) store.
    """
    m, _ = x_flat.shape
    t_cnt, _, out_c = w_fused.shape
    use_res = residual is not None

    def kernel(*refs):
        if use_res:
            xp_ref, w_ref, mk_ref, r_ref, g_ref, b_ref, a_ref, o_ref = refs
        else:
            xp_ref, w_ref, mk_ref, g_ref, b_ref, a_ref, o_ref = refs
        acc = jnp.zeros((m, out_c), jnp.float32)
        for t in range(t_cnt):                      # static unrolled tap loop
            off = taps[t]
            xs = xp_ref[pad + off: pad + off + m, :]        # shifted VMEM view
            xs = (xs * mk_ref[:, t:t + 1]).astype(jnp.bfloat16)
            acc = acc + jnp.dot(xs, w_ref[t], preferred_element_type=jnp.float32)
        if use_res:
            acc = acc + r_ref[...]
        o_ref[...] = _bn_prelu(acc, g_ref[...], b_ref[...], a_ref[...])

    xpad = jnp.pad(x_flat, ((pad, pad), (0, 0)))
    args = [xpad, w_fused, masks]
    if use_res:
        args.append(residual)
    args += [gamma.reshape(1, out_c), beta.reshape(1, out_c), alpha.reshape(1, out_c)]
    return pl.pallas_call(
        kernel,
        out_shape=jax.ShapeDtypeStruct((m, out_c), jnp.float32),
        in_specs=[_vmem()] * len(args),
        out_specs=_vmem(),
    )(*args)


# ------------------------------ conv / pool glue ----------------------------

def _im2col(x, kh, kw, stride, padding, dilation):
    # Only used for the three strided 3x3 convs (tiny inputs); inputs are
    # pre-cast to bf16 so the expansion costs half the bytes.
    n, h, w, c = x.shape
    xp = jnp.pad(x, ((0, 0), (padding, padding), (padding, padding), (0, 0)))
    hp, wp = h + 2 * padding, w + 2 * padding
    ho = (hp - dilation * (kh - 1) - 1) // stride + 1
    wo = (wp - dilation * (kw - 1) - 1) // stride + 1
    cols = []
    for i in range(kh):
        for j in range(kw):
            rs, cs = i * dilation, j * dilation
            cols.append(xp[:, rs:rs + stride * (ho - 1) + 1:stride,
                            cs:cs + stride * (wo - 1) + 1:stride, :])
    return jnp.concatenate(cols, axis=-1), ho, wo


def avg_pool_3x3_s2_p1(x):
    n, h, w, c = x.shape
    xp = jnp.pad(x, ((0, 0), (1, 1), (1, 1), (0, 0)))
    ho = (h + 2 - 3) // 2 + 1
    wo = (w + 2 - 3) // 2 + 1
    pats = []
    for i in range(3):
        for j in range(3):
            pats.append(xp[:, i:i + 2 * (ho - 1) + 1:2, j:j + 2 * (wo - 1) + 1:2, :])
    p = jnp.stack(pats, axis=0).reshape(9, n * ho * wo, c)
    return pallas_avgpool_sum(p).reshape(n, ho, wo, c)


# ------------------------------ model forward -------------------------------

def conv_bn_prelu_fwd(x, p, *, stride, padding):
    out_c, in_c, kh, kw = p["w"].shape
    n = x.shape[0]
    cols, ho, wo = _im2col(x.astype(jnp.bfloat16), kh, kw, stride, padding, 1)
    a = cols.reshape(n * ho * wo, kh * kw * in_c)
    b = jnp.transpose(p["w"], (2, 3, 1, 0)).reshape(kh * kw * in_c, out_c)
    y = pallas_mm_bn_prelu(a, b, p["gamma"], p["beta"], p["alpha"])
    return y.reshape(n, ho, wo, out_c)


def _build_esp_tail_consts(group_w, batch, h, w, dilations):
    """Fold hierarchical_fusion into per-tap weights and build row masks.

    Output channel slice s is: g0 for s=0, sum_{b=1..s} g_b for s>=1, so each
    branch b>=1 contributes its weight to every slice s>=b.  Taps whose spatial
    offset can never land inside the HxW image are dropped at trace time.
    """
    mid = int(group_w[0].shape[1])
    sizes = [int(g.shape[0]) for g in group_w]
    out_c = int(sum(sizes))
    offs = [0]
    for s in sizes:
        offs.append(offs[-1] + s)
    m = batch * h * w
    mm = np.arange(m)
    hh = (mm // w) % h
    ww = mm % w
    w_blocks, mask_cols, taps = [], [], []
    for bidx, d in enumerate(dilations):
        for i in range(3):
            for j in range(3):
                dh, dw = (i - 1) * d, (j - 1) * d
                if abs(dh) >= h or abs(dw) >= w:
                    continue  # tap never lands inside the image -> contributes 0
                wb = jnp.transpose(group_w[bidx][:, :, i, j], (1, 0))  # (mid, oc_b)
                wt = jnp.zeros((mid, out_c), jnp.float32)
                if bidx == 0:
                    wt = wt.at[:, offs[0]:offs[1]].set(wb)
                else:
                    for s in range(bidx, len(sizes)):  # cumulative fusion folded in
                        wt = wt.at[:, offs[s]:offs[s + 1]].set(wb)
                w_blocks.append(wt)
                valid = ((hh + dh >= 0) & (hh + dh < h)
                         & (ww + dw >= 0) & (ww + dw < w)).astype(np.float32)
                mask_cols.append(valid)
                taps.append(dh * w + dw)
    w_fused = jnp.stack(w_blocks, axis=0).astype(jnp.bfloat16)   # (T, mid, out_c)
    masks = jnp.asarray(np.stack(mask_cols, axis=1), dtype=jnp.float32)  # (M, T)
    pad = max(abs(t) for t in taps)
    return w_fused, masks, tuple(taps), pad, out_c


def esp_block_fwd(x_in, p, *, stride, use_residual):
    n, h_in, w_in, c_in = x_in.shape
    cw = p["conv"]["w"]                   # (mid, c_in, k, k)
    mid = cw.shape[0]
    if stride == 2:
        cols, ho, wo = _im2col(x_in.astype(jnp.bfloat16), 3, 3, 2, 1, 1)
        a = cols.reshape(n * ho * wo, 9 * c_in)
    else:                                 # 1x1 reduce conv -> plain matmul
        ho, wo = h_in, w_in
        a = x_in.reshape(n * h_in * w_in, c_in)
    b = jnp.transpose(cw, (2, 3, 1, 0)).reshape(-1, mid)
    x_mid = pallas_mm_bn_prelu(a, b, p["conv"]["gamma"], p["conv"]["beta"],
                               p["conv"]["alpha"])                 # (M, mid)

    w_fused, masks, taps, pad, out_c = _build_esp_tail_consts(
        p["group_w"], n, ho, wo, DILATIONS)
    residual = x_in.reshape(n * ho * wo, c_in) if use_residual else None
    out = pallas_esp_tail(x_mid, w_fused, masks, taps, pad, residual,
                          p["bn_gamma"], p["bn_beta"], p["act_alpha"])
    return out.reshape(n, ho, wo, out_c)


def encoder_fwd(x, p):
    half = avg_pool_3x3_s2_p1(x)
    quarter = avg_pool_3x3_s2_p1(half)
    y = conv_bn_prelu_fwd(x, p["conv1"], stride=2, padding=1)
    y = jnp.concatenate([y, half], axis=-1)                       # level1
    y = y0 = esp_block_fwd(y, p["down2"], stride=2, use_residual=False)
    for bp in p["level2"]:
        y = esp_block_fwd(y, bp, stride=1, use_residual=True)
    y = jnp.concatenate([y, y0, quarter], axis=-1)                # level2
    y = y0 = esp_block_fwd(y, p["down3"], stride=2, use_residual=False)
    for bp in p["level3"]:
        y = esp_block_fwd(y, bp, stride=1, use_residual=True)
    return y0, y     # level3 = cat([y0, y]) is folded into the classifier


def _interp_matrix(n_in, n_out):
    # bilinear, align_corners=True (built with numpy -> compile-time constant)
    if n_in == 1:
        return jnp.ones((n_out, 1), jnp.float32)
    src = np.arange(n_out, dtype=np.float64) * (n_in - 1) / (n_out - 1)
    i0 = np.clip(np.floor(src).astype(np.int64), 0, n_in - 2)
    frac = (src - i0).astype(np.float32)
    mat = np.zeros((n_out, n_in), np.float32)
    mat[np.arange(n_out), i0] += 1.0 - frac
    mat[np.arange(n_out), i0 + 1] += frac
    return jnp.asarray(mat)


def bilinear_upsample(x, h_out, w_out):
    # separable: interpolate W, then H (two small MXU matmuls)
    n, h, w, c = x.shape
    mh = _interp_matrix(h, h_out)                                  # (Ho, h)
    mw = _interp_matrix(w, w_out)                                  # (Wo, w)
    xw = jnp.transpose(x, (2, 0, 1, 3)).reshape(w, n * h * c)
    yw = pallas_matmul(mw, xw).reshape(w_out, n, h, c)
    xh = jnp.transpose(yw, (2, 1, 0, 3)).reshape(h, n * w_out * c)
    yh = pallas_matmul(mh, xh).reshape(h_out, n, w_out, c)
    return jnp.transpose(yh, (1, 0, 2, 3))                         # (N, Ho, Wo, C)


def espnet_forward(params, x_nchw):
    x = jnp.transpose(x_nchw, (0, 2, 3, 1)).astype(jnp.float32)    # NCHW -> NHWC
    y0, y = encoder_fwd(x, params["encoder"])
    n, h, w, c = y.shape
    wc = params["classifier_w"]                                    # (nc, 2c, 1, 1)
    num_classes = wc.shape[0]
    w2d = jnp.transpose(wc.reshape(num_classes, 2 * c), (1, 0))    # (2c, nc)
    logits = pallas_dual_matmul(y0.reshape(n * h * w, c), w2d[:c],
                                y.reshape(n * h * w, c), w2d[c:])
    logits = logits.reshape(n, h, w, num_classes)
    up = bilinear_upsample(logits, x.shape[1], x.shape[2])
    return jnp.transpose(up, (0, 3, 1, 2))                         # NHWC -> NCHW


# ------------------------------ parameter init ------------------------------

def _conv_weight(key, out_c, in_c, k):
    fan_in = in_c * k * k
    bound = 1.0 / math.sqrt(fan_in)
    return jax.random.uniform(key, (out_c, in_c, k, k), jnp.float32, -bound, bound)


def _conv_bn_prelu_params(key, in_c, out_c, k):
    return {
        "w": _conv_weight(key, out_c, in_c, k),
        "gamma": jnp.ones((out_c,), jnp.float32),
        "beta": jnp.zeros((out_c,), jnp.float32),
        "alpha": jnp.full((out_c,), 0.25, jnp.float32),   # PyTorch PReLU default
    }


def _esp_block_params(key, in_c, out_c, stride):
    groups = len(DILATIONS)
    mid = out_c // groups
    first = out_c - mid * (groups - 1)
    k = 3 if stride == 2 else 1
    keys = jax.random.split(key, 1 + groups)
    group_w = []
    for idx in range(groups):
        oc = first if idx == 0 else mid
        group_w.append(_conv_weight(keys[1 + idx], oc, mid, 3))
    return {
        "conv": _conv_bn_prelu_params(keys[0], in_c, mid, k),
        "group_w": group_w,
        "bn_gamma": jnp.ones((out_c,), jnp.float32),
        "bn_beta": jnp.zeros((out_c,), jnp.float32),
        "act_alpha": jnp.full((out_c,), 0.25, jnp.float32),
    }


def init_params(key, in_channels, num_classes, alphas=(2, 3)):
    keys = iter(jax.random.split(key, 4 + alphas[0] + alphas[1]))
    enc = {
        "conv1": _conv_bn_prelu_params(next(keys), in_channels, 16, 3),
        "down2": _esp_block_params(next(keys), in_channels + 16, 64, 2),
        "level2": [_esp_block_params(next(keys), 64, 64, 1) for _ in range(alphas[0])],
        "down3": _esp_block_params(next(keys), in_channels + 128, 128, 2),
        "level3": [_esp_block_params(next(keys), 128, 128, 1) for _ in range(alphas[1])],
    }
    return {
        "encoder": enc,
        "classifier_w": _conv_weight(next(keys), num_classes, 256, 1),
    }


# ----------------------------------- main ------------------------------------

if __name__ == "__main__":
    in_channels, num_classes = 3, 5
    key = jax.random.PRNGKey(0)
    pkey, xkey = jax.random.split(key)
    params = init_params(pkey, in_channels, num_classes)
    x = jax.random.normal(xkey, (2, in_channels, 16, 16), jnp.float32)  # NCHW input

    fwd = jax.jit(espnet_forward)
    out = jax.block_until_ready(fwd(params, x))

    assert out.shape == (2, num_classes, 16, 16), out.shape
    assert out.dtype == jnp.float32
    assert bool(jnp.all(jnp.isfinite(out)))
    print("KERNEL_OK")
</pallas_src>

<mosaic_0001>
module attributes {stable_mosaic.version = 11 : i64} {
  func.func @_avgpool_kernel(%arg0: memref<9x128x3xf32, #tpu.memory_space<vmem>>, %arg1: memref<128x3xf32, #tpu.memory_space<vmem>>) attributes {dimension_semantics = [], scalar_prefetch = 0 : i64, scratch_operands = 0 : i64, tpu.core_type = #tpu.core_type<tc>} {
    %c0 = arith.constant 0 : index
    %c0_0 = arith.constant 0 : index
    %c0_1 = arith.constant 0 : index
    %0 = vector.load %arg0[%c0, %c0_0, %c0_1] : memref<9x128x3xf32, #tpu.memory_space<vmem>>, vector<9x128x3xf32>
    %cst = arith.constant dense<0.000000e+00> : vector<128x3xf32>
    %1 = vector.multi_reduction <add>, %0, %cst [0] : vector<9x128x3xf32> to vector<128x3xf32>
    %cst_2 = arith.constant 0.111111112 : f32
    %2 = vector.broadcast %cst_2 : f32 to vector<128x3xf32>
    %3 = arith.mulf %1, %2 : vector<128x3xf32>
    %c0_3 = arith.constant 0 : index
    %c0_4 = arith.constant 0 : index
    %4 = vector.load %arg1[%c0_3, %c0_4] : memref<128x3xf32, #tpu.memory_space<vmem>>, vector<128x3xf32>
    tpu.vector_store %arg1[%c0_3, %c0_4], %3 {strides = array<i32>} : memref<128x3xf32, #tpu.memory_space<vmem>>, vector<128x3xf32>,
    return
  }
}

module attributes {stable_mosaic.version = 11 : i64} {
  func.func @_avgpool_kernel(%arg0: memref<9x32x3xf32, #tpu.memory_space<vmem>>, %arg1: memref<32x3xf32, #tpu.memory_space<vmem>>) attributes {dimension_semantics = [], scalar_prefetch = 0 : i64, scratch_operands = 0 : i64, tpu.core_type = #tpu.core_type<tc>} {
    %c0 = arith.constant 0 : index
    %c0_0 = arith.constant 0 : index
    %c0_1 = arith.constant 0 : index
    %0 = vector.load %arg0[%c0, %c0_0, %c0_1] : memref<9x32x3xf32, #tpu.memory_space<vmem>>, vector<9x32x3xf32>
    %cst = arith.constant dense<0.000000e+00> : vector<32x3xf32>
    %1 = vector.multi_reduction <add>, %0, %cst [0] : vector<9x32x3xf32> to vector<32x3xf32>
    %cst_2 = arith.constant 0.111111112 : f32
    %2 = vector.broadcast %cst_2 : f32 to vector<32x3xf32>
    %3 = arith.mulf %1, %2 : vector<32x3xf32>
    %c0_3 = arith.constant 0 : index
    %c0_4 = arith.constant 0 : index
    %4 = vector.load %arg1[%c0_3, %c0_4] : memref<32x3xf32, #tpu.memory_space<vmem>>, vector<32x3xf32>
    tpu.vector_store %arg1[%c0_3, %c0_4], %3 {strides = array<i32>} : memref<32x3xf32, #tpu.memory_space<vmem>>, vector<32x3xf32>,
    return
  }
}

module attributes {stable_mosaic.version = 11 : i64} {
  func.func @_mm_bn_prelu_kernel(%arg0: memref<128x27xbf16, #tpu.memory_space<vmem>>, %arg1: memref<27x16xbf16, #tpu.memory_space<vmem>>, %arg2: memref<1x16xf32, #tpu.memory_space<vmem>>, %arg3: memref<1x16xf32, #tpu.memory_space<vmem>>, %arg4: memref<1x16xf32, #tpu.memory_space<vmem>>, %arg5: memref<128x16xf32, #tpu.memory_space<vmem>>) attributes {dimension_semantics = [], scalar_prefetch = 0 : i64, scratch_operands = 0 : i64, tpu.core_type = #tpu.core_type<tc>} {
    %c0 = arith.constant 0 : index
    %c0_0 = arith.constant 0 : index
    %0 = vector.load %arg0[%c0, %c0_0] : memref<128x27xbf16, #tpu.memory_space<vmem>>, vector<128x27xbf16>
    %c0_1 = arith.constant 0 : index
    %c0_2 = arith.constant 0 : index
    %1 = vector.load %arg1[%c0_1, %c0_2] : memref<27x16xbf16, #tpu.memory_space<vmem>>, vector<27x16xbf16>
    %cst = arith.constant dense<0.000000e+00> : vector<128x16xf32>
    %2 = tpu.matmul %0, %1, %cst {dimension_numbers = #tpu.dot_dimension_numbers<[1], [0], [0], [1], [0, 0, 1, 1], [], []>} : vector<128x27xbf16>, vector<27x16xbf16>, vector<128x16xf32> -> vector<128x16xf32>
    %c0_3 = arith.constant 0 : index
    %c0_4 = arith.constant 0 : index
    %3 = vector.load %arg2[%c0_3, %c0_4] : memref<1x16xf32, #tpu.memory_space<vmem>>, vector<1x16xf32>
    %c0_5 = arith.constant 0 : index
    %c0_6 = arith.constant 0 : index
    %4 = vector.load %arg3[%c0_5, %c0_6] : memref<1x16xf32, #tpu.memory_space<vmem>>, vector<1x16xf32>
    %c0_7 = arith.constant 0 : index
    %c0_8 = arith.constant 0 : index
    %5 = vector.load %arg4[%c0_7, %c0_8] : memref<1x16xf32, #tpu.memory_space<vmem>>, vector<1x16xf32>
    %cst_9 = arith.constant dense<0.000000e+00> : vector<16xf32>
    %6 = vector.multi_reduction <add>, %2, %cst_9 [0] : vector<128x16xf32> to vector<16xf32>
    %7 = vector.shape_cast %6 : vector<16xf32> to vector<1x16xf32>
    %cst_10 = arith.constant 1.280000e+02 : f32
    %8 = vector.broadcast %cst_10 : f32 to vector<1x16xf32>
    %9 = arith.divf %7, %8 : vector<1x16xf32>
    %10 = vector.broadcast %9 : vector<1x16xf32> to vector<128x16xf32>
    %11 = arith.subf %2, %10 : vector<128x16xf32>
    %12 = arith.mulf %11, %11 : vector<128x16xf32>
    %cst_11 = arith.constant dense<0.000000e+00> : vector<16xf32>
    %13 = vector.multi_reduction <add>, %12, %cst_11 [0] : vector<128x16xf32> to vector<16xf32>
    %14 = vector.shape_cast %13 : vector<16xf32> to vector<1x16xf32>
    %cst_12 = arith.constant 1.280000e+02 : f32
    %15 = vector.broadcast %cst_12 : f32 to vector<1x16xf32>
    %16 = arith.divf %14, %15 : vector<1x16xf32>
    %17 = vector.broadcast %9 : vector<1x16xf32> to vector<128x16xf32>
    %18 = arith.subf %2, %17 : vector<128x16xf32>
    %cst_13 = arith.constant 9.99999974E-6 : f32
    %19 = vector.broadcast %cst_13 : f32 to vector<1x16xf32>
    %20 = arith.addf %16, %19 : vector<1x16xf32>
    %21 = math.rsqrt %20 : vector<1x16xf32>
    %22 = vector.broadcast %21 : vector<1x16xf32> to vector<128x16xf32>
    %23 = arith.mulf %18, %22 : vector<128x16xf32>
    %24 = vector.broadcast %3 : vector<1x16xf32> to vector<128x16xf32>
    %25 = arith.mulf %23, %24 : vector<128x16xf32>
    %26 = vector.broadcast %4 : vector<1x16xf32> to vector<128x16xf32>
    %27 = arith.addf %25, %26 : vector<128x16xf32>
    %cst_14 = arith.constant 0.000000e+00 : f32
    %28 = vector.broadcast %cst_14 : f32 to vector<128x16xf32>
    %29 = arith.cmpf ogt, %27, %28 : vector<128x16xf32>
    %30 = vector.broadcast %5 : vector<1x16xf32> to vector<128x16xf32>
    %31 = arith.mulf %30, %27 : vector<128x16xf32>
    %32 = arith.select %29, %27, %31 : vector<128x16xi1>, vector<128x16xf32>
    %c0_15 = arith.constant 0 : index
    %c0_16 = arith.constant 0 : index
    %33 = vector.load %arg5[%c0_15, %c0_16] : memref<128x16xf32, #tpu.memory_space<vmem>>, vector<128x16xf32>
    tpu.vector_store %arg5[%c0_15, %c0_16], %32 {strides = array<i32>} : memref<128x16xf32, #tpu.memory_space<vmem>>, vector<128x16xf32>,
    return
  }
}

module attributes {stable_mosaic.version = 11 : i64} {
  func.func @_mm_bn_prelu_kernel(%arg0: memref<32x171xbf16, #tpu.memory_space<vmem>>, %arg1: memref<171x12xbf16, #tpu.memory_space<vmem>>, %arg2: memref<1x12xf32, #tpu.memory_space<vmem>>, %arg3: memref<1x12xf32, #tpu.memory_space<vmem>>, %arg4: memref<1x12xf32, #tpu.memory_space<vmem>>, %arg5: memref<32x12xf32, #tpu.memory_space<vmem>>) attributes {dimension_semantics = [], scalar_prefetch = 0 : i64, scratch_operands = 0 : i64, tpu.core_type = #tpu.core_type<tc>} {
    %c0 = arith.constant 0 : index
    %c0_0 = arith.constant 0 : index
    %0 = vector.load %arg0[%c0, %c0_0] : memref<32x171xbf16, #tpu.memory_space<vmem>>, vector<32x171xbf16>
    %c0_1 = arith.constant 0 : index
    %c0_2 = arith.constant 0 : index
    %1 = vector.load %arg1[%c0_1, %c0_2] : memref<171x12xbf16, #tpu.memory_space<vmem>>, vector<171x12xbf16>
    %cst = arith.constant dense<0.000000e+00> : vector<32x12xf32>
    %2 = tpu.matmul %0, %1, %cst {dimension_numbers = #tpu.dot_dimension_numbers<[1], [0], [0], [1], [0, 0, 1, 1], [], []>} : vector<32x171xbf16>, vector<171x12xbf16>, vector<32x12xf32> -> vector<32x12xf32>
    %c0_3 = arith.constant 0 : index
    %c0_4 = arith.constant 0 : index
    %3 = vector.load %arg2[%c0_3, %c0_4] : memref<1x12xf32, #tpu.memory_space<vmem>>, vector<1x12xf32>
    %c0_5 = arith.constant 0 : index
    %c0_6 = arith.constant 0 : index
    %4 = vector.load %arg3[%c0_5, %c0_6] : memref<1x12xf32, #tpu.memory_space<vmem>>, vector<1x12xf32>
    %c0_7 = arith.constant 0 : index
    %c0_8 = arith.constant 0 : index
    %5 = vector.load %arg4[%c0_7, %c0_8] : memref<1x12xf32, #tpu.memory_space<vmem>>, vector<1x12xf32>
    %cst_9 = arith.constant dense<0.000000e+00> : vector<12xf32>
    %6 = vector.multi_reduction <add>, %2, %cst_9 [0] : vector<32x12xf32> to vector<12xf32>
    %7 = vector.shape_cast %6 : vector<12xf32> to vector<1x12xf32>
    %cst_10 = arith.constant 3.200000e+01 : f32
    %8 = vector.broadcast %cst_10 : f32 to vector<1x12xf32>
    %9 = arith.divf %7, %8 : vector<1x12xf32>
    %10 = vector.broadcast %9 : vector<1x12xf32> to vector<32x12xf32>
    %11 = arith.subf %2, %10 : vector<32x12xf32>
    %12 = arith.mulf %11, %11 : vector<32x12xf32>
    %cst_11 = arith.constant dense<0.000000e+00> : vector<12xf32>
    %13 = vector.multi_reduction <add>, %12, %cst_11 [0] : vector<32x12xf32> to vector<12xf32>
    %14 = vector.shape_cast %13 : vector<12xf32> to vector<1x12xf32>
    %cst_12 = arith.constant 3.200000e+01 : f32
    %15 = vector.broadcast %cst_12 : f32 to vector<1x12xf32>
    %16 = arith.divf %14, %15 : vector<1x12xf32>
    %17 = vector.broadcast %9 : vector<1x12xf32> to vector<32x12xf32>
    %18 = arith.subf %2, %17 : vector<32x12xf32>
    %cst_13 = arith.constant 9.99999974E-6 : f32
    %19 = vector.broadcast %cst_13 : f32 to vector<1x12xf32>
    %20 = arith.addf %16, %19 : vector<1x12xf32>
    %21 = math.rsqrt %20 : vector<1x12xf32>
    %22 = vector.broadcast %21 : vector<1x12xf32> to vector<32x12xf32>
    %23 = arith.mulf %18, %22 : vector<32x12xf32>
    %24 = vector.broadcast %3 : vector<1x12xf32> to vector<32x12xf32>
    %25 = arith.mulf %23, %24 : vector<32x12xf32>
    %26 = vector.broadcast %4 : vector<1x12xf32> to vector<32x12xf32>
    %27 = arith.addf %25, %26 : vector<32x12xf32>
    %cst_14 = arith.constant 0.000000e+00 : f32
    %28 = vector.broadcast %cst_14 : f32 to vector<32x12xf32>
    %29 = arith.cmpf ogt, %27, %28 : vector<32x12xf32>
    %30 = vector.broadcast %5 : vector<1x12xf32> to vector<32x12xf32>
    %31 = arith.mulf %30, %27 : vector<32x12xf32>
    %32 = arith.select %29, %27, %31 : vector<32x12xi1>, vector<32x12xf32>
    %c0_15 = arith.constant 0 : index
    %c0_16 = arith.constant 0 : index
    %33 = vector.load %arg5[%c0_15, %c0_16] : memref<32x12xf32, #tpu.memory_space<vmem>>, vector<32x12xf32>
    tpu.vector_store %arg5[%c0_15, %c0_16], %32 {strides = array<i32>} : memref<32x12xf32, #tpu.memory_space<vmem>>, vector<32x12xf32>,
    return
  }
}

module attributes {stable_mosaic.version = 11 : i64} {
  func.func @_mm_bn_prelu_kernel(%arg0: memref<32x64xbf16, #tpu.memory_space<vmem>>, %arg1: memref<64x12xbf16, #tpu.memory_space<vmem>>, %arg2: memref<1x12xf32, #tpu.memory_space<vmem>>, %arg3: memref<1x12xf32, #tpu.memory_space<vmem>>, %arg4: memref<1x12xf32, #tpu.memory_space<vmem>>, %arg5: memref<32x12xf32, #tpu.memory_space<vmem>>) attributes {dimension_semantics = [], scalar_prefetch = 0 : i64, scratch_operands = 0 : i64, tpu.core_type = #tpu.core_type<tc>} {
    %c0 = arith.constant 0 : index
    %c0_0 = arith.constant 0 : index
    %0 = vector.load %arg0[%c0, %c0_0] : memref<32x64xbf16, #tpu.memory_space<vmem>>, vector<32x64xbf16>
    %c0_1 = arith.constant 0 : index
    %c0_2 = arith.constant 0 : index
    %1 = vector.load %arg1[%c0_1, %c0_2] : memref<64x12xbf16, #tpu.memory_space<vmem>>, vector<64x12xbf16>
    %cst = arith.constant dense<0.000000e+00> : vector<32x12xf32>
    %2 = tpu.matmul %0, %1, %cst {dimension_numbers = #tpu.dot_dimension_numbers<[1], [0], [0], [1], [0, 0, 1, 1], [], []>} : vector<32x64xbf16>, vector<64x12xbf16>, vector<32x12xf32> -> vector<32x12xf32>
    %c0_3 = arith.constant 0 : index
    %c0_4 = arith.constant 0 : index
    %3 = vector.load %arg2[%c0_3, %c0_4] : memref<1x12xf32, #tpu.memory_space<vmem>>, vector<1x12xf32>
    %c0_5 = arith.constant 0 : index
    %c0_6 = arith.constant 0 : index
    %4 = vector.load %arg3[%c0_5, %c0_6] : memref<1x12xf32, #tpu.memory_space<vmem>>, vector<1x12xf32>
    %c0_7 = arith.constant 0 : index
    %c0_8 = arith.constant 0 : index
    %5 = vector.load %arg4[%c0_7, %c0_8] : memref<1x12xf32, #tpu.memory_space<vmem>>, vector<1x12xf32>
    %cst_9 = arith.constant dense<0.000000e+00> : vector<12xf32>
    %6 = vector.multi_reduction <add>, %2, %cst_9 [0] : vector<32x12xf32> to vector<12xf32>
    %7 = vector.shape_cast %6 : vector<12xf32> to vector<1x12xf32>
    %cst_10 = arith.constant 3.200000e+01 : f32
    %8 = vector.broadcast %cst_10 : f32 to vector<1x12xf32>
    %9 = arith.divf %7, %8 : vector<1x12xf32>
    %10 = vector.broadcast %9 : vector<1x12xf32> to vector<32x12xf32>
    %11 = arith.subf %2, %10 : vector<32x12xf32>
    %12 = arith.mulf %11, %11 : vector<32x12xf32>
    %cst_11 = arith.constant dense<0.000000e+00> : vector<12xf32>
    %13 = vector.multi_reduction <add>, %12, %cst_11 [0] : vector<32x12xf32> to vector<12xf32>
    %14 = vector.shape_cast %13 : vector<12xf32> to vector<1x12xf32>
    %cst_12 = arith.constant 3.200000e+01 : f32
    %15 = vector.broadcast %cst_12 : f32 to vector<1x12xf32>
    %16 = arith.divf %14, %15 : vector<1x12xf32>
    %17 = vector.broadcast %9 : vector<1x12xf32> to vector<32x12xf32>
    %18 = arith.subf %2, %17 : vector<32x12xf32>
    %cst_13 = arith.constant 9.99999974E-6 : f32
    %19 = vector.broadcast %cst_13 : f32 to vector<1x12xf32>
    %20 = arith.addf %16, %19 : vector<1x12xf32>
    %21 = math.rsqrt %20 : vector<1x12xf32>
    %22 = vector.broadcast %21 : vector<1x12xf32> to vector<32x12xf32>
    %23 = arith.mulf %18, %22 : vector<32x12xf32>
    %24 = vector.broadcast %3 : vector<1x12xf32> to vector<32x12xf32>
    %25 = arith.mulf %23, %24 : vector<32x12xf32>
    %26 = vector.broadcast %4 : vector<1x12xf32> to vector<32x12xf32>
    %27 = arith.addf %25, %26 : vector<32x12xf32>
    %cst_14 = arith.constant 0.000000e+00 : f32
    %28 = vector.broadcast %cst_14 : f32 to vector<32x12xf32>
    %29 = arith.cmpf ogt, %27, %28 : vector<32x12xf32>
    %30 = vector.broadcast %5 : vector<1x12xf32> to vector<32x12xf32>
    %31 = arith.mulf %30, %27 : vector<32x12xf32>
    %32 = arith.select %29, %27, %31 : vector<32x12xi1>, vector<32x12xf32>
    %c0_15 = arith.constant 0 : index
    %c0_16 = arith.constant 0 : index
    %33 = vector.load %arg5[%c0_15, %c0_16] : memref<32x12xf32, #tpu.memory_space<vmem>>, vector<32x12xf32>
    tpu.vector_store %arg5[%c0_15, %c0_16], %32 {strides = array<i32>} : memref<32x12xf32, #tpu.memory_space<vmem>>, vector<32x12xf32>,
    return
  }
}

module attributes {stable_mosaic.version = 11 : i64} {
  func.func @kernel(%arg0: memref<52x12xf32, #tpu.memory_space<vmem>>, %arg1: memref<21x12x64xbf16, #tpu.memory_space<vmem>>, %arg2: memref<32x21xf32, #tpu.memory_space<vmem>>, %arg3: memref<1x64xf32, #tpu.memory_space<vmem>>, %arg4: memref<1x64xf32, #tpu.memory_space<vmem>>, %arg5: memref<1x64xf32, #tpu.memory_space<vmem>>, %arg6: memref<32x64xf32, #tpu.memory_space<vmem>>) attributes {dimension_semantics = [], scalar_prefetch = 0 : i64, scratch_operands = 0 : i64, tpu.core_type = #tpu.core_type<tc>} {
    %cst = arith.constant 0.000000e+00 : f32
    %0 = vector.broadcast %cst : f32 to vector<32x64xf32>
    %c5 = arith.constant 5 : index
    %c0 = arith.constant 0 : index
    %1 = vector.load %arg0[%c5, %c0] : memref<52x12xf32, #tpu.memory_space<vmem>>, vector<32x12xf32>
    %c0_0 = arith.constant 0 : index
    %c0_1 = arith.constant 0 : index
    %2 = vector.load %arg2[%c0_0, %c0_1] : memref<32x21xf32, #tpu.memory_space<vmem>>, vector<32x1xf32>
    %3 = vector.broadcast %2 : vector<32x1xf32> to vector<32x12xf32>
    %4 = arith.mulf %1, %3 : vector<32x12xf32>
    %5 = arith.truncf %4 : vector<32x12xf32> to vector<32x12xbf16>
    %c0_2 = arith.constant 0 : index
    %c0_3 = arith.constant 0 : index
    %c0_4 = arith.constant 0 : index
    %6 = vector.load %arg1[%c0_2, %c0_3, %c0_4] : memref<21x12x64xbf16, #tpu.memory_space<vmem>>, vector<1x12x64xbf16>
    %7 = vector.shape_cast %6 : vector<1x12x64xbf16> to vector<12x64xbf16>
    %cst_5 = arith.constant dense<0.000000e+00> : vector<32x64xf32>
    %8 = tpu.matmul %5, %7, %cst_5 {dimension_numbers = #tpu.dot_dimension_numbers<[1], [0], [0], [1], [0, 0, 1, 1], [], []>} : vector<32x12xbf16>, vector<12x64xbf16>, vector<32x64xf32> -> vector<32x64xf32>
    %9 = arith.addf %0, %8 : vector<32x64xf32>
    %c6 = arith.constant 6 : index
    %c0_6 = arith.constant 0 : index
    %10 = vector.load %arg0[%c6, %c0_6] : memref<52x12xf32, #tpu.memory_space<vmem>>, vector<32x12xf32>
    %c0_7 = arith.constant 0 : index
    %c1 = arith.constant 1 : index
    %11 = vector.load %arg2[%c0_7, %c1] : memref<32x21xf32, #tpu.memory_space<vmem>>, vector<32x1xf32>
    %12 = vector.broadcast %11 : vector<32x1xf32> to vector<32x12xf32>
    %13 = arith.mulf %10, %12 : vector<32x12xf32>
    %14 = arith.truncf %13 : vector<32x12xf32> to vector<32x12xbf16>
    %c1_8 = arith.constant 1 : index
    %c0_9 = arith.constant 0 : index
    %c0_10 = arith.constant 0 : index
    %15 = vector.load %arg1[%c1_8, %c0_9, %c0_10] : memref<21x12x64xbf16, #tpu.memory_space<vmem>>, vector<1x12x64xbf16>
    %16 = vector.shape_cast %15 : vector<1x12x64xbf16> to vector<12x64xbf16>
    %cst_11 = arith.constant dense<0.000000e+00> : vector<32x64xf32>
    %17 = tpu.matmul %14, %16, %cst_11 {dimension_numbers = #tpu.dot_dimension_numbers<[1], [0], [0], [1], [0, 0, 1, 1], [], []>} : vector<32x12xbf16>, vector<12x64xbf16>, vector<32x64xf32> -> vector<32x64xf32>
    %18 = arith.addf %9, %17 : vector<32x64xf32>
    %c7 = arith.constant 7 : index
    %c0_12 = arith.constant 0 : index
    %19 = vector.load %arg0[%c7, %c0_12] : memref<52x12xf32, #tpu.memory_space<vmem>>, vector<32x12xf32>
    %c0_13 = arith.constant 0 : index
    %c2 = arith.constant 2 : index
    %20 = vector.load %arg2[%c0_13, %c2] : memref<32x21xf32, #tpu.memory_space<vmem>>, vector<32x1xf32>
    %21 = vector.broadcast %20 : vector<32x1xf32> to vector<32x12xf32>
    %22 = arith.mulf %19, %21 : vector<32x12xf32>
    %23 = arith.truncf %22 : vector<32x12xf32> to vector<32x12xbf16>
    %c2_14 = arith.constant 2 : index
    %c0_15 = arith.constant 0 : index
    %c0_16 = arith.constant 0 : index
    %24 = vector.load %arg1[%c2_14, %c0_15, %c0_16] : memref<21x12x64xbf16, #tpu.memory_space<vmem>>, vector<1x12x64xbf16>
    %25 = vector.shape_cast %24 : vector<1x12x64xbf16> to vector<12x64xbf16>
    %cst_17 = arith.constant dense<0.000000e+00> : vector<32x64xf32>
    %26 = tpu.matmul %23, %25, %cst_17 {dimension_numbers = #tpu.dot_dimension_numbers<[1], [0], [0], [1], [0, 0, 1, 1], [], []>} : vector<32x12xbf16>, vector<12x64xbf16>, vector<32x64xf32> -> vector<32x64xf32>
    %27 = arith.addf %18, %26 : vector<32x64xf32>
    %c9 = arith.constant 9 : index
    %c0_18 = arith.constant 0 : index
    %28 = vector.load %arg0[%c9, %c0_18] : memref<52x12xf32, #tpu.memory_space<vmem>>, vector<32x12xf32>
    %c0_19 = arith.constant 0 : index
    %c3 = arith.constant 3 : index
    %29 = vector.load %arg2[%c0_19, %c3] : memref<32x21xf32, #tpu.memory_space<vmem>>, vector<32x1xf32>
    %30 = vector.broadcast %29 : vector<32x1xf32> to vector<32x12xf32>
    %31 = arith.mulf %28, %30 : vector<32x12xf32>
    %32 = arith.truncf %31 : vector<32x12xf32> to vector<32x12xbf16>
    %c3_20 = arith.constant 3 : index
    %c0_21 = arith.constant 0 : index
    %c0_22 = arith.constant 0 : index
    %33 = vector.load %arg1[%c3_20, %c0_21, %c0_22] : memref<21x12x64xbf16, #tpu.memory_space<vmem>>, vector<1x12x64xbf16>
    %34 = vector.shape_cast %33 : vector<1x12x64xbf16> to vector<12x64xbf16>
    %cst_23 = arith.constant dense<0.000000e+00> : vector<32x64xf32>
    %35 = tpu.matmul %32, %34, %cst_23 {dimension_numbers = #tpu.dot_dimension_numbers<[1], [0], [0], [1], [0, 0, 1, 1], [], []>} : vector<32x12xbf16>, vector<12x64xbf16>, vector<32x64xf32> -> vector<32x64xf32>
    %36 = arith.addf %27, %35 : vector<32x64xf32>
    %c10 = arith.constant 10 : index
    %c0_24 = arith.constant 0 : index
    %37 = vector.load %arg0[%c10, %c0_24] : memref<52x12xf32, #tpu.memory_space<vmem>>, vector<32x12xf32>
    %c0_25 = arith.constant 0 : index
    %c4 = arith.constant 4 : index
    %38 = vector.load %arg2[%c0_25, %c4] : memref<32x21xf32, #tpu.memory_space<vmem>>, vector<32x1xf32>
    %39 = vector.broadcast %38 : vector<32x1xf32> to vector<32x12xf32>
    %40 = arith.mulf %37, %39 : vector<32x12xf32>
    %41 = arith.truncf %40 : vector<32x12xf32> to vector<32x12xbf16>
    %c4_26 = arith.constant 4 : index
    %c0_27 = arith.constant 0 : index
    %c0_28 = arith.constant 0 : index
    %42 = vector.load %arg1[%c4_26, %c0_27, %c0_28] : memref<21x12x64xbf16, #tpu.memory_space<vmem>>, vector<1x12x64xbf16>
    %43 = vector.shape_cast %42 : vector<1x12x64xbf16> to vector<12x64xbf16>
    %cst_29 = arith.constant dense<0.000000e+00> : vector<32x64xf32>
    %44 = tpu.matmul %41, %43, %cst_29 {dimension_numbers = #tpu.dot_dimension_numbers<[1], [0], [0], [1], [0, 0, 1, 1], [], []>} : vector<32x12xbf16>, vector<12x64xbf16>, vector<32x64xf32> -> vector<32x64xf32>
    %45 = arith.addf %36, %44 : vector<32x64xf32>
    %c11 = arith.constant 11 : index
    %c0_30 = arith.constant 0 : index
    %46 = vector.load %arg0[%c11, %c0_30] : memref<52x12xf32, #tpu.memory_space<vmem>>, vector<32x12xf32>
    %c0_31 = arith.constant 0 : index
    %c5_32 = arith.constant 5 : index
    %47 = vector.load %arg2[%c0_31, %c5_32] : memref<32x21xf32, #tpu.memory_space<vmem>>, vector<32x1xf32>
    %48 = vector.broadcast %47 : vector<32x1xf32> to vector<32x12xf32>
    %49 = arith.mulf %46, %48 : vector<32x12xf32>
    %50 = arith.truncf %49 : vector<32x12xf32> to vector<32x12xbf16>
    %c5_33 = arith.constant 5 : index
    %c0_34 = arith.constant 0 : index
    %c0_35 = arith.constant 0 : index
    %51 = vector.load %arg1[%c5_33, %c0_34, %c0_35] : memref<21x12x64xbf16, #tpu.memory_space<vmem>>, vector<1x12x64xbf16>
    %52 = vector.shape_cast %51 : vector<1x12x64xbf16> to vector<12x64xbf16>
    %cst_36 = arith.constant dense<0.000000e+00> : vector<32x64xf32>
    %53 = tpu.matmul %50, %52, %cst_36 {dimension_numbers = #tpu.dot_dimension_numbers<[1], [0], [0], [1], [0, 0, 1, 1], [], []>} : vector<32x12xbf16>, vector<12x64xbf16>, vector<32x64xf32> -> vector<32x64xf32>
    %54 = arith.addf %45, %53 : vector<32x64xf32>
    %c13 = arith.constant 13 : index
    %c0_37 = arith.constant 0 : index
    %55 = vector.load %arg0[%c13, %c0_37] : memref<52x12xf32, #tpu.memory_space<vmem>>, vector<32x12xf32>
    %c0_38 = arith.constant 0 : index
    %c6_39 = arith.constant 6 : index
    %56 = vector.load %arg2[%c0_38, %c6_39] : memref<32x21xf32, #tpu.memory_space<vmem>>, vector<32x1xf32>
    %57 = vector.broadcast %56 : vector<32x1xf32> to vector<32x12xf32>
    %58 = arith.mulf %55, %57 : vector<32x12xf32>
    %59 = arith.truncf %58 : vector<32x12xf32> to vector<32x12xbf16>
    %c6_40 = arith.constant 6 : index
    %c0_41 = arith.constant 0 : index
    %c0_42 = arith.constant 0 : index
    %60 = vector.load %arg1[%c6_40, %c0_41, %c0_42] : memref<21x12x64xbf16, #tpu.memory_space<vmem>>, vector<1x12x64xbf16>
    %61 = vector.shape_cast %60 : vector<1x12x64xbf16> to vector<12x64xbf16>
    %cst_43 = arith.constant dense<0.000000e+00> : vector<32x64xf32>
    %62 = tpu.matmul %59, %61, %cst_43 {dimension_numbers = #tpu.dot_dimension_numbers<[1], [0], [0], [1], [0, 0, 1, 1], [], []>} : vector<32x12xbf16>, vector<12x64xbf16>, vector<32x64xf32> -> vector<32x64xf32>
    %63 = arith.addf %54, %62 : vector<32x64xf32>
    %c14 = arith.constant 14 : index
    %c0_44 = arith.constant 0 : index
    %64 = vector.load %arg0[%c14, %c0_44] : memref<52x12xf32, #tpu.memory_space<vmem>>, vector<32x12xf32>
    %c0_45 = arith.constant 0 : index
    %c7_46 = arith.constant 7 : index
    %65 = vector.load %arg2[%c0_45, %c7_46] : memref<32x21xf32, #tpu.memory_space<vmem>>, vector<32x1xf32>
    %66 = vector.broadcast %65 : vector<32x1xf32> to vector<32x12xf32>
    %67 = arith.mulf %64, %66 : vector<32x12xf32>
    %68 = arith.truncf %67 : vector<32x12xf32> to vector<32x12xbf16>
    %c7_47 = arith.constant 7 : index
    %c0_48 = arith.constant 0 : index
    %c0_49 = arith.constant 0 : index
    %69 = vector.load %arg1[%c7_47, %c0_48, %c0_49] : memref<21x12x64xbf16, #tpu.memory_space<vmem>>, vector<1x12x64xbf16>
    %70 = vector.shape_cast %69 : vector<1x12x64xbf16> to vector<12x64xbf16>
    %cst_50 = arith.constant dense<0.000000e+00> : vector<32x64xf32>
    %71 = tpu.matmul %68, %70, %cst_50 {dimension_numbers = #tpu.dot_dimension_numbers<[1], [0], [0], [1], [0, 0, 1, 1], [], []>} : vector<32x12xbf16>, vector<12x64xbf16>, vector<32x64xf32> -> vector<32x64xf32>
    %72 = arith.addf %63, %71 : vector<32x64xf32>
    %c15 = arith.constant 15 : index
    %c0_51 = arith.constant 0 : index
    %73 = vector.load %arg0[%c15, %c0_51] : memref<52x12xf32, #tpu.memory_space<vmem>>, vector<32x12xf32>
    %c0_52 = arith.constant 0 : index
    %c8 = arith.constant 8 : index
    %74 = vector.load %arg2[%c0_52, %c8] : memref<32x21xf32, #tpu.memory_space<vmem>>, vector<32x1xf32>
    %75 = vector.broadcast %74 : vector<32x1xf32> to vector<32x12xf32>
    %76 = arith.mulf %73, %75 : vector<32x12xf32>
    %77 = arith.truncf %76 : vector<32x12xf32> to vector<32x12xbf16>
    %c8_53 = arith.constant 8 : index
    %c0_54 = arith.constant 0 : index
    %c0_55 = arith.constant 0 : index
    %78 = vector.load %arg1[%c8_53, %c0_54, %c0_55] : memref<21x12x64xbf16, #tpu.memory_space<vmem>>, vector<1x12x64xbf16>
    %79 = vector.shape_cast %78 : vector<1x12x64xbf16> to vector<12x64xbf16>
    %cst_56 = arith.constant dense<0.000000e+00> : vector<32x64xf32>
    %80 = tpu.matmul %77, %79, %cst_56 {dimension_numbers = #tpu.dot_dimension_numbers<[1], [0], [0], [1], [0, 0, 1, 1], [], []>} : vector<32x12xbf16>, vector<12x64xbf16>, vector<32x64xf32> -> vector<32x64xf32>
    %81 = arith.addf %72, %80 : vector<32x64xf32>
    %c0_57 = arith.constant 0 : index
    %c0_58 = arith.constant 0 : index
    %82 = vector.load %arg0[%c0_57, %c0_58] : memref<52x12xf32, #tpu.memory_space<vmem>>, vector<32x12xf32>
    %c0_59 = arith.constant 0 : index
    %c9_60 = arith.constant 9 : index
    %83 = vector.load %arg2[%c0_59, %c9_60] : memref<32x21xf32, #tpu.memory_space<vmem>>, vector<32x1xf32>
    %84 = vector.broadcast %83 : vector<32x1xf32> to vector<32x12xf32>
    %85 = arith.mulf %82, %84 : vector<32x12xf32>
    %86 = arith.truncf %85 : vector<32x12xf32> to vector<32x12xbf16>
    %c9_61 = arith.constant 9 : index
    %c0_62 = arith.constant 0 : index
    %c0_63 = arith.constant 0 : index
    %87 = vector.load %arg1[%c9_61, %c0_62, %c0_63] : memref<21x12x64xbf16, #tpu.memory_space<vmem>>, vector<1x12x64xbf16>
    %88 = vector.shape_cast %87 : vector<1x12x64xbf16> to vector<12x64xbf16>
    %cst_64 = arith.constant dense<0.000000e+00> : vector<32x64xf32>
    %89 = tpu.matmul %86, %88, %cst_64 {dimension_numbers = #tpu.dot_dimension_numbers<[1], [0], [0], [1], [0, 0, 1, 1], [], []>} : vector<32x12xbf16>, vector<12x64xbf16>, vector<32x64xf32> -> vector<32x64xf32>
    %90 = arith.addf %81, %89 : vector<32x64xf32>
    %c2_65 = arith.constant 2 : index
    %c0_66 = arith.constant 0 : index
    %91 = vector.load %arg0[%c2_65, %c0_66] : memref<52x12xf32, #tpu.memory_space<vmem>>, vector<32x12xf32>
    %c0_67 = arith.constant 0 : index
    %c10_68 = arith.constant 10 : index
    %92 = vector.load %arg2[%c0_67, %c10_68] : memref<32x21xf32, #tpu.memory_space<vmem>>, vector<32x1xf32>
    %93 = vector.broadcast %92 : vector<32x1xf32> to vector<32x12xf32>
    %94 = arith.mulf %91, %93 : vector<32x12xf32>
    %95 = arith.truncf %94 : vector<32x12xf32> to vector<32x12xbf16>
    %c10_69 = arith.constant 10 : index
    %c0_70 = arith.constant 0 : index
    %c0_71 = arith.constant 0 : index
    %96 = vector.load %arg1[%c10_69, %c0_70, %c0_71] : memref<21x12x64xbf16, #tpu.memory_space<vmem>>, vector<1x12x64xbf16>
    %97 = vector.shape_cast %96 : vector<1x12x64xbf16> to vector<12x64xbf16>
    %cst_72 = arith.constant dense<0.000000e+00> : vector<32x64xf32>
    %98 = tpu.matmul %95, %97, %cst_72 {dimension_numbers = #tpu.dot_dimension_numbers<[1], [0], [0], [1], [0, 0, 1, 1], [], []>} : vector<32x12xbf16>, vector<12x64xbf16>, vector<32x64xf32> -> vector<32x64xf32>
    %99 = arith.addf %90, %98 : vector<32x64xf32>
    %c4_73 = arith.constant 4 : index
    %c0_74 = arith.constant 0 : index
    %100 = vector.load %arg0[%c4_73, %c0_74] : memref<52x12xf32, #tpu.memory_space<vmem>>, vector<32x12xf32>
    %c0_75 = arith.constant 0 : index
    %c11_76 = arith.constant 11 : index
    %101 = vector.load %arg2[%c0_75, %c11_76] : memref<32x21xf32, #tpu.memory_space<vmem>>, vector<32x1xf32>
    %102 = vector.broadcast %101 : vector<32x1xf32> to vector<32x12xf32>
    %103 = arith.mulf %100, %102 : vector<32x12xf32>
    %104 = arith.truncf %103 : vector<32x12xf32> to vector<32x12xbf16>
    %c11_77 = arith.constant 11 : index
    %c0_78 = arith.constant 0 : index
    %c0_79 = arith.constant 0 : index
    %105 = vector.load %arg1[%c11_77, %c0_78, %c0_79] : memref<21x12x64xbf16, #tpu.memory_space<vmem>>, vector<1x12x64xbf16>
    %106 = vector.shape_cast %105 : vector<1x12x64xbf16> to vector<12x64xbf16>
    %cst_80 = arith.constant dense<0.000000e+00> : vector<32x64xf32>
    %107 = tpu.matmul %104, %106, %cst_80 {dimension_numbers = #tpu.dot_dimension_numbers<[1], [0], [0], [1], [0, 0, 1, 1], [], []>} : vector<32x12xbf16>, vector<12x64xbf16>, vector<32x64xf32> -> vector<32x64xf32>
    %108 = arith.addf %99, %107 : vector<32x64xf32>
    %c8_81 = arith.constant 8 : index
    %c0_82 = arith.constant 0 : index
    %109 = vector.load %arg0[%c8_81, %c0_82] : memref<52x12xf32, #tpu.memory_space<vmem>>, vector<32x12xf32>
    %c0_83 = arith.constant 0 : index
    %c12 = arith.constant 12 : index
    %110 = vector.load %arg2[%c0_83, %c12] : memref<32x21xf32, #tpu.memory_space<vmem>>, vector<32x1xf32>
    %111 = vector.broadcast %110 : vector<32x1xf32> to vector<32x12xf32>
    %112 = arith.mulf %109, %111 : vector<32x12xf32>
    %113 = arith.truncf %112 : vector<32x12xf32> to vector<32x12xbf16>
    %c12_84 = arith.constant 12 : index
    %c0_85 = arith.constant 0 : index
    %c0_86 = arith.constant 0 : index
    %114 = vector.load %arg1[%c12_84, %c0_85, %c0_86] : memref<21x12x64xbf16, #tpu.memory_space<vmem>>, vector<1x12x64xbf16>
    %115 = vector.shape_cast %114 : vector<1x12x64xbf16> to vector<12x64xbf16>
    %cst_87 = arith.constant dense<0.000000e+00> : vector<32x64xf32>
    %116 = tpu.matmul %113, %115, %cst_87 {dimension_numbers = #tpu.dot_dimension_numbers<[1], [0], [0], [1], [0, 0, 1, 1], [], []>} : vector<32x12xbf16>, vector<12x64xbf16>, vector<32x64xf32> -> vector<32x64xf32>
    %117 = arith.addf %108, %116 : vector<32x64xf32>
    %c10_88 = arith.constant 10 : index
    %c0_89 = arith.constant 0 : index
    %118 = vector.load %arg0[%c10_88, %c0_89] : memref<52x12xf32, #tpu.memory_space<vmem>>, vector<32x12xf32>
    %c0_90 = arith.constant 0 : index
    %c13_91 = arith.constant 13 : index
    %119 = vector.load %arg2[%c0_90, %c13_91] : memref<32x21xf32, #tpu.memory_space<vmem>>, vector<32x1xf32>
    %120 = vector.broadcast %119 : vector<32x1xf32> to vector<32x12xf32>
    %121 = arith.mulf %118, %120 : vector<32x12xf32>
    %122 = arith.truncf %121 : vector<32x12xf32> to vector<32x12xbf16>
    %c13_92 = arith.constant 13 : index
    %c0_93 = arith.constant 0 : index
    %c0_94 = arith.constant 0 : index
    %123 = vector.load %arg1[%c13_92, %c0_93, %c0_94] : memref<21x12x64xbf16, #tpu.memory_space<vmem>>, vector<1x12x64xbf16>
    %124 = vector.shape_cast %123 : vector<1x12x64xbf16> to vector<12x64xbf16>
    %cst_95 = arith.constant dense<0.000000e+00> : vector<32x64xf32>
    %125 = tpu.matmul %122, %124, %cst_95 {dimension_numbers = #tpu.dot_dimension_numbers<[1], [0], [0], [1], [0, 0, 1, 1], [], []>} : vector<32x12xbf16>, vector<12x64xbf16>, vector<32x64xf32> -> vector<32x64xf32>
    %126 = arith.addf %117, %125 : vector<32x64xf32>
    %c12_96 = arith.constant 12 : index
    %c0_97 = arith.constant 0 : index
    %127 = vector.load %arg0[%c12_96, %c0_97] : memref<52x12xf32, #tpu.memory_space<vmem>>, vector<32x12xf32>
    %c0_98 = arith.constant 0 : index
    %c14_99 = arith.constant 14 : index
    %128 = vector.load %arg2[%c0_98, %c14_99] : memref<32x21xf32, #tpu.memory_space<vmem>>, vector<32x1xf32>
    %129 = vector.broadcast %128 : vector<32x1xf32> to vector<32x12xf32>
    %130 = arith.mulf %127, %129 : vector<32x12xf32>
    %131 = arith.truncf %130 : vector<32x12xf32> to vector<32x12xbf16>
    %c14_100 = arith.constant 14 : index
    %c0_101 = arith.constant 0 : index
    %c0_102 = arith.constant 0 : index
    %132 = vector.load %arg1[%c14_100, %c0_101, %c0_102] : memref<21x12x64xbf16, #tpu.memory_space<vmem>>, vector<1x12x64xbf16>
    %133 = vector.shape_cast %132 : vector<1x12x64xbf16> to vector<12x64xbf16>
    %cst_103 = arith.constant dense<0.000000e+00> : vector<32x64xf32>
    %134 = tpu.matmul %131, %133, %cst_103 {dimension_numbers = #tpu.dot_dimension_numbers<[1], [0], [0], [1], [0, 0, 1, 1], [], []>} : vector<32x12xbf16>, vector<12x64xbf16>, vector<32x64xf32> -> vector<32x64xf32>
    %135 = arith.addf %126, %134 : vector<32x64xf32>
    %c16 = arith.constant 16 : index
    %c0_104 = arith.constant 0 : index
    %136 = vector.load %arg0[%c16, %c0_104] : memref<52x12xf32, #tpu.memory_space<vmem>>, vector<32x12xf32>
    %c0_105 = arith.constant 0 : index
    %c15_106 = arith.constant 15 : index
    %137 = vector.load %arg2[%c0_105, %c15_106] : memref<32x21xf32, #tpu.memory_space<vmem>>, vector<32x1xf32>
    %138 = vector.broadcast %137 : vector<32x1xf32> to vector<32x12xf32>
    %139 = arith.mulf %136, %138 : vector<32x12xf32>
    %140 = arith.truncf %139 : vector<32x12xf32> to vector<32x12xbf16>
    %c15_107 = arith.constant 15 : index
    %c0_108 = arith.constant 0 : index
    %c0_109 = arith.constant 0 : index
    %141 = vector.load %arg1[%c15_107, %c0_108, %c0_109] : memref<21x12x64xbf16, #tpu.memory_space<vmem>>, vector<1x12x64xbf16>
    %142 = vector.shape_cast %141 : vector<1x12x64xbf16> to vector<12x64xbf16>
    %cst_110 = arith.constant dense<0.000000e+00> : vector<32x64xf32>
    %143 = tpu.matmul %140, %142, %cst_110 {dimension_numbers = #tpu.dot_dimension_numbers<[1], [0], [0], [1], [0, 0, 1, 1], [], []>} : vector<32x12xbf16>, vector<12x64xbf16>, vector<32x64xf32> -> vector<32x64xf32>
    %144 = arith.addf %135, %143 : vector<32x64xf32>
    %c18 = arith.constant 18 : index
    %c0_111 = arith.constant 0 : index
    %145 = vector.load %arg0[%c18, %c0_111] : memref<52x12xf32, #tpu.memory_space<vmem>>, vector<32x12xf32>
    %c0_112 = arith.constant 0 : index
    %c16_113 = arith.constant 16 : index
    %146 = vector.load %arg2[%c0_112, %c16_113] : memref<32x21xf32, #tpu.memory_space<vmem>>, vector<32x1xf32>
    %147 = vector.broadcast %146 : vector<32x1xf32> to vector<32x12xf32>
    %148 = arith.mulf %145, %147 : vector<32x12xf32>
    %149 = arith.truncf %148 : vector<32x12xf32> to vector<32x12xbf16>
    %c16_114 = arith.constant 16 : index
    %c0_115 = arith.constant 0 : index
    %c0_116 = arith.constant 0 : index
    %150 = vector.load %arg1[%c16_114, %c0_115, %c0_116] : memref<21x12x64xbf16, #tpu.memory_space<vmem>>, vector<1x12x64xbf16>
    %151 = vector.shape_cast %150 : vector<1x12x64xbf16> to vector<12x64xbf16>
    %cst_117 = arith.constant dense<0.000000e+00> : vector<32x64xf32>
    %152 = tpu.matmul %149, %151, %cst_117 {dimension_numbers = #tpu.dot_dimension_numbers<[1], [0], [0], [1], [0, 0, 1, 1], [], []>} : vector<32x12xbf16>, vector<12x64xbf16>, vector<32x64xf32> -> vector<32x64xf32>
    %153 = arith.addf %144, %152 : vector<32x64xf32>
    %c20 = arith.constant 20 : index
    %c0_118 = arith.constant 0 : index
    %154 = vector.load %arg0[%c20, %c0_118] : memref<52x12xf32, #tpu.memory_space<vmem>>, vector<32x12xf32>
    %c0_119 = arith.constant 0 : index
    %c17 = arith.constant 17 : index
    %155 = vector.load %arg2[%c0_119, %c17] : memref<32x21xf32, #tpu.memory_space<vmem>>, vector<32x1xf32>
    %156 = vector.broadcast %155 : vector<32x1xf32> to vector<32x12xf32>
    %157 = arith.mulf %154, %156 : vector<32x12xf32>
    %158 = arith.truncf %157 : vector<32x12xf32> to vector<32x12xbf16>
    %c17_120 = arith.constant 17 : index
    %c0_121 = arith.constant 0 : index
    %c0_122 = arith.constant 0 : index
    %159 = vector.load %arg1[%c17_120, %c0_121, %c0_122] : memref<21x12x64xbf16, #tpu.memory_space<vmem>>, vector<1x12x64xbf16>
    %160 = vector.shape_cast %159 : vector<1x12x64xbf16> to vector<12x64xbf16>
    %cst_123 = arith.constant dense<0.000000e+00> : vector<32x64xf32>
    %161 = tpu.matmul %158, %160, %cst_123 {dimension_numbers = #tpu.dot_dimension_numbers<[1], [0], [0], [1], [0, 0, 1, 1], [], []>} : vector<32x12xbf16>, vector<12x64xbf16>, vector<32x64xf32> -> vector<32x64xf32>
    %162 = arith.addf %153, %161 : vector<32x64xf32>
    %c10_124 = arith.constant 10 : index
    %c0_125 = arith.constant 0 : index
    %163 = vector.load %arg0[%c10_124, %c0_125] : memref<52x12xf32, #tpu.memory_space<vmem>>, vector<32x12xf32>
    %c0_126 = arith.constant 0 : index
    %c18_127 = arith.constant 18 : index
    %164 = vector.load %arg2[%c0_126, %c18_127] : memref<32x21xf32, #tpu.memory_space<vmem>>, vector<32x1xf32>
    %165 = vector.broadcast %164 : vector<32x1xf32> to vector<32x12xf32>
    %166 = arith.mulf %163, %165 : vector<32x12xf32>
    %167 = arith.truncf %166 : vector<32x12xf32> to vector<32x12xbf16>
    %c18_128 = arith.constant 18 : index
    %c0_129 = arith.constant 0 : index
    %c0_130 = arith.constant 0 : index
    %168 = vector.load %arg1[%c18_128, %c0_129, %c0_130] : memref<21x12x64xbf16, #tpu.memory_space<vmem>>, vector<1x12x64xbf16>
    %169 = vector.shape_cast %168 : vector<1x12x64xbf16> to vector<12x64xbf16>
    %cst_131 = arith.constant dense<0.000000e+00> : vector<32x64xf32>
    %170 = tpu.matmul %167, %169, %cst_131 {dimension_numbers = #tpu.dot_dimension_numbers<[1], [0], [0], [1], [0, 0, 1, 1], [], []>} : vector<32x12xbf16>, vector<12x64xbf16>, vector<32x64xf32> -> vector<32x64xf32>
    %171 = arith.addf %162, %170 : vector<32x64xf32>
    %c10_132 = arith.constant 10 : index
    %c0_133 = arith.constant 0 : index
    %172 = vector.load %arg0[%c10_132, %c0_133] : memref<52x12xf32, #tpu.memory_space<vmem>>, vector<32x12xf32>
    %c0_134 = arith.constant 0 : index
    %c19 = arith.constant 19 : index
    %173 = vector.load %arg2[%c0_134, %c19] : memref<32x21xf32, #tpu.memory_space<vmem>>, vector<32x1xf32>
    %174 = vector.broadcast %173 : vector<32x1xf32> to vector<32x12xf32>
    %175 = arith.mulf %172, %174 : vector<32x12xf32>
    %176 = arith.truncf %175 : vector<32x12xf32> to vector<32x12xbf16>
    %c19_135 = arith.constant 19 : index
    %c0_136 = arith.constant 0 : index
    %c0_137 = arith.constant 0 : index
    %177 = vector.load %arg1[%c19_135, %c0_136, %c0_137] : memref<21x12x64xbf16, #tpu.memory_space<vmem>>, vector<1x12x64xbf16>
    %178 = vector.shape_cast %177 : vector<1x12x64xbf16> to vector<12x64xbf16>
    %cst_138 = arith.constant dense<0.000000e+00> : vector<32x64xf32>
    %179 = tpu.matmul %176, %178, %cst_138 {dimension_numbers = #tpu.dot_dimension_numbers<[1], [0], [0], [1], [0, 0, 1, 1], [], []>} : vector<32x12xbf16>, vector<12x64xbf16>, vector<32x64xf32> -> vector<32x64xf32>
    %180 = arith.addf %171, %179 : vector<32x64xf32>
    %c10_139 = arith.constant 10 : index
    %c0_140 = arith.constant 0 : index
    %181 = vector.load %arg0[%c10_139, %c0_140] : memref<52x12xf32, #tpu.memory_space<vmem>>, vector<32x12xf32>
    %c0_141 = arith.constant 0 : index
    %c20_142 = arith.constant 20 : index
    %182 = vector.load %arg2[%c0_141, %c20_142] : memref<32x21xf32, #tpu.memory_space<vmem>>, vector<32x1xf32>
    %183 = vector.broadcast %182 : vector<32x1xf32> to vector<32x12xf32>
    %184 = arith.mulf %181, %183 : vector<32x12xf32>
    %185 = arith.truncf %184 : vector<32x12xf32> to vector<32x12xbf16>
    %c20_143 = arith.constant 20 : index
    %c0_144 = arith.constant 0 : index
    %c0_145 = arith.constant 0 : index
    %186 = vector.load %arg1[%c20_143, %c0_144, %c0_145] : memref<21x12x64xbf16, #tpu.memory_space<vmem>>, vector<1x12x64xbf16>
    %187 = vector.shape_cast %186 : vector<1x12x64xbf16> to vector<12x64xbf16>
    %cst_146 = arith.constant dense<0.000000e+00> : vector<32x64xf32>
    %188 = tpu.matmul %185, %187, %cst_146 {dimension_numbers = #tpu.dot_dimension_numbers<[1], [0], [0], [1], [0, 0, 1, 1], [], []>} : vector<32x12xbf16>, vector<12x64xbf16>, vector<32x64xf32> -> vector<32x64xf32>
    %189 = arith.addf %180, %188 : vector<32x64xf32>
    %c0_147 = arith.constant 0 : index
    %c0_148 = arith.constant 0 : index
    %190 = vector.load %arg3[%c0_147, %c0_148] : memref<1x64xf32, #tpu.memory_space<vmem>>, vector<1x64xf32>
    %c0_149 = arith.constant 0 : index
    %c0_150 = arith.constant 0 : index
    %191 = vector.load %arg4[%c0_149, %c0_150] : memref<1x64xf32, #tpu.memory_space<vmem>>, vector<1x64xf32>
    %c0_151 = arith.constant 0 : index
    %c0_152 = arith.constant 0 : index
    %192 = vector.load %arg5[%c0_151, %c0_152] : memref<1x64xf32, #tpu.memory_space<vmem>>, vector<1x64xf32>
    %cst_153 = arith.constant dense<0.000000e+00> : vector<64xf32>
    %193 = vector.multi_reduction <add>, %189, %cst_153 [0] : vector<32x64xf32> to vector<64xf32>
    %194 = vector.shape_cast %193 : vector<64xf32> to vector<1x64xf32>
    %cst_154 = arith.constant 3.200000e+01 : f32
    %195 = vector.broadcast %cst_154 : f32 to vector<1x64xf32>
    %196 = arith.divf %194, %195 : vector<1x64xf32>
    %197 = vector.broadcast %196 : vector<1x64xf32> to vector<32x64xf32>
    %198 = arith.subf %189, %197 : vector<32x64xf32>
    %199 = arith.mulf %198, %198 : vector<32x64xf32>
    %cst_155 = arith.constant dense<0.000000e+00> : vector<64xf32>
    %200 = vector.multi_reduction <add>, %199, %cst_155 [0] : vector<32x64xf32> to vector<64xf32>
    %201 = vector.shape_cast %200 : vector<64xf32> to vector<1x64xf32>
    %cst_156 = arith.constant 3.200000e+01 : f32
    %202 = vector.broadcast %cst_156 : f32 to vector<1x64xf32>
    %203 = arith.divf %201, %202 : vector<1x64xf32>
    %204 = vector.broadcast %196 : vector<1x64xf32> to vector<32x64xf32>
    %205 = arith.subf %189, %204 : vector<32x64xf32>
    %cst_157 = arith.constant 9.99999974E-6 : f32
    %206 = vector.broadcast %cst_157 : f32 to vector<1x64xf32>
    %207 = arith.addf %203, %206 : vector<1x64xf32>
    %208 = math.rsqrt %207 : vector<1x64xf32>
    %209 = vector.broadcast %208 : vector<1x64xf32> to vector<32x64xf32>
    %210 = arith.mulf %205, %209 : vector<32x64xf32>
    %211 = vector.broadcast %190 : vector<1x64xf32> to vector<32x64xf32>
    %212 = arith.mulf %210, %211 : vector<32x64xf32>
    %213 = vector.broadcast %191 : vector<1x64xf32> to vector<32x64xf32>
    %214 = arith.addf %212, %213 : vector<32x64xf32>
    %cst_158 = arith.constant 0.000000e+00 : f32
    %215 = vector.broadcast %cst_158 : f32 to vector<32x64xf32>
    %216 = arith.cmpf ogt, %214, %215 : vector<32x64xf32>
    %217 = vector.broadcast %192 : vector<1x64xf32> to vector<32x64xf32>
    %218 = arith.mulf %217, %214 : vector<32x64xf32>
    %219 = arith.select %216, %214, %218 : vector<32x64xi1>, vector<32x64xf32>
    %c0_159 = arith.constant 0 : index
    %c0_160 = arith.constant 0 : index
    %220 = vector.load %arg6[%c0_159, %c0_160] : memref<32x64xf32, #tpu.memory_space<vmem>>, vector<32x64xf32>
    tpu.vector_store %arg6[%c0_159, %c0_160], %219 {strides = array<i32>} : memref<32x64xf32, #tpu.memory_space<vmem>>, vector<32x64xf32>,
    return
  }
}

module attributes {stable_mosaic.version = 11 : i64} {
  func.func @kernel(%arg0: memref<52x12xf32, #tpu.memory_space<vmem>>, %arg1: memref<21x12x64xbf16, #tpu.memory_space<vmem>>, %arg2: memref<32x21xf32, #tpu.memory_space<vmem>>, %arg3: memref<32x64xf32, #tpu.memory_space<vmem>>, %arg4: memref<1x64xf32, #tpu.memory_space<vmem>>, %arg5: memref<1x64xf32, #tpu.memory_space<vmem>>, %arg6: memref<1x64xf32, #tpu.memory_space<vmem>>, %arg7: memref<32x64xf32, #tpu.memory_space<vmem>>) attributes {dimension_semantics = [], scalar_prefetch = 0 : i64, scratch_operands = 0 : i64, tpu.core_type = #tpu.core_type<tc>} {
    %cst = arith.constant 0.000000e+00 : f32
    %0 = vector.broadcast %cst : f32 to vector<32x64xf32>
    %c5 = arith.constant 5 : index
    %c0 = arith.constant 0 : index
    %1 = vector.load %arg0[%c5, %c0] : memref<52x12xf32, #tpu.memory_space<vmem>>, vector<32x12xf32>
    %c0_0 = arith.constant 0 : index
    %c0_1 = arith.constant 0 : index
    %2 = vector.load %arg2[%c0_0, %c0_1] : memref<32x21xf32, #tpu.memory_space<vmem>>, vector<32x1xf32>
    %3 = vector.broadcast %2 : vector<32x1xf32> to vector<32x12xf32>
    %4 = arith.mulf %1, %3 : vector<32x12xf32>
    %5 = arith.truncf %4 : vector<32x12xf32> to vector<32x12xbf16>
    %c0_2 = arith.constant 0 : index
    %c0_3 = arith.constant 0 : index
    %c0_4 = arith.constant 0 : index
    %6 = vector.load %arg1[%c0_2, %c0_3, %c0_4] : memref<21x12x64xbf16, #tpu.memory_space<vmem>>, vector<1x12x64xbf16>
    %7 = vector.shape_cast %6 : vector<1x12x64xbf16> to vector<12x64xbf16>
    %cst_5 = arith.constant dense<0.000000e+00> : vector<32x64xf32>
    %8 = tpu.matmul %5, %7, %cst_5 {dimension_numbers = #tpu.dot_dimension_numbers<[1], [0], [0], [1], [0, 0, 1, 1], [], []>} : vector<32x12xbf16>, vector<12x64xbf16>, vector<32x64xf32> -> vector<32x64xf32>
    %9 = arith.addf %0, %8 : vector<32x64xf32>
    %c6 = arith.constant 6 : index
    %c0_6 = arith.constant 0 : index
    %10 = vector.load %arg0[%c6, %c0_6] : memref<52x12xf32, #tpu.memory_space<vmem>>, vector<32x12xf32>
    %c0_7 = arith.constant 0 : index
    %c1 = arith.constant 1 : index
    %11 = vector.load %arg2[%c0_7, %c1] : memref<32x21xf32, #tpu.memory_space<vmem>>, vector<32x1xf32>
    %12 = vector.broadcast %11 : vector<32x1xf32> to vector<32x12xf32>
    %13 = arith.mulf %10, %12 : vector<32x12xf32>
    %14 = arith.truncf %13 : vector<32x12xf32> to vector<32x12xbf16>
    %c1_8 = arith.constant 1 : index
    %c0_9 = arith.constant 0 : index
    %c0_10 = arith.constant 0 : index
    %15 = vector.load %arg1[%c1_8, %c0_9, %c0_10] : memref<21x12x64xbf16, #tpu.memory_space<vmem>>, vector<1x12x64xbf16>
    %16 = vector.shape_cast %15 : vector<1x12x64xbf16> to vector<12x64xbf16>
    %cst_11 = arith.constant dense<0.000000e+00> : vector<32x64xf32>
    %17 = tpu.matmul %14, %16, %cst_11 {dimension_numbers = #tpu.dot_dimension_numbers<[1], [0], [0], [1], [0, 0, 1, 1], [], []>} : vector<32x12xbf16>, vector<12x64xbf16>, vector<32x64xf32> -> vector<32x64xf32>
    %18 = arith.addf %9, %17 : vector<32x64xf32>
    %c7 = arith.constant 7 : index
    %c0_12 = arith.constant 0 : index
    %19 = vector.load %arg0[%c7, %c0_12] : memref<52x12xf32, #tpu.memory_space<vmem>>, vector<32x12xf32>
    %c0_13 = arith.constant 0 : index
    %c2 = arith.constant 2 : index
    %20 = vector.load %arg2[%c0_13, %c2] : memref<32x21xf32, #tpu.memory_space<vmem>>, vector<32x1xf32>
    %21 = vector.broadcast %20 : vector<32x1xf32> to vector<32x12xf32>
    %22 = arith.mulf %19, %21 : vector<32x12xf32>
    %23 = arith.truncf %22 : vector<32x12xf32> to vector<32x12xbf16>
    %c2_14 = arith.constant 2 : index
    %c0_15 = arith.constant 0 : index
    %c0_16 = arith.constant 0 : index
    %24 = vector.load %arg1[%c2_14, %c0_15, %c0_16] : memref<21x12x64xbf16, #tpu.memory_space<vmem>>, vector<1x12x64xbf16>
    %25 = vector.shape_cast %24 : vector<1x12x64xbf16> to vector<12x64xbf16>
    %cst_17 = arith.constant dense<0.000000e+00> : vector<32x64xf32>
    %26 = tpu.matmul %23, %25, %cst_17 {dimension_numbers = #tpu.dot_dimension_numbers<[1], [0], [0], [1], [0, 0, 1, 1], [], []>} : vector<32x12xbf16>, vector<12x64xbf16>, vector<32x64xf32> -> vector<32x64xf32>
    %27 = arith.addf %18, %26 : vector<32x64xf32>
    %c9 = arith.constant 9 : index
    %c0_18 = arith.constant 0 : index
    %28 = vector.load %arg0[%c9, %c0_18] : memref<52x12xf32, #tpu.memory_space<vmem>>, vector<32x12xf32>
    %c0_19 = arith.constant 0 : index
    %c3 = arith.constant 3 : index
    %29 = vector.load %arg2[%c0_19, %c3] : memref<32x21xf32, #tpu.memory_space<vmem>>, vector<32x1xf32>
    %30 = vector.broadcast %29 : vector<32x1xf32> to vector<32x12xf32>
    %31 = arith.mulf %28, %30 : vector<32x12xf32>
    %32 = arith.truncf %31 : vector<32x12xf32> to vector<32x12xbf16>
    %c3_20 = arith.constant 3 : index
    %c0_21 = arith.constant 0 : index
    %c0_22 = arith.constant 0 : index
    %33 = vector.load %arg1[%c3_20, %c0_21, %c0_22] : memref<21x12x64xbf16, #tpu.memory_space<vmem>>, vector<1x12x64xbf16>
    %34 = vector.shape_cast %33 : vector<1x12x64xbf16> to vector<12x64xbf16>
    %cst_23 = arith.constant dense<0.000000e+00> : vector<32x64xf32>
    %35 = tpu.matmul %32, %34, %cst_23 {dimension_numbers = #tpu.dot_dimension_numbers<[1], [0], [0], [1], [0, 0, 1, 1], [], []>} : vector<32x12xbf16>, vector<12x64xbf16>, vector<32x64xf32> -> vector<32x64xf32>
    %36 = arith.addf %27, %35 : vector<32x64xf32>
    %c10 = arith.constant 10 : index
    %c0_24 = arith.constant 0 : index
    %37 = vector.load %arg0[%c10, %c0_24] : memref<52x12xf32, #tpu.memory_space<vmem>>, vector<32x12xf32>
    %c0_25 = arith.constant 0 : index
    %c4 = arith.constant 4 : index
    %38 = vector.load %arg2[%c0_25, %c4] : memref<32x21xf32, #tpu.memory_space<vmem>>, vector<32x1xf32>
    %39 = vector.broadcast %38 : vector<32x1xf32> to vector<32x12xf32>
    %40 = arith.mulf %37, %39 : vector<32x12xf32>
    %41 = arith.truncf %40 : vector<32x12xf32> to vector<32x12xbf16>
    %c4_26 = arith.constant 4 : index
    %c0_27 = arith.constant 0 : index
    %c0_28 = arith.constant 0 : index
    %42 = vector.load %arg1[%c4_26, %c0_27, %c0_28] : memref<21x12x64xbf16, #tpu.memory_space<vmem>>, vector<1x12x64xbf16>
    %43 = vector.shape_cast %42 : vector<1x12x64xbf16> to vector<12x64xbf16>
    %cst_29 = arith.constant dense<0.000000e+00> : vector<32x64xf32>
    %44 = tpu.matmul %41, %43, %cst_29 {dimension_numbers = #tpu.dot_dimension_numbers<[1], [0], [0], [1], [0, 0, 1, 1], [], []>} : vector<32x12xbf16>, vector<12x64xbf16>, vector<32x64xf32> -> vector<32x64xf32>
    %45 = arith.addf %36, %44 : vector<32x64xf32>
    %c11 = arith.constant 11 : index
    %c0_30 = arith.constant 0 : index
    %46 = vector.load %arg0[%c11, %c0_30] : memref<52x12xf32, #tpu.memory_space<vmem>>, vector<32x12xf32>
    %c0_31 = arith.constant 0 : index
    %c5_32 = arith.constant 5 : index
    %47 = vector.load %arg2[%c0_31, %c5_32] : memref<32x21xf32, #tpu.memory_space<vmem>>, vector<32x1xf32>
    %48 = vector.broadcast %47 : vector<32x1xf32> to vector<32x12xf32>
    %49 = arith.mulf %46, %48 : vector<32x12xf32>
    %50 = arith.truncf %49 : vector<32x12xf32> to vector<32x12xbf16>
    %c5_33 = arith.constant 5 : index
    %c0_34 = arith.constant 0 : index
    %c0_35 = arith.constant 0 : index
    %51 = vector.load %arg1[%c5_33, %c0_34, %c0_35] : memref<21x12x64xbf16, #tpu.memory_space<vmem>>, vector<1x12x64xbf16>
    %52 = vector.shape_cast %51 : vector<1x12x64xbf16> to vector<12x64xbf16>
    %cst_36 = arith.constant dense<0.000000e+00> : vector<32x64xf32>
    %53 = tpu.matmul %50, %52, %cst_36 {dimension_numbers = #tpu.dot_dimension_numbers<[1], [0], [0], [1], [0, 0, 1, 1], [], []>} : vector<32x12xbf16>, vector<12x64xbf16>, vector<32x64xf32> -> vector<32x64xf32>
    %54 = arith.addf %45, %53 : vector<32x64xf32>
    %c13 = arith.constant 13 : index
    %c0_37 = arith.constant 0 : index
    %55 = vector.load %arg0[%c13, %c0_37] : memref<52x12xf32, #tpu.memory_space<vmem>>, vector<32x12xf32>
    %c0_38 = arith.constant 0 : index
    %c6_39 = arith.constant 6 : index
    %56 = vector.load %arg2[%c0_38, %c6_39] : memref<32x21xf32, #tpu.memory_space<vmem>>, vector<32x1xf32>
    %57 = vector.broadcast %56 : vector<32x1xf32> to vector<32x12xf32>
    %58 = arith.mulf %55, %57 : vector<32x12xf32>
    %59 = arith.truncf %58 : vector<32x12xf32> to vector<32x12xbf16>
    %c6_40 = arith.constant 6 : index
    %c0_41 = arith.constant 0 : index
    %c0_42 = arith.constant 0 : index
    %60 = vector.load %arg1[%c6_40, %c0_41, %c0_42] : memref<21x12x64xbf16, #tpu.memory_space<vmem>>, vector<1x12x64xbf16>
    %61 = vector.shape_cast %60 : vector<1x12x64xbf16> to vector<12x64xbf16>
    %cst_43 = arith.constant dense<0.000000e+00> : vector<32x64xf32>
    %62 = tpu.matmul %59, %61, %cst_43 {dimension_numbers = #tpu.dot_dimension_numbers<[1], [0], [0], [1], [0, 0, 1, 1], [], []>} : vector<32x12xbf16>, vector<12x64xbf16>, vector<32x64xf32> -> vector<32x64xf32>
    %63 = arith.addf %54, %62 : vector<32x64xf32>
    %c14 = arith.constant 14 : index
    %c0_44 = arith.constant 0 : index
    %64 = vector.load %arg0[%c14, %c0_44] : memref<52x12xf32, #tpu.memory_space<vmem>>, vector<32x12xf32>
    %c0_45 = arith.constant 0 : index
    %c7_46 = arith.constant 7 : index
    %65 = vector.load %arg2[%c0_45, %c7_46] : memref<32x21xf32, #tpu.memory_space<vmem>>, vector<32x1xf32>
    %66 = vector.broadcast %65 : vector<32x1xf32> to vector<32x12xf32>
    %67 = arith.mulf %64, %66 : vector<32x12xf32>
    %68 = arith.truncf %67 : vector<32x12xf32> to vector<32x12xbf16>
    %c7_47 = arith.constant 7 : index
    %c0_48 = arith.constant 0 : index
    %c0_49 = arith.constant 0 : index
    %69 = vector.load %arg1[%c7_47, %c0_48, %c0_49] : memref<21x12x64xbf16, #tpu.memory_space<vmem>>, vector<1x12x64xbf16>
    %70 = vector.shape_cast %69 : vector<1x12x64xbf16> to vector<12x64xbf16>
    %cst_50 = arith.constant dense<0.000000e+00> : vector<32x64xf32>
    %71 = tpu.matmul %68, %70, %cst_50 {dimension_numbers = #tpu.dot_dimension_numbers<[1], [0], [0], [1], [0, 0, 1, 1], [], []>} : vector<32x12xbf16>, vector<12x64xbf16>, vector<32x64xf32> -> vector<32x64xf32>
    %72 = arith.addf %63, %71 : vector<32x64xf32>
    %c15 = arith.constant 15 : index
    %c0_51 = arith.constant 0 : index
    %73 = vector.load %arg0[%c15, %c0_51] : memref<52x12xf32, #tpu.memory_space<vmem>>, vector<32x12xf32>
    %c0_52 = arith.constant 0 : index
    %c8 = arith.constant 8 : index
    %74 = vector.load %arg2[%c0_52, %c8] : memref<32x21xf32, #tpu.memory_space<vmem>>, vector<32x1xf32>
    %75 = vector.broadcast %74 : vector<32x1xf32> to vector<32x12xf32>
    %76 = arith.mulf %73, %75 : vector<32x12xf32>
    %77 = arith.truncf %76 : vector<32x12xf32> to vector<32x12xbf16>
    %c8_53 = arith.constant 8 : index
    %c0_54 = arith.constant 0 : index
    %c0_55 = arith.constant 0 : index
    %78 = vector.load %arg1[%c8_53, %c0_54, %c0_55] : memref<21x12x64xbf16, #tpu.memory_space<vmem>>, vector<1x12x64xbf16>
    %79 = vector.shape_cast %78 : vector<1x12x64xbf16> to vector<12x64xbf16>
    %cst_56 = arith.constant dense<0.000000e+00> : vector<32x64xf32>
    %80 = tpu.matmul %77, %79, %cst_56 {dimension_numbers = #tpu.dot_dimension_numbers<[1], [0], [0], [1], [0, 0, 1, 1], [], []>} : vector<32x12xbf16>, vector<12x64xbf16>, vector<32x64xf32> -> vector<32x64xf32>
    %81 = arith.addf %72, %80 : vector<32x64xf32>
    %c0_57 = arith.constant 0 : index
    %c0_58 = arith.constant 0 : index
    %82 = vector.load %arg0[%c0_57, %c0_58] : memref<52x12xf32, #tpu.memory_space<vmem>>, vector<32x12xf32>
    %c0_59 = arith.constant 0 : index
    %c9_60 = arith.constant 9 : index
    %83 = vector.load %arg2[%c0_59, %c9_60] : memref<32x21xf32, #tpu.memory_space<vmem>>, vector<32x1xf32>
    %84 = vector.broadcast %83 : vector<32x1xf32> to vector<32x12xf32>
    %85 = arith.mulf %82, %84 : vector<32x12xf32>
    %86 = arith.truncf %85 : vector<32x12xf32> to vector<32x12xbf16>
    %c9_61 = arith.constant 9 : index
    %c0_62 = arith.constant 0 : index
    %c0_63 = arith.constant 0 : index
    %87 = vector.load %arg1[%c9_61, %c0_62, %c0_63] : memref<21x12x64xbf16, #tpu.memory_space<vmem>>, vector<1x12x64xbf16>
    %88 = vector.shape_cast %87 : vector<1x12x64xbf16> to vector<12x64xbf16>
    %cst_64 = arith.constant dense<0.000000e+00> : vector<32x64xf32>
    %89 = tpu.matmul %86, %88, %cst_64 {dimension_numbers = #tpu.dot_dimension_numbers<[1], [0], [0], [1], [0, 0, 1, 1], [], []>} : vector<32x12xbf16>, vector<12x64xbf16>, vector<32x64xf32> -> vector<32x64xf32>
    %90 = arith.addf %81, %89 : vector<32x64xf32>
    %c2_65 = arith.constant 2 : index
    %c0_66 = arith.constant 0 : index
    %91 = vector.load %arg0[%c2_65, %c0_66] : memref<52x12xf32, #tpu.memory_space<vmem>>, vector<32x12xf32>
    %c0_67 = arith.constant 0 : index
    %c10_68 = arith.constant 10 : index
    %92 = vector.load %arg2[%c0_67, %c10_68] : memref<32x21xf32, #tpu.memory_space<vmem>>, vector<32x1xf32>
    %93 = vector.broadcast %92 : vector<32x1xf32> to vector<32x12xf32>
    %94 = arith.mulf %91, %93 : vector<32x12xf32>
    %95 = arith.truncf %94 : vector<32x12xf32> to vector<32x12xbf16>
    %c10_69 = arith.constant 10 : index
    %c0_70 = arith.constant 0 : index
    %c0_71 = arith.constant 0 : index
    %96 = vector.load %arg1[%c10_69, %c0_70, %c0_71] : memref<21x12x64xbf16, #tpu.memory_space<vmem>>, vector<1x12x64xbf16>
    %97 = vector.shape_cast %96 : vector<1x12x64xbf16> to vector<12x64xbf16>
    %cst_72 = arith.constant dense<0.000000e+00> : vector<32x64xf32>
    %98 = tpu.matmul %95, %97, %cst_72 {dimension_numbers = #tpu.dot_dimension_numbers<[1], [0], [0], [1], [0, 0, 1, 1], [], []>} : vector<32x12xbf16>, vector<12x64xbf16>, vector<32x64xf32> -> vector<32x64xf32>
    %99 = arith.addf %90, %98 : vector<32x64xf32>
    %c4_73 = arith.constant 4 : index
    %c0_74 = arith.constant 0 : index
    %100 = vector.load %arg0[%c4_73, %c0_74] : memref<52x12xf32, #tpu.memory_space<vmem>>, vector<32x12xf32>
    %c0_75 = arith.constant 0 : index
    %c11_76 = arith.constant 11 : index
    %101 = vector.load %arg2[%c0_75, %c11_76] : memref<32x21xf32, #tpu.memory_space<vmem>>, vector<32x1xf32>
    %102 = vector.broadcast %101 : vector<32x1xf32> to vector<32x12xf32>
    %103 = arith.mulf %100, %102 : vector<32x12xf32>
    %104 = arith.truncf %103 : vector<32x12xf32> to vector<32x12xbf16>
    %c11_77 = arith.constant 11 : index
    %c0_78 = arith.constant 0 : index
    %c0_79 = arith.constant 0 : index
    %105 = vector.load %arg1[%c11_77, %c0_78, %c0_79] : memref<21x12x64xbf16, #tpu.memory_space<vmem>>, vector<1x12x64xbf16>
    %106 = vector.shape_cast %105 : vector<1x12x64xbf16> to vector<12x64xbf16>
    %cst_80 = arith.constant dense<0.000000e+00> : vector<32x64xf32>
    %107 = tpu.matmul %104, %106, %cst_80 {dimension_numbers = #tpu.dot_dimension_numbers<[1], [0], [0], [1], [0, 0, 1, 1], [], []>} : vector<32x12xbf16>, vector<12x64xbf16>, vector<32x64xf32> -> vector<32x64xf32>
    %108 = arith.addf %99, %107 : vector<32x64xf32>
    %c8_81 = arith.constant 8 : index
    %c0_82 = arith.constant 0 : index
    %109 = vector.load %arg0[%c8_81, %c0_82] : memref<52x12xf32, #tpu.memory_space<vmem>>, vector<32x12xf32>
    %c0_83 = arith.constant 0 : index
    %c12 = arith.constant 12 : index
    %110 = vector.load %arg2[%c0_83, %c12] : memref<32x21xf32, #tpu.memory_space<vmem>>, vector<32x1xf32>
    %111 = vector.broadcast %110 : vector<32x1xf32> to vector<32x12xf32>
    %112 = arith.mulf %109, %111 : vector<32x12xf32>
    %113 = arith.truncf %112 : vector<32x12xf32> to vector<32x12xbf16>
    %c12_84 = arith.constant 12 : index
    %c0_85 = arith.constant 0 : index
    %c0_86 = arith.constant 0 : index
    %114 = vector.load %arg1[%c12_84, %c0_85, %c0_86] : memref<21x12x64xbf16, #tpu.memory_space<vmem>>, vector<1x12x64xbf16>
    %115 = vector.shape_cast %114 : vector<1x12x64xbf16> to vector<12x64xbf16>
    %cst_87 = arith.constant dense<0.000000e+00> : vector<32x64xf32>
    %116 = tpu.matmul %113, %115, %cst_87 {dimension_numbers = #tpu.dot_dimension_numbers<[1], [0], [0], [1], [0, 0, 1, 1], [], []>} : vector<32x12xbf16>, vector<12x64xbf16>, vector<32x64xf32> -> vector<32x64xf32>
    %117 = arith.addf %108, %116 : vector<32x64xf32>
    %c10_88 = arith.constant 10 : index
    %c0_89 = arith.constant 0 : index
    %118 = vector.load %arg0[%c10_88, %c0_89] : memref<52x12xf32, #tpu.memory_space<vmem>>, vector<32x12xf32>
    %c0_90 = arith.constant 0 : index
    %c13_91 = arith.constant 13 : index
    %119 = vector.load %arg2[%c0_90, %c13_91] : memref<32x21xf32, #tpu.memory_space<vmem>>, vector<32x1xf32>
    %120 = vector.broadcast %119 : vector<32x1xf32> to vector<32x12xf32>
    %121 = arith.mulf %118, %120 : vector<32x12xf32>
    %122 = arith.truncf %121 : vector<32x12xf32> to vector<32x12xbf16>
    %c13_92 = arith.constant 13 : index
    %c0_93 = arith.constant 0 : index
    %c0_94 = arith.constant 0 : index
    %123 = vector.load %arg1[%c13_92, %c0_93, %c0_94] : memref<21x12x64xbf16, #tpu.memory_space<vmem>>, vector<1x12x64xbf16>
    %124 = vector.shape_cast %123 : vector<1x12x64xbf16> to vector<12x64xbf16>
    %cst_95 = arith.constant dense<0.000000e+00> : vector<32x64xf32>
    %125 = tpu.matmul %122, %124, %cst_95 {dimension_numbers = #tpu.dot_dimension_numbers<[1], [0], [0], [1], [0, 0, 1, 1], [], []>} : vector<32x12xbf16>, vector<12x64xbf16>, vector<32x64xf32> -> vector<32x64xf32>
    %126 = arith.addf %117, %125 : vector<32x64xf32>
    %c12_96 = arith.constant 12 : index
    %c0_97 = arith.constant 0 : index
    %127 = vector.load %arg0[%c12_96, %c0_97] : memref<52x12xf32, #tpu.memory_space<vmem>>, vector<32x12xf32>
    %c0_98 = arith.constant 0 : index
    %c14_99 = arith.constant 14 : index
    %128 = vector.load %arg2[%c0_98, %c14_99] : memref<32x21xf32, #tpu.memory_space<vmem>>, vector<32x1xf32>
    %129 = vector.broadcast %128 : vector<32x1xf32> to vector<32x12xf32>
    %130 = arith.mulf %127, %129 : vector<32x12xf32>
    %131 = arith.truncf %130 : vector<32x12xf32> to vector<32x12xbf16>
    %c14_100 = arith.constant 14 : index
    %c0_101 = arith.constant 0 : index
    %c0_102 = arith.constant 0 : index
    %132 = vector.load %arg1[%c14_100, %c0_101, %c0_102] : memref<21x12x64xbf16, #tpu.memory_space<vmem>>, vector<1x12x64xbf16>
    %133 = vector.shape_cast %132 : vector<1x12x64xbf16> to vector<12x64xbf16>
    %cst_103 = arith.constant dense<0.000000e+00> : vector<32x64xf32>
    %134 = tpu.matmul %131, %133, %cst_103 {dimension_numbers = #tpu.dot_dimension_numbers<[1], [0], [0], [1], [0, 0, 1, 1], [], []>} : vector<32x12xbf16>, vector<12x64xbf16>, vector<32x64xf32> -> vector<32x64xf32>
    %135 = arith.addf %126, %134 : vector<32x64xf32>
    %c16 = arith.constant 16 : index
    %c0_104 = arith.constant 0 : index
    %136 = vector.load %arg0[%c16, %c0_104] : memref<52x12xf32, #tpu.memory_space<vmem>>, vector<32x12xf32>
    %c0_105 = arith.constant 0 : index
    %c15_106 = arith.constant 15 : index
    %137 = vector.load %arg2[%c0_105, %c15_106] : memref<32x21xf32, #tpu.memory_space<vmem>>, vector<32x1xf32>
    %138 = vector.broadcast %137 : vector<32x1xf32> to vector<32x12xf32>
    %139 = arith.mulf %136, %138 : vector<32x12xf32>
    %140 = arith.truncf %139 : vector<32x12xf32> to vector<32x12xbf16>
    %c15_107 = arith.constant 15 : index
    %c0_108 = arith.constant 0 : index
    %c0_109 = arith.constant 0 : index
    %141 = vector.load %arg1[%c15_107, %c0_108, %c0_109] : memref<21x12x64xbf16, #tpu.memory_space<vmem>>, vector<1x12x64xbf16>
    %142 = vector.shape_cast %141 : vector<1x12x64xbf16> to vector<12x64xbf16>
    %cst_110 = arith.constant dense<0.000000e+00> : vector<32x64xf32>
    %143 = tpu.matmul %140, %142, %cst_110 {dimension_numbers = #tpu.dot_dimension_numbers<[1], [0], [0], [1], [0, 0, 1, 1], [], []>} : vector<32x12xbf16>, vector<12x64xbf16>, vector<32x64xf32> -> vector<32x64xf32>
    %144 = arith.addf %135, %143 : vector<32x64xf32>
    %c18 = arith.constant 18 : index
    %c0_111 = arith.constant 0 : index
    %145 = vector.load %arg0[%c18, %c0_111] : memref<52x12xf32, #tpu.memory_space<vmem>>, vector<32x12xf32>
    %c0_112 = arith.constant 0 : index
    %c16_113 = arith.constant 16 : index
    %146 = vector.load %arg2[%c0_112, %c16_113] : memref<32x21xf32, #tpu.memory_space<vmem>>, vector<32x1xf32>
    %147 = vector.broadcast %146 : vector<32x1xf32> to vector<32x12xf32>
    %148 = arith.mulf %145, %147 : vector<32x12xf32>
    %149 = arith.truncf %148 : vector<32x12xf32> to vector<32x12xbf16>
    %c16_114 = arith.constant 16 : index
    %c0_115 = arith.constant 0 : index
    %c0_116 = arith.constant 0 : index
    %150 = vector.load %arg1[%c16_114, %c0_115, %c0_116] : memref<21x12x64xbf16, #tpu.memory_space<vmem>>, vector<1x12x64xbf16>
    %151 = vector.shape_cast %150 : vector<1x12x64xbf16> to vector<12x64xbf16>
    %cst_117 = arith.constant dense<0.000000e+00> : vector<32x64xf32>
    %152 = tpu.matmul %149, %151, %cst_117 {dimension_numbers = #tpu.dot_dimension_numbers<[1], [0], [0], [1], [0, 0, 1, 1], [], []>} : vector<32x12xbf16>, vector<12x64xbf16>, vector<32x64xf32> -> vector<32x64xf32>
    %153 = arith.addf %144, %152 : vector<32x64xf32>
    %c20 = arith.constant 20 : index
    %c0_118 = arith.constant 0 : index
    %154 = vector.load %arg0[%c20, %c0_118] : memref<52x12xf32, #tpu.memory_space<vmem>>, vector<32x12xf32>
    %c0_119 = arith.constant 0 : index
    %c17 = arith.constant 17 : index
    %155 = vector.load %arg2[%c0_119, %c17] : memref<32x21xf32, #tpu.memory_space<vmem>>, vector<32x1xf32>
    %156 = vector.broadcast %155 : vector<32x1xf32> to vector<32x12xf32>
    %157 = arith.mulf %154, %156 : vector<32x12xf32>
    %158 = arith.truncf %157 : vector<32x12xf32> to vector<32x12xbf16>
    %c17_120 = arith.constant 17 : index
    %c0_121 = arith.constant 0 : index
    %c0_122 = arith.constant 0 : index
    %159 = vector.load %arg1[%c17_120, %c0_121, %c0_122] : memref<21x12x64xbf16, #tpu.memory_space<vmem>>, vector<1x12x64xbf16>
    %160 = vector.shape_cast %159 : vector<1x12x64xbf16> to vector<12x64xbf16>
    %cst_123 = arith.constant dense<0.000000e+00> : vector<32x64xf32>
    %161 = tpu.matmul %158, %160, %cst_123 {dimension_numbers = #tpu.dot_dimension_numbers<[1], [0], [0], [1], [0, 0, 1, 1], [], []>} : vector<32x12xbf16>, vector<12x64xbf16>, vector<32x64xf32> -> vector<32x64xf32>
    %162 = arith.addf %153, %161 : vector<32x64xf32>
    %c10_124 = arith.constant 10 : index
    %c0_125 = arith.constant 0 : index
    %163 = vector.load %arg0[%c10_124, %c0_125] : memref<52x12xf32, #tpu.memory_space<vmem>>, vector<32x12xf32>
    %c0_126 = arith.constant 0 : index
    %c18_127 = arith.constant 18 : index
    %164 = vector.load %arg2[%c0_126, %c18_127] : memref<32x21xf32, #tpu.memory_space<vmem>>, vector<32x1xf32>
    %165 = vector.broadcast %164 : vector<32x1xf32> to vector<32x12xf32>
    %166 = arith.mulf %163, %165 : vector<32x12xf32>
    %167 = arith.truncf %166 : vector<32x12xf32> to vector<32x12xbf16>
    %c18_128 = arith.constant 18 : index
    %c0_129 = arith.constant 0 : index
    %c0_130 = arith.constant 0 : index
    %168 = vector.load %arg1[%c18_128, %c0_129, %c0_130] : memref<21x12x64xbf16, #tpu.memory_space<vmem>>, vector<1x12x64xbf16>
    %169 = vector.shape_cast %168 : vector<1x12x64xbf16> to vector<12x64xbf16>
    %cst_131 = arith.constant dense<0.000000e+00> : vector<32x64xf32>
    %170 = tpu.matmul %167, %169, %cst_131 {dimension_numbers = #tpu.dot_dimension_numbers<[1], [0], [0], [1], [0, 0, 1, 1], [], []>} : vector<32x12xbf16>, vector<12x64xbf16>, vector<32x64xf32> -> vector<32x64xf32>
    %171 = arith.addf %162, %170 : vector<32x64xf32>
    %c10_132 = arith.constant 10 : index
    %c0_133 = arith.constant 0 : index
    %172 = vector.load %arg0[%c10_132, %c0_133] : memref<52x12xf32, #tpu.memory_space<vmem>>, vector<32x12xf32>
    %c0_134 = arith.constant 0 : index
    %c19 = arith.constant 19 : index
    %173 = vector.load %arg2[%c0_134, %c19] : memref<32x21xf32, #tpu.memory_space<vmem>>, vector<32x1xf32>
    %174 = vector.broadcast %173 : vector<32x1xf32> to vector<32x12xf32>
    %175 = arith.mulf %172, %174 : vector<32x12xf32>
    %176 = arith.truncf %175 : vector<32x12xf32> to vector<32x12xbf16>
    %c19_135 = arith.constant 19 : index
    %c0_136 = arith.constant 0 : index
    %c0_137 = arith.constant 0 : index
    %177 = vector.load %arg1[%c19_135, %c0_136, %c0_137] : memref<21x12x64xbf16, #tpu.memory_space<vmem>>, vector<1x12x64xbf16>
    %178 = vector.shape_cast %177 : vector<1x12x64xbf16> to vector<12x64xbf16>
    %cst_138 = arith.constant dense<0.000000e+00> : vector<32x64xf32>
    %179 = tpu.matmul %176, %178, %cst_138 {dimension_numbers = #tpu.dot_dimension_numbers<[1], [0], [0], [1], [0, 0, 1, 1], [], []>} : vector<32x12xbf16>, vector<12x64xbf16>, vector<32x64xf32> -> vector<32x64xf32>
    %180 = arith.addf %171, %179 : vector<32x64xf32>
    %c10_139 = arith.constant 10 : index
    %c0_140 = arith.constant 0 : index
    %181 = vector.load %arg0[%c10_139, %c0_140] : memref<52x12xf32, #tpu.memory_space<vmem>>, vector<32x12xf32>
    %c0_141 = arith.constant 0 : index
    %c20_142 = arith.constant 20 : index
    %182 = vector.load %arg2[%c0_141, %c20_142] : memref<32x21xf32, #tpu.memory_space<vmem>>, vector<32x1xf32>
    %183 = vector.broadcast %182 : vector<32x1xf32> to vector<32x12xf32>
    %184 = arith.mulf %181, %183 : vector<32x12xf32>
    %185 = arith.truncf %184 : vector<32x12xf32> to vector<32x12xbf16>
    %c20_143 = arith.constant 20 : index
    %c0_144 = arith.constant 0 : index
    %c0_145 = arith.constant 0 : index
    %186 = vector.load %arg1[%c20_143, %c0_144, %c0_145] : memref<21x12x64xbf16, #tpu.memory_space<vmem>>, vector<1x12x64xbf16>
    %187 = vector.shape_cast %186 : vector<1x12x64xbf16> to vector<12x64xbf16>
    %cst_146 = arith.constant dense<0.000000e+00> : vector<32x64xf32>
    %188 = tpu.matmul %185, %187, %cst_146 {dimension_numbers = #tpu.dot_dimension_numbers<[1], [0], [0], [1], [0, 0, 1, 1], [], []>} : vector<32x12xbf16>, vector<12x64xbf16>, vector<32x64xf32> -> vector<32x64xf32>
    %189 = arith.addf %180, %188 : vector<32x64xf32>
    %c0_147 = arith.constant 0 : index
    %c0_148 = arith.constant 0 : index
    %190 = vector.load %arg3[%c0_147, %c0_148] : memref<32x64xf32, #tpu.memory_space<vmem>>, vector<32x64xf32>
    %191 = arith.addf %189, %190 : vector<32x64xf32>
    %c0_149 = arith.constant 0 : index
    %c0_150 = arith.constant 0 : index
    %192 = vector.load %arg4[%c0_149, %c0_150] : memref<1x64xf32, #tpu.memory_space<vmem>>, vector<1x64xf32>
    %c0_151 = arith.constant 0 : index
    %c0_152 = arith.constant 0 : index
    %193 = vector.load %arg5[%c0_151, %c0_152] : memref<1x64xf32, #tpu.memory_space<vmem>>, vector<1x64xf32>
    %c0_153 = arith.constant 0 : index
    %c0_154 = arith.constant 0 : index
    %194 = vector.load %arg6[%c0_153, %c0_154] : memref<1x64xf32, #tpu.memory_space<vmem>>, vector<1x64xf32>
    %cst_155 = arith.constant dense<0.000000e+00> : vector<64xf32>
    %195 = vector.multi_reduction <add>, %191, %cst_155 [0] : vector<32x64xf32> to vector<64xf32>
    %196 = vector.shape_cast %195 : vector<64xf32> to vector<1x64xf32>
    %cst_156 = arith.constant 3.200000e+01 : f32
    %197 = vector.broadcast %cst_156 : f32 to vector<1x64xf32>
    %198 = arith.divf %196, %197 : vector<1x64xf32>
    %199 = vector.broadcast %198 : vector<1x64xf32> to vector<32x64xf32>
    %200 = arith.subf %191, %199 : vector<32x64xf32>
    %201 = arith.mulf %200, %200 : vector<32x64xf32>
    %cst_157 = arith.constant dense<0.000000e+00> : vector<64xf32>
    %202 = vector.multi_reduction <add>, %201, %cst_157 [0] : vector<32x64xf32> to vector<64xf32>
    %203 = vector.shape_cast %202 : vector<64xf32> to vector<1x64xf32>
    %cst_158 = arith.constant 3.200000e+01 : f32
    %204 = vector.broadcast %cst_158 : f32 to vector<1x64xf32>
    %205 = arith.divf %203, %204 : vector<1x64xf32>
    %206 = vector.broadcast %198 : vector<1x64xf32> to vector<32x64xf32>
    %207 = arith.subf %191, %206 : vector<32x64xf32>
    %cst_159 = arith.constant 9.99999974E-6 : f32
    %208 = vector.broadcast %cst_159 : f32 to vector<1x64xf32>
    %209 = arith.addf %205, %208 : vector<1x64xf32>
    %210 = math.rsqrt %209 : vector<1x64xf32>
    %211 = vector.broadcast %210 : vector<1x64xf32> to vector<32x64xf32>
    %212 = arith.mulf %207, %211 : vector<32x64xf32>
    %213 = vector.broadcast %192 : vector<1x64xf32> to vector<32x64xf32>
    %214 = arith.mulf %212, %213 : vector<32x64xf32>
    %215 = vector.broadcast %193 : vector<1x64xf32> to vector<32x64xf32>
    %216 = arith.addf %214, %215 : vector<32x64xf32>
    %cst_160 = arith.constant 0.000000e+00 : f32
    %217 = vector.broadcast %cst_160 : f32 to vector<32x64xf32>
    %218 = arith.cmpf ogt, %216, %217 : vector<32x64xf32>
    %219 = vector.broadcast %194 : vector<1x64xf32> to vector<32x64xf32>
    %220 = arith.mulf %219, %216 : vector<32x64xf32>
    %221 = arith.select %218, %216, %220 : vector<32x64xi1>, vector<32x64xf32>
    %c0_161 = arith.constant 0 : index
    %c0_162 = arith.constant 0 : index
    %222 = vector.load %arg7[%c0_161, %c0_162] : memref<32x64xf32, #tpu.memory_space<vmem>>, vector<32x64xf32>
    tpu.vector_store %arg7[%c0_161, %c0_162], %221 {strides = array<i32>} : memref<32x64xf32, #tpu.memory_space<vmem>>, vector<32x64xf32>,
    return
  }
}

module attributes {stable_mosaic.version = 11 : i64} {
  func.func @_mm_bn_prelu_kernel(%arg0: memref<8x1179xbf16, #tpu.memory_space<vmem>>, %arg1: memref<1179x25xbf16, #tpu.memory_space<vmem>>, %arg2: memref<1x25xf32, #tpu.memory_space<vmem>>, %arg3: memref<1x25xf32, #tpu.memory_space<vmem>>, %arg4: memref<1x25xf32, #tpu.memory_space<vmem>>, %arg5: memref<8x25xf32, #tpu.memory_space<vmem>>) attributes {dimension_semantics = [], scalar_prefetch = 0 : i64, scratch_operands = 0 : i64, tpu.core_type = #tpu.core_type<tc>} {
    %c0 = arith.constant 0 : index
    %c0_0 = arith.constant 0 : index
    %0 = vector.load %arg0[%c0, %c0_0] : memref<8x1179xbf16, #tpu.memory_space<vmem>>, vector<8x1179xbf16>
    %c0_1 = arith.constant 0 : index
    %c0_2 = arith.constant 0 : index
    %1 = vector.load %arg1[%c0_1, %c0_2] : memref<1179x25xbf16, #tpu.memory_space<vmem>>, vector<1179x25xbf16>
    %cst = arith.constant dense<0.000000e+00> : vector<8x25xf32>
    %2 = tpu.matmul %0, %1, %cst {dimension_numbers = #tpu.dot_dimension_numbers<[1], [0], [0], [1], [0, 0, 1, 1], [], []>} : vector<8x1179xbf16>, vector<1179x25xbf16>, vector<8x25xf32> -> vector<8x25xf32>
    %c0_3 = arith.constant 0 : index
    %c0_4 = arith.constant 0 : index
    %3 = vector.load %arg2[%c0_3, %c0_4] : memref<1x25xf32, #tpu.memory_space<vmem>>, vector<1x25xf32>
    %c0_5 = arith.constant 0 : index
    %c0_6 = arith.constant 0 : index
    %4 = vector.load %arg3[%c0_5, %c0_6] : memref<1x25xf32, #tpu.memory_space<vmem>>, vector<1x25xf32>
    %c0_7 = arith.constant 0 : index
    %c0_8 = arith.constant 0 : index
    %5 = vector.load %arg4[%c0_7, %c0_8] : memref<1x25xf32, #tpu.memory_space<vmem>>, vector<1x25xf32>
    %cst_9 = arith.constant dense<0.000000e+00> : vector<25xf32>
    %6 = vector.multi_reduction <add>, %2, %cst_9 [0] : vector<8x25xf32> to vector<25xf32>
    %7 = vector.shape_cast %6 : vector<25xf32> to vector<1x25xf32>
    %cst_10 = arith.constant 8.000000e+00 : f32
    %8 = vector.broadcast %cst_10 : f32 to vector<1x25xf32>
    %9 = arith.divf %7, %8 : vector<1x25xf32>
    %10 = vector.broadcast %9 : vector<1x25xf32> to vector<8x25xf32>
    %11 = arith.subf %2, %10 : vector<8x25xf32>
    %12 = arith.mulf %11, %11 : vector<8x25xf32>
    %cst_11 = arith.constant dense<0.000000e+00> : vector<25xf32>
    %13 = vector.multi_reduction <add>, %12, %cst_11 [0] : vector<8x25xf32> to vector<25xf32>
    %14 = vector.shape_cast %13 : vector<25xf32> to vector<1x25xf32>
    %cst_12 = arith.constant 8.000000e+00 : f32
    %15 = vector.broadcast %cst_12 : f32 to vector<1x25xf32>
    %16 = arith.divf %14, %15 : vector<1x25xf32>
    %17 = vector.broadcast %9 : vector<1x25xf32> to vector<8x25xf32>
    %18 = arith.subf %2, %17 : vector<8x25xf32>
    %cst_13 = arith.constant 9.99999974E-6 : f32
    %19 = vector.broadcast %cst_13 : f32 to vector<1x25xf32>
    %20 = arith.addf %16, %19 : vector<1x25xf32>
    %21 = math.rsqrt %20 : vector<1x25xf32>
    %22 = vector.broadcast %21 : vector<1x25xf32> to vector<8x25xf32>
    %23 = arith.mulf %18, %22 : vector<8x25xf32>
    %24 = vector.broadcast %3 : vector<1x25xf32> to vector<8x25xf32>
    %25 = arith.mulf %23, %24 : vector<8x25xf32>
    %26 = vector.broadcast %4 : vector<1x25xf32> to vector<8x25xf32>
    %27 = arith.addf %25, %26 : vector<8x25xf32>
    %cst_14 = arith.constant 0.000000e+00 : f32
    %28 = vector.broadcast %cst_14 : f32 to vector<8x25xf32>
    %29 = arith.cmpf ogt, %27, %28 : vector<8x25xf32>
    %30 = vector.broadcast %5 : vector<1x25xf32> to vector<8x25xf32>
    %31 = arith.mulf %30, %27 : vector<8x25xf32>
    %32 = arith.select %29, %27, %31 : vector<8x25xi1>, vector<8x25xf32>
    %c0_15 = arith.constant 0 : index
    %c0_16 = arith.constant 0 : index
    %33 = vector.load %arg5[%c0_15, %c0_16] : memref<8x25xf32, #tpu.memory_space<vmem>>, vector<8x25xf32>
    tpu.vector_store %arg5[%c0_15, %c0_16], %32 {strides = array<i32>} : memref<8x25xf32, #tpu.memory_space<vmem>>, vector<8x25xf32>,
    return
  }
}

module attributes {stable_mosaic.version = 11 : i64} {
  func.func @kernel(%arg0: memref<14x25xf32, #tpu.memory_space<vmem>>, %arg1: memref<13x25x128xbf16, #tpu.memory_space<vmem>>, %arg2: memref<8x13xf32, #tpu.memory_space<vmem>>, %arg3: memref<1x128xf32, #tpu.memory_space<vmem>>, %arg4: memref<1x128xf32, #tpu.memory_space<vmem>>, %arg5: memref<1x128xf32, #tpu.memory_space<vmem>>, %arg6: memref<8x128xf32, #tpu.memory_space<vmem>>) attributes {dimension_semantics = [], scalar_prefetch = 0 : i64, scratch_operands = 0 : i64, tpu.core_type = #tpu.core_type<tc>} {
    %cst = arith.constant 0.000000e+00 : f32
    %0 = vector.broadcast %cst : f32 to vector<8x128xf32>
    %c0 = arith.constant 0 : index
    %c0_0 = arith.constant 0 : index
    %1 = vector.load %arg0[%c0, %c0_0] : memref<14x25xf32, #tpu.memory_space<vmem>>, vector<8x25xf32>
    %c0_1 = arith.constant 0 : index
    %c0_2 = arith.constant 0 : index
    %2 = vector.load %arg2[%c0_1, %c0_2] : memref<8x13xf32, #tpu.memory_space<vmem>>, vector<8x1xf32>
    %3 = vector.broadcast %2 : vector<8x1xf32> to vector<8x25xf32>
    %4 = arith.mulf %1, %3 : vector<8x25xf32>
    %5 = arith.truncf %4 : vector<8x25xf32> to vector<8x25xbf16>
    %c0_3 = arith.constant 0 : index
    %c0_4 = arith.constant 0 : index
    %c0_5 = arith.constant 0 : index
    %6 = vector.load %arg1[%c0_3, %c0_4, %c0_5] : memref<13x25x128xbf16, #tpu.memory_space<vmem>>, vector<1x25x128xbf16>
    %7 = vector.shape_cast %6 : vector<1x25x128xbf16> to vector<25x128xbf16>
    %cst_6 = arith.constant dense<0.000000e+00> : vector<8x128xf32>
    %8 = tpu.matmul %5, %7, %cst_6 {dimension_numbers = #tpu.dot_dimension_numbers<[1], [0], [0], [1], [0, 0, 1, 1], [], []>} : vector<8x25xbf16>, vector<25x128xbf16>, vector<8x128xf32> -> vector<8x128xf32>
    %9 = arith.addf %0, %8 : vector<8x128xf32>
    %c1 = arith.constant 1 : index
    %c0_7 = arith.constant 0 : index
    %10 = vector.load %arg0[%c1, %c0_7] : memref<14x25xf32, #tpu.memory_space<vmem>>, vector<8x25xf32>
    %c0_8 = arith.constant 0 : index
    %c1_9 = arith.constant 1 : index
    %11 = vector.load %arg2[%c0_8, %c1_9] : memref<8x13xf32, #tpu.memory_space<vmem>>, vector<8x1xf32>
    %12 = vector.broadcast %11 : vector<8x1xf32> to vector<8x25xf32>
    %13 = arith.mulf %10, %12 : vector<8x25xf32>
    %14 = arith.truncf %13 : vector<8x25xf32> to vector<8x25xbf16>
    %c1_10 = arith.constant 1 : index
    %c0_11 = arith.constant 0 : index
    %c0_12 = arith.constant 0 : index
    %15 = vector.load %arg1[%c1_10, %c0_11, %c0_12] : memref<13x25x128xbf16, #tpu.memory_space<vmem>>, vector<1x25x128xbf16>
    %16 = vector.shape_cast %15 : vector<1x25x128xbf16> to vector<25x128xbf16>
    %cst_13 = arith.constant dense<0.000000e+00> : vector<8x128xf32>
    %17 = tpu.matmul %14, %16, %cst_13 {dimension_numbers = #tpu.dot_dimension_numbers<[1], [0], [0], [1], [0, 0, 1, 1], [], []>} : vector<8x25xbf16>, vector<25x128xbf16>, vector<8x128xf32> -> vector<8x128xf32>
    %18 = arith.addf %9, %17 : vector<8x128xf32>
    %c2 = arith.constant 2 : index
    %c0_14 = arith.constant 0 : index
    %19 = vector.load %arg0[%c2, %c0_14] : memref<14x25xf32, #tpu.memory_space<vmem>>, vector<8x25xf32>
    %c0_15 = arith.constant 0 : index
    %c2_16 = arith.constant 2 : index
    %20 = vector.load %arg2[%c0_15, %c2_16] : memref<8x13xf32, #tpu.memory_space<vmem>>, vector<8x1xf32>
    %21 = vector.broadcast %20 : vector<8x1xf32> to vector<8x25xf32>
    %22 = arith.mulf %19, %21 : vector<8x25xf32>
    %23 = arith.truncf %22 : vector<8x25xf32> to vector<8x25xbf16>
    %c2_17 = arith.constant 2 : index
    %c0_18 = arith.constant 0 : index
    %c0_19 = arith.constant 0 : index
    %24 = vector.load %arg1[%c2_17, %c0_18, %c0_19] : memref<13x25x128xbf16, #tpu.memory_space<vmem>>, vector<1x25x128xbf16>
    %25 = vector.shape_cast %24 : vector<1x25x128xbf16> to vector<25x128xbf16>
    %cst_20 = arith.constant dense<0.000000e+00> : vector<8x128xf32>
    %26 = tpu.matmul %23, %25, %cst_20 {dimension_numbers = #tpu.dot_dimension_numbers<[1], [0], [0], [1], [0, 0, 1, 1], [], []>} : vector<8x25xbf16>, vector<25x128xbf16>, vector<8x128xf32> -> vector<8x128xf32>
    %27 = arith.addf %18, %26 : vector<8x128xf32>
    %c2_21 = arith.constant 2 : index
    %c0_22 = arith.constant 0 : index
    %28 = vector.load %arg0[%c2_21, %c0_22] : memref<14x25xf32, #tpu.memory_space<vmem>>, vector<8x25xf32>
    %c0_23 = arith.constant 0 : index
    %c3 = arith.constant 3 : index
    %29 = vector.load %arg2[%c0_23, %c3] : memref<8x13xf32, #tpu.memory_space<vmem>>, vector<8x1xf32>
    %30 = vector.broadcast %29 : vector<8x1xf32> to vector<8x25xf32>
    %31 = arith.mulf %28, %30 : vector<8x25xf32>
    %32 = arith.truncf %31 : vector<8x25xf32> to vector<8x25xbf16>
    %c3_24 = arith.constant 3 : index
    %c0_25 = arith.constant 0 : index
    %c0_26 = arith.constant 0 : index
    %33 = vector.load %arg1[%c3_24, %c0_25, %c0_26] : memref<13x25x128xbf16, #tpu.memory_space<vmem>>, vector<1x25x128xbf16>
    %34 = vector.shape_cast %33 : vector<1x25x128xbf16> to vector<25x128xbf16>
    %cst_27 = arith.constant dense<0.000000e+00> : vector<8x128xf32>
    %35 = tpu.matmul %32, %34, %cst_27 {dimension_numbers = #tpu.dot_dimension_numbers<[1], [0], [0], [1], [0, 0, 1, 1], [], []>} : vector<8x25xbf16>, vector<25x128xbf16>, vector<8x128xf32> -> vector<8x128xf32>
    %36 = arith.addf %27, %35 : vector<8x128xf32>
    %c3_28 = arith.constant 3 : index
    %c0_29 = arith.constant 0 : index
    %37 = vector.load %arg0[%c3_28, %c0_29] : memref<14x25xf32, #tpu.memory_space<vmem>>, vector<8x25xf32>
    %c0_30 = arith.constant 0 : index
    %c4 = arith.constant 4 : index
    %38 = vector.load %arg2[%c0_30, %c4] : memref<8x13xf32, #tpu.memory_space<vmem>>, vector<8x1xf32>
    %39 = vector.broadcast %38 : vector<8x1xf32> to vector<8x25xf32>
    %40 = arith.mulf %37, %39 : vector<8x25xf32>
    %41 = arith.truncf %40 : vector<8x25xf32> to vector<8x25xbf16>
    %c4_31 = arith.constant 4 : index
    %c0_32 = arith.constant 0 : index
    %c0_33 = arith.constant 0 : index
    %42 = vector.load %arg1[%c4_31, %c0_32, %c0_33] : memref<13x25x128xbf16, #tpu.memory_space<vmem>>, vector<1x25x128xbf16>
    %43 = vector.shape_cast %42 : vector<1x25x128xbf16> to vector<25x128xbf16>
    %cst_34 = arith.constant dense<0.000000e+00> : vector<8x128xf32>
    %44 = tpu.matmul %41, %43, %cst_34 {dimension_numbers = #tpu.dot_dimension_numbers<[1], [0], [0], [1], [0, 0, 1, 1], [], []>} : vector<8x25xbf16>, vector<25x128xbf16>, vector<8x128xf32> -> vector<8x128xf32>
    %45 = arith.addf %36, %44 : vector<8x128xf32>
    %c4_35 = arith.constant 4 : index
    %c0_36 = arith.constant 0 : index
    %46 = vector.load %arg0[%c4_35, %c0_36] : memref<14x25xf32, #tpu.memory_space<vmem>>, vector<8x25xf32>
    %c0_37 = arith.constant 0 : index
    %c5 = arith.constant 5 : index
    %47 = vector.load %arg2[%c0_37, %c5] : memref<8x13xf32, #tpu.memory_space<vmem>>, vector<8x1xf32>
    %48 = vector.broadcast %47 : vector<8x1xf32> to vector<8x25xf32>
    %49 = arith.mulf %46, %48 : vector<8x25xf32>
    %50 = arith.truncf %49 : vector<8x25xf32> to vector<8x25xbf16>
    %c5_38 = arith.constant 5 : index
    %c0_39 = arith.constant 0 : index
    %c0_40 = arith.constant 0 : index
    %51 = vector.load %arg1[%c5_38, %c0_39, %c0_40] : memref<13x25x128xbf16, #tpu.memory_space<vmem>>, vector<1x25x128xbf16>
    %52 = vector.shape_cast %51 : vector<1x25x128xbf16> to vector<25x128xbf16>
    %cst_41 = arith.constant dense<0.000000e+00> : vector<8x128xf32>
    %53 = tpu.matmul %50, %52, %cst_41 {dimension_numbers = #tpu.dot_dimension_numbers<[1], [0], [0], [1], [0, 0, 1, 1], [], []>} : vector<8x25xbf16>, vector<25x128xbf16>, vector<8x128xf32> -> vector<8x128xf32>
    %54 = arith.addf %45, %53 : vector<8x128xf32>
    %c4_42 = arith.constant 4 : index
    %c0_43 = arith.constant 0 : index
    %55 = vector.load %arg0[%c4_42, %c0_43] : memref<14x25xf32, #tpu.memory_space<vmem>>, vector<8x25xf32>
    %c0_44 = arith.constant 0 : index
    %c6 = arith.constant 6 : index
    %56 = vector.load %arg2[%c0_44, %c6] : memref<8x13xf32, #tpu.memory_space<vmem>>, vector<8x1xf32>
    %57 = vector.broadcast %56 : vector<8x1xf32> to vector<8x25xf32>
    %58 = arith.mulf %55, %57 : vector<8x25xf32>
    %59 = arith.truncf %58 : vector<8x25xf32> to vector<8x25xbf16>
    %c6_45 = arith.constant 6 : index
    %c0_46 = arith.constant 0 : index
    %c0_47 = arith.constant 0 : index
    %60 = vector.load %arg1[%c6_45, %c0_46, %c0_47] : memref<13x25x128xbf16, #tpu.memory_space<vmem>>, vector<1x25x128xbf16>
    %61 = vector.shape_cast %60 : vector<1x25x128xbf16> to vector<25x128xbf16>
    %cst_48 = arith.constant dense<0.000000e+00> : vector<8x128xf32>
    %62 = tpu.matmul %59, %61, %cst_48 {dimension_numbers = #tpu.dot_dimension_numbers<[1], [0], [0], [1], [0, 0, 1, 1], [], []>} : vector<8x25xbf16>, vector<25x128xbf16>, vector<8x128xf32> -> vector<8x128xf32>
    %63 = arith.addf %54, %62 : vector<8x128xf32>
    %c5_49 = arith.constant 5 : index
    %c0_50 = arith.constant 0 : index
    %64 = vector.load %arg0[%c5_49, %c0_50] : memref<14x25xf32, #tpu.memory_space<vmem>>, vector<8x25xf32>
    %c0_51 = arith.constant 0 : index
    %c7 = arith.constant 7 : index
    %65 = vector.load %arg2[%c0_51, %c7] : memref<8x13xf32, #tpu.memory_space<vmem>>, vector<8x1xf32>
    %66 = vector.broadcast %65 : vector<8x1xf32> to vector<8x25xf32>
    %67 = arith.mulf %64, %66 : vector<8x25xf32>
    %68 = arith.truncf %67 : vector<8x25xf32> to vector<8x25xbf16>
    %c7_52 = arith.constant 7 : index
    %c0_53 = arith.constant 0 : index
    %c0_54 = arith.constant 0 : index
    %69 = vector.load %arg1[%c7_52, %c0_53, %c0_54] : memref<13x25x128xbf16, #tpu.memory_space<vmem>>, vector<1x25x128xbf16>
    %70 = vector.shape_cast %69 : vector<1x25x128xbf16> to vector<25x128xbf16>
    %cst_55 = arith.constant dense<0.000000e+00> : vector<8x128xf32>
    %71 = tpu.matmul %68, %70, %cst_55 {dimension_numbers = #tpu.dot_dimension_numbers<[1], [0], [0], [1], [0, 0, 1, 1], [], []>} : vector<8x25xbf16>, vector<25x128xbf16>, vector<8x128xf32> -> vector<8x128xf32>
    %72 = arith.addf %63, %71 : vector<8x128xf32>
    %c6_56 = arith.constant 6 : index
    %c0_57 = arith.constant 0 : index
    %73 = vector.load %arg0[%c6_56, %c0_57] : memref<14x25xf32, #tpu.memory_space<vmem>>, vector<8x25xf32>
    %c0_58 = arith.constant 0 : index
    %c8 = arith.constant 8 : index
    %74 = vector.load %arg2[%c0_58, %c8] : memref<8x13xf32, #tpu.memory_space<vmem>>, vector<8x1xf32>
    %75 = vector.broadcast %74 : vector<8x1xf32> to vector<8x25xf32>
    %76 = arith.mulf %73, %75 : vector<8x25xf32>
    %77 = arith.truncf %76 : vector<8x25xf32> to vector<8x25xbf16>
    %c8_59 = arith.constant 8 : index
    %c0_60 = arith.constant 0 : index
    %c0_61 = arith.constant 0 : index
    %78 = vector.load %arg1[%c8_59, %c0_60, %c0_61] : memref<13x25x128xbf16, #tpu.memory_space<vmem>>, vector<1x25x128xbf16>
    %79 = vector.shape_cast %78 : vector<1x25x128xbf16> to vector<25x128xbf16>
    %cst_62 = arith.constant dense<0.000000e+00> : vector<8x128xf32>
    %80 = tpu.matmul %77, %79, %cst_62 {dimension_numbers = #tpu.dot_dimension_numbers<[1], [0], [0], [1], [0, 0, 1, 1], [], []>} : vector<8x25xbf16>, vector<25x128xbf16>, vector<8x128xf32> -> vector<8x128xf32>
    %81 = arith.addf %72, %80 : vector<8x128xf32>
    %c3_63 = arith.constant 3 : index
    %c0_64 = arith.constant 0 : index
    %82 = vector.load %arg0[%c3_63, %c0_64] : memref<14x25xf32, #tpu.memory_space<vmem>>, vector<8x25xf32>
    %c0_65 = arith.constant 0 : index
    %c9 = arith.constant 9 : index
    %83 = vector.load %arg2[%c0_65, %c9] : memref<8x13xf32, #tpu.memory_space<vmem>>, vector<8x1xf32>
    %84 = vector.broadcast %83 : vector<8x1xf32> to vector<8x25xf32>
    %85 = arith.mulf %82, %84 : vector<8x25xf32>
    %86 = arith.truncf %85 : vector<8x25xf32> to vector<8x25xbf16>
    %c9_66 = arith.constant 9 : index
    %c0_67 = arith.constant 0 : index
    %c0_68 = arith.constant 0 : index
    %87 = vector.load %arg1[%c9_66, %c0_67, %c0_68] : memref<13x25x128xbf16, #tpu.memory_space<vmem>>, vector<1x25x128xbf16>
    %88 = vector.shape_cast %87 : vector<1x25x128xbf16> to vector<25x128xbf16>
    %cst_69 = arith.constant dense<0.000000e+00> : vector<8x128xf32>
    %89 = tpu.matmul %86, %88, %cst_69 {dimension_numbers = #tpu.dot_dimension_numbers<[1], [0], [0], [1], [0, 0, 1, 1], [], []>} : vector<8x25xbf16>, vector<25x128xbf16>, vector<8x128xf32> -> vector<8x128xf32>
    %90 = arith.addf %81, %89 : vector<8x128xf32>
    %c3_70 = arith.constant 3 : index
    %c0_71 = arith.constant 0 : index
    %91 = vector.load %arg0[%c3_70, %c0_71] : memref<14x25xf32, #tpu.memory_space<vmem>>, vector<8x25xf32>
    %c0_72 = arith.constant 0 : index
    %c10 = arith.constant 10 : index
    %92 = vector.load %arg2[%c0_72, %c10] : memref<8x13xf32, #tpu.memory_space<vmem>>, vector<8x1xf32>
    %93 = vector.broadcast %92 : vector<8x1xf32> to vector<8x25xf32>
    %94 = arith.mulf %91, %93 : vector<8x25xf32>
    %95 = arith.truncf %94 : vector<8x25xf32> to vector<8x25xbf16>
    %c10_73 = arith.constant 10 : index
    %c0_74 = arith.constant 0 : index
    %c0_75 = arith.constant 0 : index
    %96 = vector.load %arg1[%c10_73, %c0_74, %c0_75] : memref<13x25x128xbf16, #tpu.memory_space<vmem>>, vector<1x25x128xbf16>
    %97 = vector.shape_cast %96 : vector<1x25x128xbf16> to vector<25x128xbf16>
    %cst_76 = arith.constant dense<0.000000e+00> : vector<8x128xf32>
    %98 = tpu.matmul %95, %97, %cst_76 {dimension_numbers = #tpu.dot_dimension_numbers<[1], [0], [0], [1], [0, 0, 1, 1], [], []>} : vector<8x25xbf16>, vector<25x128xbf16>, vector<8x128xf32> -> vector<8x128xf32>
    %99 = arith.addf %90, %98 : vector<8x128xf32>
    %c3_77 = arith.constant 3 : index
    %c0_78 = arith.constant 0 : index
    %100 = vector.load %arg0[%c3_77, %c0_78] : memref<14x25xf32, #tpu.memory_space<vmem>>, vector<8x25xf32>
    %c0_79 = arith.constant 0 : index
    %c11 = arith.constant 11 : index
    %101 = vector.load %arg2[%c0_79, %c11] : memref<8x13xf32, #tpu.memory_space<vmem>>, vector<8x1xf32>
    %102 = vector.broadcast %101 : vector<8x1xf32> to vector<8x25xf32>
    %103 = arith.mulf %100, %102 : vector<8x25xf32>
    %104 = arith.truncf %103 : vector<8x25xf32> to vector<8x25xbf16>
    %c11_80 = arith.constant 11 : index
    %c0_81 = arith.constant 0 : index
    %c0_82 = arith.constant 0 : index
    %105 = vector.load %arg1[%c11_80, %c0_81, %c0_82] : memref<13x25x128xbf16, #tpu.memory_space<vmem>>, vector<1x25x128xbf16>
    %106 = vector.shape_cast %105 : vector<1x25x128xbf16> to vector<25x128xbf16>
    %cst_83 = arith.constant dense<0.000000e+00> : vector<8x128xf32>
    %107 = tpu.matmul %104, %106, %cst_83 {dimension_numbers = #tpu.dot_dimension_numbers<[1], [0], [0], [1], [0, 0, 1, 1], [], []>} : vector<8x25xbf16>, vector<25x128xbf16>, vector<8x128xf32> -> vector<8x128xf32>
    %108 = arith.addf %99, %107 : vector<8x128xf32>
    %c3_84 = arith.constant 3 : index
    %c0_85 = arith.constant 0 : index
    %109 = vector.load %arg0[%c3_84, %c0_85] : memref<14x25xf32, #tpu.memory_space<vmem>>, vector<8x25xf32>
    %c0_86 = arith.constant 0 : index
    %c12 = arith.constant 12 : index
    %110 = vector.load %arg2[%c0_86, %c12] : memref<8x13xf32, #tpu.memory_space<vmem>>, vector<8x1xf32>
    %111 = vector.broadcast %110 : vector<8x1xf32> to vector<8x25xf32>
    %112 = arith.mulf %109, %111 : vector<8x25xf32>
    %113 = arith.truncf %112 : vector<8x25xf32> to vector<8x25xbf16>
    %c12_87 = arith.constant 12 : index
    %c0_88 = arith.constant 0 : index
    %c0_89 = arith.constant 0 : index
    %114 = vector.load %arg1[%c12_87, %c0_88, %c0_89] : memref<13x25x128xbf16, #tpu.memory_space<vmem>>, vector<1x25x128xbf16>
    %115 = vector.shape_cast %114 : vector<1x25x128xbf16> to vector<25x128xbf16>
    %cst_90 = arith.constant dense<0.000000e+00> : vector<8x128xf32>
    %116 = tpu.matmul %113, %115, %cst_90 {dimension_numbers = #tpu.dot_dimension_numbers<[1], [0], [0], [1], [0, 0, 1, 1], [], []>} : vector<8x25xbf16>, vector<25x128xbf16>, vector<8x128xf32> -> vector<8x128xf32>
    %117 = arith.addf %108, %116 : vector<8x128xf32>
    %c0_91 = arith.constant 0 : index
    %c0_92 = arith.constant 0 : index
    %118 = vector.load %arg3[%c0_91, %c0_92] : memref<1x128xf32, #tpu.memory_space<vmem>>, vector<1x128xf32>
    %c0_93 = arith.constant 0 : index
    %c0_94 = arith.constant 0 : index
    %119 = vector.load %arg4[%c0_93, %c0_94] : memref<1x128xf32, #tpu.memory_space<vmem>>, vector<1x128xf32>
    %c0_95 = arith.constant 0 : index
    %c0_96 = arith.constant 0 : index
    %120 = vector.load %arg5[%c0_95, %c0_96] : memref<1x128xf32, #tpu.memory_space<vmem>>, vector<1x128xf32>
    %cst_97 = arith.constant dense<0.000000e+00> : vector<128xf32>
    %121 = vector.multi_reduction <add>, %117, %cst_97 [0] : vector<8x128xf32> to vector<128xf32>
    %122 = vector.shape_cast %121 : vector<128xf32> to vector<1x128xf32>
    %cst_98 = arith.constant 8.000000e+00 : f32
    %123 = vector.broadcast %cst_98 : f32 to vector<1x128xf32>
    %124 = arith.divf %122, %123 : vector<1x128xf32>
    %125 = vector.broadcast %124 : vector<1x128xf32> to vector<8x128xf32>
    %126 = arith.subf %117, %125 : vector<8x128xf32>
    %127 = arith.mulf %126, %126 : vector<8x128xf32>
    %cst_99 = arith.constant dense<0.000000e+00> : vector<128xf32>
    %128 = vector.multi_reduction <add>, %127, %cst_99 [0] : vector<8x128xf32> to vector<128xf32>
    %129 = vector.shape_cast %128 : vector<128xf32> to vector<1x128xf32>
    %cst_100 = arith.constant 8.000000e+00 : f32
    %130 = vector.broadcast %cst_100 : f32 to vector<1x128xf32>
    %131 = arith.divf %129, %130 : vector<1x128xf32>
    %132 = vector.broadcast %124 : vector<1x128xf32> to vector<8x128xf32>
    %133 = arith.subf %117, %132 : vector<8x128xf32>
    %cst_101 = arith.constant 9.99999974E-6 : f32
    %134 = vector.broadcast %cst_101 : f32 to vector<1x128xf32>
    %135 = arith.addf %131, %134 : vector<1x128xf32>
    %136 = math.rsqrt %135 : vector<1x128xf32>
    %137 = vector.broadcast %136 : vector<1x128xf32> to vector<8x128xf32>
    %138 = arith.mulf %133, %137 : vector<8x128xf32>
    %139 = vector.broadcast %118 : vector<1x128xf32> to vector<8x128xf32>
    %140 = arith.mulf %138, %139 : vector<8x128xf32>
    %141 = vector.broadcast %119 : vector<1x128xf32> to vector<8x128xf32>
    %142 = arith.addf %140, %141 : vector<8x128xf32>
    %cst_102 = arith.constant 0.000000e+00 : f32
    %143 = vector.broadcast %cst_102 : f32 to vector<8x128xf32>
    %144 = arith.cmpf ogt, %142, %143 : vector<8x128xf32>
    %145 = vector.broadcast %120 : vector<1x128xf32> to vector<8x128xf32>
    %146 = arith.mulf %145, %142 : vector<8x128xf32>
    %147 = arith.select %144, %142, %146 : vector<8x128xi1>, vector<8x128xf32>
    %c0_103 = arith.constant 0 : index
    %c0_104 = arith.constant 0 : index
    %148 = vector.load %arg6[%c0_103, %c0_104] : memref<8x128xf32, #tpu.memory_space<vmem>>, vector<8x128xf32>
    tpu.vector_store %arg6[%c0_103, %c0_104], %147 {strides = array<i32>} : memref<8x128xf32, #tpu.memory_space<vmem>>, vector<8x128xf32>,
    return
  }
}

module attributes {stable_mosaic.version = 11 : i64} {
  func.func @_mm_bn_prelu_kernel(%arg0: memref<8x128xbf16, #tpu.memory_space<vmem>>, %arg1: memref<128x25xbf16, #tpu.memory_space<vmem>>, %arg2: memref<1x25xf32, #tpu.memory_space<vmem>>, %arg3: memref<1x25xf32, #tpu.memory_space<vmem>>, %arg4: memref<1x25xf32, #tpu.memory_space<vmem>>, %arg5: memref<8x25xf32, #tpu.memory_space<vmem>>) attributes {dimension_semantics = [], scalar_prefetch = 0 : i64, scratch_operands = 0 : i64, tpu.core_type = #tpu.core_type<tc>} {
    %c0 = arith.constant 0 : index
    %c0_0 = arith.constant 0 : index
    %0 = vector.load %arg0[%c0, %c0_0] : memref<8x128xbf16, #tpu.memory_space<vmem>>, vector<8x128xbf16>
    %c0_1 = arith.constant 0 : index
    %c0_2 = arith.constant 0 : index
    %1 = vector.load %arg1[%c0_1, %c0_2] : memref<128x25xbf16, #tpu.memory_space<vmem>>, vector<128x25xbf16>
    %cst = arith.constant dense<0.000000e+00> : vector<8x25xf32>
    %2 = tpu.matmul %0, %1, %cst {dimension_numbers = #tpu.dot_dimension_numbers<[1], [0], [0], [1], [0, 0, 1, 1], [], []>} : vector<8x128xbf16>, vector<128x25xbf16>, vector<8x25xf32> -> vector<8x25xf32>
    %c0_3 = arith.constant 0 : index
    %c0_4 = arith.constant 0 : index
    %3 = vector.load %arg2[%c0_3, %c0_4] : memref<1x25xf32, #tpu.memory_space<vmem>>, vector<1x25xf32>
    %c0_5 = arith.constant 0 : index
    %c0_6 = arith.constant 0 : index
    %4 = vector.load %arg3[%c0_5, %c0_6] : memref<1x25xf32, #tpu.memory_space<vmem>>, vector<1x25xf32>
    %c0_7 = arith.constant 0 : index
    %c0_8 = arith.constant 0 : index
    %5 = vector.load %arg4[%c0_7, %c0_8] : memref<1x25xf32, #tpu.memory_space<vmem>>, vector<1x25xf32>
    %cst_9 = arith.constant dense<0.000000e+00> : vector<25xf32>
    %6 = vector.multi_reduction <add>, %2, %cst_9 [0] : vector<8x25xf32> to vector<25xf32>
    %7 = vector.shape_cast %6 : vector<25xf32> to vector<1x25xf32>
    %cst_10 = arith.constant 8.000000e+00 : f32
    %8 = vector.broadcast %cst_10 : f32 to vector<1x25xf32>
    %9 = arith.divf %7, %8 : vector<1x25xf32>
    %10 = vector.broadcast %9 : vector<1x25xf32> to vector<8x25xf32>
    %11 = arith.subf %2, %10 : vector<8x25xf32>
    %12 = arith.mulf %11, %11 : vector<8x25xf32>
    %cst_11 = arith.constant dense<0.000000e+00> : vector<25xf32>
    %13 = vector.multi_reduction <add>, %12, %cst_11 [0] : vector<8x25xf32> to vector<25xf32>
    %14 = vector.shape_cast %13 : vector<25xf32> to vector<1x25xf32>
    %cst_12 = arith.constant 8.000000e+00 : f32
    %15 = vector.broadcast %cst_12 : f32 to vector<1x25xf32>
    %16 = arith.divf %14, %15 : vector<1x25xf32>
    %17 = vector.broadcast %9 : vector<1x25xf32> to vector<8x25xf32>
    %18 = arith.subf %2, %17 : vector<8x25xf32>
    %cst_13 = arith.constant 9.99999974E-6 : f32
    %19 = vector.broadcast %cst_13 : f32 to vector<1x25xf32>
    %20 = arith.addf %16, %19 : vector<1x25xf32>
    %21 = math.rsqrt %20 : vector<1x25xf32>
    %22 = vector.broadcast %21 : vector<1x25xf32> to vector<8x25xf32>
    %23 = arith.mulf %18, %22 : vector<8x25xf32>
    %24 = vector.broadcast %3 : vector<1x25xf32> to vector<8x25xf32>
    %25 = arith.mulf %23, %24 : vector<8x25xf32>
    %26 = vector.broadcast %4 : vector<1x25xf32> to vector<8x25xf32>
    %27 = arith.addf %25, %26 : vector<8x25xf32>
    %cst_14 = arith.constant 0.000000e+00 : f32
    %28 = vector.broadcast %cst_14 : f32 to vector<8x25xf32>
    %29 = arith.cmpf ogt, %27, %28 : vector<8x25xf32>
    %30 = vector.broadcast %5 : vector<1x25xf32> to vector<8x25xf32>
    %31 = arith.mulf %30, %27 : vector<8x25xf32>
    %32 = arith.select %29, %27, %31 : vector<8x25xi1>, vector<8x25xf32>
    %c0_15 = arith.constant 0 : index
    %c0_16 = arith.constant 0 : index
    %33 = vector.load %arg5[%c0_15, %c0_16] : memref<8x25xf32, #tpu.memory_space<vmem>>, vector<8x25xf32>
    tpu.vector_store %arg5[%c0_15, %c0_16], %32 {strides = array<i32>} : memref<8x25xf32, #tpu.memory_space<vmem>>, vector<8x25xf32>,
    return
  }
}

module attributes {stable_mosaic.version = 11 : i64} {
  func.func @_dual_matmul_kernel(%arg0: memref<8x128xbf16, #tpu.memory_space<vmem>>, %arg1: memref<128x5xbf16, #tpu.memory_space<vmem>>, %arg2: memref<8x128xbf16, #tpu.memory_space<vmem>>, %arg3: memref<128x5xbf16, #tpu.memory_space<vmem>>, %arg4: memref<8x5xf32, #tpu.memory_space<vmem>>) attributes {dimension_semantics = [], scalar_prefetch = 0 : i64, scratch_operands = 0 : i64, tpu.core_type = #tpu.core_type<tc>} {
    %c0 = arith.constant 0 : index
    %c0_0 = arith.constant 0 : index
    %0 = vector.load %arg0[%c0, %c0_0] : memref<8x128xbf16, #tpu.memory_space<vmem>>, vector<8x128xbf16>
    %c0_1 = arith.constant 0 : index
    %c0_2 = arith.constant 0 : index
    %1 = vector.load %arg1[%c0_1, %c0_2] : memref<128x5xbf16, #tpu.memory_space<vmem>>, vector<128x5xbf16>
    %cst = arith.constant dense<0.000000e+00> : vector<8x5xf32>
    %2 = tpu.matmul %0, %1, %cst {dimension_numbers = #tpu.dot_dimension_numbers<[1], [0], [0], [1], [0, 0, 1, 1], [], []>} : vector<8x128xbf16>, vector<128x5xbf16>, vector<8x5xf32> -> vector<8x5xf32>
    %c0_3 = arith.constant 0 : index
    %c0_4 = arith.constant 0 : index
    %3 = vector.load %arg2[%c0_3, %c0_4] : memref<8x128xbf16, #tpu.memory_space<vmem>>, vector<8x128xbf16>
    %c0_5 = arith.constant 0 : index
    %c0_6 = arith.constant 0 : index
    %4 = vector.load %arg3[%c0_5, %c0_6] : memref<128x5xbf16, #tpu.memory_space<vmem>>, vector<128x5xbf16>
    %cst_7 = arith.constant dense<0.000000e+00> : vector<8x5xf32>
    %5 = tpu.matmul %3, %4, %cst_7 {dimension_numbers = #tpu.dot_dimension_numbers<[1], [0], [0], [1], [0, 0, 1, 1], [], []>} : vector<8x128xbf16>, vector<128x5xbf16>, vector<8x5xf32> -> vector<8x5xf32>
    %6 = arith.addf %2, %5 : vector<8x5xf32>
    %c0_8 = arith.constant 0 : index
    %c0_9 = arith.constant 0 : index
    %7 = vector.load %arg4[%c0_8, %c0_9] : memref<8x5xf32, #tpu.memory_space<vmem>>, vector<8x5xf32>
    tpu.vector_store %arg4[%c0_8, %c0_9], %6 {strides = array<i32>} : memref<8x5xf32, #tpu.memory_space<vmem>>, vector<8x5xf32>,
    return
  }
}

module attributes {stable_mosaic.version = 11 : i64} {
  func.func @kernel(%arg0: memref<14x25xf32, #tpu.memory_space<vmem>>, %arg1: memref<13x25x128xbf16, #tpu.memory_space<vmem>>, %arg2: memref<8x13xf32, #tpu.memory_space<vmem>>, %arg3: memref<8x128xf32, #tpu.memory_space<vmem>>, %arg4: memref<1x128xf32, #tpu.memory_space<vmem>>, %arg5: memref<1x128xf32, #tpu.memory_space<vmem>>, %arg6: memref<1x128xf32, #tpu.memory_space<vmem>>, %arg7: memref<8x128xf32, #tpu.memory_space<vmem>>) attributes {dimension_semantics = [], scalar_prefetch = 0 : i64, scratch_operands = 0 : i64, tpu.core_type = #tpu.core_type<tc>} {
    %cst = arith.constant 0.000000e+00 : f32
    %0 = vector.broadcast %cst : f32 to vector<8x128xf32>
    %c0 = arith.constant 0 : index
    %c0_0 = arith.constant 0 : index
    %1 = vector.load %arg0[%c0, %c0_0] : memref<14x25xf32, #tpu.memory_space<vmem>>, vector<8x25xf32>
    %c0_1 = arith.constant 0 : index
    %c0_2 = arith.constant 0 : index
    %2 = vector.load %arg2[%c0_1, %c0_2] : memref<8x13xf32, #tpu.memory_space<vmem>>, vector<8x1xf32>
    %3 = vector.broadcast %2 : vector<8x1xf32> to vector<8x25xf32>
    %4 = arith.mulf %1, %3 : vector<8x25xf32>
    %5 = arith.truncf %4 : vector<8x25xf32> to vector<8x25xbf16>
    %c0_3 = arith.constant 0 : index
    %c0_4 = arith.constant 0 : index
    %c0_5 = arith.constant 0 : index
    %6 = vector.load %arg1[%c0_3, %c0_4, %c0_5] : memref<13x25x128xbf16, #tpu.memory_space<vmem>>, vector<1x25x128xbf16>
    %7 = vector.shape_cast %6 : vector<1x25x128xbf16> to vector<25x128xbf16>
    %cst_6 = arith.constant dense<0.000000e+00> : vector<8x128xf32>
    %8 = tpu.matmul %5, %7, %cst_6 {dimension_numbers = #tpu.dot_dimension_numbers<[1], [0], [0], [1], [0, 0, 1, 1], [], []>} : vector<8x25xbf16>, vector<25x128xbf16>, vector<8x128xf32> -> vector<8x128xf32>
    %9 = arith.addf %0, %8 : vector<8x128xf32>
    %c1 = arith.constant 1 : index
    %c0_7 = arith.constant 0 : index
    %10 = vector.load %arg0[%c1, %c0_7] : memref<14x25xf32, #tpu.memory_space<vmem>>, vector<8x25xf32>
    %c0_8 = arith.constant 0 : index
    %c1_9 = arith.constant 1 : index
    %11 = vector.load %arg2[%c0_8, %c1_9] : memref<8x13xf32, #tpu.memory_space<vmem>>, vector<8x1xf32>
    %12 = vector.broadcast %11 : vector<8x1xf32> to vector<8x25xf32>
    %13 = arith.mulf %10, %12 : vector<8x25xf32>
    %14 = arith.truncf %13 : vector<8x25xf32> to vector<8x25xbf16>
    %c1_10 = arith.constant 1 : index
    %c0_11 = arith.constant 0 : index
    %c0_12 = arith.constant 0 : index
    %15 = vector.load %arg1[%c1_10, %c0_11, %c0_12] : memref<13x25x128xbf16, #tpu.memory_space<vmem>>, vector<1x25x128xbf16>
    %16 = vector.shape_cast %15 : vector<1x25x128xbf16> to vector<25x128xbf16>
    %cst_13 = arith.constant dense<0.000000e+00> : vector<8x128xf32>
    %17 = tpu.matmul %14, %16, %cst_13 {dimension_numbers = #tpu.dot_dimension_numbers<[1], [0], [0], [1], [0, 0, 1, 1], [], []>} : vector<8x25xbf16>, vector<25x128xbf16>, vector<8x128xf32> -> vector<8x128xf32>
    %18 = arith.addf %9, %17 : vector<8x128xf32>
    %c2 = arith.constant 2 : index
    %c0_14 = arith.constant 0 : index
    %19 = vector.load %arg0[%c2, %c0_14] : memref<14x25xf32, #tpu.memory_space<vmem>>, vector<8x25xf32>
    %c0_15 = arith.constant 0 : index
    %c2_16 = arith.constant 2 : index
    %20 = vector.load %arg2[%c0_15, %c2_16] : memref<8x13xf32, #tpu.memory_space<vmem>>, vector<8x1xf32>
    %21 = vector.broadcast %20 : vector<8x1xf32> to vector<8x25xf32>
    %22 = arith.mulf %19, %21 : vector<8x25xf32>
    %23 = arith.truncf %22 : vector<8x25xf32> to vector<8x25xbf16>
    %c2_17 = arith.constant 2 : index
    %c0_18 = arith.constant 0 : index
    %c0_19 = arith.constant 0 : index
    %24 = vector.load %arg1[%c2_17, %c0_18, %c0_19] : memref<13x25x128xbf16, #tpu.memory_space<vmem>>, vector<1x25x128xbf16>
    %25 = vector.shape_cast %24 : vector<1x25x128xbf16> to vector<25x128xbf16>
    %cst_20 = arith.constant dense<0.000000e+00> : vector<8x128xf32>
    %26 = tpu.matmul %23, %25, %cst_20 {dimension_numbers = #tpu.dot_dimension_numbers<[1], [0], [0], [1], [0, 0, 1, 1], [], []>} : vector<8x25xbf16>, vector<25x128xbf16>, vector<8x128xf32> -> vector<8x128xf32>
    %27 = arith.addf %18, %26 : vector<8x128xf32>
    %c2_21 = arith.constant 2 : index
    %c0_22 = arith.constant 0 : index
    %28 = vector.load %arg0[%c2_21, %c0_22] : memref<14x25xf32, #tpu.memory_space<vmem>>, vector<8x25xf32>
    %c0_23 = arith.constant 0 : index
    %c3 = arith.constant 3 : index
    %29 = vector.load %arg2[%c0_23, %c3] : memref<8x13xf32, #tpu.memory_space<vmem>>, vector<8x1xf32>
    %30 = vector.broadcast %29 : vector<8x1xf32> to vector<8x25xf32>
    %31 = arith.mulf %28, %30 : vector<8x25xf32>
    %32 = arith.truncf %31 : vector<8x25xf32> to vector<8x25xbf16>
    %c3_24 = arith.constant 3 : index
    %c0_25 = arith.constant 0 : index
    %c0_26 = arith.constant 0 : index
    %33 = vector.load %arg1[%c3_24, %c0_25, %c0_26] : memref<13x25x128xbf16, #tpu.memory_space<vmem>>, vector<1x25x128xbf16>
    %34 = vector.shape_cast %33 : vector<1x25x128xbf16> to vector<25x128xbf16>
    %cst_27 = arith.constant dense<0.000000e+00> : vector<8x128xf32>
    %35 = tpu.matmul %32, %34, %cst_27 {dimension_numbers = #tpu.dot_dimension_numbers<[1], [0], [0], [1], [0, 0, 1, 1], [], []>} : vector<8x25xbf16>, vector<25x128xbf16>, vector<8x128xf32> -> vector<8x128xf32>
    %36 = arith.addf %27, %35 : vector<8x128xf32>
    %c3_28 = arith.constant 3 : index
    %c0_29 = arith.constant 0 : index
    %37 = vector.load %arg0[%c3_28, %c0_29] : memref<14x25xf32, #tpu.memory_space<vmem>>, vector<8x25xf32>
    %c0_30 = arith.constant 0 : index
    %c4 = arith.constant 4 : index
    %38 = vector.load %arg2[%c0_30, %c4] : memref<8x13xf32, #tpu.memory_space<vmem>>, vector<8x1xf32>
    %39 = vector.broadcast %38 : vector<8x1xf32> to vector<8x25xf32>
    %40 = arith.mulf %37, %39 : vector<8x25xf32>
    %41 = arith.truncf %40 : vector<8x25xf32> to vector<8x25xbf16>
    %c4_31 = arith.constant 4 : index
    %c0_32 = arith.constant 0 : index
    %c0_33 = arith.constant 0 : index
    %42 = vector.load %arg1[%c4_31, %c0_32, %c0_33] : memref<13x25x128xbf16, #tpu.memory_space<vmem>>, vector<1x25x128xbf16>
    %43 = vector.shape_cast %42 : vector<1x25x128xbf16> to vector<25x128xbf16>
    %cst_34 = arith.constant dense<0.000000e+00> : vector<8x128xf32>
    %44 = tpu.matmul %41, %43, %cst_34 {dimension_numbers = #tpu.dot_dimension_numbers<[1], [0], [0], [1], [0, 0, 1, 1], [], []>} : vector<8x25xbf16>, vector<25x128xbf16>, vector<8x128xf32> -> vector<8x128xf32>
    %45 = arith.addf %36, %44 : vector<8x128xf32>
    %c4_35 = arith.constant 4 : index
    %c0_36 = arith.constant 0 : index
    %46 = vector.load %arg0[%c4_35, %c0_36] : memref<14x25xf32, #tpu.memory_space<vmem>>, vector<8x25xf32>
    %c0_37 = arith.constant 0 : index
    %c5 = arith.constant 5 : index
    %47 = vector.load %arg2[%c0_37, %c5] : memref<8x13xf32, #tpu.memory_space<vmem>>, vector<8x1xf32>
    %48 = vector.broadcast %47 : vector<8x1xf32> to vector<8x25xf32>
    %49 = arith.mulf %46, %48 : vector<8x25xf32>
    %50 = arith.truncf %49 : vector<8x25xf32> to vector<8x25xbf16>
    %c5_38 = arith.constant 5 : index
    %c0_39 = arith.constant 0 : index
    %c0_40 = arith.constant 0 : index
    %51 = vector.load %arg1[%c5_38, %c0_39, %c0_40] : memref<13x25x128xbf16, #tpu.memory_space<vmem>>, vector<1x25x128xbf16>
    %52 = vector.shape_cast %51 : vector<1x25x128xbf16> to vector<25x128xbf16>
    %cst_41 = arith.constant dense<0.000000e+00> : vector<8x128xf32>
    %53 = tpu.matmul %50, %52, %cst_41 {dimension_numbers = #tpu.dot_dimension_numbers<[1], [0], [0], [1], [0, 0, 1, 1], [], []>} : vector<8x25xbf16>, vector<25x128xbf16>, vector<8x128xf32> -> vector<8x128xf32>
    %54 = arith.addf %45, %53 : vector<8x128xf32>
    %c4_42 = arith.constant 4 : index
    %c0_43 = arith.constant 0 : index
    %55 = vector.load %arg0[%c4_42, %c0_43] : memref<14x25xf32, #tpu.memory_space<vmem>>, vector<8x25xf32>
    %c0_44 = arith.constant 0 : index
    %c6 = arith.constant 6 : index
    %56 = vector.load %arg2[%c0_44, %c6] : memref<8x13xf32, #tpu.memory_space<vmem>>, vector<8x1xf32>
    %57 = vector.broadcast %56 : vector<8x1xf32> to vector<8x25xf32>
    %58 = arith.mulf %55, %57 : vector<8x25xf32>
    %59 = arith.truncf %58 : vector<8x25xf32> to vector<8x25xbf16>
    %c6_45 = arith.constant 6 : index
    %c0_46 = arith.constant 0 : index
    %c0_47 = arith.constant 0 : index
    %60 = vector.load %arg1[%c6_45, %c0_46, %c0_47] : memref<13x25x128xbf16, #tpu.memory_space<vmem>>, vector<1x25x128xbf16>
    %61 = vector.shape_cast %60 : vector<1x25x128xbf16> to vector<25x128xbf16>
    %cst_48 = arith.constant dense<0.000000e+00> : vector<8x128xf32>
    %62 = tpu.matmul %59, %61, %cst_48 {dimension_numbers = #tpu.dot_dimension_numbers<[1], [0], [0], [1], [0, 0, 1, 1], [], []>} : vector<8x25xbf16>, vector<25x128xbf16>, vector<8x128xf32> -> vector<8x128xf32>
    %63 = arith.addf %54, %62 : vector<8x128xf32>
    %c5_49 = arith.constant 5 : index
    %c0_50 = arith.constant 0 : index
    %64 = vector.load %arg0[%c5_49, %c0_50] : memref<14x25xf32, #tpu.memory_space<vmem>>, vector<8x25xf32>
    %c0_51 = arith.constant 0 : index
    %c7 = arith.constant 7 : index
    %65 = vector.load %arg2[%c0_51, %c7] : memref<8x13xf32, #tpu.memory_space<vmem>>, vector<8x1xf32>
    %66 = vector.broadcast %65 : vector<8x1xf32> to vector<8x25xf32>
    %67 = arith.mulf %64, %66 : vector<8x25xf32>
    %68 = arith.truncf %67 : vector<8x25xf32> to vector<8x25xbf16>
    %c7_52 = arith.constant 7 : index
    %c0_53 = arith.constant 0 : index
    %c0_54 = arith.constant 0 : index
    %69 = vector.load %arg1[%c7_52, %c0_53, %c0_54] : memref<13x25x128xbf16, #tpu.memory_space<vmem>>, vector<1x25x128xbf16>
    %70 = vector.shape_cast %69 : vector<1x25x128xbf16> to vector<25x128xbf16>
    %cst_55 = arith.constant dense<0.000000e+00> : vector<8x128xf32>
    %71 = tpu.matmul %68, %70, %cst_55 {dimension_numbers = #tpu.dot_dimension_numbers<[1], [0], [0], [1], [0, 0, 1, 1], [], []>} : vector<8x25xbf16>, vector<25x128xbf16>, vector<8x128xf32> -> vector<8x128xf32>
    %72 = arith.addf %63, %71 : vector<8x128xf32>
    %c6_56 = arith.constant 6 : index
    %c0_57 = arith.constant 0 : index
    %73 = vector.load %arg0[%c6_56, %c0_57] : memref<14x25xf32, #tpu.memory_space<vmem>>, vector<8x25xf32>
    %c0_58 = arith.constant 0 : index
    %c8 = arith.constant 8 : index
    %74 = vector.load %arg2[%c0_58, %c8] : memref<8x13xf32, #tpu.memory_space<vmem>>, vector<8x1xf32>
    %75 = vector.broadcast %74 : vector<8x1xf32> to vector<8x25xf32>
    %76 = arith.mulf %73, %75 : vector<8x25xf32>
    %77 = arith.truncf %76 : vector<8x25xf32> to vector<8x25xbf16>
    %c8_59 = arith.constant 8 : index
    %c0_60 = arith.constant 0 : index
    %c0_61 = arith.constant 0 : index
    %78 = vector.load %arg1[%c8_59, %c0_60, %c0_61] : memref<13x25x128xbf16, #tpu.memory_space<vmem>>, vector<1x25x128xbf16>
    %79 = vector.shape_cast %78 : vector<1x25x128xbf16> to vector<25x128xbf16>
    %cst_62 = arith.constant dense<0.000000e+00> : vector<8x128xf32>
    %80 = tpu.matmul %77, %79, %cst_62 {dimension_numbers = #tpu.dot_dimension_numbers<[1], [0], [0], [1], [0, 0, 1, 1], [], []>} : vector<8x25xbf16>, vector<25x128xbf16>, vector<8x128xf32> -> vector<8x128xf32>
    %81 = arith.addf %72, %80 : vector<8x128xf32>
    %c3_63 = arith.constant 3 : index
    %c0_64 = arith.constant 0 : index
    %82 = vector.load %arg0[%c3_63, %c0_64] : memref<14x25xf32, #tpu.memory_space<vmem>>, vector<8x25xf32>
    %c0_65 = arith.constant 0 : index
    %c9 = arith.constant 9 : index
    %83 = vector.load %arg2[%c0_65, %c9] : memref<8x13xf32, #tpu.memory_space<vmem>>, vector<8x1xf32>
    %84 = vector.broadcast %83 : vector<8x1xf32> to vector<8x25xf32>
    %85 = arith.mulf %82, %84 : vector<8x25xf32>
    %86 = arith.truncf %85 : vector<8x25xf32> to vector<8x25xbf16>
    %c9_66 = arith.constant 9 : index
    %c0_67 = arith.constant 0 : index
    %c0_68 = arith.constant 0 : index
    %87 = vector.load %arg1[%c9_66, %c0_67, %c0_68] : memref<13x25x128xbf16, #tpu.memory_space<vmem>>, vector<1x25x128xbf16>
    %88 = vector.shape_cast %87 : vector<1x25x128xbf16> to vector<25x128xbf16>
    %cst_69 = arith.constant dense<0.000000e+00> : vector<8x128xf32>
    %89 = tpu.matmul %86, %88, %cst_69 {dimension_numbers = #tpu.dot_dimension_numbers<[1], [0], [0], [1], [0, 0, 1, 1], [], []>} : vector<8x25xbf16>, vector<25x128xbf16>, vector<8x128xf32> -> vector<8x128xf32>
    %90 = arith.addf %81, %89 : vector<8x128xf32>
    %c3_70 = arith.constant 3 : index
    %c0_71 = arith.constant 0 : index
    %91 = vector.load %arg0[%c3_70, %c0_71] : memref<14x25xf32, #tpu.memory_space<vmem>>, vector<8x25xf32>
    %c0_72 = arith.constant 0 : index
    %c10 = arith.constant 10 : index
    %92 = vector.load %arg2[%c0_72, %c10] : memref<8x13xf32, #tpu.memory_space<vmem>>, vector<8x1xf32>
    %93 = vector.broadcast %92 : vector<8x1xf32> to vector<8x25xf32>
    %94 = arith.mulf %91, %93 : vector<8x25xf32>
    %95 = arith.truncf %94 : vector<8x25xf32> to vector<8x25xbf16>
    %c10_73 = arith.constant 10 : index
    %c0_74 = arith.constant 0 : index
    %c0_75 = arith.constant 0 : index
    %96 = vector.load %arg1[%c10_73, %c0_74, %c0_75] : memref<13x25x128xbf16, #tpu.memory_space<vmem>>, vector<1x25x128xbf16>
    %97 = vector.shape_cast %96 : vector<1x25x128xbf16> to vector<25x128xbf16>
    %cst_76 = arith.constant dense<0.000000e+00> : vector<8x128xf32>
    %98 = tpu.matmul %95, %97, %cst_76 {dimension_numbers = #tpu.dot_dimension_numbers<[1], [0], [0], [1], [0, 0, 1, 1], [], []>} : vector<8x25xbf16>, vector<25x128xbf16>, vector<8x128xf32> -> vector<8x128xf32>
    %99 = arith.addf %90, %98 : vector<8x128xf32>
    %c3_77 = arith.constant 3 : index
    %c0_78 = arith.constant 0 : index
    %100 = vector.load %arg0[%c3_77, %c0_78] : memref<14x25xf32, #tpu.memory_space<vmem>>, vector<8x25xf32>
    %c0_79 = arith.constant 0 : index
    %c11 = arith.constant 11 : index
    %101 = vector.load %arg2[%c0_79, %c11] : memref<8x13xf32, #tpu.memory_space<vmem>>, vector<8x1xf32>
    %102 = vector.broadcast %101 : vector<8x1xf32> to vector<8x25xf32>
    %103 = arith.mulf %100, %102 : vector<8x25xf32>
    %104 = arith.truncf %103 : vector<8x25xf32> to vector<8x25xbf16>
    %c11_80 = arith.constant 11 : index
    %c0_81 = arith.constant 0 : index
    %c0_82 = arith.constant 0 : index
    %105 = vector.load %arg1[%c11_80, %c0_81, %c0_82] : memref<13x25x128xbf16, #tpu.memory_space<vmem>>, vector<1x25x128xbf16>
    %106 = vector.shape_cast %105 : vector<1x25x128xbf16> to vector<25x128xbf16>
    %cst_83 = arith.constant dense<0.000000e+00> : vector<8x128xf32>
    %107 = tpu.matmul %104, %106, %cst_83 {dimension_numbers = #tpu.dot_dimension_numbers<[1], [0], [0], [1], [0, 0, 1, 1], [], []>} : vector<8x25xbf16>, vector<25x128xbf16>, vector<8x128xf32> -> vector<8x128xf32>
    %108 = arith.addf %99, %107 : vector<8x128xf32>
    %c3_84 = arith.constant 3 : index
    %c0_85 = arith.constant 0 : index
    %109 = vector.load %arg0[%c3_84, %c0_85] : memref<14x25xf32, #tpu.memory_space<vmem>>, vector<8x25xf32>
    %c0_86 = arith.constant 0 : index
    %c12 = arith.constant 12 : index
    %110 = vector.load %arg2[%c0_86, %c12] : memref<8x13xf32, #tpu.memory_space<vmem>>, vector<8x1xf32>
    %111 = vector.broadcast %110 : vector<8x1xf32> to vector<8x25xf32>
    %112 = arith.mulf %109, %111 : vector<8x25xf32>
    %113 = arith.truncf %112 : vector<8x25xf32> to vector<8x25xbf16>
    %c12_87 = arith.constant 12 : index
    %c0_88 = arith.constant 0 : index
    %c0_89 = arith.constant 0 : index
    %114 = vector.load %arg1[%c12_87, %c0_88, %c0_89] : memref<13x25x128xbf16, #tpu.memory_space<vmem>>, vector<1x25x128xbf16>
    %115 = vector.shape_cast %114 : vector<1x25x128xbf16> to vector<25x128xbf16>
    %cst_90 = arith.constant dense<0.000000e+00> : vector<8x128xf32>
    %116 = tpu.matmul %113, %115, %cst_90 {dimension_numbers = #tpu.dot_dimension_numbers<[1], [0], [0], [1], [0, 0, 1, 1], [], []>} : vector<8x25xbf16>, vector<25x128xbf16>, vector<8x128xf32> -> vector<8x128xf32>
    %117 = arith.addf %108, %116 : vector<8x128xf32>
    %c0_91 = arith.constant 0 : index
    %c0_92 = arith.constant 0 : index
    %118 = vector.load %arg3[%c0_91, %c0_92] : memref<8x128xf32, #tpu.memory_space<vmem>>, vector<8x128xf32>
    %119 = arith.addf %117, %118 : vector<8x128xf32>
    %c0_93 = arith.constant 0 : index
    %c0_94 = arith.constant 0 : index
    %120 = vector.load %arg4[%c0_93, %c0_94] : memref<1x128xf32, #tpu.memory_space<vmem>>, vector<1x128xf32>
    %c0_95 = arith.constant 0 : index
    %c0_96 = arith.constant 0 : index
    %121 = vector.load %arg5[%c0_95, %c0_96] : memref<1x128xf32, #tpu.memory_space<vmem>>, vector<1x128xf32>
    %c0_97 = arith.constant 0 : index
    %c0_98 = arith.constant 0 : index
    %122 = vector.load %arg6[%c0_97, %c0_98] : memref<1x128xf32, #tpu.memory_space<vmem>>, vector<1x128xf32>
    %cst_99 = arith.constant dense<0.000000e+00> : vector<128xf32>
    %123 = vector.multi_reduction <add>, %119, %cst_99 [0] : vector<8x128xf32> to vector<128xf32>
    %124 = vector.shape_cast %123 : vector<128xf32> to vector<1x128xf32>
    %cst_100 = arith.constant 8.000000e+00 : f32
    %125 = vector.broadcast %cst_100 : f32 to vector<1x128xf32>
    %126 = arith.divf %124, %125 : vector<1x128xf32>
    %127 = vector.broadcast %126 : vector<1x128xf32> to vector<8x128xf32>
    %128 = arith.subf %119, %127 : vector<8x128xf32>
    %129 = arith.mulf %128, %128 : vector<8x128xf32>
    %cst_101 = arith.constant dense<0.000000e+00> : vector<128xf32>
    %130 = vector.multi_reduction <add>, %129, %cst_101 [0] : vector<8x128xf32> to vector<128xf32>
    %131 = vector.shape_cast %130 : vector<128xf32> to vector<1x128xf32>
    %cst_102 = arith.constant 8.000000e+00 : f32
    %132 = vector.broadcast %cst_102 : f32 to vector<1x128xf32>
    %133 = arith.divf %131, %132 : vector<1x128xf32>
    %134 = vector.broadcast %126 : vector<1x128xf32> to vector<8x128xf32>
    %135 = arith.subf %119, %134 : vector<8x128xf32>
    %cst_103 = arith.constant 9.99999974E-6 : f32
    %136 = vector.broadcast %cst_103 : f32 to vector<1x128xf32>
    %137 = arith.addf %133, %136 : vector<1x128xf32>
    %138 = math.rsqrt %137 : vector<1x128xf32>
    %139 = vector.broadcast %138 : vector<1x128xf32> to vector<8x128xf32>
    %140 = arith.mulf %135, %139 : vector<8x128xf32>
    %141 = vector.broadcast %120 : vector<1x128xf32> to vector<8x128xf32>
    %142 = arith.mulf %140, %141 : vector<8x128xf32>
    %143 = vector.broadcast %121 : vector<1x128xf32> to vector<8x128xf32>
    %144 = arith.addf %142, %143 : vector<8x128xf32>
    %cst_104 = arith.constant 0.000000e+00 : f32
    %145 = vector.broadcast %cst_104 : f32 to vector<8x128xf32>
    %146 = arith.cmpf ogt, %144, %145 : vector<8x128xf32>
    %147 = vector.broadcast %122 : vector<1x128xf32> to vector<8x128xf32>
    %148 = arith.mulf %147, %144 : vector<8x128xf32>
    %149 = arith.select %146, %144, %148 : vector<8x128xi1>, vector<8x128xf32>
    %c0_105 = arith.constant 0 : index
    %c0_106 = arith.constant 0 : index
    %150 = vector.load %arg7[%c0_105, %c0_106] : memref<8x128xf32, #tpu.memory_space<vmem>>, vector<8x128xf32>
    tpu.vector_store %arg7[%c0_105, %c0_106], %149 {strides = array<i32>} : memref<8x128xf32, #tpu.memory_space<vmem>>, vector<8x128xf32>,
    return
  }
}

module attributes {stable_mosaic.version = 11 : i64} {
  func.func @_matmul_kernel(%arg0: memref<16x2xf32, #tpu.memory_space<vmem>>, %arg1: memref<2x20xf32, #tpu.memory_space<vmem>>, %arg2: memref<16x20xf32, #tpu.memory_space<vmem>>) attributes {dimension_semantics = [], scalar_prefetch = 0 : i64, scratch_operands = 0 : i64, tpu.core_type = #tpu.core_type<tc>} {
    %c0 = arith.constant 0 : index
    %c0_0 = arith.constant 0 : index
    %0 = vector.load %arg0[%c0, %c0_0] : memref<16x2xf32, #tpu.memory_space<vmem>>, vector<16x2xf32>
    %c0_1 = arith.constant 0 : index
    %c0_2 = arith.constant 0 : index
    %1 = vector.load %arg1[%c0_1, %c0_2] : memref<2x20xf32, #tpu.memory_space<vmem>>, vector<2x20xf32>
    %cst = arith.constant dense<0.000000e+00> : vector<16x20xf32>
    %2 = tpu.matmul %0, %1, %cst {dimension_numbers = #tpu.dot_dimension_numbers<[1], [0], [0], [1], [0, 0, 1, 1], [], []>} : vector<16x2xf32>, vector<2x20xf32>, vector<16x20xf32> -> vector<16x20xf32>
    %c0_3 = arith.constant 0 : index
    %c0_4 = arith.constant 0 : index
    %3 = vector.load %arg2[%c0_3, %c0_4] : memref<16x20xf32, #tpu.memory_space<vmem>>, vector<16x20xf32>
    tpu.vector_store %arg2[%c0_3, %c0_4], %2 {strides = array<i32>} : memref<16x20xf32, #tpu.memory_space<vmem>>, vector<16x20xf32>,
    return
  }
}

module attributes {stable_mosaic.version = 11 : i64} {
  func.func @_matmul_kernel(%arg0: memref<16x2xf32, #tpu.memory_space<vmem>>, %arg1: memref<2x160xf32, #tpu.memory_space<vmem>>, %arg2: memref<16x160xf32, #tpu.memory_space<vmem>>) attributes {dimension_semantics = [], scalar_prefetch = 0 : i64, scratch_operands = 0 : i64, tpu.core_type = #tpu.core_type<tc>} {
    %c0 = arith.constant 0 : index
    %c0_0 = arith.constant 0 : index
    %0 = vector.load %arg0[%c0, %c0_0] : memref<16x2xf32, #tpu.memory_space<vmem>>, vector<16x2xf32>
    %c0_1 = arith.constant 0 : index
    %c0_2 = arith.constant 0 : index
    %1 = vector.load %arg1[%c0_1, %c0_2] : memref<2x160xf32, #tpu.memory_space<vmem>>, vector<2x160xf32>
    %cst = arith.constant dense<0.000000e+00> : vector<16x160xf32>
    %2 = tpu.matmul %0, %1, %cst {dimension_numbers = #tpu.dot_dimension_numbers<[1], [0], [0], [1], [0, 0, 1, 1], [], []>} : vector<16x2xf32>, vector<2x160xf32>, vector<16x160xf32> -> vector<16x160xf32>
    %c0_3 = arith.constant 0 : index
    %c0_4 = arith.constant 0 : index
    %3 = vector.load %arg2[%c0_3, %c0_4] : memref<16x160xf32, #tpu.memory_space<vmem>>, vector<16x160xf32>
    tpu.vector_store %arg2[%c0_3, %c0_4], %2 {strides = array<i32>} : memref<16x160xf32, #tpu.memory_space<vmem>>, vector<16x160xf32>,
    return
  }
}

</mosaic_0001>

<llo_original>
// kernel: espnet_forward.20
$region0: #{espnet_forward.20}
  #allocation0 [shape = 'u32[]', space=smem, size = 0x4, offset = 0x4, fixed_abs, tag = 'smem constant byte address 0x4 - core index']
  #allocation1 [shape = 'u32[72,128]{1,0:T(1,128)}', space=vmem, size = 0x9000, scoped, tag = 'internal scratch']
  %s0 = inlined_call_operand.vmem [shape: f32[9,128,3], index: 0, kind: input, shape index: {}]
  %s1 = inlined_call_operand.vmem [shape: f32[128,3], index: 1, kind: output, shape index: {}]
  %s2 = sld [smem:[#allocation0]]
  $region14: #{espnet_forward.20} parent=0
    _
  %s4 = ssub.s32 1, %s2
  %s5 = scalar_select 0, %s4, %s2
  // Predicated region
  $region2: #{espnet_forward.20} parent=0 // pred_check
    _
  $region3: #{espnet_forward.20} parent=0 // pred_check_branch
    %7 = sbr.rel (0) target = $region5
  $region4: #{espnet_forward.20} parent=0 // pred_region
    _
  $region5: #{espnet_forward.20} parent=0 // pred_fallthru
    _
  %v8 = vld [vmem:[%s0] sm:$0xff]
  %v9 = vld [vmem:[%s0 + $0x8] sm:$0xff]
  %v10 = vld [vmem:[%s0 + $0x10] sm:$0xff]
  %v11 = vld [vmem:[%s0 + $0x18] sm:$0xff]
  %v12 = vld [vmem:[%s0 + $0x20] sm:$0xff]
  %v13 = vld [vmem:[%s0 + $0x28] sm:$0xff]
  %v14 = vld [vmem:[%s0 + $0x30] sm:$0xff]
  %v15 = vld [vmem:[%s0 + $0x38] sm:$0xff]
  %v16 = vld [vmem:[%s0 + $0x40] sm:$0xff]
  %v17 = vld [vmem:[%s0 + $0x48] sm:$0xff]
  %v18 = vld [vmem:[%s0 + $0x50] sm:$0xff]
  %v19 = vld [vmem:[%s0 + $0x58] sm:$0xff]
  %v20 = vld [vmem:[%s0 + $0x60] sm:$0xff]
  %v21 = vld [vmem:[%s0 + $0x68] sm:$0xff]
  %v22 = vld [vmem:[%s0 + $0x70] sm:$0xff]
  %v23 = vld [vmem:[%s0 + $0x78] sm:$0xff]
  %v24 = vld [vmem:[%s0 + $0x80] sm:$0xff]
  %v25 = vld [vmem:[%s0 + $0x88] sm:$0xff]
  %v26 = vld [vmem:[%s0 + $0x90] sm:$0xff]
  %v27 = vld [vmem:[%s0 + $0x98] sm:$0xff]
  %v28 = vld [vmem:[%s0 + $0xa0] sm:$0xff]
  %v29 = vld [vmem:[%s0 + $0xa8] sm:$0xff]
  %v30 = vld [vmem:[%s0 + $0xb0] sm:$0xff]
  %v31 = vld [vmem:[%s0 + $0xb8] sm:$0xff]
  %v32 = vld [vmem:[%s0 + $0xc0] sm:$0xff]
  %v33 = vld [vmem:[%s0 + $0xc8] sm:$0xff]
  %v34 = vld [vmem:[%s0 + $0xd0] sm:$0xff]
  %v35 = vld [vmem:[%s0 + $0xd8] sm:$0xff]
  %v36 = vld [vmem:[%s0 + $0xe0] sm:$0xff]
  %v37 = vld [vmem:[%s0 + $0xe8] sm:$0xff]
  %v38 = vld [vmem:[%s0 + $0xf0] sm:$0xff]
  %v39 = vld [vmem:[%s0 + $0xf8] sm:$0xff]
  %v40 = vld [vmem:[%s0 + $0x100] sm:$0xff]
  %v41 = vld [vmem:[%s0 + $0x108] sm:$0xff]
  %v42 = vld [vmem:[%s0 + $0x110] sm:$0xff]
  %v43 = vld [vmem:[%s0 + $0x118] sm:$0xff]
  %v44 = vld [vmem:[%s0 + $0x120] sm:$0xff]
  %v45 = vld [vmem:[%s0 + $0x128] sm:$0xff]
  %v46 = vld [vmem:[%s0 + $0x130] sm:$0xff]
  %v47 = vld [vmem:[%s0 + $0x138] sm:$0xff]
  %v48 = vld [vmem:[%s0 + $0x140] sm:$0xff]
  %v49 = vld [vmem:[%s0 + $0x148] sm:$0xff]
  %v50 = vld [vmem:[%s0 + $0x150] sm:$0xff]
  %v51 = vld [vmem:[%s0 + $0x158] sm:$0xff]
  %v52 = vld [vmem:[%s0 + $0x160] sm:$0xff]
  %v53 = vld [vmem:[%s0 + $0x168] sm:$0xff]
  %v54 = vld [vmem:[%s0 + $0x170] sm:$0xff]
  %v55 = vld [vmem:[%s0 + $0x178] sm:$0xff]
  %v56 = vld [vmem:[%s0 + $0x180] sm:$0xff]
  %v57 = vld [vmem:[%s0 + $0x188] sm:$0xff]
  %v58 = vld [vmem:[%s0 + $0x190] sm:$0xff]
  %v59 = vld [vmem:[%s0 + $0x198] sm:$0xff]
  %v60 = vld [vmem:[%s0 + $0x1a0] sm:$0xff]
  %v61 = vld [vmem:[%s0 + $0x1a8] sm:$0xff]
  %v62 = vld [vmem:[%s0 + $0x1b0] sm:$0xff]
  %v63 = vld [vmem:[%s0 + $0x1b8] sm:$0xff]
  %v64 = vld [vmem:[%s0 + $0x1c0] sm:$0xff]
  %v65 = vld [vmem:[%s0 + $0x1c8] sm:$0xff]
  %v66 = vld [vmem:[%s0 + $0x1d0] sm:$0xff]
  %v67 = vld [vmem:[%s0 + $0x1d8] sm:$0xff]
  %v68 = vld [vmem:[%s0 + $0x1e0] sm:$0xff]
  %v69 = vld [vmem:[%s0 + $0x1e8] sm:$0xff]
  %v70 = vld [vmem:[%s0 + $0x1f0] sm:$0xff]
  %v71 = vld [vmem:[%s0 + $0x1f8] sm:$0xff]
  %v72 = vld [vmem:[%s0 + $0x200] sm:$0xff]
  %v73 = vld [vmem:[%s0 + $0x208] sm:$0xff]
  %v74 = vld [vmem:[%s0 + $0x210] sm:$0xff]
  %v75 = vld [vmem:[%s0 + $0x218] sm:$0xff]
  %v76 = vld [vmem:[%s0 + $0x220] sm:$0xff]
  %v77 = vld [vmem:[%s0 + $0x228] sm:$0xff]
  %v78 = vld [vmem:[%s0 + $0x230] sm:$0xff]
  %v79 = vld [vmem:[%s0 + $0x238] sm:$0xff]
  %v80 = vld [vmem:[%s0 + $0x240] sm:$0xff]
  %v81 = vld [vmem:[%s0 + $0x248] sm:$0xff]
  %v82 = vld [vmem:[%s0 + $0x250] sm:$0xff]
  %v83 = vld [vmem:[%s0 + $0x258] sm:$0xff]
  %v84 = vld [vmem:[%s0 + $0x260] sm:$0xff]
  %v85 = vld [vmem:[%s0 + $0x268] sm:$0xff]
  %v86 = vld [vmem:[%s0 + $0x270] sm:$0xff]
  %v87 = vld [vmem:[%s0 + $0x278] sm:$0xff]
  %v88 = vld [vmem:[%s0 + $0x280] sm:$0xff]
  %v89 = vld [vmem:[%s0 + $0x288] sm:$0xff]
  %v90 = vld [vmem:[%s0 + $0x290] sm:$0xff]
  %v91 = vld [vmem:[%s0 + $0x298] sm:$0xff]
  %v92 = vld [vmem:[%s0 + $0x2a0] sm:$0xff]
  %v93 = vld [vmem:[%s0 + $0x2a8] sm:$0xff]
  %v94 = vld [vmem:[%s0 + $0x2b0] sm:$0xff]
  %v95 = vld [vmem:[%s0 + $0x2b8] sm:$0xff]
  %v96 = vld [vmem:[%s0 + $0x2c0] sm:$0xff]
  %v97 = vld [vmem:[%s0 + $0x2c8] sm:$0xff]
  %v98 = vld [vmem:[%s0 + $0x2d0] sm:$0xff]
  %v99 = vld [vmem:[%s0 + $0x2d8] sm:$0xff]
  %v100 = vld [vmem:[%s0 + $0x2e0] sm:$0xff]
  %v101 = vld [vmem:[%s0 + $0x2e8] sm:$0xff]
  %v102 = vld [vmem:[%s0 + $0x2f0] sm:$0xff]
  %v103 = vld [vmem:[%s0 + $0x2f8] sm:$0xff]
  %v104 = vld [vmem:[%s0 + $0x300] sm:$0xff]
  %v105 = vld [vmem:[%s0 + $0x308] sm:$0xff]
  %v106 = vld [vmem:[%s0 + $0x310] sm:$0xff]
  %v107 = vld [vmem:[%s0 + $0x318] sm:$0xff]
  %v108 = vld [vmem:[%s0 + $0x320] sm:$0xff]
  %v109 = vld [vmem:[%s0 + $0x328] sm:$0xff]
  %v110 = vld [vmem:[%s0 + $0x330] sm:$0xff]
  %v111 = vld [vmem:[%s0 + $0x338] sm:$0xff]
  %v112 = vld [vmem:[%s0 + $0x340] sm:$0xff]
  %v113 = vld [vmem:[%s0 + $0x348] sm:$0xff]
  %v114 = vld [vmem:[%s0 + $0x350] sm:$0xff]
  %v115 = vld [vmem:[%s0 + $0x358] sm:$0xff]
  %v116 = vld [vmem:[%s0 + $0x360] sm:$0xff]
  %v117 = vld [vmem:[%s0 + $0x368] sm:$0xff]
  %v118 = vld [vmem:[%s0 + $0x370] sm:$0xff]
  %v119 = vld [vmem:[%s0 + $0x378] sm:$0xff]
  %v120 = vld [vmem:[%s0 + $0x380] sm:$0xff]
  %v121 = vld [vmem:[%s0 + $0x388] sm:$0xff]
  %v122 = vld [vmem:[%s0 + $0x390] sm:$0xff]
  %v123 = vld [vmem:[%s0 + $0x398] sm:$0xff]
  %v124 = vld [vmem:[%s0 + $0x3a0] sm:$0xff]
  %v125 = vld [vmem:[%s0 + $0x3a8] sm:$0xff]
  %v126 = vld [vmem:[%s0 + $0x3b0] sm:$0xff]
  %v127 = vld [vmem:[%s0 + $0x3b8] sm:$0xff]
  %v128 = vld [vmem:[%s0 + $0x3c0] sm:$0xff]
  %v129 = vld [vmem:[%s0 + $0x3c8] sm:$0xff]
  %v130 = vld [vmem:[%s0 + $0x3d0] sm:$0xff]
  %v131 = vld [vmem:[%s0 + $0x3d8] sm:$0xff]
  %v132 = vld [vmem:[%s0 + $0x3e0] sm:$0xff]
  %v133 = vld [vmem:[%s0 + $0x3e8] sm:$0xff]
  %v134 = vld [vmem:[%s0 + $0x3f0] sm:$0xff]
  %v135 = vld [vmem:[%s0 + $0x3f8] sm:$0xff]
  %v136 = vld [vmem:[%s0 + $0x400] sm:$0xff]
  %v137 = vld [vmem:[%s0 + $0x408] sm:$0xff]
  %v138 = vld [vmem:[%s0 + $0x410] sm:$0xff]
  %v139 = vld [vmem:[%s0 + $0x418] sm:$0xff]
  %v140 = vld [vmem:[%s0 + $0x420] sm:$0xff]
  %v141 = vld [vmem:[%s0 + $0x428] sm:$0xff]
  %v142 = vld [vmem:[%s0 + $0x430] sm:$0xff]
  %v143 = vld [vmem:[%s0 + $0x438] sm:$0xff]
  %v144 = vld [vmem:[%s0 + $0x440] sm:$0xff]
  %v145 = vld [vmem:[%s0 + $0x448] sm:$0xff]
  %v146 = vld [vmem:[%s0 + $0x450] sm:$0xff]
  %v147 = vld [vmem:[%s0 + $0x458] sm:$0xff]
  %v148 = vld [vmem:[%s0 + $0x460] sm:$0xff]
  %v149 = vld [vmem:[%s0 + $0x468] sm:$0xff]
  %v150 = vld [vmem:[%s0 + $0x470] sm:$0xff]
  %v151 = vld [vmem:[%s0 + $0x478] sm:$0xff]
  %vm152 = vcmask 23552
  %v153 = vsel %vm152, %v8, 0.0
  %v154 = vsel %vm152, %v24, 0.0
  %v155 = vadd.f32 %v153, %v154
  %v156 = vsel %vm152, %v40, 0.0
  %v157 = vadd.f32 %v155, %v156
  %v158 = vsel %vm152, %v56, 0.0
  %v159 = vadd.f32 %v157, %v158
  %v160 = vsel %vm152, %v72, 0.0
  %v161 = vadd.f32 %v159, %v160
  %v162 = vsel %vm152, %v88, 0.0
  %v163 = vadd.f32 %v161, %v162
  %v164 = vsel %vm152, %v104, 0.0
  %v165 = vadd.f32 %v163, %v164
  %v166 = vsel %vm152, %v120, 0.0
  %v167 = vadd.f32 %v165, %v166
  %v168 = vsel %vm152, %v136, 0.0
  %v169 = vadd.f32 %v167, %v168
  %v170 = vsel %vm152, %v9, 0.0
  %v171 = vsel %vm152, %v25, 0.0
  %v172 = vadd.f32 %v170, %v171
  %v173 = vsel %vm152, %v41, 0.0
  %v174 = vadd.f32 %v172, %v173
  %v175 = vsel %vm152, %v57, 0.0
  %v176 = vadd.f32 %v174, %v175
  %v177 = vsel %vm152, %v73, 0.0
  %v178 = vadd.f32 %v176, %v177
  %v179 = vsel %vm152, %v89, 0.0
  %v180 = vadd.f32 %v178, %v179
  %v181 = vsel %vm152, %v105, 0.0
  %v182 = vadd.f32 %v180, %v181
  %v183 = vsel %vm152, %v121, 0.0
  %v184 = vadd.f32 %v182, %v183
  %v185 = vsel %vm152, %v137, 0.0
  %v186 = vadd.f32 %v184, %v185
  %v187 = vsel %vm152, %v10, 0.0
  %v188 = vsel %vm152, %v26, 0.0
  %v189 = vadd.f32 %v187, %v188
  %v190 = vsel %vm152, %v42, 0.0
  %v191 = vadd.f32 %v189, %v190
  %v192 = vsel %vm152, %v58, 0.0
  %v193 = vadd.f32 %v191, %v192
  %v194 = vsel %vm152, %v74, 0.0
  %v195 = vadd.f32 %v193, %v194
  %v196 = vsel %vm152, %v90, 0.0
  %v197 = vadd.f32 %v195, %v196
  %v198 = vsel %vm152, %v106, 0.0
  %v199 = vadd.f32 %v197, %v198
  %v200 = vsel %vm152, %v122, 0.0
  %v201 = vadd.f32 %v199, %v200
  %v202 = vsel %vm152, %v138, 0.0
  %v203 = vadd.f32 %v201, %v202
  %v204 = vsel %vm152, %v11, 0.0
  %v205 = vsel %vm152, %v27, 0.0
  %v206 = vadd.f32 %v204, %v205
  %v207 = vsel %vm152, %v43, 0.0
  %v208 = vadd.f32 %v206, %v207
  %v209 = vsel %vm152, %v59, 0.0
  %v210 = vadd.f32 %v208, %v209
  %v211 = vsel %vm152, %v75, 0.0
  %v212 = vadd.f32 %v210, %v211
  %v213 = vsel %vm152, %v91, 0.0
  %v214 = vadd.f32 %v212, %v213
  %v215 = vsel %vm152, %v107, 0.0
  %v216 = vadd.f32 %v214, %v215
  %v217 = vsel %vm152, %v123, 0.0
  %v218 = vadd.f32 %v216, %v217
  %v219 = vsel %vm152, %v139, 0.0
  %v220 = vadd.f32 %v218, %v219
  %v221 = vsel %vm152, %v12, 0.0
  %v222 = vsel %vm152, %v28, 0.0
  %v223 = vadd.f32 %v221, %v222
  %v224 = vsel %vm152, %v44, 0.0
  %v225 = vadd.f32 %v223, %v224
  %v226 = vsel %vm152, %v60, 0.0
  %v227 = vadd.f32 %v225, %v226
  %v228 = vsel %vm152, %v76, 0.0
  %v229 = vadd.f32 %v227, %v228
  %v230 = vsel %vm152, %v92, 0.0
  %v231 = vadd.f32 %v229, %v230
  %v232 = vsel %vm152, %v108, 0.0
  %v233 = vadd.f32 %v231, %v232
  %v234 = vsel %vm152, %v124, 0.0
  %v235 = vadd.f32 %v233, %v234
  %v236 = vsel %vm152, %v140, 0.0
  %v237 = vadd.f32 %v235, %v236
  %v238 = vsel %vm152, %v13, 0.0
  %v239 = vsel %vm152, %v29, 0.0
  %v240 = vadd.f32 %v238, %v239
  %v241 = vsel %vm152, %v45, 0.0
  %v242 = vadd.f32 %v240, %v241
  %v243 = vsel %vm152, %v61, 0.0
  %v244 = vadd.f32 %v242, %v243
  %v245 = vsel %vm152, %v77, 0.0
  %v246 = vadd.f32 %v244, %v245
  %v247 = vsel %vm152, %v93, 0.0
  %v248 = vadd.f32 %v246, %v247
  %v249 = vsel %vm152, %v109, 0.0
  %v250 = vadd.f32 %v248, %v249
  %v251 = vsel %vm152, %v125, 0.0
  %v252 = vadd.f32 %v250, %v251
  %v253 = vsel %vm152, %v141, 0.0
  %v254 = vadd.f32 %v252, %v253
  %v255 = vsel %vm152, %v14, 0.0
  %v256 = vsel %vm152, %v30, 0.0
  %v257 = vadd.f32 %v255, %v256
  %v258 = vsel %vm152, %v46, 0.0
  %v259 = vadd.f32 %v257, %v258
  %v260 = vsel %vm152, %v62, 0.0
  %v261 = vadd.f32 %v259, %v260
  %v262 = vsel %vm152, %v78, 0.0
  %v263 = vadd.f32 %v261, %v262
  %v264 = vsel %vm152, %v94, 0.0
  %v265 = vadd.f32 %v263, %v264
  %v266 = vsel %vm152, %v110, 0.0
  %v267 = vadd.f32 %v265, %v266
  %v268 = vsel %vm152, %v126, 0.0
  %v269 = vadd.f32 %v267, %v268
  %v270 = vsel %vm152, %v142, 0.0
  %v271 = vadd.f32 %v269, %v270
  %v272 = vsel %vm152, %v15, 0.0
  %v273 = vsel %vm152, %v31, 0.0
  %v274 = vadd.f32 %v272, %v273
  %v275 = vsel %vm152, %v47, 0.0
  %v276 = vadd.f32 %v274, %v275
  %v277 = vsel %vm152, %v63, 0.0
  %v278 = vadd.f32 %v276, %v277
  %v279 = vsel %vm152, %v79, 0.0
  %v280 = vadd.f32 %v278, %v279
  %v281 = vsel %vm152, %v95, 0.0
  %v282 = vadd.f32 %v280, %v281
  %v283 = vsel %vm152, %v111, 0.0
  %v284 = vadd.f32 %v282, %v283
  %v285 = vsel %vm152, %v127, 0.0
  %v286 = vadd.f32 %v284, %v285
  %v287 = vsel %vm152, %v143, 0.0
  %v288 = vadd.f32 %v286, %v287
  %v289 = vsel %vm152, %v16, 0.0
  %v290 = vsel %vm152, %v32, 0.0
  %v291 = vadd.f32 %v289, %v290
  %v292 = vsel %vm152, %v48, 0.0
  %v293 = vadd.f32 %v291, %v292
  %v294 = vsel %vm152, %v64, 0.0
  %v295 = vadd.f32 %v293, %v294
  %v296 = vsel %vm152, %v80, 0.0
  %v297 = vadd.f32 %v295, %v296
  %v298 = vsel %vm152, %v96, 0.0
  %v299 = vadd.f32 %v297, %v298
  %v300 = vsel %vm152, %v112, 0.0
  %v301 = vadd.f32 %v299, %v300
  %v302 = vsel %vm152, %v128, 0.0
  %v303 = vadd.f32 %v301, %v302
  %v304 = vsel %vm152, %v144, 0.0
  %v305 = vadd.f32 %v303, %v304
  %v306 = vsel %vm152, %v17, 0.0
  %v307 = vsel %vm152, %v33, 0.0
  %v308 = vadd.f32 %v306, %v307
  %v309 = vsel %vm152, %v49, 0.0
  %v310 = vadd.f32 %v308, %v309
  %v311 = vsel %vm152, %v65, 0.0
  %v312 = vadd.f32 %v310, %v311
  %v313 = vsel %vm152, %v81, 0.0
  %v314 = vadd.f32 %v312, %v313
  %v315 = vsel %vm152, %v97, 0.0
  %v316 = vadd.f32 %v314, %v315
  %v317 = vsel %vm152, %v113, 0.0
  %v318 = vadd.f32 %v316, %v317
  %v319 = vsel %vm152, %v129, 0.0
  %v320 = vadd.f32 %v318, %v319
  %v321 = vsel %vm152, %v145, 0.0
  %v322 = vadd.f32 %v320, %v321
  %v323 = vsel %vm152, %v18, 0.0
  %v324 = vsel %vm152, %v34, 0.0
  %v325 = vadd.f32 %v323, %v324
  %v326 = vsel %vm152, %v50, 0.0
  %v327 = vadd.f32 %v325, %v326
  %v328 = vsel %vm152, %v66, 0.0
  %v329 = vadd.f32 %v327, %v328
  %v330 = vsel %vm152, %v82, 0.0
  %v331 = vadd.f32 %v329, %v330
  %v332 = vsel %vm152, %v98, 0.0
  %v333 = vadd.f32 %v331, %v332
  %v334 = vsel %vm152, %v114, 0.0
  %v335 = vadd.f32 %v333, %v334
  %v336 = vsel %vm152, %v130, 0.0
  %v337 = vadd.f32 %v335, %v336
  %v338 = vsel %vm152, %v146, 0.0
  %v339 = vadd.f32 %v337, %v338
  %v340 = vsel %vm152, %v19, 0.0
  %v341 = vsel %vm152, %v35, 0.0
  %v342 = vadd.f32 %v340, %v341
  %v343 = vsel %vm152, %v51, 0.0
  %v344 = vadd.f32 %v342, %v343
  %v345 = vsel %vm152, %v67, 0.0
  %v346 = vadd.f32 %v344, %v345
  %v347 = vsel %vm152, %v83, 0.0
  %v348 = vadd.f32 %v346, %v347
  %v349 = vsel %vm152, %v99, 0.0
  %v350 = vadd.f32 %v348, %v349
  %v351 = vsel %vm152, %v115, 0.0
  %v352 = vadd.f32 %v350, %v351
  %v353 = vsel %vm152, %v131, 0.0
  %v354 = vadd.f32 %v352, %v353
  %v355 = vsel %vm152, %v147, 0.0
  %v356 = vadd.f32 %v354, %v355
  %v357 = vsel %vm152, %v20, 0.0
  %v358 = vsel %vm152, %v36, 0.0
  %v359 = vadd.f32 %v357, %v358
  %v360 = vsel %vm152, %v52, 0.0
  %v361 = vadd.f32 %v359, %v360
  %v362 = vsel %vm152, %v68, 0.0
  %v363 = vadd.f32 %v361, %v362
  %v364 = vsel %vm152, %v84, 0.0
  %v365 = vadd.f32 %v363, %v364
  %v366 = vsel %vm152, %v100, 0.0
  %v367 = vadd.f32 %v365, %v366
  %v368 = vsel %vm152, %v116, 0.0
  %v369 = vadd.f32 %v367, %v368
  %v370 = vsel %vm152, %v132, 0.0
  %v371 = vadd.f32 %v369, %v370
  %v372 = vsel %vm152, %v148, 0.0
  %v373 = vadd.f32 %v371, %v372
  %v374 = vsel %vm152, %v21, 0.0
  %v375 = vsel %vm152, %v37, 0.0
  %v376 = vadd.f32 %v374, %v375
  %v377 = vsel %vm152, %v53, 0.0
  %v378 = vadd.f32 %v376, %v377
  %v379 = vsel %vm152, %v69, 0.0
  %v380 = vadd.f32 %v378, %v379
  %v381 = vsel %vm152, %v85, 0.0
  %v382 = vadd.f32 %v380, %v381
  %v383 = vsel %vm152, %v101, 0.0
  %v384 = vadd.f32 %v382, %v383
  %v385 = vsel %vm152, %v117, 0.0
  %v386 = vadd.f32 %v384, %v385
  %v387 = vsel %vm152, %v133, 0.0
  %v388 = vadd.f32 %v386, %v387
  %v389 = vsel %vm152, %v149, 0.0
  %v390 = vadd.f32 %v388, %v389
  %v391 = vsel %vm152, %v22, 0.0
  %v392 = vsel %vm152, %v38, 0.0
  %v393 = vadd.f32 %v391, %v392
  %v394 = vsel %vm152, %v54, 0.0
  %v395 = vadd.f32 %v393, %v394
  %v396 = vsel %vm152, %v70, 0.0
  %v397 = vadd.f32 %v395, %v396
  %v398 = vsel %vm152, %v86, 0.0
  %v399 = vadd.f32 %v397, %v398
  %v400 = vsel %vm152, %v102, 0.0
  %v401 = vadd.f32 %v399, %v400
  %v402 = vsel %vm152, %v118, 0.0
  %v403 = vadd.f32 %v401, %v402
  %v404 = vsel %vm152, %v134, 0.0
  %v405 = vadd.f32 %v403, %v404
  %v406 = vsel %vm152, %v150, 0.0
  %v407 = vadd.f32 %v405, %v406
  %v408 = vsel %vm152, %v23, 0.0
  %v409 = vsel %vm152, %v39, 0.0
  %v410 = vadd.f32 %v408, %v409
  %v411 = vsel %vm152, %v55, 0.0
  %v412 = vadd.f32 %v410, %v411
  %v413 = vsel %vm152, %v71, 0.0
  %v414 = vadd.f32 %v412, %v413
  %v415 = vsel %vm152, %v87, 0.0
  %v416 = vadd.f32 %v414, %v415
  %v417 = vsel %vm152, %v103, 0.0
  %v418 = vadd.f32 %v416, %v417
  %v419 = vsel %vm152, %v119, 0.0
  %v420 = vadd.f32 %v418, %v419
  %v421 = vsel %vm152, %v135, 0.0
  %v422 = vadd.f32 %v420, %v421
  %v423 = vsel %vm152, %v151, 0.0
  %v424 = vadd.f32 %v422, %v423
  %v425 = vmul.f32 %v169, 0.11111111
  %v426 = vmul.f32 %v186, 0.11111111
  %v427 = vmul.f32 %v203, 0.11111111
  %v428 = vmul.f32 %v220, 0.11111111
  %v429 = vmul.f32 %v237, 0.11111111
  %v430 = vmul.f32 %v254, 0.11111111
  %v431 = vmul.f32 %v271, 0.11111111
  %v432 = vmul.f32 %v288, 0.11111111
  %v433 = vmul.f32 %v305, 0.11111111
  %v434 = vmul.f32 %v322, 0.11111111
  %v435 = vmul.f32 %v339, 0.11111111
  %v436 = vmul.f32 %v356, 0.11111111
  %v437 = vmul.f32 %v373, 0.11111111
  %v438 = vmul.f32 %v390, 0.11111111
  %v439 = vmul.f32 %v407, 0.11111111
  %v440 = vmul.f32 %v424, 0.11111111
  %441 = vst.msk [vmem:[%s1] sm:$0xff] %vm152, %v425
  %442 = vst.msk [vmem:[%s1 + $0x8] sm:$0xff] %vm152, %v426
  %443 = vst.msk [vmem:[%s1 + $0x10] sm:$0xff] %vm152, %v427
  %444 = vst.msk [vmem:[%s1 + $0x18] sm:$0xff] %vm152, %v428
  %445 = vst.msk [vmem:[%s1 + $0x20] sm:$0xff] %vm152, %v429
  %446 = vst.msk [vmem:[%s1 + $0x28] sm:$0xff] %vm152, %v430
  %447 = vst.msk [vmem:[%s1 + $0x30] sm:$0xff] %vm152, %v431
  %448 = vst.msk [vmem:[%s1 + $0x38] sm:$0xff] %vm152, %v432
  %449 = vst.msk [vmem:[%s1 + $0x40] sm:$0xff] %vm152, %v433
  %450 = vst.msk [vmem:[%s1 + $0x48] sm:$0xff] %vm152, %v434
  %451 = vst.msk [vmem:[%s1 + $0x50] sm:$0xff] %vm152, %v435
  %452 = vst.msk [vmem:[%s1 + $0x58] sm:$0xff] %vm152, %v436
  %453 = vst.msk [vmem:[%s1 + $0x60] sm:$0xff] %vm152, %v437
  %454 = vst.msk [vmem:[%s1 + $0x68] sm:$0xff] %vm152, %v438
  %455 = vst.msk [vmem:[%s1 + $0x70] sm:$0xff] %vm152, %v439
  %456 = vst.msk [vmem:[%s1 + $0x78] sm:$0xff] %vm152, %v440
  // Predicated region
  $region6: #{espnet_forward.20} parent=0 // pred_check
    _
  $region7: #{espnet_forward.20} parent=0 // pred_check_branch
    %458 = sbr.rel (0) target = $region9
  $region8: #{espnet_forward.20} parent=0 // pred_region
    _
  $region9: #{espnet_forward.20} parent=0 // pred_fallthru
    _
  // Predicated region
  $region10: #{espnet_forward.20} parent=0 // pred_check
    _
  $region11: #{espnet_forward.20} parent=0 // pred_check_branch
    %460 = sbr.rel (0) target = $region13
  $region12: #{espnet_forward.20} parent=0 // pred_region
    _
  $region13: #{espnet_forward.20} parent=0 // pred_fallthru
    _

// kernel: espnet_forward.21
$region0: #{espnet_forward.21}
  #allocation0 [shape = 'u32[]', space=smem, size = 0x4, offset = 0x4, fixed_abs, tag = 'smem constant byte address 0x4 - core index']
  #allocation1 [shape = 'u32[72,128]{1,0:T(1,128)}', space=vmem, size = 0x9000, scoped, tag = 'internal scratch']
  %s0 = inlined_call_operand.vmem [shape: f32[9,32,3], index: 0, kind: input, shape index: {}]
  %s1 = inlined_call_operand.vmem [shape: f32[32,3], index: 1, kind: output, shape index: {}]
  %s2 = sld [smem:[#allocation0]]
  $region14: #{espnet_forward.21} parent=0
    _
  %s4 = ssub.s32 1, %s2
  %s5 = scalar_select 0, %s4, %s2
  // Predicated region
  $region2: #{espnet_forward.21} parent=0 // pred_check
    _
  $region3: #{espnet_forward.21} parent=0 // pred_check_branch
    %7 = sbr.rel (0) target = $region5
  $region4: #{espnet_forward.21} parent=0 // pred_region
    _
  $region5: #{espnet_forward.21} parent=0 // pred_fallthru
    _
  %v8 = vld [vmem:[%s0] sm:$0xff]
  %v9 = vld [vmem:[%s0 + $0x8] sm:$0xff]
  %v10 = vld [vmem:[%s0 + $0x10] sm:$0xff]
  %v11 = vld [vmem:[%s0 + $0x18] sm:$0xff]
  %v12 = vld [vmem:[%s0 + $0x20] sm:$0xff]
  %v13 = vld [vmem:[%s0 + $0x28] sm:$0xff]
  %v14 = vld [vmem:[%s0 + $0x30] sm:$0xff]
  %v15 = vld [vmem:[%s0 + $0x38] sm:$0xff]
  %v16 = vld [vmem:[%s0 + $0x40] sm:$0xff]
  %v17 = vld [vmem:[%s0 + $0x48] sm:$0xff]
  %v18 = vld [vmem:[%s0 + $0x50] sm:$0xff]
  %v19 = vld [vmem:[%s0 + $0x58] sm:$0xff]
  %v20 = vld [vmem:[%s0 + $0x60] sm:$0xff]
  %v21 = vld [vmem:[%s0 + $0x68] sm:$0xff]
  %v22 = vld [vmem:[%s0 + $0x70] sm:$0xff]
  %v23 = vld [vmem:[%s0 + $0x78] sm:$0xff]
  %v24 = vld [vmem:[%s0 + $0x80] sm:$0xff]
  %v25 = vld [vmem:[%s0 + $0x88] sm:$0xff]
  %v26 = vld [vmem:[%s0 + $0x90] sm:$0xff]
  %v27 = vld [vmem:[%s0 + $0x98] sm:$0xff]
  %v28 = vld [vmem:[%s0 + $0xa0] sm:$0xff]
  %v29 = vld [vmem:[%s0 + $0xa8] sm:$0xff]
  %v30 = vld [vmem:[%s0 + $0xb0] sm:$0xff]
  %v31 = vld [vmem:[%s0 + $0xb8] sm:$0xff]
  %v32 = vld [vmem:[%s0 + $0xc0] sm:$0xff]
  %v33 = vld [vmem:[%s0 + $0xc8] sm:$0xff]
  %v34 = vld [vmem:[%s0 + $0xd0] sm:$0xff]
  %v35 = vld [vmem:[%s0 + $0xd8] sm:$0xff]
  %v36 = vld [vmem:[%s0 + $0xe0] sm:$0xff]
  %v37 = vld [vmem:[%s0 + $0xe8] sm:$0xff]
  %v38 = vld [vmem:[%s0 + $0xf0] sm:$0xff]
  %v39 = vld [vmem:[%s0 + $0xf8] sm:$0xff]
  %v40 = vld [vmem:[%s0 + $0x100] sm:$0xff]
  %v41 = vld [vmem:[%s0 + $0x108] sm:$0xff]
  %v42 = vld [vmem:[%s0 + $0x110] sm:$0xff]
  %v43 = vld [vmem:[%s0 + $0x118] sm:$0xff]
  %vm44 = vcmask 23552
  %v45 = vsel %vm44, %v8, 0.0
  %v46 = vsel %vm44, %v12, 0.0
  %v47 = vadd.f32 %v45, %v46
  %v48 = vsel %vm44, %v16, 0.0
  %v49 = vadd.f32 %v47, %v48
  %v50 = vsel %vm44, %v20, 0.0
  %v51 = vadd.f32 %v49, %v50
  %v52 = vsel %vm44, %v24, 0.0
  %v53 = vadd.f32 %v51, %v52
  %v54 = vsel %vm44, %v28, 0.0
  %v55 = vadd.f32 %v53, %v54
  %v56 = vsel %vm44, %v32, 0.0
  %v57 = vadd.f32 %v55, %v56
  %v58 = vsel %vm44, %v36, 0.0
  %v59 = vadd.f32 %v57, %v58
  %v60 = vsel %vm44, %v40, 0.0
  %v61 = vadd.f32 %v59, %v60
  %v62 = vsel %vm44, %v9, 0.0
  %v63 = vsel %vm44, %v13, 0.0
  %v64 = vadd.f32 %v62, %v63
  %v65 = vsel %vm44, %v17, 0.0
  %v66 = vadd.f32 %v64, %v65
  %v67 = vsel %vm44, %v21, 0.0
  %v68 = vadd.f32 %v66, %v67
  %v69 = vsel %vm44, %v25, 0.0
  %v70 = vadd.f32 %v68, %v69
  %v71 = vsel %vm44, %v29, 0.0
  %v72 = vadd.f32 %v70, %v71
  %v73 = vsel %vm44, %v33, 0.0
  %v74 = vadd.f32 %v72, %v73
  %v75 = vsel %vm44, %v37, 0.0
  %v76 = vadd.f32 %v74, %v75
  %v77 = vsel %vm44, %v41, 0.0
  %v78 = vadd.f32 %v76, %v77
  %v79 = vsel %vm44, %v10, 0.0
  %v80 = vsel %vm44, %v14, 0.0
  %v81 = vadd.f32 %v79, %v80
  %v82 = vsel %vm44, %v18, 0.0
  %v83 = vadd.f32 %v81, %v82
  %v84 = vsel %vm44, %v22, 0.0
  %v85 = vadd.f32 %v83, %v84
  %v86 = vsel %vm44, %v26, 0.0
  %v87 = vadd.f32 %v85, %v86
  %v88 = vsel %vm44, %v30, 0.0
  %v89 = vadd.f32 %v87, %v88
  %v90 = vsel %vm44, %v34, 0.0
  %v91 = vadd.f32 %v89, %v90
  %v92 = vsel %vm44, %v38, 0.0
  %v93 = vadd.f32 %v91, %v92
  %v94 = vsel %vm44, %v42, 0.0
  %v95 = vadd.f32 %v93, %v94
  %v96 = vsel %vm44, %v11, 0.0
  %v97 = vsel %vm44, %v15, 0.0
  %v98 = vadd.f32 %v96, %v97
  %v99 = vsel %vm44, %v19, 0.0
  %v100 = vadd.f32 %v98, %v99
  %v101 = vsel %vm44, %v23, 0.0
  %v102 = vadd.f32 %v100, %v101
  %v103 = vsel %vm44, %v27, 0.0
  %v104 = vadd.f32 %v102, %v103
  %v105 = vsel %vm44, %v31, 0.0
  %v106 = vadd.f32 %v104, %v105
  %v107 = vsel %vm44, %v35, 0.0
  %v108 = vadd.f32 %v106, %v107
  %v109 = vsel %vm44, %v39, 0.0
  %v110 = vadd.f32 %v108, %v109
  %v111 = vsel %vm44, %v43, 0.0
  %v112 = vadd.f32 %v110, %v111
  %v113 = vmul.f32 %v61, 0.11111111
  %v114 = vmul.f32 %v78, 0.11111111
  %v115 = vmul.f32 %v95, 0.11111111
  %v116 = vmul.f32 %v112, 0.11111111
  %117 = vst.msk [vmem:[%s1] sm:$0xff] %vm44, %v113
  %118 = vst.msk [vmem:[%s1 + $0x8] sm:$0xff] %vm44, %v114
  %119 = vst.msk [vmem:[%s1 + $0x10] sm:$0xff] %vm44, %v115
  %120 = vst.msk [vmem:[%s1 + $0x18] sm:$0xff] %vm44, %v116
  // Predicated region
  $region6: #{espnet_forward.21} parent=0 // pred_check
    _
  $region7: #{espnet_forward.21} parent=0 // pred_check_branch
    %122 = sbr.rel (0) target = $region9
  $region8: #{espnet_forward.21} parent=0 // pred_region
    _
  $region9: #{espnet_forward.21} parent=0 // pred_fallthru
    _
  // Predicated region
  $region10: #{espnet_forward.21} parent=0 // pred_check
    _
  $region11: #{espnet_forward.21} parent=0 // pred_check_branch
    %124 = sbr.rel (0) target = $region13
  $region12: #{espnet_forward.21} parent=0 // pred_region
    _
  $region13: #{espnet_forward.21} parent=0 // pred_fallthru
    _

// kernel: espnet_forward.22
$region0: #{espnet_forward.22}
  #allocation0 [shape = 'u32[]', space=smem, size = 0x4, offset = 0x4, fixed_abs, tag = 'smem constant byte address 0x4 - core index']
  #allocation1 [shape = 'u32[72,128]{1,0:T(1,128)}', space=vmem, size = 0x9000, scoped, tag = 'internal scratch']
  %s0 = inlined_call_operand.vmem [shape: bf16[128,27], index: 0, kind: input, shape index: {}]
  %s1 = inlined_call_operand.vmem [shape: bf16[27,16], index: 1, kind: input, shape index: {}]
  %s2 = inlined_call_operand.vmem [shape: f32[1,16], index: 2, kind: input, shape index: {}]
  %s3 = inlined_call_operand.vmem [shape: f32[1,16], index: 3, kind: input, shape index: {}]
  %s4 = inlined_call_operand.vmem [shape: f32[1,16], index: 4, kind: input, shape index: {}]
  %s5 = inlined_call_operand.vmem [shape: f32[128,16], index: 5, kind: output, shape index: {}]
  %s6 = sld [smem:[#allocation0]]
  $region30: #{espnet_forward.22} parent=0
    _
  %s8 = ssub.s32 1, %s6
  %s9 = scalar_select 0, %s8, %s6
  // Predicated region
  $region2: #{espnet_forward.22} parent=0 // pred_check
    _
  $region3: #{espnet_forward.22} parent=0 // pred_check_branch
    %11 = sbr.rel (0) target = $region5
  $region4: #{espnet_forward.22} parent=0 // pred_region
    _
  $region5: #{espnet_forward.22} parent=0 // pred_fallthru
    _
  // Predicated region
  $region6: #{espnet_forward.22} parent=0 // pred_check
    _
  $region7: #{espnet_forward.22} parent=0 // pred_check_branch
    %13 = sbr.rel (0) target = $region9
  $region8: #{espnet_forward.22} parent=0 // pred_region
    _
  $region9: #{espnet_forward.22} parent=0 // pred_fallthru
    _
  // Predicated region
  $region10: #{espnet_forward.22} parent=0 // pred_check
    _
  $region11: #{espnet_forward.22} parent=0 // pred_check_branch
    %15 = sbr.rel (0) target = $region13
  $region12: #{espnet_forward.22} parent=0 // pred_region
    _
  $region13: #{espnet_forward.22} parent=0 // pred_fallthru
    _
  // Predicated region
  $region14: #{espnet_forward.22} parent=0 // pred_check
    _
  $region15: #{espnet_forward.22} parent=0 // pred_check_branch
    %17 = sbr.rel (0) target = $region17
  $region16: #{espnet_forward.22} parent=0 // pred_region
    _
  $region17: #{espnet_forward.22} parent=0 // pred_fallthru
    _
  // Predicated region
  $region18: #{espnet_forward.22} parent=0 // pred_check
    _
  $region19: #{espnet_forward.22} parent=0 // pred_check_branch
    %19 = sbr.rel (0) target = $region21
  $region20: #{espnet_forward.22} parent=0 // pred_region
    _
  $region21: #{espnet_forward.22} parent=0 // pred_fallthru
    _
  %v21 = vld [vmem:[%s0] sm:$0xf]
  %v22 = vld [vmem:[%s0 + $0x4] sm:$0xf]
  %v23 = vld [vmem:[%s0 + $0x8] sm:$0xf]
  %v24 = vld [vmem:[%s0 + $0xc] sm:$0xf]
  %v25 = vld [vmem:[%s0 + $0x10] sm:$0xf]
  %v26 = vld [vmem:[%s0 + $0x14] sm:$0xf]
  %v27 = vld [vmem:[%s0 + $0x18] sm:$0xf]
  %v28 = vld [vmem:[%s0 + $0x1c] sm:$0xf]
  %v29 = vld [vmem:[%s0 + $0x20] sm:$0xf]
  %v30 = vld [vmem:[%s0 + $0x24] sm:$0xf]
  %v31 = vld [vmem:[%s0 + $0x28] sm:$0xf]
  %v32 = vld [vmem:[%s0 + $0x2c] sm:$0xf]
  %v33 = vld [vmem:[%s0 + $0x30] sm:$0xf]
  %v34 = vld [vmem:[%s0 + $0x34] sm:$0xf]
  %v35 = vld [vmem:[%s0 + $0x38] sm:$0xf]
  %v36 = vld [vmem:[%s0 + $0x3c] sm:$0xf]
  %v37 = vld [vmem:[%s1] sm:$0xf]
  %v38 = vld [vmem:[%s1 + $0x4] sm:$0xf]
  %v39 = vld [vmem:[%s1 + $0x8] sm:$0xf]
  %v40 = vld [vmem:[%s1 + $0xc] sm:$0x3]
  %v57 = vunpack.c.l.b16 %v21
  %v58 = vunpack.c.l.b16 %v22
  %v59 = vunpack.c.l.b16 %v23
  %v60 = vunpack.c.l.b16 %v24
  %v61 = vunpack.c.l.b16 %v25
  %v62 = vunpack.c.l.b16 %v26
  %v63 = vunpack.c.l.b16 %v27
  %v64 = vunpack.c.l.b16 %v28
  %v65 = vunpack.c.l.b16 %v29
  %v66 = vunpack.c.l.b16 %v30
  %v67 = vunpack.c.l.b16 %v31
  %v68 = vunpack.c.l.b16 %v32
  %v69 = vunpack.c.l.b16 %v33
  %v70 = vunpack.c.l.b16 %v34
  %v71 = vunpack.c.l.b16 %v35
  %v72 = vunpack.c.l.b16 %v36
  %v73 = vpack.c.b16 %v58, %v57
  %v74 = vpack.c.b16 %v60, %v59
  %v75 = vpack.c.b16 %v62, %v61
  %v76 = vpack.c.b16 %v64, %v63
  %v77 = vpack.c.b16 %v66, %v65
  %v78 = vpack.c.b16 %v68, %v67
  %v79 = vpack.c.b16 %v70, %v69
  %v80 = vpack.c.b16 %v72, %v71
  %v85 = vunpack.c.l.b16 %v37
  %v86 = vunpack.c.l.b16 %v38
  %v87 = vunpack.c.l.b16 %v39
  %v88 = vunpack.c.l.b16 %v40
  %v89 = vpack.c.b16 %v86, %v85
  %v90 = vpack.c.b16 %v88, %v87
  %vm92 = vcmask 220160
  %v94 = vsel %vm92, %v73, 0
  %v97 = vsel %vm92, %v74, 0
  %v100 = vsel %vm92, %v75, 0
  %v103 = vsel %vm92, %v76, 0
  %v106 = vsel %vm92, %v77, 0
  %v109 = vsel %vm92, %v78, 0
  %v112 = vsel %vm92, %v79, 0
  %v115 = vsel %vm92, %v80, 0
  %vm117 = vcmask 1044480
  %vm118 = vcmask 1045504
  %v119 = vsel %vm117, 4294967295, 65535
  %v120 = vsel %vm118, %v119, 0
  %v122 = vand.u32 %v90, %v120
  %124 = vmatpush.bf16.msra.mxu0 0
  %125 = vmatpush.bf16.msra.mxu0 0
  %126 = vmatpush.bf16.msra.mxu0 0
  %127 = vmatpush.bf16.msra.mxu0 0
  %128 = vmatpush.bf16.msra.mxu0 0
  %129 = vmatpush.bf16.msra.mxu0 0
  %130 = vmatpush.bf16.msra.mxu0 %v122
  %131 = vmatpush.bf16.msra.mxu0 %v89
  %132 = vmatmul.bf16.gmra.mxu0 %v94
  %v133 = vpop.f32.mrf.mxu0
  %v134 = vadd.f32 0.0, %v133
  %v135 = vpop.f32.mrf.mxu0
  %v136 = vadd.f32 0.0, %v135
  %137 = vmatmul.bf16.gmra.mxu0 %v97
  %v138 = vpop.f32.mrf.mxu0
  %v139 = vadd.f32 0.0, %v138
  %v140 = vpop.f32.mrf.mxu0
  %v141 = vadd.f32 0.0, %v140
  %142 = vmatmul.bf16.gmra.mxu0 %v100
  %v143 = vpop.f32.mrf.mxu0
  %v144 = vadd.f32 0.0, %v143
  %v145 = vpop.f32.mrf.mxu0
  %v146 = vadd.f32 0.0, %v145
  %147 = vmatmul.bf16.gmra.mxu0 %v103
  %v148 = vpop.f32.mrf.mxu0
  %v149 = vadd.f32 0.0, %v148
  %v150 = vpop.f32.mrf.mxu0
  %v151 = vadd.f32 0.0, %v150
  %152 = vmatmul.bf16.gmra.mxu0 %v106
  %v153 = vpop.f32.mrf.mxu0
  %v154 = vadd.f32 0.0, %v153
  %v155 = vpop.f32.mrf.mxu0
  %v156 = vadd.f32 0.0, %v155
  %157 = vmatmul.bf16.gmra.mxu0 %v109
  %v158 = vpop.f32.mrf.mxu0
  %v159 = vadd.f32 0.0, %v158
  %v160 = vpop.f32.mrf.mxu0
  %v161 = vadd.f32 0.0, %v160
  %162 = vmatmul.bf16.gmra.mxu0 %v112
  %v163 = vpop.f32.mrf.mxu0
  %v164 = vadd.f32 0.0, %v163
  %v165 = vpop.f32.mrf.mxu0
  %v166 = vadd.f32 0.0, %v165
  %167 = vmatmul.bf16.gmra.mxu0 %v115
  %v168 = vpop.f32.mrf.mxu0
  %v169 = vadd.f32 0.0, %v168
  %v170 = vpop.f32.mrf.mxu0
  %v171 = vadd.f32 0.0, %v170
  %172 = vdwg.mxu0
  %v173 = vld [vmem:[%s2] sm:$0x1]
  %v174 = vld [vmem:[%s3] sm:$0x1]
  %v175 = vld [vmem:[%s4] sm:$0x1]
  %vm176 = vcmask 130048
  %v177 = vsel %vm176, %v134, 0.0
  %v178 = vsel %vm176, %v136, 0.0
  %v179 = vadd.f32 %v177, %v178
  %v180 = vsel %vm176, %v139, 0.0
  %v181 = vadd.f32 %v179, %v180
  %v182 = vsel %vm176, %v141, 0.0
  %v183 = vadd.f32 %v181, %v182
  %v184 = vsel %vm176, %v144, 0.0
  %v185 = vadd.f32 %v183, %v184
  %v186 = vsel %vm176, %v146, 0.0
  %v187 = vadd.f32 %v185, %v186
  %v188 = vsel %vm176, %v149, 0.0
  %v189 = vadd.f32 %v187, %v188
  %v190 = vsel %vm176, %v151, 0.0
  %v191 = vadd.f32 %v189, %v190
  %v192 = vsel %vm176, %v154, 0.0
  %v193 = vadd.f32 %v191, %v192
  %v194 = vsel %vm176, %v156, 0.0
  %v195 = vadd.f32 %v193, %v194
  %v196 = vsel %vm176, %v159, 0.0
  %v197 = vadd.f32 %v195, %v196
  %v198 = vsel %vm176, %v161, 0.0
  %v199 = vadd.f32 %v197, %v198
  %v200 = vsel %vm176, %v164, 0.0
  %v201 = vadd.f32 %v199, %v200
  %v202 = vsel %vm176, %v166, 0.0
  %v203 = vadd.f32 %v201, %v202
  %v204 = vsel %vm176, %v169, 0.0
  %v205 = vadd.f32 %v203, %v204
  %v206 = vsel %vm176, %v171, 0.0
  %v207 = vadd.f32 %v205, %v206
  %v208 = vrot.slane %v207, 4
  %v209 = vadd.f32 %v207, %v208
  %v210 = vrot.slane %v209, 2
  %v211 = vadd.f32 %v209, %v210
  %v212 = vrot.slane %v211, 1
  %v213 = vadd.f32 %v211, %v212
  %v214 = vrcp.pop 128.0
  %v215 = vmul.f32 128.0, %v214
  %v216 = vsub.f32 1.0, %v215
  %v217 = vmul.f32 %v214, %v216
  %v218 = vadd.f32 %v214, %v217
  %vm219 = vweird.f32 %v214
  %v220 = vsel %vm219, %v214, %v218
  %v221 = vmul.f32 %v213, %v220
  %v222 = vsub.f32 %v134, %v221
  %v223 = vsub.f32 %v136, %v221
  %v224 = vsub.f32 %v139, %v221
  %v225 = vsub.f32 %v141, %v221
  %v226 = vsub.f32 %v144, %v221
  %v227 = vsub.f32 %v146, %v221
  %v228 = vsub.f32 %v149, %v221
  %v229 = vsub.f32 %v151, %v221
  %v230 = vsub.f32 %v154, %v221
  %v231 = vsub.f32 %v156, %v221
  %v232 = vsub.f32 %v159, %v221
  %v233 = vsub.f32 %v161, %v221
  %v234 = vsub.f32 %v164, %v221
  %v235 = vsub.f32 %v166, %v221
  %v236 = vsub.f32 %v169, %v221
  %v237 = vsub.f32 %v171, %v221
  %v238 = vmul.f32 %v222, %v222
  %v239 = vmul.f32 %v223, %v223
  %v240 = vmul.f32 %v224, %v224
  %v241 = vmul.f32 %v225, %v225
  %v242 = vmul.f32 %v226, %v226
  %v243 = vmul.f32 %v227, %v227
  %v244 = vmul.f32 %v228, %v228
  %v245 = vmul.f32 %v229, %v229
  %v246 = vmul.f32 %v230, %v230
  %v247 = vmul.f32 %v231, %v231
  %v248 = vmul.f32 %v232, %v232
  %v249 = vmul.f32 %v233, %v233
  %v250 = vmul.f32 %v234, %v234
  %v251 = vmul.f32 %v235, %v235
  %v252 = vmul.f32 %v236, %v236
  %v253 = vmul.f32 %v237, %v237
  %v254 = vsel %vm176, %v238, 0.0
  %v255 = vsel %vm176, %v239, 0.0
  %v256 = vadd.f32 %v254, %v255
  %v257 = vsel %vm176, %v240, 0.0
  %v258 = vadd.f32 %v256, %v257
  %v259 = vsel %vm176, %v241, 0.0
  %v260 = vadd.f32 %v258, %v259
  %v261 = vsel %vm176, %v242, 0.0
  %v262 = vadd.f32 %v260, %v261
  %v263 = vsel %vm176, %v243, 0.0
  %v264 = vadd.f32 %v262, %v263
  %v265 = vsel %vm176, %v244, 0.0
  %v266 = vadd.f32 %v264, %v265
  %v267 = vsel %vm176, %v245, 0.0
  %v268 = vadd.f32 %v266, %v267
  %v269 = vsel %vm176, %v246, 0.0
  %v270 = vadd.f32 %v268, %v269
  %v271 = vsel %vm176, %v247, 0.0
  %v272 = vadd.f32 %v270, %v271
  %v273 = vsel %vm176, %v248, 0.0
  %v274 = vadd.f32 %v272, %v273
  %v275 = vsel %vm176, %v249, 0.0
  %v276 = vadd.f32 %v274, %v275
  %v277 = vsel %vm176, %v250, 0.0
  %v278 = vadd.f32 %v276, %v277
  %v279 = vsel %vm176, %v251, 0.0
  %v280 = vadd.f32 %v278, %v279
  %v281 = vsel %vm176, %v252, 0.0
  %v282 = vadd.f32 %v280, %v281
  %v283 = vsel %vm176, %v253, 0.0
  %v284 = vadd.f32 %v282, %v283
  %v285 = vrot.slane %v284, 4
  %v286 = vadd.f32 %v284, %v285
  %v287 = vrot.slane %v286, 2
  %v288 = vadd.f32 %v286, %v287
  %v289 = vrot.slane %v288, 1
  %v290 = vadd.f32 %v288, %v289
  %v291 = vmul.f32 %v290, %v220
  %v292 = vadd.f32 %v291, 1e-05
  %v293 = vrsqrt.pop %v292
  %v294 = vmul.f32 %v293, %v292
  %v295 = vmul.f32 %v294, %v293
  %v296 = vmul.f32 0.5, %v295
  %v297 = vsub.f32 1.5, %v296
  %v298 = vmul.f32 %v293, %v297
  %vm299 = vweird.f32 %v292
  %vm300 = vweird.f32 %v293
  %vm301 = vmor %vm299, %vm300
  %v302 = vsel %vm301, %v293, %v298
  %v303 = vmul.f32 %v222, %v302
  %v304 = vmul.f32 %v223, %v302
  %v305 = vmul.f32 %v224, %v302
  %v306 = vmul.f32 %v225, %v302
  %v307 = vmul.f32 %v226, %v302
  %v308 = vmul.f32 %v227, %v302
  %v309 = vmul.f32 %v228, %v302
  %v310 = vmul.f32 %v229, %v302
  %v311 = vmul.f32 %v230, %v302
  %v312 = vmul.f32 %v231, %v302
  %v313 = vmul.f32 %v232, %v302
  %v314 = vmul.f32 %v233, %v302
  %v315 = vmul.f32 %v234, %v302
  %v316 = vmul.f32 %v235, %v302
  %v317 = vmul.f32 %v236, %v302
  %v318 = vmul.f32 %v237, %v302
  %v320 = vperm.slane %v173, 0
  %v322 = vmul.f32 %v303, %v320
  %v323 = vmul.f32 %v304, %v320
  %v324 = vmul.f32 %v305, %v320
  %v325 = vmul.f32 %v306, %v320
  %v326 = vmul.f32 %v307, %v320
  %v327 = vmul.f32 %v308, %v320
  %v328 = vmul.f32 %v309, %v320
  %v329 = vmul.f32 %v310, %v320
  %v330 = vmul.f32 %v311, %v320
  %v331 = vmul.f32 %v312, %v320
  %v332 = vmul.f32 %v313, %v320
  %v333 = vmul.f32 %v314, %v320
  %v334 = vmul.f32 %v315, %v320
  %v335 = vmul.f32 %v316, %v320
  %v336 = vmul.f32 %v317, %v320
  %v337 = vmul.f32 %v318, %v320
  %v339 = vperm.slane %v174, 0
  %v341 = vadd.f32 %v322, %v339
  %v342 = vadd.f32 %v323, %v339
  %v343 = vadd.f32 %v324, %v339
  %v344 = vadd.f32 %v325, %v339
  %v345 = vadd.f32 %v326, %v339
  %v346 = vadd.f32 %v327, %v339
  %v347 = vadd.f32 %v328, %v339
  %v348 = vadd.f32 %v329, %v339
  %v349 = vadd.f32 %v330, %v339
  %v350 = vadd.f32 %v331, %v339
  %v351 = vadd.f32 %v332, %v339
  %v352 = vadd.f32 %v333, %v339
  %v353 = vadd.f32 %v334, %v339
  %v354 = vadd.f32 %v335, %v339
  %v355 = vadd.f32 %v336, %v339
  %v356 = vadd.f32 %v337, %v339
  %vm357 = vcmp.gt.f32.partialorder %v341, 0.0
  %vm358 = vcmp.gt.f32.partialorder %v342, 0.0
  %vm359 = vcmp.gt.f32.partialorder %v343, 0.0
  %vm360 = vcmp.gt.f32.partialorder %v344, 0.0
  %vm361 = vcmp.gt.f32.partialorder %v345, 0.0
  %vm362 = vcmp.gt.f32.partialorder %v346, 0.0
  %vm363 = vcmp.gt.f32.partialorder %v347, 0.0
  %vm364 = vcmp.gt.f32.partialorder %v348, 0.0
  %vm365 = vcmp.gt.f32.partialorder %v349, 0.0
  %vm366 = vcmp.gt.f32.partialorder %v350, 0.0
  %vm367 = vcmp.gt.f32.partialorder %v351, 0.0
  %vm368 = vcmp.gt.f32.partialorder %v352, 0.0
  %vm369 = vcmp.gt.f32.partialorder %v353, 0.0
  %vm370 = vcmp.gt.f32.partialorder %v354, 0.0
  %vm371 = vcmp.gt.f32.partialorder %v355, 0.0
  %vm372 = vcmp.gt.f32.partialorder %v356, 0.0
  %v374 = vperm.slane %v175, 0
  %v376 = vmul.f32 %v374, %v341
  %v377 = vmul.f32 %v374, %v342
  %v378 = vmul.f32 %v374, %v343
  %v379 = vmul.f32 %v374, %v344
  %v380 = vmul.f32 %v374, %v345
  %v381 = vmul.f32 %v374, %v346
  %v382 = vmul.f32 %v374, %v347
  %v383 = vmul.f32 %v374, %v348
  %v384 = vmul.f32 %v374, %v349
  %v385 = vmul.f32 %v374, %v350
  %v386 = vmul.f32 %v374, %v351
  %v387 = vmul.f32 %v374, %v352
  %v388 = vmul.f32 %v374, %v353
  %v389 = vmul.f32 %v374, %v354
  %v390 = vmul.f32 %v374, %v355
  %v391 = vmul.f32 %v374, %v356
  %v392 = vsel %vm357, %v341, %v376
  %v393 = vsel %vm358, %v342, %v377
  %v394 = vsel %vm359, %v343, %v378
  %v395 = vsel %vm360, %v344, %v379
  %v396 = vsel %vm361, %v345, %v380
  %v397 = vsel %vm362, %v346, %v381
  %v398 = vsel %vm363, %v347, %v382
  %v399 = vsel %vm364, %v348, %v383
  %v400 = vsel %vm365, %v349, %v384
  %v401 = vsel %vm366, %v350, %v385
  %v402 = vsel %vm367, %v351, %v386
  %v403 = vsel %vm368, %v352, %v387
  %v404 = vsel %vm369, %v353, %v388
  %v405 = vsel %vm370, %v354, %v389
  %v406 = vsel %vm371, %v355, %v390
  %v407 = vsel %vm372, %v356, %v391
  %408 = vst.msk [vmem:[%s5] sm:$0xff] %vm176, %v392
  %409 = vst.msk [vmem:[%s5 + $0x8] sm:$0xff] %vm176, %v393
  %410 = vst.msk [vmem:[%s5 + $0x10] sm:$0xff] %vm176, %v394
  %411 = vst.msk [vmem:[%s5 + $0x18] sm:$0xff] %vm176, %v395
  %412 = vst.msk [vmem:[%s5 + $0x20] sm:$0xff] %vm176, %v396
  %413 = vst.msk [vmem:[%s5 + $0x28] sm:$0xff] %vm176, %v397
  %414 = vst.msk [vmem:[%s5 + $0x30] sm:$0xff] %vm176, %v398
  %415 = vst.msk [vmem:[%s5 + $0x38] sm:$0xff] %vm176, %v399
  %416 = vst.msk [vmem:[%s5 + $0x40] sm:$0xff] %vm176, %v400
  %417 = vst.msk [vmem:[%s5 + $0x48] sm:$0xff] %vm176, %v401
  %418 = vst.msk [vmem:[%s5 + $0x50] sm:$0xff] %vm176, %v402
  %419 = vst.msk [vmem:[%s5 + $0x58] sm:$0xff] %vm176, %v403
  %420 = vst.msk [vmem:[%s5 + $0x60] sm:$0xff] %vm176, %v404
  %421 = vst.msk [vmem:[%s5 + $0x68] sm:$0xff] %vm176, %v405
  %422 = vst.msk [vmem:[%s5 + $0x70] sm:$0xff] %vm176, %v406
  %423 = vst.msk [vmem:[%s5 + $0x78] sm:$0xff] %vm176, %v407
  // Predicated region
  $region22: #{espnet_forward.22} parent=0 // pred_check
    _
  $region23: #{espnet_forward.22} parent=0 // pred_check_branch
    %425 = sbr.rel (0) target = $region25
  $region24: #{espnet_forward.22} parent=0 // pred_region
    _
  $region25: #{espnet_forward.22} parent=0 // pred_fallthru
    _
  // Predicated region
  $region26: #{espnet_forward.22} parent=0 // pred_check
    _
  $region27: #{espnet_forward.22} parent=0 // pred_check_branch
    %427 = sbr.rel (0) target = $region29
  $region28: #{espnet_forward.22} parent=0 // pred_region
    _
  $region29: #{espnet_forward.22} parent=0 // pred_fallthru
    _

// kernel: espnet_forward.23
$region0: #{espnet_forward.23}
  #allocation0 [shape = 'u32[]', space=smem, size = 0x4, offset = 0x4, fixed_abs, tag = 'smem constant byte address 0x4 - core index']
  #allocation1 [shape = 'u32[72,128]{1,0:T(1,128)}', space=vmem, size = 0x9000, scoped, tag = 'internal scratch']
  %s0 = inlined_call_operand.vmem [shape: bf16[32,171], index: 0, kind: input, shape index: {}]
  %s1 = inlined_call_operand.vmem [shape: bf16[171,12], index: 1, kind: input, shape index: {}]
  %s2 = inlined_call_operand.vmem [shape: f32[1,12], index: 2, kind: input, shape index: {}]
  %s3 = inlined_call_operand.vmem [shape: f32[1,12], index: 3, kind: input, shape index: {}]
  %s4 = inlined_call_operand.vmem [shape: f32[1,12], index: 4, kind: input, shape index: {}]
  %s5 = inlined_call_operand.vmem [shape: f32[32,12], index: 5, kind: output, shape index: {}]
  %s6 = sld [smem:[#allocation0]]
  $region30: #{espnet_forward.23} parent=0
    _
  %s8 = ssub.s32 1, %s6
  %s9 = scalar_select 0, %s8, %s6
  // Predicated region
  $region2: #{espnet_forward.23} parent=0 // pred_check
    _
  $region3: #{espnet_forward.23} parent=0 // pred_check_branch
    %11 = sbr.rel (0) target = $region5
  $region4: #{espnet_forward.23} parent=0 // pred_region
    _
  $region5: #{espnet_forward.23} parent=0 // pred_fallthru
    _
  // Predicated region
  $region6: #{espnet_forward.23} parent=0 // pred_check
    _
  $region7: #{espnet_forward.23} parent=0 // pred_check_branch
    %13 = sbr.rel (0) target = $region9
  $region8: #{espnet_forward.23} parent=0 // pred_region
    _
  $region9: #{espnet_forward.23} parent=0 // pred_fallthru
    _
  // Predicated region
  $region10: #{espnet_forward.23} parent=0 // pred_check
    _
  $region11: #{espnet_forward.23} parent=0 // pred_check_branch
    %15 = sbr.rel (0) target = $region13
  $region12: #{espnet_forward.23} parent=0 // pred_region
    _
  $region13: #{espnet_forward.23} parent=0 // pred_fallthru
    _
  // Predicated region
  $region14: #{espnet_forward.23} parent=0 // pred_check
    _
  $region15: #{espnet_forward.23} parent=0 // pred_check_branch
    %17 = sbr.rel (0) target = $region17
  $region16: #{espnet_forward.23} parent=0 // pred_region
    _
  $region17: #{espnet_forward.23} parent=0 // pred_fallthru
    _
  // Predicated region
  $region18: #{espnet_forward.23} parent=0 // pred_check
    _
  $region19: #{espnet_forward.23} parent=0 // pred_check_branch
    %19 = sbr.rel (0) target = $region21
  $region20: #{espnet_forward.23} parent=0 // pred_region
    _
  $region21: #{espnet_forward.23} parent=0 // pred_fallthru
    _
  %v21 = vld [vmem:[%s0] sm:$0xff]
  %v22 = vld [vmem:[%s0 + $0x8] sm:$0xff]
  %v23 = vld [vmem:[%s0 + $0x10] sm:$0xff]
  %v24 = vld [vmem:[%s0 + $0x18] sm:$0xff]
  %v25 = vld [vmem:[%s1] sm:$0xf]
  %v26 = vld [vmem:[%s1 + $0x4] sm:$0xf]
  %v27 = vld [vmem:[%s1 + $0x8] sm:$0xf]
  %v28 = vld [vmem:[%s1 + $0xc] sm:$0xf]
  %v29 = vld [vmem:[%s1 + $0x10] sm:$0xf]
  %v30 = vld [vmem:[%s1 + $0x14] sm:$0xf]
  %v31 = vld [vmem:[%s1 + $0x18] sm:$0xf]
  %v32 = vld [vmem:[%s1 + $0x1c] sm:$0xf]
  %v33 = vld [vmem:[%s1 + $0x20] sm:$0xf]
  %v34 = vld [vmem:[%s1 + $0x24] sm:$0xf]
  %v35 = vld [vmem:[%s1 + $0x28] sm:$0xf]
  %v36 = vld [vmem:[%s1 + $0x2c] sm:$0xf]
  %v37 = vld [vmem:[%s1 + $0x30] sm:$0xf]
  %v38 = vld [vmem:[%s1 + $0x34] sm:$0xf]
  %v39 = vld [vmem:[%s1 + $0x38] sm:$0xf]
  %v40 = vld [vmem:[%s1 + $0x3c] sm:$0xf]
  %v41 = vld [vmem:[%s1 + $0x40] sm:$0xf]
  %v42 = vld [vmem:[%s1 + $0x44] sm:$0xf]
  %v43 = vld [vmem:[%s1 + $0x48] sm:$0xf]
  %v44 = vld [vmem:[%s1 + $0x4c] sm:$0xf]
  %v45 = vld [vmem:[%s1 + $0x50] sm:$0xf]
  %v46 = vld [vmem:[%s1 + $0x54] sm:$0x3]
  %v51 = vunpack.c.l.b16 %v21
  %v52 = vunpack.c.h.b16 %v21
  %v53 = vunpack.c.l.b16 %v22
  %v54 = vunpack.c.h.b16 %v22
  %v55 = vunpack.c.l.b16 %v23
  %v56 = vunpack.c.h.b16 %v23
  %v57 = vunpack.c.l.b16 %v24
  %v58 = vunpack.c.h.b16 %v24
  %v59 = vpack.c.b16 %v53, %v51
  %v60 = vpack.c.b16 %v54, %v52
  %v61 = vpack.c.b16 %v57, %v55
  %v62 = vpack.c.b16 %v58, %v56
  %v87 = vunpack.c.l.b16 %v25
  %v88 = vunpack.c.l.b16 %v26
  %v89 = vunpack.c.l.b16 %v27
  %v90 = vunpack.c.l.b16 %v28
  %v91 = vunpack.c.l.b16 %v29
  %v92 = vunpack.c.l.b16 %v30
  %v93 = vunpack.c.l.b16 %v31
  %v94 = vunpack.c.l.b16 %v32
  %v95 = vunpack.c.l.b16 %v33
  %v96 = vunpack.c.l.b16 %v34
  %v97 = vunpack.c.l.b16 %v35
  %v98 = vunpack.c.l.b16 %v36
  %v99 = vunpack.c.l.b16 %v37
  %v100 = vunpack.c.l.b16 %v38
  %v101 = vunpack.c.l.b16 %v39
  %v102 = vunpack.c.l.b16 %v40
  %v103 = vunpack.c.l.b16 %v41
  %v104 = vunpack.c.l.b16 %v42
  %v105 = vunpack.c.l.b16 %v43
  %v106 = vunpack.c.l.b16 %v44
  %v107 = vunpack.c.l.b16 %v45
  %v108 = vunpack.c.l.b16 %v46
  %v109 = vpack.c.b16 %v88, %v87
  %v110 = vpack.c.b16 %v90, %v89
  %v111 = vpack.c.b16 %v92, %v91
  %v112 = vpack.c.b16 %v94, %v93
  %v113 = vpack.c.b16 %v96, %v95
  %v114 = vpack.c.b16 %v98, %v97
  %v115 = vpack.c.b16 %v100, %v99
  %v116 = vpack.c.b16 %v102, %v101
  %v117 = vpack.c.b16 %v104, %v103
  %v118 = vpack.c.b16 %v106, %v105
  %v119 = vpack.c.b16 %v108, %v107
  %vm130 = vcmask 351232
  %v132 = vsel %vm130, %v60, 0
  %v135 = vsel %vm130, %v62, 0
  %vm137 = vcmask 1044480
  %vm138 = vcmask 1045504
  %v139 = vsel %vm137, 4294967295, 65535
  %v140 = vsel %vm138, %v139, 0
  %v142 = vand.u32 %v119, %v140
  %144 = vmatpush.bf16.msra.mxu0 %v116
  %145 = vmatpush.bf16.msra.mxu0 %v115
  %146 = vmatpush.bf16.msra.mxu0 %v114
  %147 = vmatpush.bf16.msra.mxu0 %v113
  %148 = vmatpush.bf16.msra.mxu0 %v112
  %149 = vmatpush.bf16.msra.mxu0 %v111
  %150 = vmatpush.bf16.msra.mxu0 %v110
  %151 = vmatpush.bf16.msra.mxu0 %v109
  %152 = vmatmul.bf16.gmra.mxu0 %v59
  %v153 = vpop.f32.mrf.mxu0
  %v154 = vadd.f32 0.0, %v153
  %v155 = vpop.f32.mrf.mxu0
  %v156 = vadd.f32 0.0, %v155
  %157 = vmatmul.bf16.gmra.mxu0 %v61
  %v158 = vpop.f32.mrf.mxu0
  %v159 = vadd.f32 0.0, %v158
  %v160 = vpop.f32.mrf.mxu0
  %v161 = vadd.f32 0.0, %v160
  %162 = vdwg.mxu0
  %163 = vmatpush.bf16.msra.mxu0 0
  %164 = vmatpush.bf16.msra.mxu0 0
  %165 = vmatpush.bf16.msra.mxu0 0
  %166 = vmatpush.bf16.msra.mxu0 0
  %167 = vmatpush.bf16.msra.mxu0 0
  %168 = vmatpush.bf16.msra.mxu0 %v142
  %169 = vmatpush.bf16.msra.mxu0 %v118
  %170 = vmatpush.bf16.msra.mxu0 %v117
  %171 = vmatmul.bf16.gmra.mxu0 %v132
  %v172 = vpop.f32.mrf.mxu0
  %v173 = vadd.f32 %v154, %v172
  %v174 = vpop.f32.mrf.mxu0
  %v175 = vadd.f32 %v156, %v174
  %176 = vmatmul.bf16.gmra.mxu0 %v135
  %v177 = vpop.f32.mrf.mxu0
  %v178 = vadd.f32 %v159, %v177
  %v179 = vpop.f32.mrf.mxu0
  %v180 = vadd.f32 %v161, %v179
  %181 = vdwg.mxu0
  %v182 = vld [vmem:[%s2] sm:$0x1]
  %v183 = vld [vmem:[%s3] sm:$0x1]
  %v184 = vld [vmem:[%s4] sm:$0x1]
  %vm185 = vcmask 97280
  %v186 = vsel %vm185, %v173, 0.0
  %v187 = vsel %vm185, %v175, 0.0
  %v188 = vadd.f32 %v186, %v187
  %v189 = vsel %vm185, %v178, 0.0
  %v190 = vadd.f32 %v188, %v189
  %v191 = vsel %vm185, %v180, 0.0
  %v192 = vadd.f32 %v190, %v191
  %v193 = vrot.slane %v192, 4
  %v194 = vadd.f32 %v192, %v193
  %v195 = vrot.slane %v194, 2
  %v196 = vadd.f32 %v194, %v195
  %v197 = vrot.slane %v196, 1
  %v198 = vadd.f32 %v196, %v197
  %v199 = vrcp.pop 32.0
  %v200 = vmul.f32 32.0, %v199
  %v201 = vsub.f32 1.0, %v200
  %v202 = vmul.f32 %v199, %v201
  %v203 = vadd.f32 %v199, %v202
  %vm204 = vweird.f32 %v199
  %v205 = vsel %vm204, %v199, %v203
  %v206 = vmul.f32 %v198, %v205
  %v207 = vsub.f32 %v173, %v206
  %v208 = vsub.f32 %v175, %v206
  %v209 = vsub.f32 %v178, %v206
  %v210 = vsub.f32 %v180, %v206
  %v211 = vmul.f32 %v207, %v207
  %v212 = vmul.f32 %v208, %v208
  %v213 = vmul.f32 %v209, %v209
  %v214 = vmul.f32 %v210, %v210
  %v215 = vsel %vm185, %v211, 0.0
  %v216 = vsel %vm185, %v212, 0.0
  %v217 = vadd.f32 %v215, %v216
  %v218 = vsel %vm185, %v213, 0.0
  %v219 = vadd.f32 %v217, %v218
  %v220 = vsel %vm185, %v214, 0.0
  %v221 = vadd.f32 %v219, %v220
  %v222 = vrot.slane %v221, 4
  %v223 = vadd.f32 %v221, %v222
  %v224 = vrot.slane %v223, 2
  %v225 = vadd.f32 %v223, %v224
  %v226 = vrot.slane %v225, 1
  %v227 = vadd.f32 %v225, %v226
  %v228 = vmul.f32 %v227, %v205
  %v229 = vadd.f32 %v228, 1e-05
  %v230 = vrsqrt.pop %v229
  %v231 = vmul.f32 %v230, %v229
  %v232 = vmul.f32 %v231, %v230
  %v233 = vmul.f32 0.5, %v232
  %v234 = vsub.f32 1.5, %v233
  %v235 = vmul.f32 %v230, %v234
  %vm236 = vweird.f32 %v229
  %vm237 = vweird.f32 %v230
  %vm238 = vmor %vm236, %vm237
  %v239 = vsel %vm238, %v230, %v235
  %v240 = vmul.f32 %v207, %v239
  %v241 = vmul.f32 %v208, %v239
  %v242 = vmul.f32 %v209, %v239
  %v243 = vmul.f32 %v210, %v239
  %v245 = vperm.slane %v182, 0
  %v247 = vmul.f32 %v240, %v245
  %v248 = vmul.f32 %v241, %v245
  %v249 = vmul.f32 %v242, %v245
  %v250 = vmul.f32 %v243, %v245
  %v252 = vperm.slane %v183, 0
  %v254 = vadd.f32 %v247, %v252
  %v255 = vadd.f32 %v248, %v252
  %v256 = vadd.f32 %v249, %v252
  %v257 = vadd.f32 %v250, %v252
  %vm258 = vcmp.gt.f32.partialorder %v254, 0.0
  %vm259 = vcmp.gt.f32.partialorder %v255, 0.0
  %vm260 = vcmp.gt.f32.partialorder %v256, 0.0
  %vm261 = vcmp.gt.f32.partialorder %v257, 0.0
  %v263 = vperm.slane %v184, 0
  %v265 = vmul.f32 %v263, %v254
  %v266 = vmul.f32 %v263, %v255
  %v267 = vmul.f32 %v263, %v256
  %v268 = vmul.f32 %v263, %v257
  %v269 = vsel %vm258, %v254, %v265
  %v270 = vsel %vm259, %v255, %v266
  %v271 = vsel %vm260, %v256, %v267
  %v272 = vsel %vm261, %v257, %v268
  %273 = vst.msk [vmem:[%s5] sm:$0xff] %vm185, %v269
  %274 = vst.msk [vmem:[%s5 + $0x8] sm:$0xff] %vm185, %v270
  %275 = vst.msk [vmem:[%s5 + $0x10] sm:$0xff] %vm185, %v271
  %276 = vst.msk [vmem:[%s5 + $0x18] sm:$0xff] %vm185, %v272
  // Predicated region
  $region22: #{espnet_forward.23} parent=0 // pred_check
    _
  $region23: #{espnet_forward.23} parent=0 // pred_check_branch
    %278 = sbr.rel (0) target = $region25
  $region24: #{espnet_forward.23} parent=0 // pred_region
    _
  $region25: #{espnet_forward.23} parent=0 // pred_fallthru
    _
  // Predicated region
  $region26: #{espnet_forward.23} parent=0 // pred_check
    _
  $region27: #{espnet_forward.23} parent=0 // pred_check_branch
    %280 = sbr.rel (0) target = $region29
  $region28: #{espnet_forward.23} parent=0 // pred_region
    _
  $region29: #{espnet_forward.23} parent=0 // pred_fallthru
    _

// kernel: espnet_forward.25
$region0: #{espnet_forward.25}
  #allocation0 [shape = 'u32[]', space=smem, size = 0x4, offset = 0x4, fixed_abs, tag = 'smem constant byte address 0x4 - core index']
  #allocation1 [shape = 'u32[72,128]{1,0:T(1,128)}', space=vmem, size = 0x9000, scoped, tag = 'internal scratch']
  %s0 = inlined_call_operand.vmem [shape: bf16[32,64], index: 0, kind: input, shape index: {}]
  %s1 = inlined_call_operand.vmem [shape: bf16[64,12], index: 1, kind: input, shape index: {}]
  %s2 = inlined_call_operand.vmem [shape: f32[1,12], index: 2, kind: input, shape index: {}]
  %s3 = inlined_call_operand.vmem [shape: f32[1,12], index: 3, kind: input, shape index: {}]
  %s4 = inlined_call_operand.vmem [shape: f32[1,12], index: 4, kind: input, shape index: {}]
  %s5 = inlined_call_operand.vmem [shape: f32[32,12], index: 5, kind: output, shape index: {}]
  %s6 = sld [smem:[#allocation0]]
  $region30: #{espnet_forward.25} parent=0
    _
  %s8 = ssub.s32 1, %s6
  %s9 = scalar_select 0, %s8, %s6
  // Predicated region
  $region2: #{espnet_forward.25} parent=0 // pred_check
    _
  $region3: #{espnet_forward.25} parent=0 // pred_check_branch
    %11 = sbr.rel (0) target = $region5
  $region4: #{espnet_forward.25} parent=0 // pred_region
    _
  $region5: #{espnet_forward.25} parent=0 // pred_fallthru
    _
  // Predicated region
  $region6: #{espnet_forward.25} parent=0 // pred_check
    _
  $region7: #{espnet_forward.25} parent=0 // pred_check_branch
    %13 = sbr.rel (0) target = $region9
  $region8: #{espnet_forward.25} parent=0 // pred_region
    _
  $region9: #{espnet_forward.25} parent=0 // pred_fallthru
    _
  // Predicated region
  $region10: #{espnet_forward.25} parent=0 // pred_check
    _
  $region11: #{espnet_forward.25} parent=0 // pred_check_branch
    %15 = sbr.rel (0) target = $region13
  $region12: #{espnet_forward.25} parent=0 // pred_region
    _
  $region13: #{espnet_forward.25} parent=0 // pred_fallthru
    _
  // Predicated region
  $region14: #{espnet_forward.25} parent=0 // pred_check
    _
  $region15: #{espnet_forward.25} parent=0 // pred_check_branch
    %17 = sbr.rel (0) target = $region17
  $region16: #{espnet_forward.25} parent=0 // pred_region
    _
  $region17: #{espnet_forward.25} parent=0 // pred_fallthru
    _
  // Predicated region
  $region18: #{espnet_forward.25} parent=0 // pred_check
    _
  $region19: #{espnet_forward.25} parent=0 // pred_check_branch
    %19 = sbr.rel (0) target = $region21
  $region20: #{espnet_forward.25} parent=0 // pred_region
    _
  $region21: #{espnet_forward.25} parent=0 // pred_fallthru
    _
  %v21 = vld [vmem:[%s0] sm:$0xf]
  %v22 = vld [vmem:[%s0 + $0x4] sm:$0xf]
  %v23 = vld [vmem:[%s0 + $0x8] sm:$0xf]
  %v24 = vld [vmem:[%s0 + $0xc] sm:$0xf]
  %v25 = vld [vmem:[%s1] sm:$0xf]
  %v26 = vld [vmem:[%s1 + $0x4] sm:$0xf]
  %v27 = vld [vmem:[%s1 + $0x8] sm:$0xf]
  %v28 = vld [vmem:[%s1 + $0xc] sm:$0xf]
  %v29 = vld [vmem:[%s1 + $0x10] sm:$0xf]
  %v30 = vld [vmem:[%s1 + $0x14] sm:$0xf]
  %v31 = vld [vmem:[%s1 + $0x18] sm:$0xf]
  %v32 = vld [vmem:[%s1 + $0x1c] sm:$0xf]
  %v37 = vunpack.c.l.b16 %v21
  %v38 = vunpack.c.l.b16 %v22
  %v39 = vunpack.c.l.b16 %v23
  %v40 = vunpack.c.l.b16 %v24
  %v41 = vpack.c.b16 %v38, %v37
  %v42 = vpack.c.b16 %v40, %v39
  %v51 = vunpack.c.l.b16 %v25
  %v52 = vunpack.c.l.b16 %v26
  %v53 = vunpack.c.l.b16 %v27
  %v54 = vunpack.c.l.b16 %v28
  %v55 = vunpack.c.l.b16 %v29
  %v56 = vunpack.c.l.b16 %v30
  %v57 = vunpack.c.l.b16 %v31
  %v58 = vunpack.c.l.b16 %v32
  %v59 = vpack.c.b16 %v52, %v51
  %v60 = vpack.c.b16 %v54, %v53
  %v61 = vpack.c.b16 %v56, %v55
  %v62 = vpack.c.b16 %v58, %v57
  %vm67 = vcmask 523264
  %v69 = vsel %vm67, %v41, 0
  %v72 = vsel %vm67, %v42, 0
  %74 = vmatpush.bf16.msra.mxu0 0
  %75 = vmatpush.bf16.msra.mxu0 0
  %76 = vmatpush.bf16.msra.mxu0 0
  %77 = vmatpush.bf16.msra.mxu0 0
  %78 = vmatpush.bf16.msra.mxu0 %v62
  %79 = vmatpush.bf16.msra.mxu0 %v61
  %80 = vmatpush.bf16.msra.mxu0 %v60
  %81 = vmatpush.bf16.msra.mxu0 %v59
  %82 = vmatmul.bf16.gmra.mxu0 %v69
  %v83 = vpop.f32.mrf.mxu0
  %v84 = vadd.f32 0.0, %v83
  %v85 = vpop.f32.mrf.mxu0
  %v86 = vadd.f32 0.0, %v85
  %87 = vmatmul.bf16.gmra.mxu0 %v72
  %v88 = vpop.f32.mrf.mxu0
  %v89 = vadd.f32 0.0, %v88
  %v90 = vpop.f32.mrf.mxu0
  %v91 = vadd.f32 0.0, %v90
  %92 = vdwg.mxu0
  %v93 = vld [vmem:[%s2] sm:$0x1]
  %v94 = vld [vmem:[%s3] sm:$0x1]
  %v95 = vld [vmem:[%s4] sm:$0x1]
  %vm96 = vcmask 97280
  %v97 = vsel %vm96, %v84, 0.0
  %v98 = vsel %vm96, %v86, 0.0
  %v99 = vadd.f32 %v97, %v98
  %v100 = vsel %vm96, %v89, 0.0
  %v101 = vadd.f32 %v99, %v100
  %v102 = vsel %vm96, %v91, 0.0
  %v103 = vadd.f32 %v101, %v102
  %v104 = vrot.slane %v103, 4
  %v105 = vadd.f32 %v103, %v104
  %v106 = vrot.slane %v105, 2
  %v107 = vadd.f32 %v105, %v106
  %v108 = vrot.slane %v107, 1
  %v109 = vadd.f32 %v107, %v108
  %v110 = vrcp.pop 32.0
  %v111 = vmul.f32 32.0, %v110
  %v112 = vsub.f32 1.0, %v111
  %v113 = vmul.f32 %v110, %v112
  %v114 = vadd.f32 %v110, %v113
  %vm115 = vweird.f32 %v110
  %v116 = vsel %vm115, %v110, %v114
  %v117 = vmul.f32 %v109, %v116
  %v118 = vsub.f32 %v84, %v117
  %v119 = vsub.f32 %v86, %v117
  %v120 = vsub.f32 %v89, %v117
  %v121 = vsub.f32 %v91, %v117
  %v122 = vmul.f32 %v118, %v118
  %v123 = vmul.f32 %v119, %v119
  %v124 = vmul.f32 %v120, %v120
  %v125 = vmul.f32 %v121, %v121
  %v126 = vsel %vm96, %v122, 0.0
  %v127 = vsel %vm96, %v123, 0.0
  %v128 = vadd.f32 %v126, %v127
  %v129 = vsel %vm96, %v124, 0.0
  %v130 = vadd.f32 %v128, %v129
  %v131 = vsel %vm96, %v125, 0.0
  %v132 = vadd.f32 %v130, %v131
  %v133 = vrot.slane %v132, 4
  %v134 = vadd.f32 %v132, %v133
  %v135 = vrot.slane %v134, 2
  %v136 = vadd.f32 %v134, %v135
  %v137 = vrot.slane %v136, 1
  %v138 = vadd.f32 %v136, %v137
  %v139 = vmul.f32 %v138, %v116
  %v140 = vadd.f32 %v139, 1e-05
  %v141 = vrsqrt.pop %v140
  %v142 = vmul.f32 %v141, %v140
  %v143 = vmul.f32 %v142, %v141
  %v144 = vmul.f32 0.5, %v143
  %v145 = vsub.f32 1.5, %v144
  %v146 = vmul.f32 %v141, %v145
  %vm147 = vweird.f32 %v140
  %vm148 = vweird.f32 %v141
  %vm149 = vmor %vm147, %vm148
  %v150 = vsel %vm149, %v141, %v146
  %v151 = vmul.f32 %v118, %v150
  %v152 = vmul.f32 %v119, %v150
  %v153 = vmul.f32 %v120, %v150
  %v154 = vmul.f32 %v121, %v150
  %v156 = vperm.slane %v93, 0
  %v158 = vmul.f32 %v151, %v156
  %v159 = vmul.f32 %v152, %v156
  %v160 = vmul.f32 %v153, %v156
  %v161 = vmul.f32 %v154, %v156
  %v163 = vperm.slane %v94, 0
  %v165 = vadd.f32 %v158, %v163
  %v166 = vadd.f32 %v159, %v163
  %v167 = vadd.f32 %v160, %v163
  %v168 = vadd.f32 %v161, %v163
  %vm169 = vcmp.gt.f32.partialorder %v165, 0.0
  %vm170 = vcmp.gt.f32.partialorder %v166, 0.0
  %vm171 = vcmp.gt.f32.partialorder %v167, 0.0
  %vm172 = vcmp.gt.f32.partialorder %v168, 0.0
  %v174 = vperm.slane %v95, 0
  %v176 = vmul.f32 %v174, %v165
  %v177 = vmul.f32 %v174, %v166
  %v178 = vmul.f32 %v174, %v167
  %v179 = vmul.f32 %v174, %v168
  %v180 = vsel %vm169, %v165, %v176
  %v181 = vsel %vm170, %v166, %v177
  %v182 = vsel %vm171, %v167, %v178
  %v183 = vsel %vm172, %v168, %v179
  %184 = vst.msk [vmem:[%s5] sm:$0xff] %vm96, %v180
  %185 = vst.msk [vmem:[%s5 + $0x8] sm:$0xff] %vm96, %v181
  %186 = vst.msk [vmem:[%s5 + $0x10] sm:$0xff] %vm96, %v182
  %187 = vst.msk [vmem:[%s5 + $0x18] sm:$0xff] %vm96, %v183
  // Predicated region
  $region22: #{espnet_forward.25} parent=0 // pred_check
    _
  $region23: #{espnet_forward.25} parent=0 // pred_check_branch
    %189 = sbr.rel (0) target = $region25
  $region24: #{espnet_forward.25} parent=0 // pred_region
    _
  $region25: #{espnet_forward.25} parent=0 // pred_fallthru
    _
  // Predicated region
  $region26: #{espnet_forward.25} parent=0 // pred_check
    _
  $region27: #{espnet_forward.25} parent=0 // pred_check_branch
    %191 = sbr.rel (0) target = $region29
  $region28: #{espnet_forward.25} parent=0 // pred_region
    _
  $region29: #{espnet_forward.25} parent=0 // pred_fallthru
    _

// kernel: espnet_forward.24
$region0: #{espnet_forward.24}
  #allocation0 [shape = 'u32[]', space=smem, size = 0x4, offset = 0x4, fixed_abs, tag = 'smem constant byte address 0x4 - core index']
  #allocation1 [shape = 'u32[72,128]{1,0:T(1,128)}', space=vmem, size = 0x9000, scoped, tag = 'internal scratch']
  %s0 = inlined_call_operand.vmem [shape: f32[52,12], index: 0, kind: input, shape index: {}]
  %s1 = inlined_call_operand.vmem [shape: bf16[21,12,64], index: 1, kind: input, shape index: {}]
  %s2 = inlined_call_operand.vmem [shape: f32[32,21], index: 2, kind: input, shape index: {}]
  %s3 = inlined_call_operand.vmem [shape: f32[1,64], index: 3, kind: input, shape index: {}]
  %s4 = inlined_call_operand.vmem [shape: f32[1,64], index: 4, kind: input, shape index: {}]
  %s5 = inlined_call_operand.vmem [shape: f32[1,64], index: 5, kind: input, shape index: {}]
  %s6 = inlined_call_operand.vmem [shape: f32[32,64], index: 6, kind: output, shape index: {}]
  %s7 = sld [smem:[#allocation0]]
  $region34: #{espnet_forward.24} parent=0
    _
  %s9 = ssub.s32 1, %s7
  %s10 = scalar_select 0, %s9, %s7
  // Predicated region
  $region2: #{espnet_forward.24} parent=0 // pred_check
    _
  $region3: #{espnet_forward.24} parent=0 // pred_check_branch
    %12 = sbr.rel (0) target = $region5
  $region4: #{espnet_forward.24} parent=0 // pred_region
    _
  $region5: #{espnet_forward.24} parent=0 // pred_fallthru
    _
  // Predicated region
  $region6: #{espnet_forward.24} parent=0 // pred_check
    _
  $region7: #{espnet_forward.24} parent=0 // pred_check_branch
    %14 = sbr.rel (0) target = $region9
  $region8: #{espnet_forward.24} parent=0 // pred_region
    _
  $region9: #{espnet_forward.24} parent=0 // pred_fallthru
    _
  // Predicated region
  $region10: #{espnet_forward.24} parent=0 // pred_check
    _
  $region11: #{espnet_forward.24} parent=0 // pred_check_branch
    %16 = sbr.rel (0) target = $region13
  $region12: #{espnet_forward.24} parent=0 // pred_region
    _
  $region13: #{espnet_forward.24} parent=0 // pred_fallthru
    _
  // Predicated region
  $region14: #{espnet_forward.24} parent=0 // pred_check
    _
  $region15: #{espnet_forward.24} parent=0 // pred_check_branch
    %18 = sbr.rel (0) target = $region17
  $region16: #{espnet_forward.24} parent=0 // pred_region
    _
  $region17: #{espnet_forward.24} parent=0 // pred_fallthru
    _
  // Predicated region
  $region18: #{espnet_forward.24} parent=0 // pred_check
    _
  $region19: #{espnet_forward.24} parent=0 // pred_check_branch
    %20 = sbr.rel (0) target = $region21
  $region20: #{espnet_forward.24} parent=0 // pred_region
    _
  $region21: #{espnet_forward.24} parent=0 // pred_fallthru
    _
  // Predicated region
  $region22: #{espnet_forward.24} parent=0 // pred_check
    _
  $region23: #{espnet_forward.24} parent=0 // pred_check_branch
    %22 = sbr.rel (0) target = $region25
  $region24: #{espnet_forward.24} parent=0 // pred_region
    _
  $region25: #{espnet_forward.24} parent=0 // pred_fallthru
    _
  %v24 = vld [vmem:[%s0 + $0x5] sm:$0xff]
  %v25 = vld [vmem:[%s0 + $0xd] sm:$0xff]
  %v26 = vld [vmem:[%s0 + $0x15] sm:$0xff]
  %v27 = vld [vmem:[%s0 + $0x1d] sm:$0xff]
  %v28 = vld [vmem:[%s2] sm:$0xff]
  %v29 = vld [vmem:[%s2 + $0x8] sm:$0xff]
  %v30 = vld [vmem:[%s2 + $0x10] sm:$0xff]
  %v31 = vld [vmem:[%s2 + $0x18] sm:$0xff]
  %33 = vset.pattern.permute.xlu0 0
  %34 = vperm.xlu0 %33, %v28
  %v35 = vpop.permute.xlu0 %34
  %38 = vset.pattern.permute.xlu0 0
  %39 = vperm.xlu0 %38, %v29
  %v40 = vpop.permute.xlu0 %39
  %43 = vset.pattern.permute.xlu0 0
  %44 = vperm.xlu0 %43, %v30
  %v45 = vpop.permute.xlu0 %44
  %48 = vset.pattern.permute.xlu0 0
  %49 = vperm.xlu0 %48, %v31
  %v50 = vpop.permute.xlu0 %49
  %v52 = vmul.f32 %v24, %v35
  %v53 = vmul.f32 %v25, %v40
  %v54 = vmul.f32 %v26, %v45
  %v55 = vmul.f32 %v27, %v50
  %v56 = vpack.c.bf16 %v53, %v52
  %v57 = vpack.c.bf16 %v55, %v54
  %v58 = vld [vmem:[%s1] sm:$0xf]
  %v59 = vld [vmem:[%s1 + $0x4] sm:$0x3]
  %v60 = vld [vmem:[%s0 + $0x6] sm:$0xff]
  %v61 = vld [vmem:[%s0 + $0xe] sm:$0xff]
  %v62 = vld [vmem:[%s0 + $0x16] sm:$0xff]
  %v63 = vld [vmem:[%s0 + $0x1e] sm:$0xff]
  %64 = vset.pattern.permute.xlu0 1
  %65 = vperm.xlu0 %64, %v28
  %v66 = vpop.permute.xlu0 %65
  %68 = vset.pattern.permute.xlu0 1
  %69 = vperm.xlu0 %68, %v29
  %v70 = vpop.permute.xlu0 %69
  %72 = vset.pattern.permute.xlu0 1
  %73 = vperm.xlu0 %72, %v30
  %v74 = vpop.permute.xlu0 %73
  %76 = vset.pattern.permute.xlu0 1
  %77 = vperm.xlu0 %76, %v31
  %v78 = vpop.permute.xlu0 %77
  %v80 = vmul.f32 %v60, %v66
  %v81 = vmul.f32 %v61, %v70
  %v82 = vmul.f32 %v62, %v74
  %v83 = vmul.f32 %v63, %v78
  %v84 = vpack.c.bf16 %v81, %v80
  %v85 = vpack.c.bf16 %v83, %v82
  %s86 = scalar_lea.vmem %s1, 8
  %v87 = vld [vmem:[%s86] sm:$0xf]
  %v88 = vld [vmem:[%s86 + $0x4] sm:$0x3]
  %v91 = vunpack.c.l.b16 %v87
  %v92 = vunpack.c.l.b16 %v88
  %v93 = vpack.c.b16 %v92, %v91
  %vm94 = vcmask 97280
  %v96 = vsel %vm94, %v84, 0
  %v99 = vsel %vm94, %v85, 0
  %vm101 = vcmask 1045504
  %v103 = vsel %vm101, %v93, 0
  %105 = vmatpush.bf16.msra.mxu0 0
  %106 = vmatpush.bf16.msra.mxu0 0
  %107 = vmatpush.bf16.msra.mxu0 0
  %108 = vmatpush.bf16.msra.mxu0 0
  %109 = vmatpush.bf16.msra.mxu0 0
  %110 = vmatpush.bf16.msra.mxu0 0
  %111 = vmatpush.bf16.msra.mxu0 0
  %112 = vmatpush.bf16.msra.mxu0 %v103
  %113 = vmatmul.bf16.gmra.mxu0 %v96
  %v114 = vpop.f32.mrf.mxu0
  %v115 = vadd.f32 0.0, %v114
  %v116 = vpop.f32.mrf.mxu0
  %v117 = vadd.f32 0.0, %v116
  %118 = vmatmul.bf16.gmra.mxu0 %v99
  %v119 = vpop.f32.mrf.mxu0
  %v120 = vadd.f32 0.0, %v119
  %v121 = vpop.f32.mrf.mxu0
  %v122 = vadd.f32 0.0, %v121
  %123 = vdwg.mxu0
  %v126 = vunpack.c.l.b16 %v58
  %v127 = vunpack.c.l.b16 %v59
  %v128 = vpack.c.b16 %v127, %v126
  %v130 = vsel %vm94, %v56, 0
  %v133 = vsel %vm94, %v57, 0
  %v136 = vsel %vm101, %v128, 0
  %138 = vmatpush.bf16.msra.mxu0 0
  %139 = vmatpush.bf16.msra.mxu0 0
  %140 = vmatpush.bf16.msra.mxu0 0
  %141 = vmatpush.bf16.msra.mxu0 0
  %142 = vmatpush.bf16.msra.mxu0 0
  %143 = vmatpush.bf16.msra.mxu0 0
  %144 = vmatpush.bf16.msra.mxu0 0
  %145 = vmatpush.bf16.msra.mxu0 %v136
  %146 = vmatmul.bf16.gmra.mxu0 %v130
  %v147 = vpop.f32.mrf.mxu0
  %v148 = vadd.f32 %v115, %v147
  %v149 = vpop.f32.mrf.mxu0
  %v150 = vadd.f32 %v117, %v149
  %151 = vmatmul.bf16.gmra.mxu0 %v133
  %v152 = vpop.f32.mrf.mxu0
  %v153 = vadd.f32 %v120, %v152
  %v154 = vpop.f32.mrf.mxu0
  %v155 = vadd.f32 %v122, %v154
  %156 = vdwg.mxu0
  %v157 = vld [vmem:[%s0 + $0x7] sm:$0xff]
  %v158 = vld [vmem:[%s0 + $0xf] sm:$0xff]
  %v159 = vld [vmem:[%s0 + $0x17] sm:$0xff]
  %v160 = vld [vmem:[%s0 + $0x1f] sm:$0xff]
  %161 = vset.pattern.permute.xlu0 2
  %162 = vperm.xlu0 %161, %v28
  %v163 = vpop.permute.xlu0 %162
  %165 = vset.pattern.permute.xlu0 2
  %166 = vperm.xlu0 %165, %v29
  %v167 = vpop.permute.xlu0 %166
  %169 = vset.pattern.permute.xlu0 2
  %170 = vperm.xlu0 %169, %v30
  %v171 = vpop.permute.xlu0 %170
  %173 = vset.pattern.permute.xlu0 2
  %174 = vperm.xlu0 %173, %v31
  %v175 = vpop.permute.xlu0 %174
  %v177 = vmul.f32 %v157, %v163
  %v178 = vmul.f32 %v158, %v167
  %v179 = vmul.f32 %v159, %v171
  %v180 = vmul.f32 %v160, %v175
  %v181 = vpack.c.bf16 %v178, %v177
  %v182 = vpack.c.bf16 %v180, %v179
  %s183 = scalar_lea.vmem %s1, 16
  %v184 = vld [vmem:[%s183] sm:$0xf]
  %v185 = vld [vmem:[%s183 + $0x4] sm:$0x3]
  %v188 = vunpack.c.l.b16 %v184
  %v189 = vunpack.c.l.b16 %v185
  %v190 = vpack.c.b16 %v189, %v188
  %v192 = vsel %vm94, %v181, 0
  %v195 = vsel %vm94, %v182, 0
  %v198 = vsel %vm101, %v190, 0
  %200 = vmatpush.bf16.msra.mxu0 0
  %201 = vmatpush.bf16.msra.mxu0 0
  %202 = vmatpush.bf16.msra.mxu0 0
  %203 = vmatpush.bf16.msra.mxu0 0
  %204 = vmatpush.bf16.msra.mxu0 0
  %205 = vmatpush.bf16.msra.mxu0 0
  %206 = vmatpush.bf16.msra.mxu0 0
  %207 = vmatpush.bf16.msra.mxu0 %v198
  %208 = vmatmul.bf16.gmra.mxu0 %v192
  %v209 = vpop.f32.mrf.mxu0
  %v210 = vadd.f32 0.0, %v209
  %v211 = vpop.f32.mrf.mxu0
  %v212 = vadd.f32 0.0, %v211
  %213 = vmatmul.bf16.gmra.mxu0 %v195
  %v214 = vpop.f32.mrf.mxu0
  %v215 = vadd.f32 0.0, %v214
  %v216 = vpop.f32.mrf.mxu0
  %v217 = vadd.f32 0.0, %v216
  %218 = vdwg.mxu0
  %v219 = vadd.f32 %v148, %v210
  %v220 = vadd.f32 %v150, %v212
  %v221 = vadd.f32 %v153, %v215
  %v222 = vadd.f32 %v155, %v217
  %v223 = vld [vmem:[%s0 + $0x9] sm:$0xff]
  %v224 = vld [vmem:[%s0 + $0x11] sm:$0xff]
  %v225 = vld [vmem:[%s0 + $0x19] sm:$0xff]
  %v226 = vld [vmem:[%s0 + $0x21] sm:$0xff]
  %227 = vset.pattern.permute.xlu0 3
  %228 = vperm.xlu0 %227, %v28
  %v229 = vpop.permute.xlu0 %228
  %231 = vset.pattern.permute.xlu0 3
  %232 = vperm.xlu0 %231, %v29
  %v233 = vpop.permute.xlu0 %232
  %235 = vset.pattern.permute.xlu0 3
  %236 = vperm.xlu0 %235, %v30
  %v237 = vpop.permute.xlu0 %236
  %239 = vset.pattern.permute.xlu0 3
  %240 = vperm.xlu0 %239, %v31
  %v241 = vpop.permute.xlu0 %240
  %v243 = vmul.f32 %v223, %v229
  %v244 = vmul.f32 %v224, %v233
  %v245 = vmul.f32 %v225, %v237
  %v246 = vmul.f32 %v226, %v241
  %v247 = vpack.c.bf16 %v244, %v243
  %v248 = vpack.c.bf16 %v246, %v245
  %s249 = scalar_lea.vmem %s1, 24
  %v250 = vld [vmem:[%s249] sm:$0xf]
  %v251 = vld [vmem:[%s249 + $0x4] sm:$0x3]
  %v254 = vunpack.c.l.b16 %v250
  %v255 = vunpack.c.l.b16 %v251
  %v256 = vpack.c.b16 %v255, %v254
  %v258 = vsel %vm94, %v247, 0
  %v261 = vsel %vm94, %v248, 0
  %v264 = vsel %vm101, %v256, 0
  %266 = vmatpush.bf16.msra.mxu0 0
  %267 = vmatpush.bf16.msra.mxu0 0
  %268 = vmatpush.bf16.msra.mxu0 0
  %269 = vmatpush.bf16.msra.mxu0 0
  %270 = vmatpush.bf16.msra.mxu0 0
  %271 = vmatpush.bf16.msra.mxu0 0
  %272 = vmatpush.bf16.msra.mxu0 0
  %273 = vmatpush.bf16.msra.mxu0 %v264
  %274 = vmatmul.bf16.gmra.mxu0 %v258
  %v275 = vpop.f32.mrf.mxu0
  %v276 = vadd.f32 0.0, %v275
  %v277 = vpop.f32.mrf.mxu0
  %v278 = vadd.f32 0.0, %v277
  %279 = vmatmul.bf16.gmra.mxu0 %v261
  %v280 = vpop.f32.mrf.mxu0
  %v281 = vadd.f32 0.0, %v280
  %v282 = vpop.f32.mrf.mxu0
  %v283 = vadd.f32 0.0, %v282
  %284 = vdwg.mxu0
  %v285 = vadd.f32 %v219, %v276
  %v286 = vadd.f32 %v220, %v278
  %v287 = vadd.f32 %v221, %v281
  %v288 = vadd.f32 %v222, %v283
  %v289 = vld [vmem:[%s0 + $0xa] sm:$0xff]
  %v290 = vld [vmem:[%s0 + $0x12] sm:$0xff]
  %v291 = vld [vmem:[%s0 + $0x1a] sm:$0xff]
  %v292 = vld [vmem:[%s0 + $0x22] sm:$0xff]
  %293 = vset.pattern.permute.xlu0 4
  %294 = vperm.xlu0 %293, %v28
  %v295 = vpop.permute.xlu0 %294
  %297 = vset.pattern.permute.xlu0 4
  %298 = vperm.xlu0 %297, %v29
  %v299 = vpop.permute.xlu0 %298
  %301 = vset.pattern.permute.xlu0 4
  %302 = vperm.xlu0 %301, %v30
  %v303 = vpop.permute.xlu0 %302
  %305 = vset.pattern.permute.xlu0 4
  %306 = vperm.xlu0 %305, %v31
  %v307 = vpop.permute.xlu0 %306
  %v309 = vmul.f32 %v289, %v295
  %v310 = vmul.f32 %v290, %v299
  %v311 = vmul.f32 %v291, %v303
  %v312 = vmul.f32 %v292, %v307
  %v313 = vpack.c.bf16 %v310, %v309
  %v314 = vpack.c.bf16 %v312, %v311
  %s315 = scalar_lea.vmem %s1, 32
  %v316 = vld [vmem:[%s315] sm:$0xf]
  %v317 = vld [vmem:[%s315 + $0x4] sm:$0x3]
  %v320 = vunpack.c.l.b16 %v316
  %v321 = vunpack.c.l.b16 %v317
  %v322 = vpack.c.b16 %v321, %v320
  %v324 = vsel %vm94, %v313, 0
  %v327 = vsel %vm94, %v314, 0
  %v330 = vsel %vm101, %v322, 0
  %332 = vmatpush.bf16.msra.mxu0 0
  %333 = vmatpush.bf16.msra.mxu0 0
  %334 = vmatpush.bf16.msra.mxu0 0
  %335 = vmatpush.bf16.msra.mxu0 0
  %336 = vmatpush.bf16.msra.mxu0 0
  %337 = vmatpush.bf16.msra.mxu0 0
  %338 = vmatpush.bf16.msra.mxu0 0
  %339 = vmatpush.bf16.msra.mxu0 %v330
  %340 = vmatmul.bf16.gmra.mxu0 %v324
  %v341 = vpop.f32.mrf.mxu0
  %v342 = vadd.f32 0.0, %v341
  %v343 = vpop.f32.mrf.mxu0
  %v344 = vadd.f32 0.0, %v343
  %345 = vmatmul.bf16.gmra.mxu0 %v327
  %v346 = vpop.f32.mrf.mxu0
  %v347 = vadd.f32 0.0, %v346
  %v348 = vpop.f32.mrf.mxu0
  %v349 = vadd.f32 0.0, %v348
  %350 = vdwg.mxu0
  %v351 = vadd.f32 %v285, %v342
  %v352 = vadd.f32 %v286, %v344
  %v353 = vadd.f32 %v287, %v347
  %v354 = vadd.f32 %v288, %v349
  %v355 = vld [vmem:[%s0 + $0xb] sm:$0xff]
  %v356 = vld [vmem:[%s0 + $0x13] sm:$0xff]
  %v357 = vld [vmem:[%s0 + $0x1b] sm:$0xff]
  %v358 = vld [vmem:[%s0 + $0x23] sm:$0xff]
  %359 = vset.pattern.permute.xlu0 5
  %360 = vperm.xlu0 %359, %v28
  %v361 = vpop.permute.xlu0 %360
  %363 = vset.pattern.permute.xlu0 5
  %364 = vperm.xlu0 %363, %v29
  %v365 = vpop.permute.xlu0 %364
  %367 = vset.pattern.permute.xlu0 5
  %368 = vperm.xlu0 %367, %v30
  %v369 = vpop.permute.xlu0 %368
  %371 = vset.pattern.permute.xlu0 5
  %372 = vperm.xlu0 %371, %v31
  %v373 = vpop.permute.xlu0 %372
  %v375 = vmul.f32 %v355, %v361
  %v376 = vmul.f32 %v356, %v365
  %v377 = vmul.f32 %v357, %v369
  %v378 = vmul.f32 %v358, %v373
  %v379 = vpack.c.bf16 %v376, %v375
  %v380 = vpack.c.bf16 %v378, %v377
  %s381 = scalar_lea.vmem %s1, 40
  %v382 = vld [vmem:[%s381] sm:$0xf]
  %v383 = vld [vmem:[%s381 + $0x4] sm:$0x3]
  %v386 = vunpack.c.l.b16 %v382
  %v387 = vunpack.c.l.b16 %v383
  %v388 = vpack.c.b16 %v387, %v386
  %v390 = vsel %vm94, %v379, 0
  %v393 = vsel %vm94, %v380, 0
  %v396 = vsel %vm101, %v388, 0
  %398 = vmatpush.bf16.msra.mxu0 0
  %399 = vmatpush.bf16.msra.mxu0 0
  %400 = vmatpush.bf16.msra.mxu0 0
  %401 = vmatpush.bf16.msra.mxu0 0
  %402 = vmatpush.bf16.msra.mxu0 0
  %403 = vmatpush.bf16.msra.mxu0 0
  %404 = vmatpush.bf16.msra.mxu0 0
  %405 = vmatpush.bf16.msra.mxu0 %v396
  %406 = vmatmul.bf16.gmra.mxu0 %v390
  %v407 = vpop.f32.mrf.mxu0
  %v408 = vadd.f32 0.0, %v407
  %v409 = vpop.f32.mrf.mxu0
  %v410 = vadd.f32 0.0, %v409
  %411 = vmatmul.bf16.gmra.mxu0 %v393
  %v412 = vpop.f32.mrf.mxu0
  %v413 = vadd.f32 0.0, %v412
  %v414 = vpop.f32.mrf.mxu0
  %v415 = vadd.f32 0.0, %v414
  %416 = vdwg.mxu0
  %v417 = vadd.f32 %v351, %v408
  %v418 = vadd.f32 %v352, %v410
  %v419 = vadd.f32 %v353, %v413
  %v420 = vadd.f32 %v354, %v415
  %v421 = vld [vmem:[%s0 + $0xd] sm:$0xff]
  %v422 = vld [vmem:[%s0 + $0x15] sm:$0xff]
  %v423 = vld [vmem:[%s0 + $0x1d] sm:$0xff]
  %v424 = vld [vmem:[%s0 + $0x25] sm:$0xff]
  %425 = vset.pattern.permute.xlu0 6
  %426 = vperm.xlu0 %425, %v28
  %v427 = vpop.permute.xlu0 %426
  %429 = vset.pattern.permute.xlu0 6
  %430 = vperm.xlu0 %429, %v29
  %v431 = vpop.permute.xlu0 %430
  %433 = vset.pattern.permute.xlu0 6
  %434 = vperm.xlu0 %433, %v30
  %v435 = vpop.permute.xlu0 %434
  %437 = vset.pattern.permute.xlu0 6
  %438 = vperm.xlu0 %437, %v31
  %v439 = vpop.permute.xlu0 %438
  %v441 = vmul.f32 %v421, %v427
  %v442 = vmul.f32 %v422, %v431
  %v443 = vmul.f32 %v423, %v435
  %v444 = vmul.f32 %v424, %v439
  %v445 = vpack.c.bf16 %v442, %v441
  %v446 = vpack.c.bf16 %v444, %v443
  %s447 = scalar_lea.vmem %s1, 48
  %v448 = vld [vmem:[%s447] sm:$0xf]
  %v449 = vld [vmem:[%s447 + $0x4] sm:$0x3]
  %v452 = vunpack.c.l.b16 %v448
  %v453 = vunpack.c.l.b16 %v449
  %v454 = vpack.c.b16 %v453, %v452
  %v456 = vsel %vm94, %v445, 0
  %v459 = vsel %vm94, %v446, 0
  %v462 = vsel %vm101, %v454, 0
  %464 = vmatpush.bf16.msra.mxu0 0
  %465 = vmatpush.bf16.msra.mxu0 0
  %466 = vmatpush.bf16.msra.mxu0 0
  %467 = vmatpush.bf16.msra.mxu0 0
  %468 = vmatpush.bf16.msra.mxu0 0
  %469 = vmatpush.bf16.msra.mxu0 0
  %470 = vmatpush.bf16.msra.mxu0 0
  %471 = vmatpush.bf16.msra.mxu0 %v462
  %472 = vmatmul.bf16.gmra.mxu0 %v456
  %v473 = vpop.f32.mrf.mxu0
  %v474 = vadd.f32 0.0, %v473
  %v475 = vpop.f32.mrf.mxu0
  %v476 = vadd.f32 0.0, %v475
  %477 = vmatmul.bf16.gmra.mxu0 %v459
  %v478 = vpop.f32.mrf.mxu0
  %v479 = vadd.f32 0.0, %v478
  %v480 = vpop.f32.mrf.mxu0
  %v481 = vadd.f32 0.0, %v480
  %482 = vdwg.mxu0
  %v483 = vadd.f32 %v417, %v474
  %v484 = vadd.f32 %v418, %v476
  %v485 = vadd.f32 %v419, %v479
  %v486 = vadd.f32 %v420, %v481
  %v487 = vld [vmem:[%s0 + $0xe] sm:$0xff]
  %v488 = vld [vmem:[%s0 + $0x16] sm:$0xff]
  %v489 = vld [vmem:[%s0 + $0x1e] sm:$0xff]
  %v490 = vld [vmem:[%s0 + $0x26] sm:$0xff]
  %491 = vset.pattern.permute.xlu0 7
  %492 = vperm.xlu0 %491, %v28
  %v493 = vpop.permute.xlu0 %492
  %495 = vset.pattern.permute.xlu0 7
  %496 = vperm.xlu0 %495, %v29
  %v497 = vpop.permute.xlu0 %496
  %499 = vset.pattern.permute.xlu0 7
  %500 = vperm.xlu0 %499, %v30
  %v501 = vpop.permute.xlu0 %500
  %503 = vset.pattern.permute.xlu0 7
  %504 = vperm.xlu0 %503, %v31
  %v505 = vpop.permute.xlu0 %504
  %v507 = vmul.f32 %v487, %v493
  %v508 = vmul.f32 %v488, %v497
  %v509 = vmul.f32 %v489, %v501
  %v510 = vmul.f32 %v490, %v505
  %v511 = vpack.c.bf16 %v508, %v507
  %v512 = vpack.c.bf16 %v510, %v509
  %s513 = scalar_lea.vmem %s1, 56
  %v514 = vld [vmem:[%s513] sm:$0xf]
  %v515 = vld [vmem:[%s513 + $0x4] sm:$0x3]
  %v518 = vunpack.c.l.b16 %v514
  %v519 = vunpack.c.l.b16 %v515
  %v520 = vpack.c.b16 %v519, %v518
  %v522 = vsel %vm94, %v511, 0
  %v525 = vsel %vm94, %v512, 0
  %v528 = vsel %vm101, %v520, 0
  %530 = vmatpush.bf16.msra.mxu0 0
  %531 = vmatpush.bf16.msra.mxu0 0
  %532 = vmatpush.bf16.msra.mxu0 0
  %533 = vmatpush.bf16.msra.mxu0 0
  %534 = vmatpush.bf16.msra.mxu0 0
  %535 = vmatpush.bf16.msra.mxu0 0
  %536 = vmatpush.bf16.msra.mxu0 0
  %537 = vmatpush.bf16.msra.mxu0 %v528
  %538 = vmatmul.bf16.gmra.mxu0 %v522
  %v539 = vpop.f32.mrf.mxu0
  %v540 = vadd.f32 0.0, %v539
  %v541 = vpop.f32.mrf.mxu0
  %v542 = vadd.f32 0.0, %v541
  %543 = vmatmul.bf16.gmra.mxu0 %v525
  %v544 = vpop.f32.mrf.mxu0
  %v545 = vadd.f32 0.0, %v544
  %v546 = vpop.f32.mrf.mxu0
  %v547 = vadd.f32 0.0, %v546
  %548 = vdwg.mxu0
  %v549 = vadd.f32 %v483, %v540
  %v550 = vadd.f32 %v484, %v542
  %v551 = vadd.f32 %v485, %v545
  %v552 = vadd.f32 %v486, %v547
  %v553 = vld [vmem:[%s0 + $0xf] sm:$0xff]
  %v554 = vld [vmem:[%s0 + $0x17] sm:$0xff]
  %v555 = vld [vmem:[%s0 + $0x1f] sm:$0xff]
  %v556 = vld [vmem:[%s0 + $0x27] sm:$0xff]
  %557 = vset.pattern.permute.xlu0 8
  %558 = vperm.xlu0 %557, %v28
  %v559 = vpop.permute.xlu0 %558
  %561 = vset.pattern.permute.xlu0 8
  %562 = vperm.xlu0 %561, %v29
  %v563 = vpop.permute.xlu0 %562
  %565 = vset.pattern.permute.xlu0 8
  %566 = vperm.xlu0 %565, %v30
  %v567 = vpop.permute.xlu0 %566
  %569 = vset.pattern.permute.xlu0 8
  %570 = vperm.xlu0 %569, %v31
  %v571 = vpop.permute.xlu0 %570
  %v573 = vmul.f32 %v553, %v559
  %v574 = vmul.f32 %v554, %v563
  %v575 = vmul.f32 %v555, %v567
  %v576 = vmul.f32 %v556, %v571
  %v577 = vpack.c.bf16 %v574, %v573
  %v578 = vpack.c.bf16 %v576, %v575
  %s579 = scalar_lea.vmem %s1, 64
  %v580 = vld [vmem:[%s579] sm:$0xf]
  %v581 = vld [vmem:[%s579 + $0x4] sm:$0x3]
  %v584 = vunpack.c.l.b16 %v580
  %v585 = vunpack.c.l.b16 %v581
  %v586 = vpack.c.b16 %v585, %v584
  %v588 = vsel %vm94, %v577, 0
  %v591 = vsel %vm94, %v578, 0
  %v594 = vsel %vm101, %v586, 0
  %596 = vmatpush.bf16.msra.mxu0 0
  %597 = vmatpush.bf16.msra.mxu0 0
  %598 = vmatpush.bf16.msra.mxu0 0
  %599 = vmatpush.bf16.msra.mxu0 0
  %600 = vmatpush.bf16.msra.mxu0 0
  %601 = vmatpush.bf16.msra.mxu0 0
  %602 = vmatpush.bf16.msra.mxu0 0
  %603 = vmatpush.bf16.msra.mxu0 %v594
  %604 = vmatmul.bf16.gmra.mxu0 %v588
  %v605 = vpop.f32.mrf.mxu0
  %v606 = vadd.f32 0.0, %v605
  %v607 = vpop.f32.mrf.mxu0
  %v608 = vadd.f32 0.0, %v607
  %609 = vmatmul.bf16.gmra.mxu0 %v591
  %v610 = vpop.f32.mrf.mxu0
  %v611 = vadd.f32 0.0, %v610
  %v612 = vpop.f32.mrf.mxu0
  %v613 = vadd.f32 0.0, %v612
  %614 = vdwg.mxu0
  %v615 = vadd.f32 %v549, %v606
  %v616 = vadd.f32 %v550, %v608
  %v617 = vadd.f32 %v551, %v611
  %v618 = vadd.f32 %v552, %v613
  %v619 = vld [vmem:[%s0] sm:$0xff]
  %v620 = vld [vmem:[%s0 + $0x8] sm:$0xff]
  %v621 = vld [vmem:[%s0 + $0x10] sm:$0xff]
  %v622 = vld [vmem:[%s0 + $0x18] sm:$0xff]
  %623 = vset.pattern.permute.xlu0 9
  %624 = vperm.xlu0 %623, %v28
  %v625 = vpop.permute.xlu0 %624
  %627 = vset.pattern.permute.xlu0 9
  %628 = vperm.xlu0 %627, %v29
  %v629 = vpop.permute.xlu0 %628
  %631 = vset.pattern.permute.xlu0 9
  %632 = vperm.xlu0 %631, %v30
  %v633 = vpop.permute.xlu0 %632
  %635 = vset.pattern.permute.xlu0 9
  %636 = vperm.xlu0 %635, %v31
  %v637 = vpop.permute.xlu0 %636
  %v639 = vmul.f32 %v619, %v625
  %v640 = vmul.f32 %v620, %v629
  %v641 = vmul.f32 %v621, %v633
  %v642 = vmul.f32 %v622, %v637
  %v643 = vpack.c.bf16 %v640, %v639
  %v644 = vpack.c.bf16 %v642, %v641
  %s645 = scalar_lea.vmem %s1, 72
  %v646 = vld [vmem:[%s645] sm:$0xf]
  %v647 = vld [vmem:[%s645 + $0x4] sm:$0x3]
  %v650 = vunpack.c.l.b16 %v646
  %v651 = vunpack.c.l.b16 %v647
  %v652 = vpack.c.b16 %v651, %v650
  %v654 = vsel %vm94, %v643, 0
  %v657 = vsel %vm94, %v644, 0
  %v660 = vsel %vm101, %v652, 0
  %662 = vmatpush.bf16.msra.mxu0 0
  %663 = vmatpush.bf16.msra.mxu0 0
  %664 = vmatpush.bf16.msra.mxu0 0
  %665 = vmatpush.bf16.msra.mxu0 0
  %666 = vmatpush.bf16.msra.mxu0 0
  %667 = vmatpush.bf16.msra.mxu0 0
  %668 = vmatpush.bf16.msra.mxu0 0
  %669 = vmatpush.bf16.msra.mxu0 %v660
  %670 = vmatmul.bf16.gmra.mxu0 %v654
  %v671 = vpop.f32.mrf.mxu0
  %v672 = vadd.f32 0.0, %v671
  %v673 = vpop.f32.mrf.mxu0
  %v674 = vadd.f32 0.0, %v673
  %675 = vmatmul.bf16.gmra.mxu0 %v657
  %v676 = vpop.f32.mrf.mxu0
  %v677 = vadd.f32 0.0, %v676
  %v678 = vpop.f32.mrf.mxu0
  %v679 = vadd.f32 0.0, %v678
  %680 = vdwg.mxu0
  %v681 = vadd.f32 %v615, %v672
  %v682 = vadd.f32 %v616, %v674
  %v683 = vadd.f32 %v617, %v677
  %v684 = vadd.f32 %v618, %v679
  %v685 = vld [vmem:[%s0 + $0x2] sm:$0xff]
  %v686 = vld [vmem:[%s0 + $0xa] sm:$0xff]
  %v687 = vld [vmem:[%s0 + $0x12] sm:$0xff]
  %v688 = vld [vmem:[%s0 + $0x1a] sm:$0xff]
  %689 = vset.pattern.permute.xlu0 10
  %690 = vperm.xlu0 %689, %v28
  %v691 = vpop.permute.xlu0 %690
  %693 = vset.pattern.permute.xlu0 10
  %694 = vperm.xlu0 %693, %v29
  %v695 = vpop.permute.xlu0 %694
  %697 = vset.pattern.permute.xlu0 10
  %698 = vperm.xlu0 %697, %v30
  %v699 = vpop.permute.xlu0 %698
  %701 = vset.pattern.permute.xlu0 10
  %702 = vperm.xlu0 %701, %v31
  %v703 = vpop.permute.xlu0 %702
  %v705 = vmul.f32 %v685, %v691
  %v706 = vmul.f32 %v686, %v695
  %v707 = vmul.f32 %v687, %v699
  %v708 = vmul.f32 %v688, %v703
  %v709 = vpack.c.bf16 %v706, %v705
  %v710 = vpack.c.bf16 %v708, %v707
  %s711 = scalar_lea.vmem %s1, 80
  %v712 = vld [vmem:[%s711] sm:$0xf]
  %v713 = vld [vmem:[%s711 + $0x4] sm:$0x3]
  %v716 = vunpack.c.l.b16 %v712
  %v717 = vunpack.c.l.b16 %v713
  %v718 = vpack.c.b16 %v717, %v716
  %v720 = vsel %vm94, %v709, 0
  %v723 = vsel %vm94, %v710, 0
  %v726 = vsel %vm101, %v718, 0
  %728 = vmatpush.bf16.msra.mxu0 0
  %729 = vmatpush.bf16.msra.mxu0 0
  %730 = vmatpush.bf16.msra.mxu0 0
  %731 = vmatpush.bf16.msra.mxu0 0
  %732 = vmatpush.bf16.msra.mxu0 0
  %733 = vmatpush.bf16.msra.mxu0 0
  %734 = vmatpush.bf16.msra.mxu0 0
  %735 = vmatpush.bf16.msra.mxu0 %v726
  %736 = vmatmul.bf16.gmra.mxu0 %v720
  %v737 = vpop.f32.mrf.mxu0
  %v738 = vadd.f32 0.0, %v737
  %v739 = vpop.f32.mrf.mxu0
  %v740 = vadd.f32 0.0, %v739
  %741 = vmatmul.bf16.gmra.mxu0 %v723
  %v742 = vpop.f32.mrf.mxu0
  %v743 = vadd.f32 0.0, %v742
  %v744 = vpop.f32.mrf.mxu0
  %v745 = vadd.f32 0.0, %v744
  %746 = vdwg.mxu0
  %v747 = vadd.f32 %v681, %v738
  %v748 = vadd.f32 %v682, %v740
  %v749 = vadd.f32 %v683, %v743
  %v750 = vadd.f32 %v684, %v745
  %v751 = vld [vmem:[%s0 + $0x4] sm:$0xff]
  %v752 = vld [vmem:[%s0 + $0xc] sm:$0xff]
  %v753 = vld [vmem:[%s0 + $0x14] sm:$0xff]
  %v754 = vld [vmem:[%s0 + $0x1c] sm:$0xff]
  %755 = vset.pattern.permute.xlu0 11
  %756 = vperm.xlu0 %755, %v28
  %v757 = vpop.permute.xlu0 %756
  %759 = vset.pattern.permute.xlu0 11
  %760 = vperm.xlu0 %759, %v29
  %v761 = vpop.permute.xlu0 %760
  %763 = vset.pattern.permute.xlu0 11
  %764 = vperm.xlu0 %763, %v30
  %v765 = vpop.permute.xlu0 %764
  %767 = vset.pattern.permute.xlu0 11
  %768 = vperm.xlu0 %767, %v31
  %v769 = vpop.permute.xlu0 %768
  %v771 = vmul.f32 %v751, %v757
  %v772 = vmul.f32 %v752, %v761
  %v773 = vmul.f32 %v753, %v765
  %v774 = vmul.f32 %v754, %v769
  %v775 = vpack.c.bf16 %v772, %v771
  %v776 = vpack.c.bf16 %v774, %v773
  %s777 = scalar_lea.vmem %s1, 88
  %v778 = vld [vmem:[%s777] sm:$0xf]
  %v779 = vld [vmem:[%s777 + $0x4] sm:$0x3]
  %v782 = vunpack.c.l.b16 %v778
  %v783 = vunpack.c.l.b16 %v779
  %v784 = vpack.c.b16 %v783, %v782
  %v786 = vsel %vm94, %v775, 0
  %v789 = vsel %vm94, %v776, 0
  %v792 = vsel %vm101, %v784, 0
  %794 = vmatpush.bf16.msra.mxu0 0
  %795 = vmatpush.bf16.msra.mxu0 0
  %796 = vmatpush.bf16.msra.mxu0 0
  %797 = vmatpush.bf16.msra.mxu0 0
  %798 = vmatpush.bf16.msra.mxu0 0
  %799 = vmatpush.bf16.msra.mxu0 0
  %800 = vmatpush.bf16.msra.mxu0 0
  %801 = vmatpush.bf16.msra.mxu0 %v792
  %802 = vmatmul.bf16.gmra.mxu0 %v786
  %v803 = vpop.f32.mrf.mxu0
  %v804 = vadd.f32 0.0, %v803
  %v805 = vpop.f32.mrf.mxu0
  %v806 = vadd.f32 0.0, %v805
  %807 = vmatmul.bf16.gmra.mxu0 %v789
  %v808 = vpop.f32.mrf.mxu0
  %v809 = vadd.f32 0.0, %v808
  %v810 = vpop.f32.mrf.mxu0
  %v811 = vadd.f32 0.0, %v810
  %812 = vdwg.mxu0
  %v813 = vadd.f32 %v747, %v804
  %v814 = vadd.f32 %v748, %v806
  %v815 = vadd.f32 %v749, %v809
  %v816 = vadd.f32 %v750, %v811
  %v817 = vld [vmem:[%s0 + $0x8] sm:$0xff]
  %v818 = vld [vmem:[%s0 + $0x10] sm:$0xff]
  %v819 = vld [vmem:[%s0 + $0x18] sm:$0xff]
  %v820 = vld [vmem:[%s0 + $0x20] sm:$0xff]
  %821 = vset.pattern.permute.xlu0 12
  %822 = vperm.xlu0 %821, %v28
  %v823 = vpop.permute.xlu0 %822
  %825 = vset.pattern.permute.xlu0 12
  %826 = vperm.xlu0 %825, %v29
  %v827 = vpop.permute.xlu0 %826
  %829 = vset.pattern.permute.xlu0 12
  %830 = vperm.xlu0 %829, %v30
  %v831 = vpop.permute.xlu0 %830
  %833 = vset.pattern.permute.xlu0 12
  %834 = vperm.xlu0 %833, %v31
  %v835 = vpop.permute.xlu0 %834
  %v837 = vmul.f32 %v817, %v823
  %v838 = vmul.f32 %v818, %v827
  %v839 = vmul.f32 %v819, %v831
  %v840 = vmul.f32 %v820, %v835
  %v841 = vpack.c.bf16 %v838, %v837
  %v842 = vpack.c.bf16 %v840, %v839
  %s843 = scalar_lea.vmem %s1, 96
  %v844 = vld [vmem:[%s843] sm:$0xf]
  %v845 = vld [vmem:[%s843 + $0x4] sm:$0x3]
  %v848 = vunpack.c.l.b16 %v844
  %v849 = vunpack.c.l.b16 %v845
  %v850 = vpack.c.b16 %v849, %v848
  %v852 = vsel %vm94, %v841, 0
  %v855 = vsel %vm94, %v842, 0
  %v858 = vsel %vm101, %v850, 0
  %860 = vmatpush.bf16.msra.mxu0 0
  %861 = vmatpush.bf16.msra.mxu0 0
  %862 = vmatpush.bf16.msra.mxu0 0
  %863 = vmatpush.bf16.msra.mxu0 0
  %864 = vmatpush.bf16.msra.mxu0 0
  %865 = vmatpush.bf16.msra.mxu0 0
  %866 = vmatpush.bf16.msra.mxu0 0
  %867 = vmatpush.bf16.msra.mxu0 %v858
  %868 = vmatmul.bf16.gmra.mxu0 %v852
  %v869 = vpop.f32.mrf.mxu0
  %v870 = vadd.f32 0.0, %v869
  %v871 = vpop.f32.mrf.mxu0
  %v872 = vadd.f32 0.0, %v871
  %873 = vmatmul.bf16.gmra.mxu0 %v855
  %v874 = vpop.f32.mrf.mxu0
  %v875 = vadd.f32 0.0, %v874
  %v876 = vpop.f32.mrf.mxu0
  %v877 = vadd.f32 0.0, %v876
  %878 = vdwg.mxu0
  %v879 = vadd.f32 %v813, %v870
  %v880 = vadd.f32 %v814, %v872
  %v881 = vadd.f32 %v815, %v875
  %v882 = vadd.f32 %v816, %v877
  %883 = vset.pattern.permute.xlu0 13
  %884 = vperm.xlu0 %883, %v28
  %v885 = vpop.permute.xlu0 %884
  %887 = vset.pattern.permute.xlu0 13
  %888 = vperm.xlu0 %887, %v29
  %v889 = vpop.permute.xlu0 %888
  %891 = vset.pattern.permute.xlu0 13
  %892 = vperm.xlu0 %891, %v30
  %v893 = vpop.permute.xlu0 %892
  %895 = vset.pattern.permute.xlu0 13
  %896 = vperm.xlu0 %895, %v31
  %v897 = vpop.permute.xlu0 %896
  %v899 = vmul.f32 %v289, %v885
  %v900 = vmul.f32 %v290, %v889
  %v901 = vmul.f32 %v291, %v893
  %v902 = vmul.f32 %v292, %v897
  %v903 = vpack.c.bf16 %v900, %v899
  %v904 = vpack.c.bf16 %v902, %v901
  %s905 = scalar_lea.vmem %s1, 104
  %v906 = vld [vmem:[%s905] sm:$0xf]
  %v907 = vld [vmem:[%s905 + $0x4] sm:$0x3]
  %v910 = vunpack.c.l.b16 %v906
  %v911 = vunpack.c.l.b16 %v907
  %v912 = vpack.c.b16 %v911, %v910
  %v914 = vsel %vm94, %v903, 0
  %v917 = vsel %vm94, %v904, 0
  %v920 = vsel %vm101, %v912, 0
  %922 = vmatpush.bf16.msra.mxu0 0
  %923 = vmatpush.bf16.msra.mxu0 0
  %924 = vmatpush.bf16.msra.mxu0 0
  %925 = vmatpush.bf16.msra.mxu0 0
  %926 = vmatpush.bf16.msra.mxu0 0
  %927 = vmatpush.bf16.msra.mxu0 0
  %928 = vmatpush.bf16.msra.mxu0 0
  %929 = vmatpush.bf16.msra.mxu0 %v920
  %930 = vmatmul.bf16.gmra.mxu0 %v914
  %v931 = vpop.f32.mrf.mxu0
  %v932 = vadd.f32 0.0, %v931
  %v933 = vpop.f32.mrf.mxu0
  %v934 = vadd.f32 0.0, %v933
  %935 = vmatmul.bf16.gmra.mxu0 %v917
  %v936 = vpop.f32.mrf.mxu0
  %v937 = vadd.f32 0.0, %v936
  %v938 = vpop.f32.mrf.mxu0
  %v939 = vadd.f32 0.0, %v938
  %940 = vdwg.mxu0
  %v941 = vadd.f32 %v879, %v932
  %v942 = vadd.f32 %v880, %v934
  %v943 = vadd.f32 %v881, %v937
  %v944 = vadd.f32 %v882, %v939
  %v945 = vld [vmem:[%s0 + $0xc] sm:$0xff]
  %v946 = vld [vmem:[%s0 + $0x14] sm:$0xff]
  %v947 = vld [vmem:[%s0 + $0x1c] sm:$0xff]
  %v948 = vld [vmem:[%s0 + $0x24] sm:$0xff]
  %949 = vset.pattern.permute.xlu0 14
  %950 = vperm.xlu0 %949, %v28
  %v951 = vpop.permute.xlu0 %950
  %953 = vset.pattern.permute.xlu0 14
  %954 = vperm.xlu0 %953, %v29
  %v955 = vpop.permute.xlu0 %954
  %957 = vset.pattern.permute.xlu0 14
  %958 = vperm.xlu0 %957, %v30
  %v959 = vpop.permute.xlu0 %958
  %961 = vset.pattern.permute.xlu0 14
  %962 = vperm.xlu0 %961, %v31
  %v963 = vpop.permute.xlu0 %962
  %v965 = vmul.f32 %v945, %v951
  %v966 = vmul.f32 %v946, %v955
  %v967 = vmul.f32 %v947, %v959
  %v968 = vmul.f32 %v948, %v963
  %v969 = vpack.c.bf16 %v966, %v965
  %v970 = vpack.c.bf16 %v968, %v967
  %s971 = scalar_lea.vmem %s1, 112
  %v972 = vld [vmem:[%s971] sm:$0xf]
  %v973 = vld [vmem:[%s971 + $0x4] sm:$0x3]
  %v976 = vunpack.c.l.b16 %v972
  %v977 = vunpack.c.l.b16 %v973
  %v978 = vpack.c.b16 %v977, %v976
  %v980 = vsel %vm94, %v969, 0
  %v983 = vsel %vm94, %v970, 0
  %v986 = vsel %vm101, %v978, 0
  %988 = vmatpush.bf16.msra.mxu0 0
  %989 = vmatpush.bf16.msra.mxu0 0
  %990 = vmatpush.bf16.msra.mxu0 0
  %991 = vmatpush.bf16.msra.mxu0 0
  %992 = vmatpush.bf16.msra.mxu0 0
  %993 = vmatpush.bf16.msra.mxu0 0
  %994 = vmatpush.bf16.msra.mxu0 0
  %995 = vmatpush.bf16.msra.mxu0 %v986
  %996 = vmatmul.bf16.gmra.mxu0 %v980
  %v997 = vpop.f32.mrf.mxu0
  %v998 = vadd.f32 0.0, %v997
  %v999 = vpop.f32.mrf.mxu0
  %v1000 = vadd.f32 0.0, %v999
  %1001 = vmatmul.bf16.gmra.mxu0 %v983
  %v1002 = vpop.f32.mrf.mxu0
  %v1003 = vadd.f32 0.0, %v1002
  %v1004 = vpop.f32.mrf.mxu0
  %v1005 = vadd.f32 0.0, %v1004
  %1006 = vdwg.mxu0
  %v1007 = vadd.f32 %v941, %v998
  %v1008 = vadd.f32 %v942, %v1000
  %v1009 = vadd.f32 %v943, %v1003
  %v1010 = vadd.f32 %v944, %v1005
  %v1011 = vld [vmem:[%s0 + $0x10] sm:$0xff]
  %v1012 = vld [vmem:[%s0 + $0x18] sm:$0xff]
  %v1013 = vld [vmem:[%s0 + $0x20] sm:$0xff]
  %v1014 = vld [vmem:[%s0 + $0x28] sm:$0xff]
  %1015 = vset.pattern.permute.xlu0 15
  %1016 = vperm.xlu0 %1015, %v28
  %v1017 = vpop.permute.xlu0 %1016
  %1019 = vset.pattern.permute.xlu0 15
  %1020 = vperm.xlu0 %1019, %v29
  %v1021 = vpop.permute.xlu0 %1020
  %1023 = vset.pattern.permute.xlu0 15
  %1024 = vperm.xlu0 %1023, %v30
  %v1025 = vpop.permute.xlu0 %1024
  %1027 = vset.pattern.permute.xlu0 15
  %1028 = vperm.xlu0 %1027, %v31
  %v1029 = vpop.permute.xlu0 %1028
  %v1031 = vmul.f32 %v1011, %v1017
  %v1032 = vmul.f32 %v1012, %v1021
  %v1033 = vmul.f32 %v1013, %v1025
  %v1034 = vmul.f32 %v1014, %v1029
  %v1035 = vpack.c.bf16 %v1032, %v1031
  %v1036 = vpack.c.bf16 %v1034, %v1033
  %s1037 = scalar_lea.vmem %s1, 120
  %v1038 = vld [vmem:[%s1037] sm:$0xf]
  %v1039 = vld [vmem:[%s1037 + $0x4] sm:$0x3]
  %v1042 = vunpack.c.l.b16 %v1038
  %v1043 = vunpack.c.l.b16 %v1039
  %v1044 = vpack.c.b16 %v1043, %v1042
  %v1046 = vsel %vm94, %v1035, 0
  %v1049 = vsel %vm94, %v1036, 0
  %v1052 = vsel %vm101, %v1044, 0
  %1054 = vmatpush.bf16.msra.mxu0 0
  %1055 = vmatpush.bf16.msra.mxu0 0
  %1056 = vmatpush.bf16.msra.mxu0 0
  %1057 = vmatpush.bf16.msra.mxu0 0
  %1058 = vmatpush.bf16.msra.mxu0 0
  %1059 = vmatpush.bf16.msra.mxu0 0
  %1060 = vmatpush.bf16.msra.mxu0 0
  %1061 = vmatpush.bf16.msra.mxu0 %v1052
  %1062 = vmatmul.bf16.gmra.mxu0 %v1046
  %v1063 = vpop.f32.mrf.mxu0
  %v1064 = vadd.f32 0.0, %v1063
  %v1065 = vpop.f32.mrf.mxu0
  %v1066 = vadd.f32 0.0, %v1065
  %1067 = vmatmul.bf16.gmra.mxu0 %v1049
  %v1068 = vpop.f32.mrf.mxu0
  %v1069 = vadd.f32 0.0, %v1068
  %v1070 = vpop.f32.mrf.mxu0
  %v1071 = vadd.f32 0.0, %v1070
  %1072 = vdwg.mxu0
  %v1073 = vadd.f32 %v1007, %v1064
  %v1074 = vadd.f32 %v1008, %v1066
  %v1075 = vadd.f32 %v1009, %v1069
  %v1076 = vadd.f32 %v1010, %v1071
  %v1077 = vld [vmem:[%s0 + $0x12] sm:$0xff]
  %v1078 = vld [vmem:[%s0 + $0x1a] sm:$0xff]
  %v1079 = vld [vmem:[%s0 + $0x22] sm:$0xff]
  %v1080 = vld [vmem:[%s0 + $0x2a] sm:$0xff]
  %1081 = vset.pattern.permute.xlu0 16
  %1082 = vperm.xlu0 %1081, %v28
  %v1083 = vpop.permute.xlu0 %1082
  %1085 = vset.pattern.permute.xlu0 16
  %1086 = vperm.xlu0 %1085, %v29
  %v1087 = vpop.permute.xlu0 %1086
  %1089 = vset.pattern.permute.xlu0 16
  %1090 = vperm.xlu0 %1089, %v30
  %v1091 = vpop.permute.xlu0 %1090
  %1093 = vset.pattern.permute.xlu0 16
  %1094 = vperm.xlu0 %1093, %v31
  %v1095 = vpop.permute.xlu0 %1094
  %v1097 = vmul.f32 %v1077, %v1083
  %v1098 = vmul.f32 %v1078, %v1087
  %v1099 = vmul.f32 %v1079, %v1091
  %v1100 = vmul.f32 %v1080, %v1095
  %v1101 = vpack.c.bf16 %v1098, %v1097
  %v1102 = vpack.c.bf16 %v1100, %v1099
  %s1103 = scalar_lea.vmem %s1, 128
  %v1104 = vld [vmem:[%s1103] sm:$0xf]
  %v1105 = vld [vmem:[%s1103 + $0x4] sm:$0x3]
  %v1108 = vunpack.c.l.b16 %v1104
  %v1109 = vunpack.c.l.b16 %v1105
  %v1110 = vpack.c.b16 %v1109, %v1108
  %v1112 = vsel %vm94, %v1101, 0
  %v1115 = vsel %vm94, %v1102, 0
  %v1118 = vsel %vm101, %v1110, 0
  %1120 = vmatpush.bf16.msra.mxu0 0
  %1121 = vmatpush.bf16.msra.mxu0 0
  %1122 = vmatpush.bf16.msra.mxu0 0
  %1123 = vmatpush.bf16.msra.mxu0 0
  %1124 = vmatpush.bf16.msra.mxu0 0
  %1125 = vmatpush.bf16.msra.mxu0 0
  %1126 = vmatpush.bf16.msra.mxu0 0
  %1127 = vmatpush.bf16.msra.mxu0 %v1118
  %1128 = vmatmul.bf16.gmra.mxu0 %v1112
  %v1129 = vpop.f32.mrf.mxu0
  %v1130 = vadd.f32 0.0, %v1129
  %v1131 = vpop.f32.mrf.mxu0
  %v1132 = vadd.f32 0.0, %v1131
  %1133 = vmatmul.bf16.gmra.mxu0 %v1115
  %v1134 = vpop.f32.mrf.mxu0
  %v1135 = vadd.f32 0.0, %v1134
  %v1136 = vpop.f32.mrf.mxu0
  %v1137 = vadd.f32 0.0, %v1136
  %1138 = vdwg.mxu0
  %v1139 = vadd.f32 %v1073, %v1130
  %v1140 = vadd.f32 %v1074, %v1132
  %v1141 = vadd.f32 %v1075, %v1135
  %v1142 = vadd.f32 %v1076, %v1137
  %v1143 = vld [vmem:[%s0 + $0x14] sm:$0xff]
  %v1144 = vld [vmem:[%s0 + $0x1c] sm:$0xff]
  %v1145 = vld [vmem:[%s0 + $0x24] sm:$0xff]
  %v1146 = vld [vmem:[%s0 + $0x2c] sm:$0xff]
  %1147 = vset.pattern.permute.xlu0 17
  %1148 = vperm.xlu0 %1147, %v28
  %v1149 = vpop.permute.xlu0 %1148
  %1151 = vset.pattern.permute.xlu0 17
  %1152 = vperm.xlu0 %1151, %v29
  %v1153 = vpop.permute.xlu0 %1152
  %1155 = vset.pattern.permute.xlu0 17
  %1156 = vperm.xlu0 %1155, %v30
  %v1157 = vpop.permute.xlu0 %1156
  %1159 = vset.pattern.permute.xlu0 17
  %1160 = vperm.xlu0 %1159, %v31
  %v1161 = vpop.permute.xlu0 %1160
  %v1163 = vmul.f32 %v1143, %v1149
  %v1164 = vmul.f32 %v1144, %v1153
  %v1165 = vmul.f32 %v1145, %v1157
  %v1166 = vmul.f32 %v1146, %v1161
  %v1167 = vpack.c.bf16 %v1164, %v1163
  %v1168 = vpack.c.bf16 %v1166, %v1165
  %s1169 = scalar_lea.vmem %s1, 136
  %v1170 = vld [vmem:[%s1169] sm:$0xf]
  %v1171 = vld [vmem:[%s1169 + $0x4] sm:$0x3]
  %v1174 = vunpack.c.l.b16 %v1170
  %v1175 = vunpack.c.l.b16 %v1171
  %v1176 = vpack.c.b16 %v1175, %v1174
  %v1178 = vsel %vm94, %v1167, 0
  %v1181 = vsel %vm94, %v1168, 0
  %v1184 = vsel %vm101, %v1176, 0
  %1186 = vmatpush.bf16.msra.mxu0 0
  %1187 = vmatpush.bf16.msra.mxu0 0
  %1188 = vmatpush.bf16.msra.mxu0 0
  %1189 = vmatpush.bf16.msra.mxu0 0
  %1190 = vmatpush.bf16.msra.mxu0 0
  %1191 = vmatpush.bf16.msra.mxu0 0
  %1192 = vmatpush.bf16.msra.mxu0 0
  %1193 = vmatpush.bf16.msra.mxu0 %v1184
  %1194 = vmatmul.bf16.gmra.mxu0 %v1178
  %v1195 = vpop.f32.mrf.mxu0
  %v1196 = vadd.f32 0.0, %v1195
  %v1197 = vpop.f32.mrf.mxu0
  %v1198 = vadd.f32 0.0, %v1197
  %1199 = vmatmul.bf16.gmra.mxu0 %v1181
  %v1200 = vpop.f32.mrf.mxu0
  %v1201 = vadd.f32 0.0, %v1200
  %v1202 = vpop.f32.mrf.mxu0
  %v1203 = vadd.f32 0.0, %v1202
  %1204 = vdwg.mxu0
  %v1205 = vadd.f32 %v1139, %v1196
  %v1206 = vadd.f32 %v1140, %v1198
  %v1207 = vadd.f32 %v1141, %v1201
  %v1208 = vadd.f32 %v1142, %v1203
  %1209 = vset.pattern.permute.xlu0 18
  %1210 = vperm.xlu0 %1209, %v28
  %v1211 = vpop.permute.xlu0 %1210
  %1213 = vset.pattern.permute.xlu0 18
  %1214 = vperm.xlu0 %1213, %v29
  %v1215 = vpop.permute.xlu0 %1214
  %1217 = vset.pattern.permute.xlu0 18
  %1218 = vperm.xlu0 %1217, %v30
  %v1219 = vpop.permute.xlu0 %1218
  %1221 = vset.pattern.permute.xlu0 18
  %1222 = vperm.xlu0 %1221, %v31
  %v1223 = vpop.permute.xlu0 %1222
  %v1225 = vmul.f32 %v289, %v1211
  %v1226 = vmul.f32 %v290, %v1215
  %v1227 = vmul.f32 %v291, %v1219
  %v1228 = vmul.f32 %v292, %v1223
  %v1229 = vpack.c.bf16 %v1226, %v1225
  %v1230 = vpack.c.bf16 %v1228, %v1227
  %s1231 = scalar_lea.vmem %s1, 144
  %v1232 = vld [vmem:[%s1231] sm:$0xf]
  %v1233 = vld [vmem:[%s1231 + $0x4] sm:$0x3]
  %v1236 = vunpack.c.l.b16 %v1232
  %v1237 = vunpack.c.l.b16 %v1233
  %v1238 = vpack.c.b16 %v1237, %v1236
  %v1240 = vsel %vm94, %v1229, 0
  %v1243 = vsel %vm94, %v1230, 0
  %v1246 = vsel %vm101, %v1238, 0
  %1248 = vmatpush.bf16.msra.mxu0 0
  %1249 = vmatpush.bf16.msra.mxu0 0
  %1250 = vmatpush.bf16.msra.mxu0 0
  %1251 = vmatpush.bf16.msra.mxu0 0
  %1252 = vmatpush.bf16.msra.mxu0 0
  %1253 = vmatpush.bf16.msra.mxu0 0
  %1254 = vmatpush.bf16.msra.mxu0 0
  %1255 = vmatpush.bf16.msra.mxu0 %v1246
  %1256 = vmatmul.bf16.gmra.mxu0 %v1240
  %v1257 = vpop.f32.mrf.mxu0
  %v1258 = vadd.f32 0.0, %v1257
  %v1259 = vpop.f32.mrf.mxu0
  %v1260 = vadd.f32 0.0, %v1259
  %1261 = vmatmul.bf16.gmra.mxu0 %v1243
  %v1262 = vpop.f32.mrf.mxu0
  %v1263 = vadd.f32 0.0, %v1262
  %v1264 = vpop.f32.mrf.mxu0
  %v1265 = vadd.f32 0.0, %v1264
  %1266 = vdwg.mxu0
  %v1267 = vadd.f32 %v1205, %v1258
  %v1268 = vadd.f32 %v1206, %v1260
  %v1269 = vadd.f32 %v1207, %v1263
  %v1270 = vadd.f32 %v1208, %v1265
  %1271 = vset.pattern.permute.xlu0 19
  %1272 = vperm.xlu0 %1271, %v28
  %v1273 = vpop.permute.xlu0 %1272
  %1275 = vset.pattern.permute.xlu0 19
  %1276 = vperm.xlu0 %1275, %v29
  %v1277 = vpop.permute.xlu0 %1276
  %1279 = vset.pattern.permute.xlu0 19
  %1280 = vperm.xlu0 %1279, %v30
  %v1281 = vpop.permute.xlu0 %1280
  %1283 = vset.pattern.permute.xlu0 19
  %1284 = vperm.xlu0 %1283, %v31
  %v1285 = vpop.permute.xlu0 %1284
  %v1287 = vmul.f32 %v289, %v1273
  %v1288 = vmul.f32 %v290, %v1277
  %v1289 = vmul.f32 %v291, %v1281
  %v1290 = vmul.f32 %v292, %v1285
  %v1291 = vpack.c.bf16 %v1288, %v1287
  %v1292 = vpack.c.bf16 %v1290, %v1289
  %s1293 = scalar_lea.vmem %s1, 152
  %v1294 = vld [vmem:[%s1293] sm:$0xf]
  %v1295 = vld [vmem:[%s1293 + $0x4] sm:$0x3]
  %v1298 = vunpack.c.l.b16 %v1294
  %v1299 = vunpack.c.l.b16 %v1295
  %v1300 = vpack.c.b16 %v1299, %v1298
  %v1302 = vsel %vm94, %v1291, 0
  %v1305 = vsel %vm94, %v1292, 0
  %v1308 = vsel %vm101, %v1300, 0
  %1310 = vmatpush.bf16.msra.mxu0 0
  %1311 = vmatpush.bf16.msra.mxu0 0
  %1312 = vmatpush.bf16.msra.mxu0 0
  %1313 = vmatpush.bf16.msra.mxu0 0
  %1314 = vmatpush.bf16.msra.mxu0 0
  %1315 = vmatpush.bf16.msra.mxu0 0
  %1316 = vmatpush.bf16.msra.mxu0 0
  %1317 = vmatpush.bf16.msra.mxu0 %v1308
  %1318 = vmatmul.bf16.gmra.mxu0 %v1302
  %v1319 = vpop.f32.mrf.mxu0
  %v1320 = vadd.f32 0.0, %v1319
  %v1321 = vpop.f32.mrf.mxu0
  %v1322 = vadd.f32 0.0, %v1321
  %1323 = vmatmul.bf16.gmra.mxu0 %v1305
  %v1324 = vpop.f32.mrf.mxu0
  %v1325 = vadd.f32 0.0, %v1324
  %v1326 = vpop.f32.mrf.mxu0
  %v1327 = vadd.f32 0.0, %v1326
  %1328 = vdwg.mxu0
  %v1329 = vadd.f32 %v1267, %v1320
  %v1330 = vadd.f32 %v1268, %v1322
  %v1331 = vadd.f32 %v1269, %v1325
  %v1332 = vadd.f32 %v1270, %v1327
  %1333 = vset.pattern.permute.xlu0 20
  %1334 = vperm.xlu0 %1333, %v28
  %v1335 = vpop.permute.xlu0 %1334
  %1337 = vset.pattern.permute.xlu0 20
  %1338 = vperm.xlu0 %1337, %v29
  %v1339 = vpop.permute.xlu0 %1338
  %1341 = vset.pattern.permute.xlu0 20
  %1342 = vperm.xlu0 %1341, %v30
  %v1343 = vpop.permute.xlu0 %1342
  %1345 = vset.pattern.permute.xlu0 20
  %1346 = vperm.xlu0 %1345, %v31
  %v1347 = vpop.permute.xlu0 %1346
  %v1349 = vmul.f32 %v289, %v1335
  %v1350 = vmul.f32 %v290, %v1339
  %v1351 = vmul.f32 %v291, %v1343
  %v1352 = vmul.f32 %v292, %v1347
  %v1353 = vpack.c.bf16 %v1350, %v1349
  %v1354 = vpack.c.bf16 %v1352, %v1351
  %s1355 = scalar_lea.vmem %s1, 160
  %v1356 = vld [vmem:[%s1355] sm:$0xf]
  %v1357 = vld [vmem:[%s1355 + $0x4] sm:$0x3]
  %v1360 = vunpack.c.l.b16 %v1356
  %v1361 = vunpack.c.l.b16 %v1357
  %v1362 = vpack.c.b16 %v1361, %v1360
  %v1364 = vsel %vm94, %v1353, 0
  %v1367 = vsel %vm94, %v1354, 0
  %v1370 = vsel %vm101, %v1362, 0
  %1372 = vmatpush.bf16.msra.mxu0 0
  %1373 = vmatpush.bf16.msra.mxu0 0
  %1374 = vmatpush.bf16.msra.mxu0 0
  %1375 = vmatpush.bf16.msra.mxu0 0
  %1376 = vmatpush.bf16.msra.mxu0 0
  %1377 = vmatpush.bf16.msra.mxu0 0
  %1378 = vmatpush.bf16.msra.mxu0 0
  %1379 = vmatpush.bf16.msra.mxu0 %v1370
  %1380 = vmatmul.bf16.gmra.mxu0 %v1364
  %v1381 = vpop.f32.mrf.mxu0
  %v1382 = vadd.f32 0.0, %v1381
  %v1383 = vpop.f32.mrf.mxu0
  %v1384 = vadd.f32 0.0, %v1383
  %1385 = vmatmul.bf16.gmra.mxu0 %v1367
  %v1386 = vpop.f32.mrf.mxu0
  %v1387 = vadd.f32 0.0, %v1386
  %v1388 = vpop.f32.mrf.mxu0
  %v1389 = vadd.f32 0.0, %v1388
  %1390 = vdwg.mxu0
  %v1391 = vadd.f32 %v1329, %v1382
  %v1392 = vadd.f32 %v1330, %v1384
  %v1393 = vadd.f32 %v1331, %v1387
  %v1394 = vadd.f32 %v1332, %v1389
  %v1395 = vld [vmem:[%s3] sm:$0x1]
  %v1396 = vld [vmem:[%s4] sm:$0x1]
  %v1397 = vld [vmem:[%s5] sm:$0x1]
  %vm1398 = vcmask 523264
  %v1399 = vsel %vm1398, %v1391, 0.0
  %v1400 = vsel %vm1398, %v1392, 0.0
  %v1401 = vadd.f32 %v1399, %v1400
  %v1402 = vsel %vm1398, %v1393, 0.0
  %v1403 = vadd.f32 %v1401, %v1402
  %v1404 = vsel %vm1398, %v1394, 0.0
  %v1405 = vadd.f32 %v1403, %v1404
  %v1406 = vrot.slane %v1405, 4
  %v1407 = vadd.f32 %v1405, %v1406
  %v1408 = vrot.slane %v1407, 2
  %v1409 = vadd.f32 %v1407, %v1408
  %v1410 = vrot.slane %v1409, 1
  %v1411 = vadd.f32 %v1409, %v1410
  %v1412 = vrcp.pop 32.0
  %v1413 = vmul.f32 32.0, %v1412
  %v1414 = vsub.f32 1.0, %v1413
  %v1415 = vmul.f32 %v1412, %v1414
  %v1416 = vadd.f32 %v1412, %v1415
  %vm1417 = vweird.f32 %v1412
  %v1418 = vsel %vm1417, %v1412, %v1416
  %v1419 = vmul.f32 %v1411, %v1418
  %v1420 = vsub.f32 %v1391, %v1419
  %v1421 = vsub.f32 %v1392, %v1419
  %v1422 = vsub.f32 %v1393, %v1419
  %v1423 = vsub.f32 %v1394, %v1419
  %v1424 = vmul.f32 %v1420, %v1420
  %v1425 = vmul.f32 %v1421, %v1421
  %v1426 = vmul.f32 %v1422, %v1422
  %v1427 = vmul.f32 %v1423, %v1423
  %v1428 = vsel %vm1398, %v1424, 0.0
  %v1429 = vsel %vm1398, %v1425, 0.0
  %v1430 = vadd.f32 %v1428, %v1429
  %v1431 = vsel %vm1398, %v1426, 0.0
  %v1432 = vadd.f32 %v1430, %v1431
  %v1433 = vsel %vm1398, %v1427, 0.0
  %v1434 = vadd.f32 %v1432, %v1433
  %v1435 = vrot.slane %v1434, 4
  %v1436 = vadd.f32 %v1434, %v1435
  %v1437 = vrot.slane %v1436, 2
  %v1438 = vadd.f32 %v1436, %v1437
  %v1439 = vrot.slane %v1438, 1
  %v1440 = vadd.f32 %v1438, %v1439
  %v1441 = vmul.f32 %v1440, %v1418
  %v1442 = vadd.f32 %v1441, 1e-05
  %v1443 = vrsqrt.pop %v1442
  %v1444 = vmul.f32 %v1443, %v1442
  %v1445 = vmul.f32 %v1444, %v1443
  %v1446 = vmul.f32 0.5, %v1445
  %v1447 = vsub.f32 1.5, %v1446
  %v1448 = vmul.f32 %v1443, %v1447
  %vm1449 = vweird.f32 %v1442
  %vm1450 = vweird.f32 %v1443
  %vm1451 = vmor %vm1449, %vm1450
  %v1452 = vsel %vm1451, %v1443, %v1448
  %v1453 = vmul.f32 %v1420, %v1452
  %v1454 = vmul.f32 %v1421, %v1452
  %v1455 = vmul.f32 %v1422, %v1452
  %v1456 = vmul.f32 %v1423, %v1452
  %v1458 = vperm.slane %v1395, 0
  %v1460 = vmul.f32 %v1453, %v1458
  %v1461 = vmul.f32 %v1454, %v1458
  %v1462 = vmul.f32 %v1455, %v1458
  %v1463 = vmul.f32 %v1456, %v1458
  %v1465 = vperm.slane %v1396, 0
  %v1467 = vadd.f32 %v1460, %v1465
  %v1468 = vadd.f32 %v1461, %v1465
  %v1469 = vadd.f32 %v1462, %v1465
  %v1470 = vadd.f32 %v1463, %v1465
  %vm1471 = vcmp.gt.f32.partialorder %v1467, 0.0
  %vm1472 = vcmp.gt.f32.partialorder %v1468, 0.0
  %vm1473 = vcmp.gt.f32.partialorder %v1469, 0.0
  %vm1474 = vcmp.gt.f32.partialorder %v1470, 0.0
  %v1476 = vperm.slane %v1397, 0
  %v1478 = vmul.f32 %v1476, %v1467
  %v1479 = vmul.f32 %v1476, %v1468
  %v1480 = vmul.f32 %v1476, %v1469
  %v1481 = vmul.f32 %v1476, %v1470
  %v1482 = vsel %vm1471, %v1467, %v1478
  %v1483 = vsel %vm1472, %v1468, %v1479
  %v1484 = vsel %vm1473, %v1469, %v1480
  %v1485 = vsel %vm1474, %v1470, %v1481
  %1486 = vst.msk [vmem:[%s6] sm:$0xff] %vm1398, %v1482
  %1487 = vst.msk [vmem:[%s6 + $0x8] sm:$0xff] %vm1398, %v1483
  %1488 = vst.msk [vmem:[%s6 + $0x10] sm:$0xff] %vm1398, %v1484
  %1489 = vst.msk [vmem:[%s6 + $0x18] sm:$0xff] %vm1398, %v1485
  // Predicated region
  $region26: #{espnet_forward.24} parent=0 // pred_check
    _
  $region27: #{espnet_forward.24} parent=0 // pred_check_branch
    %1491 = sbr.rel (0) target = $region29
  $region28: #{espnet_forward.24} parent=0 // pred_region
    _
  $region29: #{espnet_forward.24} parent=0 // pred_fallthru
    _
  // Predicated region
  $region30: #{espnet_forward.24} parent=0 // pred_check
    _
  $region31: #{espnet_forward.24} parent=0 // pred_check_branch
    %1493 = sbr.rel (0) target = $region33
  $region32: #{espnet_forward.24} parent=0 // pred_region
    _
  $region33: #{espnet_forward.24} parent=0 // pred_fallthru
    _

// kernel: espnet_forward.26
$region0: #{espnet_forward.26}
  #allocation0 [shape = 'u32[]', space=smem, size = 0x4, offset = 0x4, fixed_abs, tag = 'smem constant byte address 0x4 - core index']
  #allocation1 [shape = 'u32[72,128]{1,0:T(1,128)}', space=vmem, size = 0x9000, scoped, tag = 'internal scratch']
  %s0 = inlined_call_operand.vmem [shape: f32[52,12], index: 0, kind: input, shape index: {}]
  %s1 = inlined_call_operand.vmem [shape: bf16[21,12,64], index: 1, kind: input, shape index: {}]
  %s2 = inlined_call_operand.vmem [shape: f32[32,21], index: 2, kind: input, shape index: {}]
  %s3 = inlined_call_operand.vmem [shape: f32[32,64], index: 3, kind: input, shape index: {}]
  %s4 = inlined_call_operand.vmem [shape: f32[1,64], index: 4, kind: input, shape index: {}]
  %s5 = inlined_call_operand.vmem [shape: f32[1,64], index: 5, kind: input, shape index: {}]
  %s6 = inlined_call_operand.vmem [shape: f32[1,64], index: 6, kind: input, shape index: {}]
  %s7 = inlined_call_operand.vmem [shape: f32[32,64], index: 7, kind: output, shape index: {}]
  %s8 = sld [smem:[#allocation0]]
  $region38: #{espnet_forward.26} parent=0
    _
  %s10 = ssub.s32 1, %s8
  %s11 = scalar_select 0, %s10, %s8
  // Predicated region
  $region2: #{espnet_forward.26} parent=0 // pred_check
    _
  $region3: #{espnet_forward.26} parent=0 // pred_check_branch
    %13 = sbr.rel (0) target = $region5
  $region4: #{espnet_forward.26} parent=0 // pred_region
    _
  $region5: #{espnet_forward.26} parent=0 // pred_fallthru
    _
  // Predicated region
  $region6: #{espnet_forward.26} parent=0 // pred_check
    _
  $region7: #{espnet_forward.26} parent=0 // pred_check_branch
    %15 = sbr.rel (0) target = $region9
  $region8: #{espnet_forward.26} parent=0 // pred_region
    _
  $region9: #{espnet_forward.26} parent=0 // pred_fallthru
    _
  // Predicated region
  $region10: #{espnet_forward.26} parent=0 // pred_check
    _
  $region11: #{espnet_forward.26} parent=0 // pred_check_branch
    %17 = sbr.rel (0) target = $region13
  $region12: #{espnet_forward.26} parent=0 // pred_region
    _
  $region13: #{espnet_forward.26} parent=0 // pred_fallthru
    _
  // Predicated region
  $region14: #{espnet_forward.26} parent=0 // pred_check
    _
  $region15: #{espnet_forward.26} parent=0 // pred_check_branch
    %19 = sbr.rel (0) target = $region17
  $region16: #{espnet_forward.26} parent=0 // pred_region
    _
  $region17: #{espnet_forward.26} parent=0 // pred_fallthru
    _
  // Predicated region
  $region18: #{espnet_forward.26} parent=0 // pred_check
    _
  $region19: #{espnet_forward.26} parent=0 // pred_check_branch
    %21 = sbr.rel (0) target = $region21
  $region20: #{espnet_forward.26} parent=0 // pred_region
    _
  $region21: #{espnet_forward.26} parent=0 // pred_fallthru
    _
  // Predicated region
  $region22: #{espnet_forward.26} parent=0 // pred_check
    _
  $region23: #{espnet_forward.26} parent=0 // pred_check_branch
    %23 = sbr.rel (0) target = $region25
  $region24: #{espnet_forward.26} parent=0 // pred_region
    _
  $region25: #{espnet_forward.26} parent=0 // pred_fallthru
    _
  // Predicated region
  $region26: #{espnet_forward.26} parent=0 // pred_check
    _
  $region27: #{espnet_forward.26} parent=0 // pred_check_branch
    %25 = sbr.rel (0) target = $region29
  $region28: #{espnet_forward.26} parent=0 // pred_region
    _
  $region29: #{espnet_forward.26} parent=0 // pred_fallthru
    _
  %v27 = vld [vmem:[%s0 + $0x5] sm:$0xff]
  %v28 = vld [vmem:[%s0 + $0xd] sm:$0xff]
  %v29 = vld [vmem:[%s0 + $0x15] sm:$0xff]
  %v30 = vld [vmem:[%s0 + $0x1d] sm:$0xff]
  %v31 = vld [vmem:[%s2] sm:$0xff]
  %v32 = vld [vmem:[%s2 + $0x8] sm:$0xff]
  %v33 = vld [vmem:[%s2 + $0x10] sm:$0xff]
  %v34 = vld [vmem:[%s2 + $0x18] sm:$0xff]
  %36 = vset.pattern.permute.xlu0 0
  %37 = vperm.xlu0 %36, %v31
  %v38 = vpop.permute.xlu0 %37
  %41 = vset.pattern.permute.xlu0 0
  %42 = vperm.xlu0 %41, %v32
  %v43 = vpop.permute.xlu0 %42
  %46 = vset.pattern.permute.xlu0 0
  %47 = vperm.xlu0 %46, %v33
  %v48 = vpop.permute.xlu0 %47
  %51 = vset.pattern.permute.xlu0 0
  %52 = vperm.xlu0 %51, %v34
  %v53 = vpop.permute.xlu0 %52
  %v55 = vmul.f32 %v27, %v38
  %v56 = vmul.f32 %v28, %v43
  %v57 = vmul.f32 %v29, %v48
  %v58 = vmul.f32 %v30, %v53
  %v59 = vpack.c.bf16 %v56, %v55
  %v60 = vpack.c.bf16 %v58, %v57
  %v61 = vld [vmem:[%s1] sm:$0xf]
  %v62 = vld [vmem:[%s1 + $0x4] sm:$0x3]
  %v63 = vld [vmem:[%s0 + $0x6] sm:$0xff]
  %v64 = vld [vmem:[%s0 + $0xe] sm:$0xff]
  %v65 = vld [vmem:[%s0 + $0x16] sm:$0xff]
  %v66 = vld [vmem:[%s0 + $0x1e] sm:$0xff]
  %67 = vset.pattern.permute.xlu0 1
  %68 = vperm.xlu0 %67, %v31
  %v69 = vpop.permute.xlu0 %68
  %71 = vset.pattern.permute.xlu0 1
  %72 = vperm.xlu0 %71, %v32
  %v73 = vpop.permute.xlu0 %72
  %75 = vset.pattern.permute.xlu0 1
  %76 = vperm.xlu0 %75, %v33
  %v77 = vpop.permute.xlu0 %76
  %79 = vset.pattern.permute.xlu0 1
  %80 = vperm.xlu0 %79, %v34
  %v81 = vpop.permute.xlu0 %80
  %v83 = vmul.f32 %v63, %v69
  %v84 = vmul.f32 %v64, %v73
  %v85 = vmul.f32 %v65, %v77
  %v86 = vmul.f32 %v66, %v81
  %v87 = vpack.c.bf16 %v84, %v83
  %v88 = vpack.c.bf16 %v86, %v85
  %s89 = scalar_lea.vmem %s1, 8
  %v90 = vld [vmem:[%s89] sm:$0xf]
  %v91 = vld [vmem:[%s89 + $0x4] sm:$0x3]
  %v94 = vunpack.c.l.b16 %v90
  %v95 = vunpack.c.l.b16 %v91
  %v96 = vpack.c.b16 %v95, %v94
  %vm97 = vcmask 97280
  %v99 = vsel %vm97, %v87, 0
  %v102 = vsel %vm97, %v88, 0
  %vm104 = vcmask 1045504
  %v106 = vsel %vm104, %v96, 0
  %108 = vmatpush.bf16.msra.mxu0 0
  %109 = vmatpush.bf16.msra.mxu0 0
  %110 = vmatpush.bf16.msra.mxu0 0
  %111 = vmatpush.bf16.msra.mxu0 0
  %112 = vmatpush.bf16.msra.mxu0 0
  %113 = vmatpush.bf16.msra.mxu0 0
  %114 = vmatpush.bf16.msra.mxu0 0
  %115 = vmatpush.bf16.msra.mxu0 %v106
  %116 = vmatmul.bf16.gmra.mxu0 %v99
  %v117 = vpop.f32.mrf.mxu0
  %v118 = vadd.f32 0.0, %v117
  %v119 = vpop.f32.mrf.mxu0
  %v120 = vadd.f32 0.0, %v119
  %121 = vmatmul.bf16.gmra.mxu0 %v102
  %v122 = vpop.f32.mrf.mxu0
  %v123 = vadd.f32 0.0, %v122
  %v124 = vpop.f32.mrf.mxu0
  %v125 = vadd.f32 0.0, %v124
  %126 = vdwg.mxu0
  %v129 = vunpack.c.l.b16 %v61
  %v130 = vunpack.c.l.b16 %v62
  %v131 = vpack.c.b16 %v130, %v129
  %v133 = vsel %vm97, %v59, 0
  %v136 = vsel %vm97, %v60, 0
  %v139 = vsel %vm104, %v131, 0
  %141 = vmatpush.bf16.msra.mxu0 0
  %142 = vmatpush.bf16.msra.mxu0 0
  %143 = vmatpush.bf16.msra.mxu0 0
  %144 = vmatpush.bf16.msra.mxu0 0
  %145 = vmatpush.bf16.msra.mxu0 0
  %146 = vmatpush.bf16.msra.mxu0 0
  %147 = vmatpush.bf16.msra.mxu0 0
  %148 = vmatpush.bf16.msra.mxu0 %v139
  %149 = vmatmul.bf16.gmra.mxu0 %v133
  %v150 = vpop.f32.mrf.mxu0
  %v151 = vadd.f32 %v118, %v150
  %v152 = vpop.f32.mrf.mxu0
  %v153 = vadd.f32 %v120, %v152
  %154 = vmatmul.bf16.gmra.mxu0 %v136
  %v155 = vpop.f32.mrf.mxu0
  %v156 = vadd.f32 %v123, %v155
  %v157 = vpop.f32.mrf.mxu0
  %v158 = vadd.f32 %v125, %v157
  %159 = vdwg.mxu0
  %v160 = vld [vmem:[%s0 + $0x7] sm:$0xff]
  %v161 = vld [vmem:[%s0 + $0xf] sm:$0xff]
  %v162 = vld [vmem:[%s0 + $0x17] sm:$0xff]
  %v163 = vld [vmem:[%s0 + $0x1f] sm:$0xff]
  %164 = vset.pattern.permute.xlu0 2
  %165 = vperm.xlu0 %164, %v31
  %v166 = vpop.permute.xlu0 %165
  %168 = vset.pattern.permute.xlu0 2
  %169 = vperm.xlu0 %168, %v32
  %v170 = vpop.permute.xlu0 %169
  %172 = vset.pattern.permute.xlu0 2
  %173 = vperm.xlu0 %172, %v33
  %v174 = vpop.permute.xlu0 %173
  %176 = vset.pattern.permute.xlu0 2
  %177 = vperm.xlu0 %176, %v34
  %v178 = vpop.permute.xlu0 %177
  %v180 = vmul.f32 %v160, %v166
  %v181 = vmul.f32 %v161, %v170
  %v182 = vmul.f32 %v162, %v174
  %v183 = vmul.f32 %v163, %v178
  %v184 = vpack.c.bf16 %v181, %v180
  %v185 = vpack.c.bf16 %v183, %v182
  %s186 = scalar_lea.vmem %s1, 16
  %v187 = vld [vmem:[%s186] sm:$0xf]
  %v188 = vld [vmem:[%s186 + $0x4] sm:$0x3]
  %v191 = vunpack.c.l.b16 %v187
  %v192 = vunpack.c.l.b16 %v188
  %v193 = vpack.c.b16 %v192, %v191
  %v195 = vsel %vm97, %v184, 0
  %v198 = vsel %vm97, %v185, 0
  %v201 = vsel %vm104, %v193, 0
  %203 = vmatpush.bf16.msra.mxu0 0
  %204 = vmatpush.bf16.msra.mxu0 0
  %205 = vmatpush.bf16.msra.mxu0 0
  %206 = vmatpush.bf16.msra.mxu0 0
  %207 = vmatpush.bf16.msra.mxu0 0
  %208 = vmatpush.bf16.msra.mxu0 0
  %209 = vmatpush.bf16.msra.mxu0 0
  %210 = vmatpush.bf16.msra.mxu0 %v201
  %211 = vmatmul.bf16.gmra.mxu0 %v195
  %v212 = vpop.f32.mrf.mxu0
  %v213 = vadd.f32 0.0, %v212
  %v214 = vpop.f32.mrf.mxu0
  %v215 = vadd.f32 0.0, %v214
  %216 = vmatmul.bf16.gmra.mxu0 %v198
  %v217 = vpop.f32.mrf.mxu0
  %v218 = vadd.f32 0.0, %v217
  %v219 = vpop.f32.mrf.mxu0
  %v220 = vadd.f32 0.0, %v219
  %221 = vdwg.mxu0
  %v222 = vadd.f32 %v151, %v213
  %v223 = vadd.f32 %v153, %v215
  %v224 = vadd.f32 %v156, %v218
  %v225 = vadd.f32 %v158, %v220
  %v226 = vld [vmem:[%s0 + $0x9] sm:$0xff]
  %v227 = vld [vmem:[%s0 + $0x11] sm:$0xff]
  %v228 = vld [vmem:[%s0 + $0x19] sm:$0xff]
  %v229 = vld [vmem:[%s0 + $0x21] sm:$0xff]
  %230 = vset.pattern.permute.xlu0 3
  %231 = vperm.xlu0 %230, %v31
  %v232 = vpop.permute.xlu0 %231
  %234 = vset.pattern.permute.xlu0 3
  %235 = vperm.xlu0 %234, %v32
  %v236 = vpop.permute.xlu0 %235
  %238 = vset.pattern.permute.xlu0 3
  %239 = vperm.xlu0 %238, %v33
  %v240 = vpop.permute.xlu0 %239
  %242 = vset.pattern.permute.xlu0 3
  %243 = vperm.xlu0 %242, %v34
  %v244 = vpop.permute.xlu0 %243
  %v246 = vmul.f32 %v226, %v232
  %v247 = vmul.f32 %v227, %v236
  %v248 = vmul.f32 %v228, %v240
  %v249 = vmul.f32 %v229, %v244
  %v250 = vpack.c.bf16 %v247, %v246
  %v251 = vpack.c.bf16 %v249, %v248
  %s252 = scalar_lea.vmem %s1, 24
  %v253 = vld [vmem:[%s252] sm:$0xf]
  %v254 = vld [vmem:[%s252 + $0x4] sm:$0x3]
  %v257 = vunpack.c.l.b16 %v253
  %v258 = vunpack.c.l.b16 %v254
  %v259 = vpack.c.b16 %v258, %v257
  %v261 = vsel %vm97, %v250, 0
  %v264 = vsel %vm97, %v251, 0
  %v267 = vsel %vm104, %v259, 0
  %269 = vmatpush.bf16.msra.mxu0 0
  %270 = vmatpush.bf16.msra.mxu0 0
  %271 = vmatpush.bf16.msra.mxu0 0
  %272 = vmatpush.bf16.msra.mxu0 0
  %273 = vmatpush.bf16.msra.mxu0 0
  %274 = vmatpush.bf16.msra.mxu0 0
  %275 = vmatpush.bf16.msra.mxu0 0
  %276 = vmatpush.bf16.msra.mxu0 %v267
  %277 = vmatmul.bf16.gmra.mxu0 %v261
  %v278 = vpop.f32.mrf.mxu0
  %v279 = vadd.f32 0.0, %v278
  %v280 = vpop.f32.mrf.mxu0
  %v281 = vadd.f32 0.0, %v280
  %282 = vmatmul.bf16.gmra.mxu0 %v264
  %v283 = vpop.f32.mrf.mxu0
  %v284 = vadd.f32 0.0, %v283
  %v285 = vpop.f32.mrf.mxu0
  %v286 = vadd.f32 0.0, %v285
  %287 = vdwg.mxu0
  %v288 = vadd.f32 %v222, %v279
  %v289 = vadd.f32 %v223, %v281
  %v290 = vadd.f32 %v224, %v284
  %v291 = vadd.f32 %v225, %v286
  %v292 = vld [vmem:[%s0 + $0xa] sm:$0xff]
  %v293 = vld [vmem:[%s0 + $0x12] sm:$0xff]
  %v294 = vld [vmem:[%s0 + $0x1a] sm:$0xff]
  %v295 = vld [vmem:[%s0 + $0x22] sm:$0xff]
  %296 = vset.pattern.permute.xlu0 4
  %297 = vperm.xlu0 %296, %v31
  %v298 = vpop.permute.xlu0 %297
  %300 = vset.pattern.permute.xlu0 4
  %301 = vperm.xlu0 %300, %v32
  %v302 = vpop.permute.xlu0 %301
  %304 = vset.pattern.permute.xlu0 4
  %305 = vperm.xlu0 %304, %v33
  %v306 = vpop.permute.xlu0 %305
  %308 = vset.pattern.permute.xlu0 4
  %309 = vperm.xlu0 %308, %v34
  %v310 = vpop.permute.xlu0 %309
  %v312 = vmul.f32 %v292, %v298
  %v313 = vmul.f32 %v293, %v302
  %v314 = vmul.f32 %v294, %v306
  %v315 = vmul.f32 %v295, %v310
  %v316 = vpack.c.bf16 %v313, %v312
  %v317 = vpack.c.bf16 %v315, %v314
  %s318 = scalar_lea.vmem %s1, 32
  %v319 = vld [vmem:[%s318] sm:$0xf]
  %v320 = vld [vmem:[%s318 + $0x4] sm:$0x3]
  %v323 = vunpack.c.l.b16 %v319
  %v324 = vunpack.c.l.b16 %v320
  %v325 = vpack.c.b16 %v324, %v323
  %v327 = vsel %vm97, %v316, 0
  %v330 = vsel %vm97, %v317, 0
  %v333 = vsel %vm104, %v325, 0
  %335 = vmatpush.bf16.msra.mxu0 0
  %336 = vmatpush.bf16.msra.mxu0 0
  %337 = vmatpush.bf16.msra.mxu0 0
  %338 = vmatpush.bf16.msra.mxu0 0
  %339 = vmatpush.bf16.msra.mxu0 0
  %340 = vmatpush.bf16.msra.mxu0 0
  %341 = vmatpush.bf16.msra.mxu0 0
  %342 = vmatpush.bf16.msra.mxu0 %v333
  %343 = vmatmul.bf16.gmra.mxu0 %v327
  %v344 = vpop.f32.mrf.mxu0
  %v345 = vadd.f32 0.0, %v344
  %v346 = vpop.f32.mrf.mxu0
  %v347 = vadd.f32 0.0, %v346
  %348 = vmatmul.bf16.gmra.mxu0 %v330
  %v349 = vpop.f32.mrf.mxu0
  %v350 = vadd.f32 0.0, %v349
  %v351 = vpop.f32.mrf.mxu0
  %v352 = vadd.f32 0.0, %v351
  %353 = vdwg.mxu0
  %v354 = vadd.f32 %v288, %v345
  %v355 = vadd.f32 %v289, %v347
  %v356 = vadd.f32 %v290, %v350
  %v357 = vadd.f32 %v291, %v352
  %v358 = vld [vmem:[%s0 + $0xb] sm:$0xff]
  %v359 = vld [vmem:[%s0 + $0x13] sm:$0xff]
  %v360 = vld [vmem:[%s0 + $0x1b] sm:$0xff]
  %v361 = vld [vmem:[%s0 + $0x23] sm:$0xff]
  %362 = vset.pattern.permute.xlu0 5
  %363 = vperm.xlu0 %362, %v31
  %v364 = vpop.permute.xlu0 %363
  %366 = vset.pattern.permute.xlu0 5
  %367 = vperm.xlu0 %366, %v32
  %v368 = vpop.permute.xlu0 %367
  %370 = vset.pattern.permute.xlu0 5
  %371 = vperm.xlu0 %370, %v33
  %v372 = vpop.permute.xlu0 %371
  %374 = vset.pattern.permute.xlu0 5
  %375 = vperm.xlu0 %374, %v34
  %v376 = vpop.permute.xlu0 %375
  %v378 = vmul.f32 %v358, %v364
  %v379 = vmul.f32 %v359, %v368
  %v380 = vmul.f32 %v360, %v372
  %v381 = vmul.f32 %v361, %v376
  %v382 = vpack.c.bf16 %v379, %v378
  %v383 = vpack.c.bf16 %v381, %v380
  %s384 = scalar_lea.vmem %s1, 40
  %v385 = vld [vmem:[%s384] sm:$0xf]
  %v386 = vld [vmem:[%s384 + $0x4] sm:$0x3]
  %v389 = vunpack.c.l.b16 %v385
  %v390 = vunpack.c.l.b16 %v386
  %v391 = vpack.c.b16 %v390, %v389
  %v393 = vsel %vm97, %v382, 0
  %v396 = vsel %vm97, %v383, 0
  %v399 = vsel %vm104, %v391, 0
  %401 = vmatpush.bf16.msra.mxu0 0
  %402 = vmatpush.bf16.msra.mxu0 0
  %403 = vmatpush.bf16.msra.mxu0 0
  %404 = vmatpush.bf16.msra.mxu0 0
  %405 = vmatpush.bf16.msra.mxu0 0
  %406 = vmatpush.bf16.msra.mxu0 0
  %407 = vmatpush.bf16.msra.mxu0 0
  %408 = vmatpush.bf16.msra.mxu0 %v399
  %409 = vmatmul.bf16.gmra.mxu0 %v393
  %v410 = vpop.f32.mrf.mxu0
  %v411 = vadd.f32 0.0, %v410
  %v412 = vpop.f32.mrf.mxu0
  %v413 = vadd.f32 0.0, %v412
  %414 = vmatmul.bf16.gmra.mxu0 %v396
  %v415 = vpop.f32.mrf.mxu0
  %v416 = vadd.f32 0.0, %v415
  %v417 = vpop.f32.mrf.mxu0
  %v418 = vadd.f32 0.0, %v417
  %419 = vdwg.mxu0
  %v420 = vadd.f32 %v354, %v411
  %v421 = vadd.f32 %v355, %v413
  %v422 = vadd.f32 %v356, %v416
  %v423 = vadd.f32 %v357, %v418
  %v424 = vld [vmem:[%s0 + $0xd] sm:$0xff]
  %v425 = vld [vmem:[%s0 + $0x15] sm:$0xff]
  %v426 = vld [vmem:[%s0 + $0x1d] sm:$0xff]
  %v427 = vld [vmem:[%s0 + $0x25] sm:$0xff]
  %428 = vset.pattern.permute.xlu0 6
  %429 = vperm.xlu0 %428, %v31
  %v430 = vpop.permute.xlu0 %429
  %432 = vset.pattern.permute.xlu0 6
  %433 = vperm.xlu0 %432, %v32
  %v434 = vpop.permute.xlu0 %433
  %436 = vset.pattern.permute.xlu0 6
  %437 = vperm.xlu0 %436, %v33
  %v438 = vpop.permute.xlu0 %437
  %440 = vset.pattern.permute.xlu0 6
  %441 = vperm.xlu0 %440, %v34
  %v442 = vpop.permute.xlu0 %441
  %v444 = vmul.f32 %v424, %v430
  %v445 = vmul.f32 %v425, %v434
  %v446 = vmul.f32 %v426, %v438
  %v447 = vmul.f32 %v427, %v442
  %v448 = vpack.c.bf16 %v445, %v444
  %v449 = vpack.c.bf16 %v447, %v446
  %s450 = scalar_lea.vmem %s1, 48
  %v451 = vld [vmem:[%s450] sm:$0xf]
  %v452 = vld [vmem:[%s450 + $0x4] sm:$0x3]
  %v455 = vunpack.c.l.b16 %v451
  %v456 = vunpack.c.l.b16 %v452
  %v457 = vpack.c.b16 %v456, %v455
  %v459 = vsel %vm97, %v448, 0
  %v462 = vsel %vm97, %v449, 0
  %v465 = vsel %vm104, %v457, 0
  %467 = vmatpush.bf16.msra.mxu0 0
  %468 = vmatpush.bf16.msra.mxu0 0
  %469 = vmatpush.bf16.msra.mxu0 0
  %470 = vmatpush.bf16.msra.mxu0 0
  %471 = vmatpush.bf16.msra.mxu0 0
  %472 = vmatpush.bf16.msra.mxu0 0
  %473 = vmatpush.bf16.msra.mxu0 0
  %474 = vmatpush.bf16.msra.mxu0 %v465
  %475 = vmatmul.bf16.gmra.mxu0 %v459
  %v476 = vpop.f32.mrf.mxu0
  %v477 = vadd.f32 0.0, %v476
  %v478 = vpop.f32.mrf.mxu0
  %v479 = vadd.f32 0.0, %v478
  %480 = vmatmul.bf16.gmra.mxu0 %v462
  %v481 = vpop.f32.mrf.mxu0
  %v482 = vadd.f32 0.0, %v481
  %v483 = vpop.f32.mrf.mxu0
  %v484 = vadd.f32 0.0, %v483
  %485 = vdwg.mxu0
  %v486 = vadd.f32 %v420, %v477
  %v487 = vadd.f32 %v421, %v479
  %v488 = vadd.f32 %v422, %v482
  %v489 = vadd.f32 %v423, %v484
  %v490 = vld [vmem:[%s0 + $0xe] sm:$0xff]
  %v491 = vld [vmem:[%s0 + $0x16] sm:$0xff]
  %v492 = vld [vmem:[%s0 + $0x1e] sm:$0xff]
  %v493 = vld [vmem:[%s0 + $0x26] sm:$0xff]
  %494 = vset.pattern.permute.xlu0 7
  %495 = vperm.xlu0 %494, %v31
  %v496 = vpop.permute.xlu0 %495
  %498 = vset.pattern.permute.xlu0 7
  %499 = vperm.xlu0 %498, %v32
  %v500 = vpop.permute.xlu0 %499
  %502 = vset.pattern.permute.xlu0 7
  %503 = vperm.xlu0 %502, %v33
  %v504 = vpop.permute.xlu0 %503
  %506 = vset.pattern.permute.xlu0 7
  %507 = vperm.xlu0 %506, %v34
  %v508 = vpop.permute.xlu0 %507
  %v510 = vmul.f32 %v490, %v496
  %v511 = vmul.f32 %v491, %v500
  %v512 = vmul.f32 %v492, %v504
  %v513 = vmul.f32 %v493, %v508
  %v514 = vpack.c.bf16 %v511, %v510
  %v515 = vpack.c.bf16 %v513, %v512
  %s516 = scalar_lea.vmem %s1, 56
  %v517 = vld [vmem:[%s516] sm:$0xf]
  %v518 = vld [vmem:[%s516 + $0x4] sm:$0x3]
  %v521 = vunpack.c.l.b16 %v517
  %v522 = vunpack.c.l.b16 %v518
  %v523 = vpack.c.b16 %v522, %v521
  %v525 = vsel %vm97, %v514, 0
  %v528 = vsel %vm97, %v515, 0
  %v531 = vsel %vm104, %v523, 0
  %533 = vmatpush.bf16.msra.mxu0 0
  %534 = vmatpush.bf16.msra.mxu0 0
  %535 = vmatpush.bf16.msra.mxu0 0
  %536 = vmatpush.bf16.msra.mxu0 0
  %537 = vmatpush.bf16.msra.mxu0 0
  %538 = vmatpush.bf16.msra.mxu0 0
  %539 = vmatpush.bf16.msra.mxu0 0
  %540 = vmatpush.bf16.msra.mxu0 %v531
  %541 = vmatmul.bf16.gmra.mxu0 %v525
  %v542 = vpop.f32.mrf.mxu0
  %v543 = vadd.f32 0.0, %v542
  %v544 = vpop.f32.mrf.mxu0
  %v545 = vadd.f32 0.0, %v544
  %546 = vmatmul.bf16.gmra.mxu0 %v528
  %v547 = vpop.f32.mrf.mxu0
  %v548 = vadd.f32 0.0, %v547
  %v549 = vpop.f32.mrf.mxu0
  %v550 = vadd.f32 0.0, %v549
  %551 = vdwg.mxu0
  %v552 = vadd.f32 %v486, %v543
  %v553 = vadd.f32 %v487, %v545
  %v554 = vadd.f32 %v488, %v548
  %v555 = vadd.f32 %v489, %v550
  %v556 = vld [vmem:[%s0 + $0xf] sm:$0xff]
  %v557 = vld [vmem:[%s0 + $0x17] sm:$0xff]
  %v558 = vld [vmem:[%s0 + $0x1f] sm:$0xff]
  %v559 = vld [vmem:[%s0 + $0x27] sm:$0xff]
  %560 = vset.pattern.permute.xlu0 8
  %561 = vperm.xlu0 %560, %v31
  %v562 = vpop.permute.xlu0 %561
  %564 = vset.pattern.permute.xlu0 8
  %565 = vperm.xlu0 %564, %v32
  %v566 = vpop.permute.xlu0 %565
  %568 = vset.pattern.permute.xlu0 8
  %569 = vperm.xlu0 %568, %v33
  %v570 = vpop.permute.xlu0 %569
  %572 = vset.pattern.permute.xlu0 8
  %573 = vperm.xlu0 %572, %v34
  %v574 = vpop.permute.xlu0 %573
  %v576 = vmul.f32 %v556, %v562
  %v577 = vmul.f32 %v557, %v566
  %v578 = vmul.f32 %v558, %v570
  %v579 = vmul.f32 %v559, %v574
  %v580 = vpack.c.bf16 %v577, %v576
  %v581 = vpack.c.bf16 %v579, %v578
  %s582 = scalar_lea.vmem %s1, 64
  %v583 = vld [vmem:[%s582] sm:$0xf]
  %v584 = vld [vmem:[%s582 + $0x4] sm:$0x3]
  %v587 = vunpack.c.l.b16 %v583
  %v588 = vunpack.c.l.b16 %v584
  %v589 = vpack.c.b16 %v588, %v587
  %v591 = vsel %vm97, %v580, 0
  %v594 = vsel %vm97, %v581, 0
  %v597 = vsel %vm104, %v589, 0
  %599 = vmatpush.bf16.msra.mxu0 0
  %600 = vmatpush.bf16.msra.mxu0 0
  %601 = vmatpush.bf16.msra.mxu0 0
  %602 = vmatpush.bf16.msra.mxu0 0
  %603 = vmatpush.bf16.msra.mxu0 0
  %604 = vmatpush.bf16.msra.mxu0 0
  %605 = vmatpush.bf16.msra.mxu0 0
  %606 = vmatpush.bf16.msra.mxu0 %v597
  %607 = vmatmul.bf16.gmra.mxu0 %v591
  %v608 = vpop.f32.mrf.mxu0
  %v609 = vadd.f32 0.0, %v608
  %v610 = vpop.f32.mrf.mxu0
  %v611 = vadd.f32 0.0, %v610
  %612 = vmatmul.bf16.gmra.mxu0 %v594
  %v613 = vpop.f32.mrf.mxu0
  %v614 = vadd.f32 0.0, %v613
  %v615 = vpop.f32.mrf.mxu0
  %v616 = vadd.f32 0.0, %v615
  %617 = vdwg.mxu0
  %v618 = vadd.f32 %v552, %v609
  %v619 = vadd.f32 %v553, %v611
  %v620 = vadd.f32 %v554, %v614
  %v621 = vadd.f32 %v555, %v616
  %v622 = vld [vmem:[%s0] sm:$0xff]
  %v623 = vld [vmem:[%s0 + $0x8] sm:$0xff]
  %v624 = vld [vmem:[%s0 + $0x10] sm:$0xff]
  %v625 = vld [vmem:[%s0 + $0x18] sm:$0xff]
  %626 = vset.pattern.permute.xlu0 9
  %627 = vperm.xlu0 %626, %v31
  %v628 = vpop.permute.xlu0 %627
  %630 = vset.pattern.permute.xlu0 9
  %631 = vperm.xlu0 %630, %v32
  %v632 = vpop.permute.xlu0 %631
  %634 = vset.pattern.permute.xlu0 9
  %635 = vperm.xlu0 %634, %v33
  %v636 = vpop.permute.xlu0 %635
  %638 = vset.pattern.permute.xlu0 9
  %639 = vperm.xlu0 %638, %v34
  %v640 = vpop.permute.xlu0 %639
  %v642 = vmul.f32 %v622, %v628
  %v643 = vmul.f32 %v623, %v632
  %v644 = vmul.f32 %v624, %v636
  %v645 = vmul.f32 %v625, %v640
  %v646 = vpack.c.bf16 %v643, %v642
  %v647 = vpack.c.bf16 %v645, %v644
  %s648 = scalar_lea.vmem %s1, 72
  %v649 = vld [vmem:[%s648] sm:$0xf]
  %v650 = vld [vmem:[%s648 + $0x4] sm:$0x3]
  %v653 = vunpack.c.l.b16 %v649
  %v654 = vunpack.c.l.b16 %v650
  %v655 = vpack.c.b16 %v654, %v653
  %v657 = vsel %vm97, %v646, 0
  %v660 = vsel %vm97, %v647, 0
  %v663 = vsel %vm104, %v655, 0
  %665 = vmatpush.bf16.msra.mxu0 0
  %666 = vmatpush.bf16.msra.mxu0 0
  %667 = vmatpush.bf16.msra.mxu0 0
  %668 = vmatpush.bf16.msra.mxu0 0
  %669 = vmatpush.bf16.msra.mxu0 0
  %670 = vmatpush.bf16.msra.mxu0 0
  %671 = vmatpush.bf16.msra.mxu0 0
  %672 = vmatpush.bf16.msra.mxu0 %v663
  %673 = vmatmul.bf16.gmra.mxu0 %v657
  %v674 = vpop.f32.mrf.mxu0
  %v675 = vadd.f32 0.0, %v674
  %v676 = vpop.f32.mrf.mxu0
  %v677 = vadd.f32 0.0, %v676
  %678 = vmatmul.bf16.gmra.mxu0 %v660
  %v679 = vpop.f32.mrf.mxu0
  %v680 = vadd.f32 0.0, %v679
  %v681 = vpop.f32.mrf.mxu0
  %v682 = vadd.f32 0.0, %v681
  %683 = vdwg.mxu0
  %v684 = vadd.f32 %v618, %v675
  %v685 = vadd.f32 %v619, %v677
  %v686 = vadd.f32 %v620, %v680
  %v687 = vadd.f32 %v621, %v682
  %v688 = vld [vmem:[%s0 + $0x2] sm:$0xff]
  %v689 = vld [vmem:[%s0 + $0xa] sm:$0xff]
  %v690 = vld [vmem:[%s0 + $0x12] sm:$0xff]
  %v691 = vld [vmem:[%s0 + $0x1a] sm:$0xff]
  %692 = vset.pattern.permute.xlu0 10
  %693 = vperm.xlu0 %692, %v31
  %v694 = vpop.permute.xlu0 %693
  %696 = vset.pattern.permute.xlu0 10
  %697 = vperm.xlu0 %696, %v32
  %v698 = vpop.permute.xlu0 %697
  %700 = vset.pattern.permute.xlu0 10
  %701 = vperm.xlu0 %700, %v33
  %v702 = vpop.permute.xlu0 %701
  %704 = vset.pattern.permute.xlu0 10
  %705 = vperm.xlu0 %704, %v34
  %v706 = vpop.permute.xlu0 %705
  %v708 = vmul.f32 %v688, %v694
  %v709 = vmul.f32 %v689, %v698
  %v710 = vmul.f32 %v690, %v702
  %v711 = vmul.f32 %v691, %v706
  %v712 = vpack.c.bf16 %v709, %v708
  %v713 = vpack.c.bf16 %v711, %v710
  %s714 = scalar_lea.vmem %s1, 80
  %v715 = vld [vmem:[%s714] sm:$0xf]
  %v716 = vld [vmem:[%s714 + $0x4] sm:$0x3]
  %v719 = vunpack.c.l.b16 %v715
  %v720 = vunpack.c.l.b16 %v716
  %v721 = vpack.c.b16 %v720, %v719
  %v723 = vsel %vm97, %v712, 0
  %v726 = vsel %vm97, %v713, 0
  %v729 = vsel %vm104, %v721, 0
  %731 = vmatpush.bf16.msra.mxu0 0
  %732 = vmatpush.bf16.msra.mxu0 0
  %733 = vmatpush.bf16.msra.mxu0 0
  %734 = vmatpush.bf16.msra.mxu0 0
  %735 = vmatpush.bf16.msra.mxu0 0
  %736 = vmatpush.bf16.msra.mxu0 0
  %737 = vmatpush.bf16.msra.mxu0 0
  %738 = vmatpush.bf16.msra.mxu0 %v729
  %739 = vmatmul.bf16.gmra.mxu0 %v723
  %v740 = vpop.f32.mrf.mxu0
  %v741 = vadd.f32 0.0, %v740
  %v742 = vpop.f32.mrf.mxu0
  %v743 = vadd.f32 0.0, %v742
  %744 = vmatmul.bf16.gmra.mxu0 %v726
  %v745 = vpop.f32.mrf.mxu0
  %v746 = vadd.f32 0.0, %v745
  %v747 = vpop.f32.mrf.mxu0
  %v748 = vadd.f32 0.0, %v747
  %749 = vdwg.mxu0
  %v750 = vadd.f32 %v684, %v741
  %v751 = vadd.f32 %v685, %v743
  %v752 = vadd.f32 %v686, %v746
  %v753 = vadd.f32 %v687, %v748
  %v754 = vld [vmem:[%s0 + $0x4] sm:$0xff]
  %v755 = vld [vmem:[%s0 + $0xc] sm:$0xff]
  %v756 = vld [vmem:[%s0 + $0x14] sm:$0xff]
  %v757 = vld [vmem:[%s0 + $0x1c] sm:$0xff]
  %758 = vset.pattern.permute.xlu0 11
  %759 = vperm.xlu0 %758, %v31
  %v760 = vpop.permute.xlu0 %759
  %762 = vset.pattern.permute.xlu0 11
  %763 = vperm.xlu0 %762, %v32
  %v764 = vpop.permute.xlu0 %763
  %766 = vset.pattern.permute.xlu0 11
  %767 = vperm.xlu0 %766, %v33
  %v768 = vpop.permute.xlu0 %767
  %770 = vset.pattern.permute.xlu0 11
  %771 = vperm.xlu0 %770, %v34
  %v772 = vpop.permute.xlu0 %771
  %v774 = vmul.f32 %v754, %v760
  %v775 = vmul.f32 %v755, %v764
  %v776 = vmul.f32 %v756, %v768
  %v777 = vmul.f32 %v757, %v772
  %v778 = vpack.c.bf16 %v775, %v774
  %v779 = vpack.c.bf16 %v777, %v776
  %s780 = scalar_lea.vmem %s1, 88
  %v781 = vld [vmem:[%s780] sm:$0xf]
  %v782 = vld [vmem:[%s780 + $0x4] sm:$0x3]
  %v785 = vunpack.c.l.b16 %v781
  %v786 = vunpack.c.l.b16 %v782
  %v787 = vpack.c.b16 %v786, %v785
  %v789 = vsel %vm97, %v778, 0
  %v792 = vsel %vm97, %v779, 0
  %v795 = vsel %vm104, %v787, 0
  %797 = vmatpush.bf16.msra.mxu0 0
  %798 = vmatpush.bf16.msra.mxu0 0
  %799 = vmatpush.bf16.msra.mxu0 0
  %800 = vmatpush.bf16.msra.mxu0 0
  %801 = vmatpush.bf16.msra.mxu0 0
  %802 = vmatpush.bf16.msra.mxu0 0
  %803 = vmatpush.bf16.msra.mxu0 0
  %804 = vmatpush.bf16.msra.mxu0 %v795
  %805 = vmatmul.bf16.gmra.mxu0 %v789
  %v806 = vpop.f32.mrf.mxu0
  %v807 = vadd.f32 0.0, %v806
  %v808 = vpop.f32.mrf.mxu0
  %v809 = vadd.f32 0.0, %v808
  %810 = vmatmul.bf16.gmra.mxu0 %v792
  %v811 = vpop.f32.mrf.mxu0
  %v812 = vadd.f32 0.0, %v811
  %v813 = vpop.f32.mrf.mxu0
  %v814 = vadd.f32 0.0, %v813
  %815 = vdwg.mxu0
  %v816 = vadd.f32 %v750, %v807
  %v817 = vadd.f32 %v751, %v809
  %v818 = vadd.f32 %v752, %v812
  %v819 = vadd.f32 %v753, %v814
  %v820 = vld [vmem:[%s0 + $0x8] sm:$0xff]
  %v821 = vld [vmem:[%s0 + $0x10] sm:$0xff]
  %v822 = vld [vmem:[%s0 + $0x18] sm:$0xff]
  %v823 = vld [vmem:[%s0 + $0x20] sm:$0xff]
  %824 = vset.pattern.permute.xlu0 12
  %825 = vperm.xlu0 %824, %v31
  %v826 = vpop.permute.xlu0 %825
  %828 = vset.pattern.permute.xlu0 12
  %829 = vperm.xlu0 %828, %v32
  %v830 = vpop.permute.xlu0 %829
  %832 = vset.pattern.permute.xlu0 12
  %833 = vperm.xlu0 %832, %v33
  %v834 = vpop.permute.xlu0 %833
  %836 = vset.pattern.permute.xlu0 12
  %837 = vperm.xlu0 %836, %v34
  %v838 = vpop.permute.xlu0 %837
  %v840 = vmul.f32 %v820, %v826
  %v841 = vmul.f32 %v821, %v830
  %v842 = vmul.f32 %v822, %v834
  %v843 = vmul.f32 %v823, %v838
  %v844 = vpack.c.bf16 %v841, %v840
  %v845 = vpack.c.bf16 %v843, %v842
  %s846 = scalar_lea.vmem %s1, 96
  %v847 = vld [vmem:[%s846] sm:$0xf]
  %v848 = vld [vmem:[%s846 + $0x4] sm:$0x3]
  %v851 = vunpack.c.l.b16 %v847
  %v852 = vunpack.c.l.b16 %v848
  %v853 = vpack.c.b16 %v852, %v851
  %v855 = vsel %vm97, %v844, 0
  %v858 = vsel %vm97, %v845, 0
  %v861 = vsel %vm104, %v853, 0
  %863 = vmatpush.bf16.msra.mxu0 0
  %864 = vmatpush.bf16.msra.mxu0 0
  %865 = vmatpush.bf16.msra.mxu0 0
  %866 = vmatpush.bf16.msra.mxu0 0
  %867 = vmatpush.bf16.msra.mxu0 0
  %868 = vmatpush.bf16.msra.mxu0 0
  %869 = vmatpush.bf16.msra.mxu0 0
  %870 = vmatpush.bf16.msra.mxu0 %v861
  %871 = vmatmul.bf16.gmra.mxu0 %v855
  %v872 = vpop.f32.mrf.mxu0
  %v873 = vadd.f32 0.0, %v872
  %v874 = vpop.f32.mrf.mxu0
  %v875 = vadd.f32 0.0, %v874
  %876 = vmatmul.bf16.gmra.mxu0 %v858
  %v877 = vpop.f32.mrf.mxu0
  %v878 = vadd.f32 0.0, %v877
  %v879 = vpop.f32.mrf.mxu0
  %v880 = vadd.f32 0.0, %v879
  %881 = vdwg.mxu0
  %v882 = vadd.f32 %v816, %v873
  %v883 = vadd.f32 %v817, %v875
  %v884 = vadd.f32 %v818, %v878
  %v885 = vadd.f32 %v819, %v880
  %886 = vset.pattern.permute.xlu0 13
  %887 = vperm.xlu0 %886, %v31
  %v888 = vpop.permute.xlu0 %887
  %890 = vset.pattern.permute.xlu0 13
  %891 = vperm.xlu0 %890, %v32
  %v892 = vpop.permute.xlu0 %891
  %894 = vset.pattern.permute.xlu0 13
  %895 = vperm.xlu0 %894, %v33
  %v896 = vpop.permute.xlu0 %895
  %898 = vset.pattern.permute.xlu0 13
  %899 = vperm.xlu0 %898, %v34
  %v900 = vpop.permute.xlu0 %899
  %v902 = vmul.f32 %v292, %v888
  %v903 = vmul.f32 %v293, %v892
  %v904 = vmul.f32 %v294, %v896
  %v905 = vmul.f32 %v295, %v900
  %v906 = vpack.c.bf16 %v903, %v902
  %v907 = vpack.c.bf16 %v905, %v904
  %s908 = scalar_lea.vmem %s1, 104
  %v909 = vld [vmem:[%s908] sm:$0xf]
  %v910 = vld [vmem:[%s908 + $0x4] sm:$0x3]
  %v913 = vunpack.c.l.b16 %v909
  %v914 = vunpack.c.l.b16 %v910
  %v915 = vpack.c.b16 %v914, %v913
  %v917 = vsel %vm97, %v906, 0
  %v920 = vsel %vm97, %v907, 0
  %v923 = vsel %vm104, %v915, 0
  %925 = vmatpush.bf16.msra.mxu0 0
  %926 = vmatpush.bf16.msra.mxu0 0
  %927 = vmatpush.bf16.msra.mxu0 0
  %928 = vmatpush.bf16.msra.mxu0 0
  %929 = vmatpush.bf16.msra.mxu0 0
  %930 = vmatpush.bf16.msra.mxu0 0
  %931 = vmatpush.bf16.msra.mxu0 0
  %932 = vmatpush.bf16.msra.mxu0 %v923
  %933 = vmatmul.bf16.gmra.mxu0 %v917
  %v934 = vpop.f32.mrf.mxu0
  %v935 = vadd.f32 0.0, %v934
  %v936 = vpop.f32.mrf.mxu0
  %v937 = vadd.f32 0.0, %v936
  %938 = vmatmul.bf16.gmra.mxu0 %v920
  %v939 = vpop.f32.mrf.mxu0
  %v940 = vadd.f32 0.0, %v939
  %v941 = vpop.f32.mrf.mxu0
  %v942 = vadd.f32 0.0, %v941
  %943 = vdwg.mxu0
  %v944 = vadd.f32 %v882, %v935
  %v945 = vadd.f32 %v883, %v937
  %v946 = vadd.f32 %v884, %v940
  %v947 = vadd.f32 %v885, %v942
  %v948 = vld [vmem:[%s0 + $0xc] sm:$0xff]
  %v949 = vld [vmem:[%s0 + $0x14] sm:$0xff]
  %v950 = vld [vmem:[%s0 + $0x1c] sm:$0xff]
  %v951 = vld [vmem:[%s0 + $0x24] sm:$0xff]
  %952 = vset.pattern.permute.xlu0 14
  %953 = vperm.xlu0 %952, %v31
  %v954 = vpop.permute.xlu0 %953
  %956 = vset.pattern.permute.xlu0 14
  %957 = vperm.xlu0 %956, %v32
  %v958 = vpop.permute.xlu0 %957
  %960 = vset.pattern.permute.xlu0 14
  %961 = vperm.xlu0 %960, %v33
  %v962 = vpop.permute.xlu0 %961
  %964 = vset.pattern.permute.xlu0 14
  %965 = vperm.xlu0 %964, %v34
  %v966 = vpop.permute.xlu0 %965
  %v968 = vmul.f32 %v948, %v954
  %v969 = vmul.f32 %v949, %v958
  %v970 = vmul.f32 %v950, %v962
  %v971 = vmul.f32 %v951, %v966
  %v972 = vpack.c.bf16 %v969, %v968
  %v973 = vpack.c.bf16 %v971, %v970
  %s974 = scalar_lea.vmem %s1, 112
  %v975 = vld [vmem:[%s974] sm:$0xf]
  %v976 = vld [vmem:[%s974 + $0x4] sm:$0x3]
  %v979 = vunpack.c.l.b16 %v975
  %v980 = vunpack.c.l.b16 %v976
  %v981 = vpack.c.b16 %v980, %v979
  %v983 = vsel %vm97, %v972, 0
  %v986 = vsel %vm97, %v973, 0
  %v989 = vsel %vm104, %v981, 0
  %991 = vmatpush.bf16.msra.mxu0 0
  %992 = vmatpush.bf16.msra.mxu0 0
  %993 = vmatpush.bf16.msra.mxu0 0
  %994 = vmatpush.bf16.msra.mxu0 0
  %995 = vmatpush.bf16.msra.mxu0 0
  %996 = vmatpush.bf16.msra.mxu0 0
  %997 = vmatpush.bf16.msra.mxu0 0
  %998 = vmatpush.bf16.msra.mxu0 %v989
  %999 = vmatmul.bf16.gmra.mxu0 %v983
  %v1000 = vpop.f32.mrf.mxu0
  %v1001 = vadd.f32 0.0, %v1000
  %v1002 = vpop.f32.mrf.mxu0
  %v1003 = vadd.f32 0.0, %v1002
  %1004 = vmatmul.bf16.gmra.mxu0 %v986
  %v1005 = vpop.f32.mrf.mxu0
  %v1006 = vadd.f32 0.0, %v1005
  %v1007 = vpop.f32.mrf.mxu0
  %v1008 = vadd.f32 0.0, %v1007
  %1009 = vdwg.mxu0
  %v1010 = vadd.f32 %v944, %v1001
  %v1011 = vadd.f32 %v945, %v1003
  %v1012 = vadd.f32 %v946, %v1006
  %v1013 = vadd.f32 %v947, %v1008
  %v1014 = vld [vmem:[%s0 + $0x10] sm:$0xff]
  %v1015 = vld [vmem:[%s0 + $0x18] sm:$0xff]
  %v1016 = vld [vmem:[%s0 + $0x20] sm:$0xff]
  %v1017 = vld [vmem:[%s0 + $0x28] sm:$0xff]
  %1018 = vset.pattern.permute.xlu0 15
  %1019 = vperm.xlu0 %1018, %v31
  %v1020 = vpop.permute.xlu0 %1019
  %1022 = vset.pattern.permute.xlu0 15
  %1023 = vperm.xlu0 %1022, %v32
  %v1024 = vpop.permute.xlu0 %1023
  %1026 = vset.pattern.permute.xlu0 15
  %1027 = vperm.xlu0 %1026, %v33
  %v1028 = vpop.permute.xlu0 %1027
  %1030 = vset.pattern.permute.xlu0 15
  %1031 = vperm.xlu0 %1030, %v34
  %v1032 = vpop.permute.xlu0 %1031
  %v1034 = vmul.f32 %v1014, %v1020
  %v1035 = vmul.f32 %v1015, %v1024
  %v1036 = vmul.f32 %v1016, %v1028
  %v1037 = vmul.f32 %v1017, %v1032
  %v1038 = vpack.c.bf16 %v1035, %v1034
  %v1039 = vpack.c.bf16 %v1037, %v1036
  %s1040 = scalar_lea.vmem %s1, 120
  %v1041 = vld [vmem:[%s1040] sm:$0xf]
  %v1042 = vld [vmem:[%s1040 + $0x4] sm:$0x3]
  %v1045 = vunpack.c.l.b16 %v1041
  %v1046 = vunpack.c.l.b16 %v1042
  %v1047 = vpack.c.b16 %v1046, %v1045
  %v1049 = vsel %vm97, %v1038, 0
  %v1052 = vsel %vm97, %v1039, 0
  %v1055 = vsel %vm104, %v1047, 0
  %1057 = vmatpush.bf16.msra.mxu0 0
  %1058 = vmatpush.bf16.msra.mxu0 0
  %1059 = vmatpush.bf16.msra.mxu0 0
  %1060 = vmatpush.bf16.msra.mxu0 0
  %1061 = vmatpush.bf16.msra.mxu0 0
  %1062 = vmatpush.bf16.msra.mxu0 0
  %1063 = vmatpush.bf16.msra.mxu0 0
  %1064 = vmatpush.bf16.msra.mxu0 %v1055
  %1065 = vmatmul.bf16.gmra.mxu0 %v1049
  %v1066 = vpop.f32.mrf.mxu0
  %v1067 = vadd.f32 0.0, %v1066
  %v1068 = vpop.f32.mrf.mxu0
  %v1069 = vadd.f32 0.0, %v1068
  %1070 = vmatmul.bf16.gmra.mxu0 %v1052
  %v1071 = vpop.f32.mrf.mxu0
  %v1072 = vadd.f32 0.0, %v1071
  %v1073 = vpop.f32.mrf.mxu0
  %v1074 = vadd.f32 0.0, %v1073
  %1075 = vdwg.mxu0
  %v1076 = vadd.f32 %v1010, %v1067
  %v1077 = vadd.f32 %v1011, %v1069
  %v1078 = vadd.f32 %v1012, %v1072
  %v1079 = vadd.f32 %v1013, %v1074
  %v1080 = vld [vmem:[%s0 + $0x12] sm:$0xff]
  %v1081 = vld [vmem:[%s0 + $0x1a] sm:$0xff]
  %v1082 = vld [vmem:[%s0 + $0x22] sm:$0xff]
  %v1083 = vld [vmem:[%s0 + $0x2a] sm:$0xff]
  %1084 = vset.pattern.permute.xlu0 16
  %1085 = vperm.xlu0 %1084, %v31
  %v1086 = vpop.permute.xlu0 %1085
  %1088 = vset.pattern.permute.xlu0 16
  %1089 = vperm.xlu0 %1088, %v32
  %v1090 = vpop.permute.xlu0 %1089
  %1092 = vset.pattern.permute.xlu0 16
  %1093 = vperm.xlu0 %1092, %v33
  %v1094 = vpop.permute.xlu0 %1093
  %1096 = vset.pattern.permute.xlu0 16
  %1097 = vperm.xlu0 %1096, %v34
  %v1098 = vpop.permute.xlu0 %1097
  %v1100 = vmul.f32 %v1080, %v1086
  %v1101 = vmul.f32 %v1081, %v1090
  %v1102 = vmul.f32 %v1082, %v1094
  %v1103 = vmul.f32 %v1083, %v1098
  %v1104 = vpack.c.bf16 %v1101, %v1100
  %v1105 = vpack.c.bf16 %v1103, %v1102
  %s1106 = scalar_lea.vmem %s1, 128
  %v1107 = vld [vmem:[%s1106] sm:$0xf]
  %v1108 = vld [vmem:[%s1106 + $0x4] sm:$0x3]
  %v1111 = vunpack.c.l.b16 %v1107
  %v1112 = vunpack.c.l.b16 %v1108
  %v1113 = vpack.c.b16 %v1112, %v1111
  %v1115 = vsel %vm97, %v1104, 0
  %v1118 = vsel %vm97, %v1105, 0
  %v1121 = vsel %vm104, %v1113, 0
  %1123 = vmatpush.bf16.msra.mxu0 0
  %1124 = vmatpush.bf16.msra.mxu0 0
  %1125 = vmatpush.bf16.msra.mxu0 0
  %1126 = vmatpush.bf16.msra.mxu0 0
  %1127 = vmatpush.bf16.msra.mxu0 0
  %1128 = vmatpush.bf16.msra.mxu0 0
  %1129 = vmatpush.bf16.msra.mxu0 0
  %1130 = vmatpush.bf16.msra.mxu0 %v1121
  %1131 = vmatmul.bf16.gmra.mxu0 %v1115
  %v1132 = vpop.f32.mrf.mxu0
  %v1133 = vadd.f32 0.0, %v1132
  %v1134 = vpop.f32.mrf.mxu0
  %v1135 = vadd.f32 0.0, %v1134
  %1136 = vmatmul.bf16.gmra.mxu0 %v1118
  %v1137 = vpop.f32.mrf.mxu0
  %v1138 = vadd.f32 0.0, %v1137
  %v1139 = vpop.f32.mrf.mxu0
  %v1140 = vadd.f32 0.0, %v1139
  %1141 = vdwg.mxu0
  %v1142 = vadd.f32 %v1076, %v1133
  %v1143 = vadd.f32 %v1077, %v1135
  %v1144 = vadd.f32 %v1078, %v1138
  %v1145 = vadd.f32 %v1079, %v1140
  %v1146 = vld [vmem:[%s0 + $0x14] sm:$0xff]
  %v1147 = vld [vmem:[%s0 + $0x1c] sm:$0xff]
  %v1148 = vld [vmem:[%s0 + $0x24] sm:$0xff]
  %v1149 = vld [vmem:[%s0 + $0x2c] sm:$0xff]
  %1150 = vset.pattern.permute.xlu0 17
  %1151 = vperm.xlu0 %1150, %v31
  %v1152 = vpop.permute.xlu0 %1151
  %1154 = vset.pattern.permute.xlu0 17
  %1155 = vperm.xlu0 %1154, %v32
  %v1156 = vpop.permute.xlu0 %1155
  %1158 = vset.pattern.permute.xlu0 17
  %1159 = vperm.xlu0 %1158, %v33
  %v1160 = vpop.permute.xlu0 %1159
  %1162 = vset.pattern.permute.xlu0 17
  %1163 = vperm.xlu0 %1162, %v34
  %v1164 = vpop.permute.xlu0 %1163
  %v1166 = vmul.f32 %v1146, %v1152
  %v1167 = vmul.f32 %v1147, %v1156
  %v1168 = vmul.f32 %v1148, %v1160
  %v1169 = vmul.f32 %v1149, %v1164
  %v1170 = vpack.c.bf16 %v1167, %v1166
  %v1171 = vpack.c.bf16 %v1169, %v1168
  %s1172 = scalar_lea.vmem %s1, 136
  %v1173 = vld [vmem:[%s1172] sm:$0xf]
  %v1174 = vld [vmem:[%s1172 + $0x4] sm:$0x3]
  %v1177 = vunpack.c.l.b16 %v1173
  %v1178 = vunpack.c.l.b16 %v1174
  %v1179 = vpack.c.b16 %v1178, %v1177
  %v1181 = vsel %vm97, %v1170, 0
  %v1184 = vsel %vm97, %v1171, 0
  %v1187 = vsel %vm104, %v1179, 0
  %1189 = vmatpush.bf16.msra.mxu0 0
  %1190 = vmatpush.bf16.msra.mxu0 0
  %1191 = vmatpush.bf16.msra.mxu0 0
  %1192 = vmatpush.bf16.msra.mxu0 0
  %1193 = vmatpush.bf16.msra.mxu0 0
  %1194 = vmatpush.bf16.msra.mxu0 0
  %1195 = vmatpush.bf16.msra.mxu0 0
  %1196 = vmatpush.bf16.msra.mxu0 %v1187
  %1197 = vmatmul.bf16.gmra.mxu0 %v1181
  %v1198 = vpop.f32.mrf.mxu0
  %v1199 = vadd.f32 0.0, %v1198
  %v1200 = vpop.f32.mrf.mxu0
  %v1201 = vadd.f32 0.0, %v1200
  %1202 = vmatmul.bf16.gmra.mxu0 %v1184
  %v1203 = vpop.f32.mrf.mxu0
  %v1204 = vadd.f32 0.0, %v1203
  %v1205 = vpop.f32.mrf.mxu0
  %v1206 = vadd.f32 0.0, %v1205
  %1207 = vdwg.mxu0
  %v1208 = vadd.f32 %v1142, %v1199
  %v1209 = vadd.f32 %v1143, %v1201
  %v1210 = vadd.f32 %v1144, %v1204
  %v1211 = vadd.f32 %v1145, %v1206
  %1212 = vset.pattern.permute.xlu0 18
  %1213 = vperm.xlu0 %1212, %v31
  %v1214 = vpop.permute.xlu0 %1213
  %1216 = vset.pattern.permute.xlu0 18
  %1217 = vperm.xlu0 %1216, %v32
  %v1218 = vpop.permute.xlu0 %1217
  %1220 = vset.pattern.permute.xlu0 18
  %1221 = vperm.xlu0 %1220, %v33
  %v1222 = vpop.permute.xlu0 %1221
  %1224 = vset.pattern.permute.xlu0 18
  %1225 = vperm.xlu0 %1224, %v34
  %v1226 = vpop.permute.xlu0 %1225
  %v1228 = vmul.f32 %v292, %v1214
  %v1229 = vmul.f32 %v293, %v1218
  %v1230 = vmul.f32 %v294, %v1222
  %v1231 = vmul.f32 %v295, %v1226
  %v1232 = vpack.c.bf16 %v1229, %v1228
  %v1233 = vpack.c.bf16 %v1231, %v1230
  %s1234 = scalar_lea.vmem %s1, 144
  %v1235 = vld [vmem:[%s1234] sm:$0xf]
  %v1236 = vld [vmem:[%s1234 + $0x4] sm:$0x3]
  %v1239 = vunpack.c.l.b16 %v1235
  %v1240 = vunpack.c.l.b16 %v1236
  %v1241 = vpack.c.b16 %v1240, %v1239
  %v1243 = vsel %vm97, %v1232, 0
  %v1246 = vsel %vm97, %v1233, 0
  %v1249 = vsel %vm104, %v1241, 0
  %1251 = vmatpush.bf16.msra.mxu0 0
  %1252 = vmatpush.bf16.msra.mxu0 0
  %1253 = vmatpush.bf16.msra.mxu0 0
  %1254 = vmatpush.bf16.msra.mxu0 0
  %1255 = vmatpush.bf16.msra.mxu0 0
  %1256 = vmatpush.bf16.msra.mxu0 0
  %1257 = vmatpush.bf16.msra.mxu0 0
  %1258 = vmatpush.bf16.msra.mxu0 %v1249
  %1259 = vmatmul.bf16.gmra.mxu0 %v1243
  %v1260 = vpop.f32.mrf.mxu0
  %v1261 = vadd.f32 0.0, %v1260
  %v1262 = vpop.f32.mrf.mxu0
  %v1263 = vadd.f32 0.0, %v1262
  %1264 = vmatmul.bf16.gmra.mxu0 %v1246
  %v1265 = vpop.f32.mrf.mxu0
  %v1266 = vadd.f32 0.0, %v1265
  %v1267 = vpop.f32.mrf.mxu0
  %v1268 = vadd.f32 0.0, %v1267
  %1269 = vdwg.mxu0
  %v1270 = vadd.f32 %v1208, %v1261
  %v1271 = vadd.f32 %v1209, %v1263
  %v1272 = vadd.f32 %v1210, %v1266
  %v1273 = vadd.f32 %v1211, %v1268
  %1274 = vset.pattern.permute.xlu0 19
  %1275 = vperm.xlu0 %1274, %v31
  %v1276 = vpop.permute.xlu0 %1275
  %1278 = vset.pattern.permute.xlu0 19
  %1279 = vperm.xlu0 %1278, %v32
  %v1280 = vpop.permute.xlu0 %1279
  %1282 = vset.pattern.permute.xlu0 19
  %1283 = vperm.xlu0 %1282, %v33
  %v1284 = vpop.permute.xlu0 %1283
  %1286 = vset.pattern.permute.xlu0 19
  %1287 = vperm.xlu0 %1286, %v34
  %v1288 = vpop.permute.xlu0 %1287
  %v1290 = vmul.f32 %v292, %v1276
  %v1291 = vmul.f32 %v293, %v1280
  %v1292 = vmul.f32 %v294, %v1284
  %v1293 = vmul.f32 %v295, %v1288
  %v1294 = vpack.c.bf16 %v1291, %v1290
  %v1295 = vpack.c.bf16 %v1293, %v1292
  %s1296 = scalar_lea.vmem %s1, 152
  %v1297 = vld [vmem:[%s1296] sm:$0xf]
  %v1298 = vld [vmem:[%s1296 + $0x4] sm:$0x3]
  %v1301 = vunpack.c.l.b16 %v1297
  %v1302 = vunpack.c.l.b16 %v1298
  %v1303 = vpack.c.b16 %v1302, %v1301
  %v1305 = vsel %vm97, %v1294, 0
  %v1308 = vsel %vm97, %v1295, 0
  %v1311 = vsel %vm104, %v1303, 0
  %1313 = vmatpush.bf16.msra.mxu0 0
  %1314 = vmatpush.bf16.msra.mxu0 0
  %1315 = vmatpush.bf16.msra.mxu0 0
  %1316 = vmatpush.bf16.msra.mxu0 0
  %1317 = vmatpush.bf16.msra.mxu0 0
  %1318 = vmatpush.bf16.msra.mxu0 0
  %1319 = vmatpush.bf16.msra.mxu0 0
  %1320 = vmatpush.bf16.msra.mxu0 %v1311
  %1321 = vmatmul.bf16.gmra.mxu0 %v1305
  %v1322 = vpop.f32.mrf.mxu0
  %v1323 = vadd.f32 0.0, %v1322
  %v1324 = vpop.f32.mrf.mxu0
  %v1325 = vadd.f32 0.0, %v1324
  %1326 = vmatmul.bf16.gmra.mxu0 %v1308
  %v1327 = vpop.f32.mrf.mxu0
  %v1328 = vadd.f32 0.0, %v1327
  %v1329 = vpop.f32.mrf.mxu0
  %v1330 = vadd.f32 0.0, %v1329
  %1331 = vdwg.mxu0
  %v1332 = vadd.f32 %v1270, %v1323
  %v1333 = vadd.f32 %v1271, %v1325
  %v1334 = vadd.f32 %v1272, %v1328
  %v1335 = vadd.f32 %v1273, %v1330
  %1336 = vset.pattern.permute.xlu0 20
  %1337 = vperm.xlu0 %1336, %v31
  %v1338 = vpop.permute.xlu0 %1337
  %1340 = vset.pattern.permute.xlu0 20
  %1341 = vperm.xlu0 %1340, %v32
  %v1342 = vpop.permute.xlu0 %1341
  %1344 = vset.pattern.permute.xlu0 20
  %1345 = vperm.xlu0 %1344, %v33
  %v1346 = vpop.permute.xlu0 %1345
  %1348 = vset.pattern.permute.xlu0 20
  %1349 = vperm.xlu0 %1348, %v34
  %v1350 = vpop.permute.xlu0 %1349
  %v1352 = vmul.f32 %v292, %v1338
  %v1353 = vmul.f32 %v293, %v1342
  %v1354 = vmul.f32 %v294, %v1346
  %v1355 = vmul.f32 %v295, %v1350
  %v1356 = vpack.c.bf16 %v1353, %v1352
  %v1357 = vpack.c.bf16 %v1355, %v1354
  %s1358 = scalar_lea.vmem %s1, 160
  %v1359 = vld [vmem:[%s1358] sm:$0xf]
  %v1360 = vld [vmem:[%s1358 + $0x4] sm:$0x3]
  %v1363 = vunpack.c.l.b16 %v1359
  %v1364 = vunpack.c.l.b16 %v1360
  %v1365 = vpack.c.b16 %v1364, %v1363
  %v1367 = vsel %vm97, %v1356, 0
  %v1370 = vsel %vm97, %v1357, 0
  %v1373 = vsel %vm104, %v1365, 0
  %1375 = vmatpush.bf16.msra.mxu0 0
  %1376 = vmatpush.bf16.msra.mxu0 0
  %1377 = vmatpush.bf16.msra.mxu0 0
  %1378 = vmatpush.bf16.msra.mxu0 0
  %1379 = vmatpush.bf16.msra.mxu0 0
  %1380 = vmatpush.bf16.msra.mxu0 0
  %1381 = vmatpush.bf16.msra.mxu0 0
  %1382 = vmatpush.bf16.msra.mxu0 %v1373
  %1383 = vmatmul.bf16.gmra.mxu0 %v1367
  %v1384 = vpop.f32.mrf.mxu0
  %v1385 = vadd.f32 0.0, %v1384
  %v1386 = vpop.f32.mrf.mxu0
  %v1387 = vadd.f32 0.0, %v1386
  %1388 = vmatmul.bf16.gmra.mxu0 %v1370
  %v1389 = vpop.f32.mrf.mxu0
  %v1390 = vadd.f32 0.0, %v1389
  %v1391 = vpop.f32.mrf.mxu0
  %v1392 = vadd.f32 0.0, %v1391
  %1393 = vdwg.mxu0
  %v1394 = vadd.f32 %v1332, %v1385
  %v1395 = vadd.f32 %v1333, %v1387
  %v1396 = vadd.f32 %v1334, %v1390
  %v1397 = vadd.f32 %v1335, %v1392
  %v1398 = vld [vmem:[%s3] sm:$0xff]
  %v1399 = vld [vmem:[%s3 + $0x8] sm:$0xff]
  %v1400 = vld [vmem:[%s3 + $0x10] sm:$0xff]
  %v1401 = vld [vmem:[%s3 + $0x18] sm:$0xff]
  %v1402 = vadd.f32 %v1394, %v1398
  %v1403 = vadd.f32 %v1395, %v1399
  %v1404 = vadd.f32 %v1396, %v1400
  %v1405 = vadd.f32 %v1397, %v1401
  %v1406 = vld [vmem:[%s4] sm:$0x1]
  %v1407 = vld [vmem:[%s5] sm:$0x1]
  %v1408 = vld [vmem:[%s6] sm:$0x1]
  %vm1409 = vcmask 523264
  %v1410 = vsel %vm1409, %v1402, 0.0
  %v1411 = vsel %vm1409, %v1403, 0.0
  %v1412 = vadd.f32 %v1410, %v1411
  %v1413 = vsel %vm1409, %v1404, 0.0
  %v1414 = vadd.f32 %v1412, %v1413
  %v1415 = vsel %vm1409, %v1405, 0.0
  %v1416 = vadd.f32 %v1414, %v1415
  %v1417 = vrot.slane %v1416, 4
  %v1418 = vadd.f32 %v1416, %v1417
  %v1419 = vrot.slane %v1418, 2
  %v1420 = vadd.f32 %v1418, %v1419
  %v1421 = vrot.slane %v1420, 1
  %v1422 = vadd.f32 %v1420, %v1421
  %v1423 = vrcp.pop 32.0
  %v1424 = vmul.f32 32.0, %v1423
  %v1425 = vsub.f32 1.0, %v1424
  %v1426 = vmul.f32 %v1423, %v1425
  %v1427 = vadd.f32 %v1423, %v1426
  %vm1428 = vweird.f32 %v1423
  %v1429 = vsel %vm1428, %v1423, %v1427
  %v1430 = vmul.f32 %v1422, %v1429
  %v1431 = vsub.f32 %v1402, %v1430
  %v1432 = vsub.f32 %v1403, %v1430
  %v1433 = vsub.f32 %v1404, %v1430
  %v1434 = vsub.f32 %v1405, %v1430
  %v1435 = vmul.f32 %v1431, %v1431
  %v1436 = vmul.f32 %v1432, %v1432
  %v1437 = vmul.f32 %v1433, %v1433
  %v1438 = vmul.f32 %v1434, %v1434
  %v1439 = vsel %vm1409, %v1435, 0.0
  %v1440 = vsel %vm1409, %v1436, 0.0
  %v1441 = vadd.f32 %v1439, %v1440
  %v1442 = vsel %vm1409, %v1437, 0.0
  %v1443 = vadd.f32 %v1441, %v1442
  %v1444 = vsel %vm1409, %v1438, 0.0
  %v1445 = vadd.f32 %v1443, %v1444
  %v1446 = vrot.slane %v1445, 4
  %v1447 = vadd.f32 %v1445, %v1446
  %v1448 = vrot.slane %v1447, 2
  %v1449 = vadd.f32 %v1447, %v1448
  %v1450 = vrot.slane %v1449, 1
  %v1451 = vadd.f32 %v1449, %v1450
  %v1452 = vmul.f32 %v1451, %v1429
  %v1453 = vadd.f32 %v1452, 1e-05
  %v1454 = vrsqrt.pop %v1453
  %v1455 = vmul.f32 %v1454, %v1453
  %v1456 = vmul.f32 %v1455, %v1454
  %v1457 = vmul.f32 0.5, %v1456
  %v1458 = vsub.f32 1.5, %v1457
  %v1459 = vmul.f32 %v1454, %v1458
  %vm1460 = vweird.f32 %v1453
  %vm1461 = vweird.f32 %v1454
  %vm1462 = vmor %vm1460, %vm1461
  %v1463 = vsel %vm1462, %v1454, %v1459
  %v1464 = vmul.f32 %v1431, %v1463
  %v1465 = vmul.f32 %v1432, %v1463
  %v1466 = vmul.f32 %v1433, %v1463
  %v1467 = vmul.f32 %v1434, %v1463
  %v1469 = vperm.slane %v1406, 0
  %v1471 = vmul.f32 %v1464, %v1469
  %v1472 = vmul.f32 %v1465, %v1469
  %v1473 = vmul.f32 %v1466, %v1469
  %v1474 = vmul.f32 %v1467, %v1469
  %v1476 = vperm.slane %v1407, 0
  %v1478 = vadd.f32 %v1471, %v1476
  %v1479 = vadd.f32 %v1472, %v1476
  %v1480 = vadd.f32 %v1473, %v1476
  %v1481 = vadd.f32 %v1474, %v1476
  %vm1482 = vcmp.gt.f32.partialorder %v1478, 0.0
  %vm1483 = vcmp.gt.f32.partialorder %v1479, 0.0
  %vm1484 = vcmp.gt.f32.partialorder %v1480, 0.0
  %vm1485 = vcmp.gt.f32.partialorder %v1481, 0.0
  %v1487 = vperm.slane %v1408, 0
  %v1489 = vmul.f32 %v1487, %v1478
  %v1490 = vmul.f32 %v1487, %v1479
  %v1491 = vmul.f32 %v1487, %v1480
  %v1492 = vmul.f32 %v1487, %v1481
  %v1493 = vsel %vm1482, %v1478, %v1489
  %v1494 = vsel %vm1483, %v1479, %v1490
  %v1495 = vsel %vm1484, %v1480, %v1491
  %v1496 = vsel %vm1485, %v1481, %v1492
  %1497 = vst.msk [vmem:[%s7] sm:$0xff] %vm1409, %v1493
  %1498 = vst.msk [vmem:[%s7 + $0x8] sm:$0xff] %vm1409, %v1494
  %1499 = vst.msk [vmem:[%s7 + $0x10] sm:$0xff] %vm1409, %v1495
  %1500 = vst.msk [vmem:[%s7 + $0x18] sm:$0xff] %vm1409, %v1496
  // Predicated region
  $region30: #{espnet_forward.26} parent=0 // pred_check
    _
  $region31: #{espnet_forward.26} parent=0 // pred_check_branch
    %1502 = sbr.rel (0) target = $region33
  $region32: #{espnet_forward.26} parent=0 // pred_region
    _
  $region33: #{espnet_forward.26} parent=0 // pred_fallthru
    _
  // Predicated region
  $region34: #{espnet_forward.26} parent=0 // pred_check
    _
  $region35: #{espnet_forward.26} parent=0 // pred_check_branch
    %1504 = sbr.rel (0) target = $region37
  $region36: #{espnet_forward.26} parent=0 // pred_region
    _
  $region37: #{espnet_forward.26} parent=0 // pred_fallthru
    _

// kernel: espnet_forward.29
$region0: #{espnet_forward.29}
  #allocation0 [shape = 'u32[]', space=smem, size = 0x4, offset = 0x4, fixed_abs, tag = 'smem constant byte address 0x4 - core index']
  #allocation1 [shape = 'u32[72,128]{1,0:T(1,128)}', space=vmem, size = 0x9000, scoped, tag = 'internal scratch']
  %s0 = inlined_call_operand.vmem [shape: bf16[8,1179], index: 0, kind: input, shape index: {}]
  %s1 = inlined_call_operand.vmem [shape: bf16[1179,25], index: 1, kind: input, shape index: {}]
  %s2 = inlined_call_operand.vmem [shape: f32[1,25], index: 2, kind: input, shape index: {}]
  %s3 = inlined_call_operand.vmem [shape: f32[1,25], index: 3, kind: input, shape index: {}]
  %s4 = inlined_call_operand.vmem [shape: f32[1,25], index: 4, kind: input, shape index: {}]
  %s5 = inlined_call_operand.vmem [shape: f32[8,25], index: 5, kind: output, shape index: {}]
  %s6 = sld [smem:[#allocation0]]
  $region30: #{espnet_forward.29} parent=0
    _
  %s8 = ssub.s32 1, %s6
  %s9 = scalar_select 0, %s8, %s6
  // Predicated region
  $region2: #{espnet_forward.29} parent=0 // pred_check
    _
  $region3: #{espnet_forward.29} parent=0 // pred_check_branch
    %11 = sbr.rel (0) target = $region5
  $region4: #{espnet_forward.29} parent=0 // pred_region
    _
  $region5: #{espnet_forward.29} parent=0 // pred_fallthru
    _
  // Predicated region
  $region6: #{espnet_forward.29} parent=0 // pred_check
    _
  $region7: #{espnet_forward.29} parent=0 // pred_check_branch
    %13 = sbr.rel (0) target = $region9
  $region8: #{espnet_forward.29} parent=0 // pred_region
    _
  $region9: #{espnet_forward.29} parent=0 // pred_fallthru
    _
  // Predicated region
  $region10: #{espnet_forward.29} parent=0 // pred_check
    _
  $region11: #{espnet_forward.29} parent=0 // pred_check_branch
    %15 = sbr.rel (0) target = $region13
  $region12: #{espnet_forward.29} parent=0 // pred_region
    _
  $region13: #{espnet_forward.29} parent=0 // pred_fallthru
    _
  // Predicated region
  $region14: #{espnet_forward.29} parent=0 // pred_check
    _
  $region15: #{espnet_forward.29} parent=0 // pred_check_branch
    %17 = sbr.rel (0) target = $region17
  $region16: #{espnet_forward.29} parent=0 // pred_region
    _
  $region17: #{espnet_forward.29} parent=0 // pred_fallthru
    _
  // Predicated region
  $region18: #{espnet_forward.29} parent=0 // pred_check
    _
  $region19: #{espnet_forward.29} parent=0 // pred_check_branch
    %19 = sbr.rel (0) target = $region21
  $region20: #{espnet_forward.29} parent=0 // pred_region
    _
  $region21: #{espnet_forward.29} parent=0 // pred_fallthru
    _
  %v21 = vld [vmem:[%s0] sm:$0xff]
  %v22 = vld [vmem:[%s0 + $0x8] sm:$0xff]
  %v23 = vld [vmem:[%s0 + $0x10] sm:$0xff]
  %v24 = vld [vmem:[%s0 + $0x18] sm:$0xff]
  %v25 = vld [vmem:[%s0 + $0x20] sm:$0xff]
  %v26 = vld [vmem:[%s1] sm:$0xf]
  %v27 = vld [vmem:[%s1 + $0x4] sm:$0xf]
  %v28 = vld [vmem:[%s1 + $0x8] sm:$0xf]
  %v29 = vld [vmem:[%s1 + $0xc] sm:$0xf]
  %v30 = vld [vmem:[%s1 + $0x10] sm:$0xf]
  %v31 = vld [vmem:[%s1 + $0x14] sm:$0xf]
  %v32 = vld [vmem:[%s1 + $0x18] sm:$0xf]
  %v33 = vld [vmem:[%s1 + $0x1c] sm:$0xf]
  %v34 = vld [vmem:[%s1 + $0x20] sm:$0xf]
  %v35 = vld [vmem:[%s1 + $0x24] sm:$0xf]
  %v36 = vld [vmem:[%s1 + $0x28] sm:$0xf]
  %v37 = vld [vmem:[%s1 + $0x2c] sm:$0xf]
  %v38 = vld [vmem:[%s1 + $0x30] sm:$0xf]
  %v39 = vld [vmem:[%s1 + $0x34] sm:$0xf]
  %v40 = vld [vmem:[%s1 + $0x38] sm:$0xf]
  %v41 = vld [vmem:[%s1 + $0x3c] sm:$0xf]
  %v42 = vld [vmem:[%s1 + $0x40] sm:$0xf]
  %v43 = vld [vmem:[%s1 + $0x44] sm:$0xf]
  %v44 = vld [vmem:[%s1 + $0x48] sm:$0xf]
  %v45 = vld [vmem:[%s1 + $0x4c] sm:$0xf]
  %v46 = vld [vmem:[%s1 + $0x50] sm:$0xf]
  %v47 = vld [vmem:[%s1 + $0x54] sm:$0xf]
  %v48 = vld [vmem:[%s1 + $0x58] sm:$0xf]
  %v49 = vld [vmem:[%s1 + $0x5c] sm:$0xf]
  %v50 = vld [vmem:[%s1 + $0x60] sm:$0xf]
  %v51 = vld [vmem:[%s1 + $0x64] sm:$0xf]
  %v52 = vld [vmem:[%s1 + $0x68] sm:$0xf]
  %v53 = vld [vmem:[%s1 + $0x6c] sm:$0xf]
  %v54 = vld [vmem:[%s1 + $0x70] sm:$0xf]
  %v55 = vld [vmem:[%s1 + $0x74] sm:$0xf]
  %v56 = vld [vmem:[%s1 + $0x78] sm:$0xf]
  %v57 = vld [vmem:[%s1 + $0x7c] sm:$0xf]
  %v58 = vld [vmem:[%s1 + $0x80] sm:$0xf]
  %v59 = vld [vmem:[%s1 + $0x84] sm:$0xf]
  %v60 = vld [vmem:[%s1 + $0x88] sm:$0xf]
  %v61 = vld [vmem:[%s1 + $0x8c] sm:$0xf]
  %v62 = vld [vmem:[%s1 + $0x90] sm:$0xf]
  %v63 = vld [vmem:[%s1 + $0x94] sm:$0xf]
  %v64 = vld [vmem:[%s1 + $0x98] sm:$0xf]
  %v65 = vld [vmem:[%s1 + $0x9c] sm:$0xf]
  %v66 = vld [vmem:[%s1 + $0xa0] sm:$0xf]
  %v67 = vld [vmem:[%s1 + $0xa4] sm:$0xf]
  %v68 = vld [vmem:[%s1 + $0xa8] sm:$0xf]
  %v69 = vld [vmem:[%s1 + $0xac] sm:$0xf]
  %v70 = vld [vmem:[%s1 + $0xb0] sm:$0xf]
  %v71 = vld [vmem:[%s1 + $0xb4] sm:$0xf]
  %v72 = vld [vmem:[%s1 + $0xb8] sm:$0xf]
  %v73 = vld [vmem:[%s1 + $0xbc] sm:$0xf]
  %v74 = vld [vmem:[%s1 + $0xc0] sm:$0xf]
  %v75 = vld [vmem:[%s1 + $0xc4] sm:$0xf]
  %v76 = vld [vmem:[%s1 + $0xc8] sm:$0xf]
  %v77 = vld [vmem:[%s1 + $0xcc] sm:$0xf]
  %v78 = vld [vmem:[%s1 + $0xd0] sm:$0xf]
  %v79 = vld [vmem:[%s1 + $0xd4] sm:$0xf]
  %v80 = vld [vmem:[%s1 + $0xd8] sm:$0xf]
  %v81 = vld [vmem:[%s1 + $0xdc] sm:$0xf]
  %v82 = vld [vmem:[%s1 + $0xe0] sm:$0xf]
  %v83 = vld [vmem:[%s1 + $0xe4] sm:$0xf]
  %v84 = vld [vmem:[%s1 + $0xe8] sm:$0xf]
  %v85 = vld [vmem:[%s1 + $0xec] sm:$0xf]
  %v86 = vld [vmem:[%s1 + $0xf0] sm:$0xf]
  %v87 = vld [vmem:[%s1 + $0xf4] sm:$0xf]
  %v88 = vld [vmem:[%s1 + $0xf8] sm:$0xf]
  %v89 = vld [vmem:[%s1 + $0xfc] sm:$0xf]
  %v90 = vld [vmem:[%s1 + $0x100] sm:$0xf]
  %v91 = vld [vmem:[%s1 + $0x104] sm:$0xf]
  %v92 = vld [vmem:[%s1 + $0x108] sm:$0xf]
  %v93 = vld [vmem:[%s1 + $0x10c] sm:$0xf]
  %v94 = vld [vmem:[%s1 + $0x110] sm:$0xf]
  %v95 = vld [vmem:[%s1 + $0x114] sm:$0xf]
  %v96 = vld [vmem:[%s1 + $0x118] sm:$0xf]
  %v97 = vld [vmem:[%s1 + $0x11c] sm:$0xf]
  %v98 = vld [vmem:[%s1 + $0x120] sm:$0xf]
  %v99 = vld [vmem:[%s1 + $0x124] sm:$0xf]
  %v100 = vld [vmem:[%s1 + $0x128] sm:$0xf]
  %v101 = vld [vmem:[%s1 + $0x12c] sm:$0xf]
  %v102 = vld [vmem:[%s1 + $0x130] sm:$0xf]
  %v103 = vld [vmem:[%s1 + $0x134] sm:$0xf]
  %v104 = vld [vmem:[%s1 + $0x138] sm:$0xf]
  %v105 = vld [vmem:[%s1 + $0x13c] sm:$0xf]
  %v106 = vld [vmem:[%s1 + $0x140] sm:$0xf]
  %v107 = vld [vmem:[%s1 + $0x144] sm:$0xf]
  %v108 = vld [vmem:[%s1 + $0x148] sm:$0xf]
  %v109 = vld [vmem:[%s1 + $0x14c] sm:$0xf]
  %v110 = vld [vmem:[%s1 + $0x150] sm:$0xf]
  %v111 = vld [vmem:[%s1 + $0x154] sm:$0xf]
  %v112 = vld [vmem:[%s1 + $0x158] sm:$0xf]
  %v113 = vld [vmem:[%s1 + $0x15c] sm:$0xf]
  %v114 = vld [vmem:[%s1 + $0x160] sm:$0xf]
  %v115 = vld [vmem:[%s1 + $0x164] sm:$0xf]
  %v116 = vld [vmem:[%s1 + $0x168] sm:$0xf]
  %v117 = vld [vmem:[%s1 + $0x16c] sm:$0xf]
  %v118 = vld [vmem:[%s1 + $0x170] sm:$0xf]
  %v119 = vld [vmem:[%s1 + $0x174] sm:$0xf]
  %v120 = vld [vmem:[%s1 + $0x178] sm:$0xf]
  %v121 = vld [vmem:[%s1 + $0x17c] sm:$0xf]
  %v122 = vld [vmem:[%s1 + $0x180] sm:$0xf]
  %v123 = vld [vmem:[%s1 + $0x184] sm:$0xf]
  %v124 = vld [vmem:[%s1 + $0x188] sm:$0xf]
  %v125 = vld [vmem:[%s1 + $0x18c] sm:$0xf]
  %v126 = vld [vmem:[%s1 + $0x190] sm:$0xf]
  %v127 = vld [vmem:[%s1 + $0x194] sm:$0xf]
  %v128 = vld [vmem:[%s1 + $0x198] sm:$0xf]
  %v129 = vld [vmem:[%s1 + $0x19c] sm:$0xf]
  %v130 = vld [vmem:[%s1 + $0x1a0] sm:$0xf]
  %v131 = vld [vmem:[%s1 + $0x1a4] sm:$0xf]
  %v132 = vld [vmem:[%s1 + $0x1a8] sm:$0xf]
  %v133 = vld [vmem:[%s1 + $0x1ac] sm:$0xf]
  %v134 = vld [vmem:[%s1 + $0x1b0] sm:$0xf]
  %v135 = vld [vmem:[%s1 + $0x1b4] sm:$0xf]
  %v136 = vld [vmem:[%s1 + $0x1b8] sm:$0xf]
  %v137 = vld [vmem:[%s1 + $0x1bc] sm:$0xf]
  %v138 = vld [vmem:[%s1 + $0x1c0] sm:$0xf]
  %v139 = vld [vmem:[%s1 + $0x1c4] sm:$0xf]
  %v140 = vld [vmem:[%s1 + $0x1c8] sm:$0xf]
  %v141 = vld [vmem:[%s1 + $0x1cc] sm:$0xf]
  %v142 = vld [vmem:[%s1 + $0x1d0] sm:$0xf]
  %v143 = vld [vmem:[%s1 + $0x1d4] sm:$0xf]
  %v144 = vld [vmem:[%s1 + $0x1d8] sm:$0xf]
  %v145 = vld [vmem:[%s1 + $0x1dc] sm:$0xf]
  %v146 = vld [vmem:[%s1 + $0x1e0] sm:$0xf]
  %v147 = vld [vmem:[%s1 + $0x1e4] sm:$0xf]
  %v148 = vld [vmem:[%s1 + $0x1e8] sm:$0xf]
  %v149 = vld [vmem:[%s1 + $0x1ec] sm:$0xf]
  %v150 = vld [vmem:[%s1 + $0x1f0] sm:$0xf]
  %v151 = vld [vmem:[%s1 + $0x1f4] sm:$0xf]
  %v152 = vld [vmem:[%s1 + $0x1f8] sm:$0xf]
  %v153 = vld [vmem:[%s1 + $0x1fc] sm:$0xf]
  %v154 = vld [vmem:[%s1 + $0x200] sm:$0xf]
  %v155 = vld [vmem:[%s1 + $0x204] sm:$0xf]
  %v156 = vld [vmem:[%s1 + $0x208] sm:$0xf]
  %v157 = vld [vmem:[%s1 + $0x20c] sm:$0xf]
  %v158 = vld [vmem:[%s1 + $0x210] sm:$0xf]
  %v159 = vld [vmem:[%s1 + $0x214] sm:$0xf]
  %v160 = vld [vmem:[%s1 + $0x218] sm:$0xf]
  %v161 = vld [vmem:[%s1 + $0x21c] sm:$0xf]
  %v162 = vld [vmem:[%s1 + $0x220] sm:$0xf]
  %v163 = vld [vmem:[%s1 + $0x224] sm:$0xf]
  %v164 = vld [vmem:[%s1 + $0x228] sm:$0xf]
  %v165 = vld [vmem:[%s1 + $0x22c] sm:$0xf]
  %v166 = vld [vmem:[%s1 + $0x230] sm:$0xf]
  %v167 = vld [vmem:[%s1 + $0x234] sm:$0xf]
  %v168 = vld [vmem:[%s1 + $0x238] sm:$0xf]
  %v169 = vld [vmem:[%s1 + $0x23c] sm:$0xf]
  %v170 = vld [vmem:[%s1 + $0x240] sm:$0xf]
  %v171 = vld [vmem:[%s1 + $0x244] sm:$0xf]
  %v172 = vld [vmem:[%s1 + $0x248] sm:$0xf]
  %v173 = vld [vmem:[%s1 + $0x24c] sm:$0x3]
  %v179 = vunpack.c.l.b16 %v21
  %v180 = vunpack.c.h.b16 %v21
  %v181 = vunpack.c.l.b16 %v22
  %v182 = vunpack.c.h.b16 %v22
  %v183 = vunpack.c.l.b16 %v23
  %v184 = vunpack.c.h.b16 %v23
  %v185 = vunpack.c.l.b16 %v24
  %v186 = vunpack.c.h.b16 %v24
  %v187 = vunpack.c.l.b16 %v25
  %v188 = vunpack.c.h.b16 %v25
  %v189 = vpack.c.b16 %v179, %v179
  %v190 = vpack.c.b16 %v180, %v180
  %v191 = vpack.c.b16 %v181, %v181
  %v192 = vpack.c.b16 %v182, %v182
  %v193 = vpack.c.b16 %v183, %v183
  %v194 = vpack.c.b16 %v184, %v184
  %v195 = vpack.c.b16 %v185, %v185
  %v196 = vpack.c.b16 %v186, %v186
  %v197 = vpack.c.b16 %v187, %v187
  %v198 = vpack.c.b16 %v188, %v188
  %v356 = vunpack.c.l.b16 %v26
  %v357 = vunpack.c.l.b16 %v27
  %v358 = vunpack.c.l.b16 %v28
  %v359 = vunpack.c.l.b16 %v29
  %v360 = vunpack.c.l.b16 %v30
  %v361 = vunpack.c.l.b16 %v31
  %v362 = vunpack.c.l.b16 %v32
  %v363 = vunpack.c.l.b16 %v33
  %v364 = vunpack.c.l.b16 %v34
  %v365 = vunpack.c.l.b16 %v35
  %v366 = vunpack.c.l.b16 %v36
  %v367 = vunpack.c.l.b16 %v37
  %v368 = vunpack.c.l.b16 %v38
  %v369 = vunpack.c.l.b16 %v39
  %v370 = vunpack.c.l.b16 %v40
  %v371 = vunpack.c.l.b16 %v41
  %v372 = vunpack.c.l.b16 %v42
  %v373 = vunpack.c.l.b16 %v43
  %v374 = vunpack.c.l.b16 %v44
  %v375 = vunpack.c.l.b16 %v45
  %v376 = vunpack.c.l.b16 %v46
  %v377 = vunpack.c.l.b16 %v47
  %v378 = vunpack.c.l.b16 %v48
  %v379 = vunpack.c.l.b16 %v49
  %v380 = vunpack.c.l.b16 %v50
  %v381 = vunpack.c.l.b16 %v51
  %v382 = vunpack.c.l.b16 %v52
  %v383 = vunpack.c.l.b16 %v53
  %v384 = vunpack.c.l.b16 %v54
  %v385 = vunpack.c.l.b16 %v55
  %v386 = vunpack.c.l.b16 %v56
  %v387 = vunpack.c.l.b16 %v57
  %v388 = vunpack.c.l.b16 %v58
  %v389 = vunpack.c.l.b16 %v59
  %v390 = vunpack.c.l.b16 %v60
  %v391 = vunpack.c.l.b16 %v61
  %v392 = vunpack.c.l.b16 %v62
  %v393 = vunpack.c.l.b16 %v63
  %v394 = vunpack.c.l.b16 %v64
  %v395 = vunpack.c.l.b16 %v65
  %v396 = vunpack.c.l.b16 %v66
  %v397 = vunpack.c.l.b16 %v67
  %v398 = vunpack.c.l.b16 %v68
  %v399 = vunpack.c.l.b16 %v69
  %v400 = vunpack.c.l.b16 %v70
  %v401 = vunpack.c.l.b16 %v71
  %v402 = vunpack.c.l.b16 %v72
  %v403 = vunpack.c.l.b16 %v73
  %v404 = vunpack.c.l.b16 %v74
  %v405 = vunpack.c.l.b16 %v75
  %v406 = vunpack.c.l.b16 %v76
  %v407 = vunpack.c.l.b16 %v77
  %v408 = vunpack.c.l.b16 %v78
  %v409 = vunpack.c.l.b16 %v79
  %v410 = vunpack.c.l.b16 %v80
  %v411 = vunpack.c.l.b16 %v81
  %v412 = vunpack.c.l.b16 %v82
  %v413 = vunpack.c.l.b16 %v83
  %v414 = vunpack.c.l.b16 %v84
  %v415 = vunpack.c.l.b16 %v85
  %v416 = vunpack.c.l.b16 %v86
  %v417 = vunpack.c.l.b16 %v87
  %v418 = vunpack.c.l.b16 %v88
  %v419 = vunpack.c.l.b16 %v89
  %v420 = vunpack.c.l.b16 %v90
  %v421 = vunpack.c.l.b16 %v91
  %v422 = vunpack.c.l.b16 %v92
  %v423 = vunpack.c.l.b16 %v93
  %v424 = vunpack.c.l.b16 %v94
  %v425 = vunpack.c.l.b16 %v95
  %v426 = vunpack.c.l.b16 %v96
  %v427 = vunpack.c.l.b16 %v97
  %v428 = vunpack.c.l.b16 %v98
  %v429 = vunpack.c.l.b16 %v99
  %v430 = vunpack.c.l.b16 %v100
  %v431 = vunpack.c.l.b16 %v101
  %v432 = vunpack.c.l.b16 %v102
  %v433 = vunpack.c.l.b16 %v103
  %v434 = vunpack.c.l.b16 %v104
  %v435 = vunpack.c.l.b16 %v105
  %v436 = vunpack.c.l.b16 %v106
  %v437 = vunpack.c.l.b16 %v107
  %v438 = vunpack.c.l.b16 %v108
  %v439 = vunpack.c.l.b16 %v109
  %v440 = vunpack.c.l.b16 %v110
  %v441 = vunpack.c.l.b16 %v111
  %v442 = vunpack.c.l.b16 %v112
  %v443 = vunpack.c.l.b16 %v113
  %v444 = vunpack.c.l.b16 %v114
  %v445 = vunpack.c.l.b16 %v115
  %v446 = vunpack.c.l.b16 %v116
  %v447 = vunpack.c.l.b16 %v117
  %v448 = vunpack.c.l.b16 %v118
  %v449 = vunpack.c.l.b16 %v119
  %v450 = vunpack.c.l.b16 %v120
  %v451 = vunpack.c.l.b16 %v121
  %v452 = vunpack.c.l.b16 %v122
  %v453 = vunpack.c.l.b16 %v123
  %v454 = vunpack.c.l.b16 %v124
  %v455 = vunpack.c.l.b16 %v125
  %v456 = vunpack.c.l.b16 %v126
  %v457 = vunpack.c.l.b16 %v127
  %v458 = vunpack.c.l.b16 %v128
  %v459 = vunpack.c.l.b16 %v129
  %v460 = vunpack.c.l.b16 %v130
  %v461 = vunpack.c.l.b16 %v131
  %v462 = vunpack.c.l.b16 %v132
  %v463 = vunpack.c.l.b16 %v133
  %v464 = vunpack.c.l.b16 %v134
  %v465 = vunpack.c.l.b16 %v135
  %v466 = vunpack.c.l.b16 %v136
  %v467 = vunpack.c.l.b16 %v137
  %v468 = vunpack.c.l.b16 %v138
  %v469 = vunpack.c.l.b16 %v139
  %v470 = vunpack.c.l.b16 %v140
  %v471 = vunpack.c.l.b16 %v141
  %v472 = vunpack.c.l.b16 %v142
  %v473 = vunpack.c.l.b16 %v143
  %v474 = vunpack.c.l.b16 %v144
  %v475 = vunpack.c.l.b16 %v145
  %v476 = vunpack.c.l.b16 %v146
  %v477 = vunpack.c.l.b16 %v147
  %v478 = vunpack.c.l.b16 %v148
  %v479 = vunpack.c.l.b16 %v149
  %v480 = vunpack.c.l.b16 %v150
  %v481 = vunpack.c.l.b16 %v151
  %v482 = vunpack.c.l.b16 %v152
  %v483 = vunpack.c.l.b16 %v153
  %v484 = vunpack.c.l.b16 %v154
  %v485 = vunpack.c.l.b16 %v155
  %v486 = vunpack.c.l.b16 %v156
  %v487 = vunpack.c.l.b16 %v157
  %v488 = vunpack.c.l.b16 %v158
  %v489 = vunpack.c.l.b16 %v159
  %v490 = vunpack.c.l.b16 %v160
  %v491 = vunpack.c.l.b16 %v161
  %v492 = vunpack.c.l.b16 %v162
  %v493 = vunpack.c.l.b16 %v163
  %v494 = vunpack.c.l.b16 %v164
  %v495 = vunpack.c.l.b16 %v165
  %v496 = vunpack.c.l.b16 %v166
  %v497 = vunpack.c.l.b16 %v167
  %v498 = vunpack.c.l.b16 %v168
  %v499 = vunpack.c.l.b16 %v169
  %v500 = vunpack.c.l.b16 %v170
  %v501 = vunpack.c.l.b16 %v171
  %v502 = vunpack.c.l.b16 %v172
  %v503 = vunpack.c.l.b16 %v173
  %v504 = vpack.c.b16 %v357, %v356
  %v505 = vpack.c.b16 %v359, %v358
  %v506 = vpack.c.b16 %v361, %v360
  %v507 = vpack.c.b16 %v363, %v362
  %v508 = vpack.c.b16 %v365, %v364
  %v509 = vpack.c.b16 %v367, %v366
  %v510 = vpack.c.b16 %v369, %v368
  %v511 = vpack.c.b16 %v371, %v370
  %v512 = vpack.c.b16 %v373, %v372
  %v513 = vpack.c.b16 %v375, %v374
  %v514 = vpack.c.b16 %v377, %v376
  %v515 = vpack.c.b16 %v379, %v378
  %v516 = vpack.c.b16 %v381, %v380
  %v517 = vpack.c.b16 %v383, %v382
  %v518 = vpack.c.b16 %v385, %v384
  %v519 = vpack.c.b16 %v387, %v386
  %v520 = vpack.c.b16 %v389, %v388
  %v521 = vpack.c.b16 %v391, %v390
  %v522 = vpack.c.b16 %v393, %v392
  %v523 = vpack.c.b16 %v395, %v394
  %v524 = vpack.c.b16 %v397, %v396
  %v525 = vpack.c.b16 %v399, %v398
  %v526 = vpack.c.b16 %v401, %v400
  %v527 = vpack.c.b16 %v403, %v402
  %v528 = vpack.c.b16 %v405, %v404
  %v529 = vpack.c.b16 %v407, %v406
  %v530 = vpack.c.b16 %v409, %v408
  %v531 = vpack.c.b16 %v411, %v410
  %v532 = vpack.c.b16 %v413, %v412
  %v533 = vpack.c.b16 %v415, %v414
  %v534 = vpack.c.b16 %v417, %v416
  %v535 = vpack.c.b16 %v419, %v418
  %v536 = vpack.c.b16 %v421, %v420
  %v537 = vpack.c.b16 %v423, %v422
  %v538 = vpack.c.b16 %v425, %v424
  %v539 = vpack.c.b16 %v427, %v426
  %v540 = vpack.c.b16 %v429, %v428
  %v541 = vpack.c.b16 %v431, %v430
  %v542 = vpack.c.b16 %v433, %v432
  %v543 = vpack.c.b16 %v435, %v434
  %v544 = vpack.c.b16 %v437, %v436
  %v545 = vpack.c.b16 %v439, %v438
  %v546 = vpack.c.b16 %v441, %v440
  %v547 = vpack.c.b16 %v443, %v442
  %v548 = vpack.c.b16 %v445, %v444
  %v549 = vpack.c.b16 %v447, %v446
  %v550 = vpack.c.b16 %v449, %v448
  %v551 = vpack.c.b16 %v451, %v450
  %v552 = vpack.c.b16 %v453, %v452
  %v553 = vpack.c.b16 %v455, %v454
  %v554 = vpack.c.b16 %v457, %v456
  %v555 = vpack.c.b16 %v459, %v458
  %v556 = vpack.c.b16 %v461, %v460
  %v557 = vpack.c.b16 %v463, %v462
  %v558 = vpack.c.b16 %v465, %v464
  %v559 = vpack.c.b16 %v467, %v466
  %v560 = vpack.c.b16 %v469, %v468
  %v561 = vpack.c.b16 %v471, %v470
  %v562 = vpack.c.b16 %v473, %v472
  %v563 = vpack.c.b16 %v475, %v474
  %v564 = vpack.c.b16 %v477, %v476
  %v565 = vpack.c.b16 %v479, %v478
  %v566 = vpack.c.b16 %v481, %v480
  %v567 = vpack.c.b16 %v483, %v482
  %v568 = vpack.c.b16 %v485, %v484
  %v569 = vpack.c.b16 %v487, %v486
  %v570 = vpack.c.b16 %v489, %v488
  %v571 = vpack.c.b16 %v491, %v490
  %v572 = vpack.c.b16 %v493, %v492
  %v573 = vpack.c.b16 %v495, %v494
  %v574 = vpack.c.b16 %v497, %v496
  %v575 = vpack.c.b16 %v499, %v498
  %v576 = vpack.c.b16 %v501, %v500
  %v577 = vpack.c.b16 %v503, %v502
  %vm651 = vcmask 220160
  %v653 = vsel %vm651, %v198, 0
  %vm655 = vcmask 1044480
  %vm656 = vcmask 1045504
  %v657 = vsel %vm655, 4294967295, 65535
  %v658 = vsel %vm656, %v657, 0
  %v660 = vand.u32 %v577, %v658
  %662 = vmatpush.bf16.msra.mxu0 %v511
  %663 = vmatpush.bf16.msra.mxu0 %v510
  %664 = vmatpush.bf16.msra.mxu0 %v509
  %665 = vmatpush.bf16.msra.mxu0 %v508
  %666 = vmatpush.bf16.msra.mxu0 %v507
  %667 = vmatpush.bf16.msra.mxu0 %v506
  %668 = vmatpush.bf16.msra.mxu0 %v505
  %669 = vmatpush.bf16.msra.mxu0 %v504
  %670 = vmatmul.bf16.gmra.mxu0 %v189
  %v671 = vpop.f32.mrf.mxu0
  %v672 = vadd.f32 0.0, %v671
  %v673 = vpop.f32.mrf.mxu0
  %674 = vdwg.mxu0
  %675 = vmatpush.bf16.msra.mxu0 %v519
  %676 = vmatpush.bf16.msra.mxu0 %v518
  %677 = vmatpush.bf16.msra.mxu0 %v517
  %678 = vmatpush.bf16.msra.mxu0 %v516
  %679 = vmatpush.bf16.msra.mxu0 %v515
  %680 = vmatpush.bf16.msra.mxu0 %v514
  %681 = vmatpush.bf16.msra.mxu0 %v513
  %682 = vmatpush.bf16.msra.mxu0 %v512
  %683 = vmatmul.bf16.gmra.mxu0 %v190
  %v684 = vpop.f32.mrf.mxu0
  %v685 = vadd.f32 %v672, %v684
  %v686 = vpop.f32.mrf.mxu0
  %687 = vdwg.mxu0
  %688 = vmatpush.bf16.msra.mxu0 %v527
  %689 = vmatpush.bf16.msra.mxu0 %v526
  %690 = vmatpush.bf16.msra.mxu0 %v525
  %691 = vmatpush.bf16.msra.mxu0 %v524
  %692 = vmatpush.bf16.msra.mxu0 %v523
  %693 = vmatpush.bf16.msra.mxu0 %v522
  %694 = vmatpush.bf16.msra.mxu0 %v521
  %695 = vmatpush.bf16.msra.mxu0 %v520
  %696 = vmatmul.bf16.gmra.mxu0 %v191
  %v697 = vpop.f32.mrf.mxu0
  %v698 = vadd.f32 %v685, %v697
  %v699 = vpop.f32.mrf.mxu0
  %700 = vdwg.mxu0
  %701 = vmatpush.bf16.msra.mxu0 %v535
  %702 = vmatpush.bf16.msra.mxu0 %v534
  %703 = vmatpush.bf16.msra.mxu0 %v533
  %704 = vmatpush.bf16.msra.mxu0 %v532
  %705 = vmatpush.bf16.msra.mxu0 %v531
  %706 = vmatpush.bf16.msra.mxu0 %v530
  %707 = vmatpush.bf16.msra.mxu0 %v529
  %708 = vmatpush.bf16.msra.mxu0 %v528
  %709 = vmatmul.bf16.gmra.mxu0 %v192
  %v710 = vpop.f32.mrf.mxu0
  %v711 = vadd.f32 %v698, %v710
  %v712 = vpop.f32.mrf.mxu0
  %713 = vdwg.mxu0
  %714 = vmatpush.bf16.msra.mxu0 %v543
  %715 = vmatpush.bf16.msra.mxu0 %v542
  %716 = vmatpush.bf16.msra.mxu0 %v541
  %717 = vmatpush.bf16.msra.mxu0 %v540
  %718 = vmatpush.bf16.msra.mxu0 %v539
  %719 = vmatpush.bf16.msra.mxu0 %v538
  %720 = vmatpush.bf16.msra.mxu0 %v537
  %721 = vmatpush.bf16.msra.mxu0 %v536
  %722 = vmatmul.bf16.gmra.mxu0 %v193
  %v723 = vpop.f32.mrf.mxu0
  %v724 = vadd.f32 %v711, %v723
  %v725 = vpop.f32.mrf.mxu0
  %726 = vdwg.mxu0
  %727 = vmatpush.bf16.msra.mxu0 %v551
  %728 = vmatpush.bf16.msra.mxu0 %v550
  %729 = vmatpush.bf16.msra.mxu0 %v549
  %730 = vmatpush.bf16.msra.mxu0 %v548
  %731 = vmatpush.bf16.msra.mxu0 %v547
  %732 = vmatpush.bf16.msra.mxu0 %v546
  %733 = vmatpush.bf16.msra.mxu0 %v545
  %734 = vmatpush.bf16.msra.mxu0 %v544
  %735 = vmatmul.bf16.gmra.mxu0 %v194
  %v736 = vpop.f32.mrf.mxu0
  %v737 = vadd.f32 %v724, %v736
  %v738 = vpop.f32.mrf.mxu0
  %739 = vdwg.mxu0
  %740 = vmatpush.bf16.msra.mxu0 %v559
  %741 = vmatpush.bf16.msra.mxu0 %v558
  %742 = vmatpush.bf16.msra.mxu0 %v557
  %743 = vmatpush.bf16.msra.mxu0 %v556
  %744 = vmatpush.bf16.msra.mxu0 %v555
  %745 = vmatpush.bf16.msra.mxu0 %v554
  %746 = vmatpush.bf16.msra.mxu0 %v553
  %747 = vmatpush.bf16.msra.mxu0 %v552
  %748 = vmatmul.bf16.gmra.mxu0 %v195
  %v749 = vpop.f32.mrf.mxu0
  %v750 = vadd.f32 %v737, %v749
  %v751 = vpop.f32.mrf.mxu0
  %752 = vdwg.mxu0
  %753 = vmatpush.bf16.msra.mxu0 %v567
  %754 = vmatpush.bf16.msra.mxu0 %v566
  %755 = vmatpush.bf16.msra.mxu0 %v565
  %756 = vmatpush.bf16.msra.mxu0 %v564
  %757 = vmatpush.bf16.msra.mxu0 %v563
  %758 = vmatpush.bf16.msra.mxu0 %v562
  %759 = vmatpush.bf16.msra.mxu0 %v561
  %760 = vmatpush.bf16.msra.mxu0 %v560
  %761 = vmatmul.bf16.gmra.mxu0 %v196
  %v762 = vpop.f32.mrf.mxu0
  %v763 = vadd.f32 %v750, %v762
  %v764 = vpop.f32.mrf.mxu0
  %765 = vdwg.mxu0
  %766 = vmatpush.bf16.msra.mxu0 %v575
  %767 = vmatpush.bf16.msra.mxu0 %v574
  %768 = vmatpush.bf16.msra.mxu0 %v573
  %769 = vmatpush.bf16.msra.mxu0 %v572
  %770 = vmatpush.bf16.msra.mxu0 %v571
  %771 = vmatpush.bf16.msra.mxu0 %v570
  %772 = vmatpush.bf16.msra.mxu0 %v569
  %773 = vmatpush.bf16.msra.mxu0 %v568
  %774 = vmatmul.bf16.gmra.mxu0 %v197
  %v775 = vpop.f32.mrf.mxu0
  %v776 = vadd.f32 %v763, %v775
  %v777 = vpop.f32.mrf.mxu0
  %778 = vdwg.mxu0
  %779 = vmatpush.bf16.msra.mxu0 0
  %780 = vmatpush.bf16.msra.mxu0 0
  %781 = vmatpush.bf16.msra.mxu0 0
  %782 = vmatpush.bf16.msra.mxu0 0
  %783 = vmatpush.bf16.msra.mxu0 0
  %784 = vmatpush.bf16.msra.mxu0 0
  %785 = vmatpush.bf16.msra.mxu0 %v660
  %786 = vmatpush.bf16.msra.mxu0 %v576
  %787 = vmatmul.bf16.gmra.mxu0 %v653
  %v788 = vpop.f32.mrf.mxu0
  %v789 = vadd.f32 %v776, %v788
  %v790 = vpop.f32.mrf.mxu0
  %791 = vdwg.mxu0
  %v792 = vld [vmem:[%s2] sm:$0x1]
  %v793 = vld [vmem:[%s3] sm:$0x1]
  %v794 = vld [vmem:[%s4] sm:$0x1]
  %vm795 = vcmask 203776
  %v796 = vsel %vm795, %v789, 0.0
  %v797 = vrot.slane %v796, 4
  %v798 = vadd.f32 %v796, %v797
  %v799 = vrot.slane %v798, 2
  %v800 = vadd.f32 %v798, %v799
  %v801 = vrot.slane %v800, 1
  %v802 = vadd.f32 %v800, %v801
  %v803 = vrcp.pop 8.0
  %v804 = vmul.f32 8.0, %v803
  %v805 = vsub.f32 1.0, %v804
  %v806 = vmul.f32 %v803, %v805
  %v807 = vadd.f32 %v803, %v806
  %vm808 = vweird.f32 %v803
  %v809 = vsel %vm808, %v803, %v807
  %v810 = vmul.f32 %v802, %v809
  %v811 = vsub.f32 %v789, %v810
  %v812 = vmul.f32 %v811, %v811
  %v813 = vsel %vm795, %v812, 0.0
  %v814 = vrot.slane %v813, 4
  %v815 = vadd.f32 %v813, %v814
  %v816 = vrot.slane %v815, 2
  %v817 = vadd.f32 %v815, %v816
  %v818 = vrot.slane %v817, 1
  %v819 = vadd.f32 %v817, %v818
  %v820 = vmul.f32 %v819, %v809
  %v821 = vadd.f32 %v820, 1e-05
  %v822 = vrsqrt.pop %v821
  %v823 = vmul.f32 %v822, %v821
  %v824 = vmul.f32 %v823, %v822
  %v825 = vmul.f32 0.5, %v824
  %v826 = vsub.f32 1.5, %v825
  %v827 = vmul.f32 %v822, %v826
  %vm828 = vweird.f32 %v821
  %vm829 = vweird.f32 %v822
  %vm830 = vmor %vm828, %vm829
  %v831 = vsel %vm830, %v822, %v827
  %v832 = vmul.f32 %v811, %v831
  %v834 = vperm.slane %v792, 0
  %v836 = vmul.f32 %v832, %v834
  %v838 = vperm.slane %v793, 0
  %v840 = vadd.f32 %v836, %v838
  %vm841 = vcmp.gt.f32.partialorder %v840, 0.0
  %v843 = vperm.slane %v794, 0
  %v845 = vmul.f32 %v843, %v840
  %v846 = vsel %vm841, %v840, %v845
  %847 = vst.msk [vmem:[%s5] sm:$0xff] %vm795, %v846
  // Predicated region
  $region22: #{espnet_forward.29} parent=0 // pred_check
    _
  $region23: #{espnet_forward.29} parent=0 // pred_check_branch
    %849 = sbr.rel (0) target = $region25
  $region24: #{espnet_forward.29} parent=0 // pred_region
    _
  $region25: #{espnet_forward.29} parent=0 // pred_fallthru
    _
  // Predicated region
  $region26: #{espnet_forward.29} parent=0 // pred_check
    _
  $region27: #{espnet_forward.29} parent=0 // pred_check_branch
    %851 = sbr.rel (0) target = $region29
  $region28: #{espnet_forward.29} parent=0 // pred_region
    _
  $region29: #{espnet_forward.29} parent=0 // pred_fallthru
    _

// kernel: espnet_forward.31
$region0: #{espnet_forward.31}
  #allocation0 [shape = 'u32[]', space=smem, size = 0x4, offset = 0x4, fixed_abs, tag = 'smem constant byte address 0x4 - core index']
  #allocation1 [shape = 'u32[72,128]{1,0:T(1,128)}', space=vmem, size = 0x9000, scoped, tag = 'internal scratch']
  %s0 = inlined_call_operand.vmem [shape: bf16[8,128], index: 0, kind: input, shape index: {}]
  %s1 = inlined_call_operand.vmem [shape: bf16[128,25], index: 1, kind: input, shape index: {}]
  %s2 = inlined_call_operand.vmem [shape: f32[1,25], index: 2, kind: input, shape index: {}]
  %s3 = inlined_call_operand.vmem [shape: f32[1,25], index: 3, kind: input, shape index: {}]
  %s4 = inlined_call_operand.vmem [shape: f32[1,25], index: 4, kind: input, shape index: {}]
  %s5 = inlined_call_operand.vmem [shape: f32[8,25], index: 5, kind: output, shape index: {}]
  %s6 = sld [smem:[#allocation0]]
  $region30: #{espnet_forward.31} parent=0
    _
  %s8 = ssub.s32 1, %s6
  %s9 = scalar_select 0, %s8, %s6
  // Predicated region
  $region2: #{espnet_forward.31} parent=0 // pred_check
    _
  $region3: #{espnet_forward.31} parent=0 // pred_check_branch
    %11 = sbr.rel (0) target = $region5
  $region4: #{espnet_forward.31} parent=0 // pred_region
    _
  $region5: #{espnet_forward.31} parent=0 // pred_fallthru
    _
  // Predicated region
  $region6: #{espnet_forward.31} parent=0 // pred_check
    _
  $region7: #{espnet_forward.31} parent=0 // pred_check_branch
    %13 = sbr.rel (0) target = $region9
  $region8: #{espnet_forward.31} parent=0 // pred_region
    _
  $region9: #{espnet_forward.31} parent=0 // pred_fallthru
    _
  // Predicated region
  $region10: #{espnet_forward.31} parent=0 // pred_check
    _
  $region11: #{espnet_forward.31} parent=0 // pred_check_branch
    %15 = sbr.rel (0) target = $region13
  $region12: #{espnet_forward.31} parent=0 // pred_region
    _
  $region13: #{espnet_forward.31} parent=0 // pred_fallthru
    _
  // Predicated region
  $region14: #{espnet_forward.31} parent=0 // pred_check
    _
  $region15: #{espnet_forward.31} parent=0 // pred_check_branch
    %17 = sbr.rel (0) target = $region17
  $region16: #{espnet_forward.31} parent=0 // pred_region
    _
  $region17: #{espnet_forward.31} parent=0 // pred_fallthru
    _
  // Predicated region
  $region18: #{espnet_forward.31} parent=0 // pred_check
    _
  $region19: #{espnet_forward.31} parent=0 // pred_check_branch
    %19 = sbr.rel (0) target = $region21
  $region20: #{espnet_forward.31} parent=0 // pred_region
    _
  $region21: #{espnet_forward.31} parent=0 // pred_fallthru
    _
  %v20 = vld [vmem:[%s0] sm:$0xf]
  %v21 = vld [vmem:[%s1] sm:$0xf]
  %v22 = vld [vmem:[%s1 + $0x4] sm:$0xf]
  %v23 = vld [vmem:[%s1 + $0x8] sm:$0xf]
  %v24 = vld [vmem:[%s1 + $0xc] sm:$0xf]
  %v25 = vld [vmem:[%s1 + $0x10] sm:$0xf]
  %v26 = vld [vmem:[%s1 + $0x14] sm:$0xf]
  %v27 = vld [vmem:[%s1 + $0x18] sm:$0xf]
  %v28 = vld [vmem:[%s1 + $0x1c] sm:$0xf]
  %v29 = vld [vmem:[%s1 + $0x20] sm:$0xf]
  %v30 = vld [vmem:[%s1 + $0x24] sm:$0xf]
  %v31 = vld [vmem:[%s1 + $0x28] sm:$0xf]
  %v32 = vld [vmem:[%s1 + $0x2c] sm:$0xf]
  %v33 = vld [vmem:[%s1 + $0x30] sm:$0xf]
  %v34 = vld [vmem:[%s1 + $0x34] sm:$0xf]
  %v35 = vld [vmem:[%s1 + $0x38] sm:$0xf]
  %v36 = vld [vmem:[%s1 + $0x3c] sm:$0xf]
  %v53 = vunpack.c.l.b16 %v21
  %v54 = vunpack.c.l.b16 %v22
  %v55 = vunpack.c.l.b16 %v23
  %v56 = vunpack.c.l.b16 %v24
  %v57 = vunpack.c.l.b16 %v25
  %v58 = vunpack.c.l.b16 %v26
  %v59 = vunpack.c.l.b16 %v27
  %v60 = vunpack.c.l.b16 %v28
  %v61 = vunpack.c.l.b16 %v29
  %v62 = vunpack.c.l.b16 %v30
  %v63 = vunpack.c.l.b16 %v31
  %v64 = vunpack.c.l.b16 %v32
  %v65 = vunpack.c.l.b16 %v33
  %v66 = vunpack.c.l.b16 %v34
  %v67 = vunpack.c.l.b16 %v35
  %v68 = vunpack.c.l.b16 %v36
  %v69 = vpack.c.b16 %v54, %v53
  %v70 = vpack.c.b16 %v56, %v55
  %v71 = vpack.c.b16 %v58, %v57
  %v72 = vpack.c.b16 %v60, %v59
  %v73 = vpack.c.b16 %v62, %v61
  %v74 = vpack.c.b16 %v64, %v63
  %v75 = vpack.c.b16 %v66, %v65
  %v76 = vpack.c.b16 %v68, %v67
  %85 = vmatpush.bf16.msra.mxu0 %v76
  %86 = vmatpush.bf16.msra.mxu0 %v75
  %87 = vmatpush.bf16.msra.mxu0 %v74
  %88 = vmatpush.bf16.msra.mxu0 %v73
  %89 = vmatpush.bf16.msra.mxu0 %v72
  %90 = vmatpush.bf16.msra.mxu0 %v71
  %91 = vmatpush.bf16.msra.mxu0 %v70
  %92 = vmatpush.bf16.msra.mxu0 %v69
  %93 = vmatmul.bf16.gmra.mxu0 %v20
  %v94 = vpop.f32.mrf.mxu0
  %v95 = vadd.f32 0.0, %v94
  %v96 = vpop.f32.mrf.mxu0
  %97 = vdwg.mxu0
  %v98 = vld [vmem:[%s2] sm:$0x1]
  %v99 = vld [vmem:[%s3] sm:$0x1]
  %v100 = vld [vmem:[%s4] sm:$0x1]
  %vm101 = vcmask 203776
  %v102 = vsel %vm101, %v95, 0.0
  %v103 = vrot.slane %v102, 4
  %v104 = vadd.f32 %v102, %v103
  %v105 = vrot.slane %v104, 2
  %v106 = vadd.f32 %v104, %v105
  %v107 = vrot.slane %v106, 1
  %v108 = vadd.f32 %v106, %v107
  %v109 = vrcp.pop 8.0
  %v110 = vmul.f32 8.0, %v109
  %v111 = vsub.f32 1.0, %v110
  %v112 = vmul.f32 %v109, %v111
  %v113 = vadd.f32 %v109, %v112
  %vm114 = vweird.f32 %v109
  %v115 = vsel %vm114, %v109, %v113
  %v116 = vmul.f32 %v108, %v115
  %v117 = vsub.f32 %v95, %v116
  %v118 = vmul.f32 %v117, %v117
  %v119 = vsel %vm101, %v118, 0.0
  %v120 = vrot.slane %v119, 4
  %v121 = vadd.f32 %v119, %v120
  %v122 = vrot.slane %v121, 2
  %v123 = vadd.f32 %v121, %v122
  %v124 = vrot.slane %v123, 1
  %v125 = vadd.f32 %v123, %v124
  %v126 = vmul.f32 %v125, %v115
  %v127 = vadd.f32 %v126, 1e-05
  %v128 = vrsqrt.pop %v127
  %v129 = vmul.f32 %v128, %v127
  %v130 = vmul.f32 %v129, %v128
  %v131 = vmul.f32 0.5, %v130
  %v132 = vsub.f32 1.5, %v131
  %v133 = vmul.f32 %v128, %v132
  %vm134 = vweird.f32 %v127
  %vm135 = vweird.f32 %v128
  %vm136 = vmor %vm134, %vm135
  %v137 = vsel %vm136, %v128, %v133
  %v138 = vmul.f32 %v117, %v137
  %v140 = vperm.slane %v98, 0
  %v142 = vmul.f32 %v138, %v140
  %v144 = vperm.slane %v99, 0
  %v146 = vadd.f32 %v142, %v144
  %vm147 = vcmp.gt.f32.partialorder %v146, 0.0
  %v149 = vperm.slane %v100, 0
  %v151 = vmul.f32 %v149, %v146
  %v152 = vsel %vm147, %v146, %v151
  %153 = vst.msk [vmem:[%s5] sm:$0xff] %vm101, %v152
  // Predicated region
  $region22: #{espnet_forward.31} parent=0 // pred_check
    _
  $region23: #{espnet_forward.31} parent=0 // pred_check_branch
    %155 = sbr.rel (0) target = $region25
  $region24: #{espnet_forward.31} parent=0 // pred_region
    _
  $region25: #{espnet_forward.31} parent=0 // pred_fallthru
    _
  // Predicated region
  $region26: #{espnet_forward.31} parent=0 // pred_check
    _
  $region27: #{espnet_forward.31} parent=0 // pred_check_branch
    %157 = sbr.rel (0) target = $region29
  $region28: #{espnet_forward.31} parent=0 // pred_region
    _
  $region29: #{espnet_forward.31} parent=0 // pred_fallthru
    _

// kernel: espnet_forward.37
$region0: #{espnet_forward.37}
  #allocation0 [shape = 'u32[]', space=smem, size = 0x4, offset = 0x4, fixed_abs, tag = 'smem constant byte address 0x4 - core index']
  #allocation1 [shape = 'u32[72,128]{1,0:T(1,128)}', space=vmem, size = 0x9000, scoped, tag = 'internal scratch']
  %s0 = inlined_call_operand.vmem [shape: bf16[8,128], index: 0, kind: input, shape index: {}]
  %s1 = inlined_call_operand.vmem [shape: bf16[128,5], index: 1, kind: input, shape index: {}]
  %s2 = inlined_call_operand.vmem [shape: bf16[8,128], index: 2, kind: input, shape index: {}]
  %s3 = inlined_call_operand.vmem [shape: bf16[128,5], index: 3, kind: input, shape index: {}]
  %s4 = inlined_call_operand.vmem [shape: f32[8,5], index: 4, kind: output, shape index: {}]
  %s5 = sld [smem:[#allocation0]]
  $region26: #{espnet_forward.37} parent=0
    _
  %s7 = ssub.s32 1, %s5
  %s8 = scalar_select 0, %s7, %s5
  // Predicated region
  $region2: #{espnet_forward.37} parent=0 // pred_check
    _
  $region3: #{espnet_forward.37} parent=0 // pred_check_branch
    %10 = sbr.rel (0) target = $region5
  $region4: #{espnet_forward.37} parent=0 // pred_region
    _
  $region5: #{espnet_forward.37} parent=0 // pred_fallthru
    _
  // Predicated region
  $region6: #{espnet_forward.37} parent=0 // pred_check
    _
  $region7: #{espnet_forward.37} parent=0 // pred_check_branch
    %12 = sbr.rel (0) target = $region9
  $region8: #{espnet_forward.37} parent=0 // pred_region
    _
  $region9: #{espnet_forward.37} parent=0 // pred_fallthru
    _
  // Predicated region
  $region10: #{espnet_forward.37} parent=0 // pred_check
    _
  $region11: #{espnet_forward.37} parent=0 // pred_check_branch
    %14 = sbr.rel (0) target = $region13
  $region12: #{espnet_forward.37} parent=0 // pred_region
    _
  $region13: #{espnet_forward.37} parent=0 // pred_fallthru
    _
  // Predicated region
  $region14: #{espnet_forward.37} parent=0 // pred_check
    _
  $region15: #{espnet_forward.37} parent=0 // pred_check_branch
    %16 = sbr.rel (0) target = $region17
  $region16: #{espnet_forward.37} parent=0 // pred_region
    _
  $region17: #{espnet_forward.37} parent=0 // pred_fallthru
    _
  %v17 = vld [vmem:[%s0] sm:$0xf]
  %v18 = vld [vmem:[%s1] sm:$0xf]
  %v19 = vld [vmem:[%s1 + $0x4] sm:$0xf]
  %v20 = vld [vmem:[%s1 + $0x8] sm:$0xf]
  %v21 = vld [vmem:[%s1 + $0xc] sm:$0xf]
  %v22 = vld [vmem:[%s1 + $0x10] sm:$0xf]
  %v23 = vld [vmem:[%s1 + $0x14] sm:$0xf]
  %v24 = vld [vmem:[%s1 + $0x18] sm:$0xf]
  %v25 = vld [vmem:[%s1 + $0x1c] sm:$0xf]
  %v26 = vld [vmem:[%s1 + $0x20] sm:$0xf]
  %v27 = vld [vmem:[%s1 + $0x24] sm:$0xf]
  %v28 = vld [vmem:[%s1 + $0x28] sm:$0xf]
  %v29 = vld [vmem:[%s1 + $0x2c] sm:$0xf]
  %v30 = vld [vmem:[%s1 + $0x30] sm:$0xf]
  %v31 = vld [vmem:[%s1 + $0x34] sm:$0xf]
  %v32 = vld [vmem:[%s1 + $0x38] sm:$0xf]
  %v33 = vld [vmem:[%s1 + $0x3c] sm:$0xf]
  %v34 = vld [vmem:[%s2] sm:$0xf]
  %v35 = vld [vmem:[%s3] sm:$0xf]
  %v36 = vld [vmem:[%s3 + $0x4] sm:$0xf]
  %v37 = vld [vmem:[%s3 + $0x8] sm:$0xf]
  %v38 = vld [vmem:[%s3 + $0xc] sm:$0xf]
  %v39 = vld [vmem:[%s3 + $0x10] sm:$0xf]
  %v40 = vld [vmem:[%s3 + $0x14] sm:$0xf]
  %v41 = vld [vmem:[%s3 + $0x18] sm:$0xf]
  %v42 = vld [vmem:[%s3 + $0x1c] sm:$0xf]
  %v43 = vld [vmem:[%s3 + $0x20] sm:$0xf]
  %v44 = vld [vmem:[%s3 + $0x24] sm:$0xf]
  %v45 = vld [vmem:[%s3 + $0x28] sm:$0xf]
  %v46 = vld [vmem:[%s3 + $0x2c] sm:$0xf]
  %v47 = vld [vmem:[%s3 + $0x30] sm:$0xf]
  %v48 = vld [vmem:[%s3 + $0x34] sm:$0xf]
  %v49 = vld [vmem:[%s3 + $0x38] sm:$0xf]
  %v50 = vld [vmem:[%s3 + $0x3c] sm:$0xf]
  %v67 = vunpack.c.l.b16 %v35
  %v68 = vunpack.c.l.b16 %v36
  %v69 = vunpack.c.l.b16 %v37
  %v70 = vunpack.c.l.b16 %v38
  %v71 = vunpack.c.l.b16 %v39
  %v72 = vunpack.c.l.b16 %v40
  %v73 = vunpack.c.l.b16 %v41
  %v74 = vunpack.c.l.b16 %v42
  %v75 = vunpack.c.l.b16 %v43
  %v76 = vunpack.c.l.b16 %v44
  %v77 = vunpack.c.l.b16 %v45
  %v78 = vunpack.c.l.b16 %v46
  %v79 = vunpack.c.l.b16 %v47
  %v80 = vunpack.c.l.b16 %v48
  %v81 = vunpack.c.l.b16 %v49
  %v82 = vunpack.c.l.b16 %v50
  %v83 = vpack.c.b16 %v68, %v67
  %v84 = vpack.c.b16 %v70, %v69
  %v85 = vpack.c.b16 %v72, %v71
  %v86 = vpack.c.b16 %v74, %v73
  %v87 = vpack.c.b16 %v76, %v75
  %v88 = vpack.c.b16 %v78, %v77
  %v89 = vpack.c.b16 %v80, %v79
  %v90 = vpack.c.b16 %v82, %v81
  %99 = vmatpush.bf16.msra.mxu0 %v90
  %100 = vmatpush.bf16.msra.mxu0 %v89
  %101 = vmatpush.bf16.msra.mxu0 %v88
  %102 = vmatpush.bf16.msra.mxu0 %v87
  %103 = vmatpush.bf16.msra.mxu0 %v86
  %104 = vmatpush.bf16.msra.mxu0 %v85
  %105 = vmatpush.bf16.msra.mxu0 %v84
  %106 = vmatpush.bf16.msra.mxu0 %v83
  %107 = vmatmul.bf16.gmra.mxu0 %v34
  %v108 = vpop.f32.mrf.mxu0
  %v109 = vadd.f32 0.0, %v108
  %v110 = vpop.f32.mrf.mxu0
  %111 = vdwg.mxu0
  %v128 = vunpack.c.l.b16 %v18
  %v129 = vunpack.c.l.b16 %v19
  %v130 = vunpack.c.l.b16 %v20
  %v131 = vunpack.c.l.b16 %v21
  %v132 = vunpack.c.l.b16 %v22
  %v133 = vunpack.c.l.b16 %v23
  %v134 = vunpack.c.l.b16 %v24
  %v135 = vunpack.c.l.b16 %v25
  %v136 = vunpack.c.l.b16 %v26
  %v137 = vunpack.c.l.b16 %v27
  %v138 = vunpack.c.l.b16 %v28
  %v139 = vunpack.c.l.b16 %v29
  %v140 = vunpack.c.l.b16 %v30
  %v141 = vunpack.c.l.b16 %v31
  %v142 = vunpack.c.l.b16 %v32
  %v143 = vunpack.c.l.b16 %v33
  %v144 = vpack.c.b16 %v129, %v128
  %v145 = vpack.c.b16 %v131, %v130
  %v146 = vpack.c.b16 %v133, %v132
  %v147 = vpack.c.b16 %v135, %v134
  %v148 = vpack.c.b16 %v137, %v136
  %v149 = vpack.c.b16 %v139, %v138
  %v150 = vpack.c.b16 %v141, %v140
  %v151 = vpack.c.b16 %v143, %v142
  %160 = vmatpush.bf16.msra.mxu0 %v151
  %161 = vmatpush.bf16.msra.mxu0 %v150
  %162 = vmatpush.bf16.msra.mxu0 %v149
  %163 = vmatpush.bf16.msra.mxu0 %v148
  %164 = vmatpush.bf16.msra.mxu0 %v147
  %165 = vmatpush.bf16.msra.mxu0 %v146
  %166 = vmatpush.bf16.msra.mxu0 %v145
  %167 = vmatpush.bf16.msra.mxu0 %v144
  %168 = vmatmul.bf16.gmra.mxu0 %v17
  %v169 = vpop.f32.mrf.mxu0
  %v170 = vadd.f32 %v109, %v169
  %v171 = vpop.f32.mrf.mxu0
  %172 = vdwg.mxu0
  %vm173 = vcmask 39936
  %174 = vst.msk [vmem:[%s4] sm:$0xff] %vm173, %v170
  // Predicated region
  $region18: #{espnet_forward.37} parent=0 // pred_check
    _
  $region19: #{espnet_forward.37} parent=0 // pred_check_branch
    %176 = sbr.rel (0) target = $region21
  $region20: #{espnet_forward.37} parent=0 // pred_region
    _
  $region21: #{espnet_forward.37} parent=0 // pred_fallthru
    _
  // Predicated region
  $region22: #{espnet_forward.37} parent=0 // pred_check
    _
  $region23: #{espnet_forward.37} parent=0 // pred_check_branch
    %178 = sbr.rel (0) target = $region25
  $region24: #{espnet_forward.37} parent=0 // pred_region
    _
  $region25: #{espnet_forward.37} parent=0 // pred_fallthru
    _

// kernel: espnet_forward.30
$region0: #{espnet_forward.30}
  #allocation0 [shape = 'u32[]', space=smem, size = 0x4, offset = 0x4, fixed_abs, tag = 'smem constant byte address 0x4 - core index']
  #allocation1 [shape = 'u32[72,128]{1,0:T(1,128)}', space=vmem, size = 0x9000, scoped, tag = 'internal scratch']
  %s0 = inlined_call_operand.vmem [shape: f32[14,25], index: 0, kind: input, shape index: {}]
  %s1 = inlined_call_operand.vmem [shape: bf16[13,25,128], index: 1, kind: input, shape index: {}]
  %s2 = inlined_call_operand.vmem [shape: f32[8,13], index: 2, kind: input, shape index: {}]
  %s3 = inlined_call_operand.vmem [shape: f32[1,128], index: 3, kind: input, shape index: {}]
  %s4 = inlined_call_operand.vmem [shape: f32[1,128], index: 4, kind: input, shape index: {}]
  %s5 = inlined_call_operand.vmem [shape: f32[1,128], index: 5, kind: input, shape index: {}]
  %s6 = inlined_call_operand.vmem [shape: f32[8,128], index: 6, kind: output, shape index: {}]
  %s7 = sld [smem:[#allocation0]]
  $region34: #{espnet_forward.30} parent=0
    _
  %s9 = ssub.s32 1, %s7
  %s10 = scalar_select 0, %s9, %s7
  // Predicated region
  $region2: #{espnet_forward.30} parent=0 // pred_check
    _
  $region3: #{espnet_forward.30} parent=0 // pred_check_branch
    %12 = sbr.rel (0) target = $region5
  $region4: #{espnet_forward.30} parent=0 // pred_region
    _
  $region5: #{espnet_forward.30} parent=0 // pred_fallthru
    _
  // Predicated region
  $region6: #{espnet_forward.30} parent=0 // pred_check
    _
  $region7: #{espnet_forward.30} parent=0 // pred_check_branch
    %14 = sbr.rel (0) target = $region9
  $region8: #{espnet_forward.30} parent=0 // pred_region
    _
  $region9: #{espnet_forward.30} parent=0 // pred_fallthru
    _
  // Predicated region
  $region10: #{espnet_forward.30} parent=0 // pred_check
    _
  $region11: #{espnet_forward.30} parent=0 // pred_check_branch
    %16 = sbr.rel (0) target = $region13
  $region12: #{espnet_forward.30} parent=0 // pred_region
    _
  $region13: #{espnet_forward.30} parent=0 // pred_fallthru
    _
  // Predicated region
  $region14: #{espnet_forward.30} parent=0 // pred_check
    _
  $region15: #{espnet_forward.30} parent=0 // pred_check_branch
    %18 = sbr.rel (0) target = $region17
  $region16: #{espnet_forward.30} parent=0 // pred_region
    _
  $region17: #{espnet_forward.30} parent=0 // pred_fallthru
    _
  // Predicated region
  $region18: #{espnet_forward.30} parent=0 // pred_check
    _
  $region19: #{espnet_forward.30} parent=0 // pred_check_branch
    %20 = sbr.rel (0) target = $region21
  $region20: #{espnet_forward.30} parent=0 // pred_region
    _
  $region21: #{espnet_forward.30} parent=0 // pred_fallthru
    _
  // Predicated region
  $region22: #{espnet_forward.30} parent=0 // pred_check
    _
  $region23: #{espnet_forward.30} parent=0 // pred_check_branch
    %22 = sbr.rel (0) target = $region25
  $region24: #{espnet_forward.30} parent=0 // pred_region
    _
  $region25: #{espnet_forward.30} parent=0 // pred_fallthru
    _
  %v24 = vld [vmem:[%s0] sm:$0xff]
  %v25 = vld [vmem:[%s2] sm:$0xff]
  %27 = vset.pattern.permute.xlu0 0
  %28 = vperm.xlu0 %27, %v25
  %v29 = vpop.permute.xlu0 %28
  %v31 = vmul.f32 %v24, %v29
  %v32 = vpack.c.bf16 %v31, %v31
  %v33 = vld [vmem:[%s1] sm:$0xf]
  %v34 = vld [vmem:[%s1 + $0x4] sm:$0xf]
  %v35 = vld [vmem:[%s1 + $0x8] sm:$0xf]
  %v36 = vld [vmem:[%s1 + $0xc] sm:$0x1]
  %v37 = vld [vmem:[%s0 + $0x1] sm:$0xff]
  %38 = vset.pattern.permute.xlu0 1
  %39 = vperm.xlu0 %38, %v25
  %v40 = vpop.permute.xlu0 %39
  %v42 = vmul.f32 %v37, %v40
  %v43 = vpack.c.bf16 %v42, %v42
  %s44 = scalar_lea.vmem %s1, 16
  %v45 = vld [vmem:[%s44] sm:$0xf]
  %v46 = vld [vmem:[%s44 + $0x4] sm:$0xf]
  %v47 = vld [vmem:[%s44 + $0x8] sm:$0xf]
  %v48 = vld [vmem:[%s44 + $0xc] sm:$0x1]
  %v53 = vunpack.c.l.b16 %v45
  %v54 = vunpack.c.l.b16 %v46
  %v55 = vunpack.c.l.b16 %v47
  %v56 = vunpack.c.l.b16 %v48
  %v57 = vpack.c.b16 %v54, %v53
  %v58 = vpack.c.b16 %v56, %v55
  %vm60 = vcmask 203776
  %v62 = vsel %vm60, %v43, 0
  %vm64 = vcmask 1043456
  %vm65 = vcmask 1044480
  %v66 = vsel %vm64, 4294967295, 65535
  %v67 = vsel %vm65, %v66, 0
  %v69 = vand.u32 %v58, %v67
  %71 = vmatpush.bf16.msra.mxu0 0
  %72 = vmatpush.bf16.msra.mxu0 0
  %73 = vmatpush.bf16.msra.mxu0 0
  %74 = vmatpush.bf16.msra.mxu0 0
  %75 = vmatpush.bf16.msra.mxu0 0
  %76 = vmatpush.bf16.msra.mxu0 0
  %77 = vmatpush.bf16.msra.mxu0 %v69
  %78 = vmatpush.bf16.msra.mxu0 %v57
  %79 = vmatmul.bf16.gmra.mxu0 %v62
  %v80 = vpop.f32.mrf.mxu0
  %v81 = vadd.f32 0.0, %v80
  %v82 = vpop.f32.mrf.mxu0
  %83 = vdwg.mxu0
  %v88 = vunpack.c.l.b16 %v33
  %v89 = vunpack.c.l.b16 %v34
  %v90 = vunpack.c.l.b16 %v35
  %v91 = vunpack.c.l.b16 %v36
  %v92 = vpack.c.b16 %v89, %v88
  %v93 = vpack.c.b16 %v91, %v90
  %v96 = vsel %vm60, %v32, 0
  %v99 = vand.u32 %v93, %v67
  %101 = vmatpush.bf16.msra.mxu0 0
  %102 = vmatpush.bf16.msra.mxu0 0
  %103 = vmatpush.bf16.msra.mxu0 0
  %104 = vmatpush.bf16.msra.mxu0 0
  %105 = vmatpush.bf16.msra.mxu0 0
  %106 = vmatpush.bf16.msra.mxu0 0
  %107 = vmatpush.bf16.msra.mxu0 %v99
  %108 = vmatpush.bf16.msra.mxu0 %v92
  %109 = vmatmul.bf16.gmra.mxu0 %v96
  %v110 = vpop.f32.mrf.mxu0
  %v111 = vadd.f32 %v81, %v110
  %v112 = vpop.f32.mrf.mxu0
  %113 = vdwg.mxu0
  %v114 = vld [vmem:[%s0 + $0x2] sm:$0xff]
  %115 = vset.pattern.permute.xlu0 2
  %116 = vperm.xlu0 %115, %v25
  %v117 = vpop.permute.xlu0 %116
  %v119 = vmul.f32 %v114, %v117
  %v120 = vpack.c.bf16 %v119, %v119
  %s121 = scalar_lea.vmem %s1, 32
  %v122 = vld [vmem:[%s121] sm:$0xf]
  %v123 = vld [vmem:[%s121 + $0x4] sm:$0xf]
  %v124 = vld [vmem:[%s121 + $0x8] sm:$0xf]
  %v125 = vld [vmem:[%s121 + $0xc] sm:$0x1]
  %v130 = vunpack.c.l.b16 %v122
  %v131 = vunpack.c.l.b16 %v123
  %v132 = vunpack.c.l.b16 %v124
  %v133 = vunpack.c.l.b16 %v125
  %v134 = vpack.c.b16 %v131, %v130
  %v135 = vpack.c.b16 %v133, %v132
  %v138 = vsel %vm60, %v120, 0
  %v141 = vand.u32 %v135, %v67
  %143 = vmatpush.bf16.msra.mxu0 0
  %144 = vmatpush.bf16.msra.mxu0 0
  %145 = vmatpush.bf16.msra.mxu0 0
  %146 = vmatpush.bf16.msra.mxu0 0
  %147 = vmatpush.bf16.msra.mxu0 0
  %148 = vmatpush.bf16.msra.mxu0 0
  %149 = vmatpush.bf16.msra.mxu0 %v141
  %150 = vmatpush.bf16.msra.mxu0 %v134
  %151 = vmatmul.bf16.gmra.mxu0 %v138
  %v152 = vpop.f32.mrf.mxu0
  %v153 = vadd.f32 0.0, %v152
  %v154 = vpop.f32.mrf.mxu0
  %155 = vdwg.mxu0
  %v156 = vadd.f32 %v111, %v153
  %157 = vset.pattern.permute.xlu0 3
  %158 = vperm.xlu0 %157, %v25
  %v159 = vpop.permute.xlu0 %158
  %v161 = vmul.f32 %v114, %v159
  %v162 = vpack.c.bf16 %v161, %v161
  %s163 = scalar_lea.vmem %s1, 48
  %v164 = vld [vmem:[%s163] sm:$0xf]
  %v165 = vld [vmem:[%s163 + $0x4] sm:$0xf]
  %v166 = vld [vmem:[%s163 + $0x8] sm:$0xf]
  %v167 = vld [vmem:[%s163 + $0xc] sm:$0x1]
  %v172 = vunpack.c.l.b16 %v164
  %v173 = vunpack.c.l.b16 %v165
  %v174 = vunpack.c.l.b16 %v166
  %v175 = vunpack.c.l.b16 %v167
  %v176 = vpack.c.b16 %v173, %v172
  %v177 = vpack.c.b16 %v175, %v174
  %v180 = vsel %vm60, %v162, 0
  %v183 = vand.u32 %v177, %v67
  %185 = vmatpush.bf16.msra.mxu0 0
  %186 = vmatpush.bf16.msra.mxu0 0
  %187 = vmatpush.bf16.msra.mxu0 0
  %188 = vmatpush.bf16.msra.mxu0 0
  %189 = vmatpush.bf16.msra.mxu0 0
  %190 = vmatpush.bf16.msra.mxu0 0
  %191 = vmatpush.bf16.msra.mxu0 %v183
  %192 = vmatpush.bf16.msra.mxu0 %v176
  %193 = vmatmul.bf16.gmra.mxu0 %v180
  %v194 = vpop.f32.mrf.mxu0
  %v195 = vadd.f32 0.0, %v194
  %v196 = vpop.f32.mrf.mxu0
  %197 = vdwg.mxu0
  %v198 = vadd.f32 %v156, %v195
  %v199 = vld [vmem:[%s0 + $0x3] sm:$0xff]
  %200 = vset.pattern.permute.xlu0 4
  %201 = vperm.xlu0 %200, %v25
  %v202 = vpop.permute.xlu0 %201
  %v204 = vmul.f32 %v199, %v202
  %v205 = vpack.c.bf16 %v204, %v204
  %s206 = scalar_lea.vmem %s1, 64
  %v207 = vld [vmem:[%s206] sm:$0xf]
  %v208 = vld [vmem:[%s206 + $0x4] sm:$0xf]
  %v209 = vld [vmem:[%s206 + $0x8] sm:$0xf]
  %v210 = vld [vmem:[%s206 + $0xc] sm:$0x1]
  %v215 = vunpack.c.l.b16 %v207
  %v216 = vunpack.c.l.b16 %v208
  %v217 = vunpack.c.l.b16 %v209
  %v218 = vunpack.c.l.b16 %v210
  %v219 = vpack.c.b16 %v216, %v215
  %v220 = vpack.c.b16 %v218, %v217
  %v223 = vsel %vm60, %v205, 0
  %v226 = vand.u32 %v220, %v67
  %228 = vmatpush.bf16.msra.mxu0 0
  %229 = vmatpush.bf16.msra.mxu0 0
  %230 = vmatpush.bf16.msra.mxu0 0
  %231 = vmatpush.bf16.msra.mxu0 0
  %232 = vmatpush.bf16.msra.mxu0 0
  %233 = vmatpush.bf16.msra.mxu0 0
  %234 = vmatpush.bf16.msra.mxu0 %v226
  %235 = vmatpush.bf16.msra.mxu0 %v219
  %236 = vmatmul.bf16.gmra.mxu0 %v223
  %v237 = vpop.f32.mrf.mxu0
  %v238 = vadd.f32 0.0, %v237
  %v239 = vpop.f32.mrf.mxu0
  %240 = vdwg.mxu0
  %v241 = vadd.f32 %v198, %v238
  %v242 = vld [vmem:[%s0 + $0x4] sm:$0xff]
  %243 = vset.pattern.permute.xlu0 5
  %244 = vperm.xlu0 %243, %v25
  %v245 = vpop.permute.xlu0 %244
  %v247 = vmul.f32 %v242, %v245
  %v248 = vpack.c.bf16 %v247, %v247
  %s249 = scalar_lea.vmem %s1, 80
  %v250 = vld [vmem:[%s249] sm:$0xf]
  %v251 = vld [vmem:[%s249 + $0x4] sm:$0xf]
  %v252 = vld [vmem:[%s249 + $0x8] sm:$0xf]
  %v253 = vld [vmem:[%s249 + $0xc] sm:$0x1]
  %v258 = vunpack.c.l.b16 %v250
  %v259 = vunpack.c.l.b16 %v251
  %v260 = vunpack.c.l.b16 %v252
  %v261 = vunpack.c.l.b16 %v253
  %v262 = vpack.c.b16 %v259, %v258
  %v263 = vpack.c.b16 %v261, %v260
  %v266 = vsel %vm60, %v248, 0
  %v269 = vand.u32 %v263, %v67
  %271 = vmatpush.bf16.msra.mxu0 0
  %272 = vmatpush.bf16.msra.mxu0 0
  %273 = vmatpush.bf16.msra.mxu0 0
  %274 = vmatpush.bf16.msra.mxu0 0
  %275 = vmatpush.bf16.msra.mxu0 0
  %276 = vmatpush.bf16.msra.mxu0 0
  %277 = vmatpush.bf16.msra.mxu0 %v269
  %278 = vmatpush.bf16.msra.mxu0 %v262
  %279 = vmatmul.bf16.gmra.mxu0 %v266
  %v280 = vpop.f32.mrf.mxu0
  %v281 = vadd.f32 0.0, %v280
  %v282 = vpop.f32.mrf.mxu0
  %283 = vdwg.mxu0
  %v284 = vadd.f32 %v241, %v281
  %285 = vset.pattern.permute.xlu0 6
  %286 = vperm.xlu0 %285, %v25
  %v287 = vpop.permute.xlu0 %286
  %v289 = vmul.f32 %v242, %v287
  %v290 = vpack.c.bf16 %v289, %v289
  %s291 = scalar_lea.vmem %s1, 96
  %v292 = vld [vmem:[%s291] sm:$0xf]
  %v293 = vld [vmem:[%s291 + $0x4] sm:$0xf]
  %v294 = vld [vmem:[%s291 + $0x8] sm:$0xf]
  %v295 = vld [vmem:[%s291 + $0xc] sm:$0x1]
  %v300 = vunpack.c.l.b16 %v292
  %v301 = vunpack.c.l.b16 %v293
  %v302 = vunpack.c.l.b16 %v294
  %v303 = vunpack.c.l.b16 %v295
  %v304 = vpack.c.b16 %v301, %v300
  %v305 = vpack.c.b16 %v303, %v302
  %v308 = vsel %vm60, %v290, 0
  %v311 = vand.u32 %v305, %v67
  %313 = vmatpush.bf16.msra.mxu0 0
  %314 = vmatpush.bf16.msra.mxu0 0
  %315 = vmatpush.bf16.msra.mxu0 0
  %316 = vmatpush.bf16.msra.mxu0 0
  %317 = vmatpush.bf16.msra.mxu0 0
  %318 = vmatpush.bf16.msra.mxu0 0
  %319 = vmatpush.bf16.msra.mxu0 %v311
  %320 = vmatpush.bf16.msra.mxu0 %v304
  %321 = vmatmul.bf16.gmra.mxu0 %v308
  %v322 = vpop.f32.mrf.mxu0
  %v323 = vadd.f32 0.0, %v322
  %v324 = vpop.f32.mrf.mxu0
  %325 = vdwg.mxu0
  %v326 = vadd.f32 %v284, %v323
  %v327 = vld [vmem:[%s0 + $0x5] sm:$0xff]
  %328 = vset.pattern.permute.xlu0 7
  %329 = vperm.xlu0 %328, %v25
  %v330 = vpop.permute.xlu0 %329
  %v332 = vmul.f32 %v327, %v330
  %v333 = vpack.c.bf16 %v332, %v332
  %s334 = scalar_lea.vmem %s1, 112
  %v335 = vld [vmem:[%s334] sm:$0xf]
  %v336 = vld [vmem:[%s334 + $0x4] sm:$0xf]
  %v337 = vld [vmem:[%s334 + $0x8] sm:$0xf]
  %v338 = vld [vmem:[%s334 + $0xc] sm:$0x1]
  %v343 = vunpack.c.l.b16 %v335
  %v344 = vunpack.c.l.b16 %v336
  %v345 = vunpack.c.l.b16 %v337
  %v346 = vunpack.c.l.b16 %v338
  %v347 = vpack.c.b16 %v344, %v343
  %v348 = vpack.c.b16 %v346, %v345
  %v351 = vsel %vm60, %v333, 0
  %v354 = vand.u32 %v348, %v67
  %356 = vmatpush.bf16.msra.mxu0 0
  %357 = vmatpush.bf16.msra.mxu0 0
  %358 = vmatpush.bf16.msra.mxu0 0
  %359 = vmatpush.bf16.msra.mxu0 0
  %360 = vmatpush.bf16.msra.mxu0 0
  %361 = vmatpush.bf16.msra.mxu0 0
  %362 = vmatpush.bf16.msra.mxu0 %v354
  %363 = vmatpush.bf16.msra.mxu0 %v347
  %364 = vmatmul.bf16.gmra.mxu0 %v351
  %v365 = vpop.f32.mrf.mxu0
  %v366 = vadd.f32 0.0, %v365
  %v367 = vpop.f32.mrf.mxu0
  %368 = vdwg.mxu0
  %v369 = vadd.f32 %v326, %v366
  %v370 = vld [vmem:[%s0 + $0x6] sm:$0xff]
  %371 = vset.pattern.permute.xlu0 8
  %372 = vperm.xlu0 %371, %v25
  %v373 = vpop.permute.xlu0 %372
  %v375 = vmul.f32 %v370, %v373
  %v376 = vpack.c.bf16 %v375, %v375
  %s377 = scalar_lea.vmem %s1, 128
  %v378 = vld [vmem:[%s377] sm:$0xf]
  %v379 = vld [vmem:[%s377 + $0x4] sm:$0xf]
  %v380 = vld [vmem:[%s377 + $0x8] sm:$0xf]
  %v381 = vld [vmem:[%s377 + $0xc] sm:$0x1]
  %v386 = vunpack.c.l.b16 %v378
  %v387 = vunpack.c.l.b16 %v379
  %v388 = vunpack.c.l.b16 %v380
  %v389 = vunpack.c.l.b16 %v381
  %v390 = vpack.c.b16 %v387, %v386
  %v391 = vpack.c.b16 %v389, %v388
  %v394 = vsel %vm60, %v376, 0
  %v397 = vand.u32 %v391, %v67
  %399 = vmatpush.bf16.msra.mxu0 0
  %400 = vmatpush.bf16.msra.mxu0 0
  %401 = vmatpush.bf16.msra.mxu0 0
  %402 = vmatpush.bf16.msra.mxu0 0
  %403 = vmatpush.bf16.msra.mxu0 0
  %404 = vmatpush.bf16.msra.mxu0 0
  %405 = vmatpush.bf16.msra.mxu0 %v397
  %406 = vmatpush.bf16.msra.mxu0 %v390
  %407 = vmatmul.bf16.gmra.mxu0 %v394
  %v408 = vpop.f32.mrf.mxu0
  %v409 = vadd.f32 0.0, %v408
  %v410 = vpop.f32.mrf.mxu0
  %411 = vdwg.mxu0
  %v412 = vadd.f32 %v369, %v409
  %413 = vset.pattern.permute.xlu0 9
  %414 = vperm.xlu0 %413, %v25
  %v415 = vpop.permute.xlu0 %414
  %v417 = vmul.f32 %v199, %v415
  %v418 = vpack.c.bf16 %v417, %v417
  %s419 = scalar_lea.vmem %s1, 144
  %v420 = vld [vmem:[%s419] sm:$0xf]
  %v421 = vld [vmem:[%s419 + $0x4] sm:$0xf]
  %v422 = vld [vmem:[%s419 + $0x8] sm:$0xf]
  %v423 = vld [vmem:[%s419 + $0xc] sm:$0x1]
  %v428 = vunpack.c.l.b16 %v420
  %v429 = vunpack.c.l.b16 %v421
  %v430 = vunpack.c.l.b16 %v422
  %v431 = vunpack.c.l.b16 %v423
  %v432 = vpack.c.b16 %v429, %v428
  %v433 = vpack.c.b16 %v431, %v430
  %v436 = vsel %vm60, %v418, 0
  %v439 = vand.u32 %v433, %v67
  %441 = vmatpush.bf16.msra.mxu0 0
  %442 = vmatpush.bf16.msra.mxu0 0
  %443 = vmatpush.bf16.msra.mxu0 0
  %444 = vmatpush.bf16.msra.mxu0 0
  %445 = vmatpush.bf16.msra.mxu0 0
  %446 = vmatpush.bf16.msra.mxu0 0
  %447 = vmatpush.bf16.msra.mxu0 %v439
  %448 = vmatpush.bf16.msra.mxu0 %v432
  %449 = vmatmul.bf16.gmra.mxu0 %v436
  %v450 = vpop.f32.mrf.mxu0
  %v451 = vadd.f32 0.0, %v450
  %v452 = vpop.f32.mrf.mxu0
  %453 = vdwg.mxu0
  %v454 = vadd.f32 %v412, %v451
  %455 = vset.pattern.permute.xlu0 10
  %456 = vperm.xlu0 %455, %v25
  %v457 = vpop.permute.xlu0 %456
  %v459 = vmul.f32 %v199, %v457
  %v460 = vpack.c.bf16 %v459, %v459
  %s461 = scalar_lea.vmem %s1, 160
  %v462 = vld [vmem:[%s461] sm:$0xf]
  %v463 = vld [vmem:[%s461 + $0x4] sm:$0xf]
  %v464 = vld [vmem:[%s461 + $0x8] sm:$0xf]
  %v465 = vld [vmem:[%s461 + $0xc] sm:$0x1]
  %v470 = vunpack.c.l.b16 %v462
  %v471 = vunpack.c.l.b16 %v463
  %v472 = vunpack.c.l.b16 %v464
  %v473 = vunpack.c.l.b16 %v465
  %v474 = vpack.c.b16 %v471, %v470
  %v475 = vpack.c.b16 %v473, %v472
  %v478 = vsel %vm60, %v460, 0
  %v481 = vand.u32 %v475, %v67
  %483 = vmatpush.bf16.msra.mxu0 0
  %484 = vmatpush.bf16.msra.mxu0 0
  %485 = vmatpush.bf16.msra.mxu0 0
  %486 = vmatpush.bf16.msra.mxu0 0
  %487 = vmatpush.bf16.msra.mxu0 0
  %488 = vmatpush.bf16.msra.mxu0 0
  %489 = vmatpush.bf16.msra.mxu0 %v481
  %490 = vmatpush.bf16.msra.mxu0 %v474
  %491 = vmatmul.bf16.gmra.mxu0 %v478
  %v492 = vpop.f32.mrf.mxu0
  %v493 = vadd.f32 0.0, %v492
  %v494 = vpop.f32.mrf.mxu0
  %495 = vdwg.mxu0
  %v496 = vadd.f32 %v454, %v493
  %497 = vset.pattern.permute.xlu0 11
  %498 = vperm.xlu0 %497, %v25
  %v499 = vpop.permute.xlu0 %498
  %v501 = vmul.f32 %v199, %v499
  %v502 = vpack.c.bf16 %v501, %v501
  %s503 = scalar_lea.vmem %s1, 176
  %v504 = vld [vmem:[%s503] sm:$0xf]
  %v505 = vld [vmem:[%s503 + $0x4] sm:$0xf]
  %v506 = vld [vmem:[%s503 + $0x8] sm:$0xf]
  %v507 = vld [vmem:[%s503 + $0xc] sm:$0x1]
  %v512 = vunpack.c.l.b16 %v504
  %v513 = vunpack.c.l.b16 %v505
  %v514 = vunpack.c.l.b16 %v506
  %v515 = vunpack.c.l.b16 %v507
  %v516 = vpack.c.b16 %v513, %v512
  %v517 = vpack.c.b16 %v515, %v514
  %v520 = vsel %vm60, %v502, 0
  %v523 = vand.u32 %v517, %v67
  %525 = vmatpush.bf16.msra.mxu0 0
  %526 = vmatpush.bf16.msra.mxu0 0
  %527 = vmatpush.bf16.msra.mxu0 0
  %528 = vmatpush.bf16.msra.mxu0 0
  %529 = vmatpush.bf16.msra.mxu0 0
  %530 = vmatpush.bf16.msra.mxu0 0
  %531 = vmatpush.bf16.msra.mxu0 %v523
  %532 = vmatpush.bf16.msra.mxu0 %v516
  %533 = vmatmul.bf16.gmra.mxu0 %v520
  %v534 = vpop.f32.mrf.mxu0
  %v535 = vadd.f32 0.0, %v534
  %v536 = vpop.f32.mrf.mxu0
  %537 = vdwg.mxu0
  %v538 = vadd.f32 %v496, %v535
  %539 = vset.pattern.permute.xlu0 12
  %540 = vperm.xlu0 %539, %v25
  %v541 = vpop.permute.xlu0 %540
  %v543 = vmul.f32 %v199, %v541
  %v544 = vpack.c.bf16 %v543, %v543
  %s545 = scalar_lea.vmem %s1, 192
  %v546 = vld [vmem:[%s545] sm:$0xf]
  %v547 = vld [vmem:[%s545 + $0x4] sm:$0xf]
  %v548 = vld [vmem:[%s545 + $0x8] sm:$0xf]
  %v549 = vld [vmem:[%s545 + $0xc] sm:$0x1]
  %v554 = vunpack.c.l.b16 %v546
  %v555 = vunpack.c.l.b16 %v547
  %v556 = vunpack.c.l.b16 %v548
  %v557 = vunpack.c.l.b16 %v549
  %v558 = vpack.c.b16 %v555, %v554
  %v559 = vpack.c.b16 %v557, %v556
  %v562 = vsel %vm60, %v544, 0
  %v565 = vand.u32 %v559, %v67
  %567 = vmatpush.bf16.msra.mxu0 0
  %568 = vmatpush.bf16.msra.mxu0 0
  %569 = vmatpush.bf16.msra.mxu0 0
  %570 = vmatpush.bf16.msra.mxu0 0
  %571 = vmatpush.bf16.msra.mxu0 0
  %572 = vmatpush.bf16.msra.mxu0 0
  %573 = vmatpush.bf16.msra.mxu0 %v565
  %574 = vmatpush.bf16.msra.mxu0 %v558
  %575 = vmatmul.bf16.gmra.mxu0 %v562
  %v576 = vpop.f32.mrf.mxu0
  %v577 = vadd.f32 0.0, %v576
  %v578 = vpop.f32.mrf.mxu0
  %579 = vdwg.mxu0
  %v580 = vadd.f32 %v538, %v577
  %v581 = vld [vmem:[%s3] sm:$0x1]
  %v582 = vld [vmem:[%s4] sm:$0x1]
  %v583 = vld [vmem:[%s5] sm:$0x1]
  %v584 = vrot.slane %v580, 4
  %v585 = vadd.f32 %v580, %v584
  %v586 = vrot.slane %v585, 2
  %v587 = vadd.f32 %v585, %v586
  %v588 = vrot.slane %v587, 1
  %v589 = vadd.f32 %v587, %v588
  %v590 = vrcp.pop 8.0
  %v591 = vmul.f32 8.0, %v590
  %v592 = vsub.f32 1.0, %v591
  %v593 = vmul.f32 %v590, %v592
  %v594 = vadd.f32 %v590, %v593
  %vm595 = vweird.f32 %v590
  %v596 = vsel %vm595, %v590, %v594
  %v597 = vmul.f32 %v589, %v596
  %v598 = vsub.f32 %v580, %v597
  %v599 = vmul.f32 %v598, %v598
  %v600 = vrot.slane %v599, 4
  %v601 = vadd.f32 %v599, %v600
  %v602 = vrot.slane %v601, 2
  %v603 = vadd.f32 %v601, %v602
  %v604 = vrot.slane %v603, 1
  %v605 = vadd.f32 %v603, %v604
  %v606 = vmul.f32 %v605, %v596
  %v607 = vadd.f32 %v606, 1e-05
  %v608 = vrsqrt.pop %v607
  %v609 = vmul.f32 %v608, %v607
  %v610 = vmul.f32 %v609, %v608
  %v611 = vmul.f32 0.5, %v610
  %v612 = vsub.f32 1.5, %v611
  %v613 = vmul.f32 %v608, %v612
  %vm614 = vweird.f32 %v607
  %vm615 = vweird.f32 %v608
  %vm616 = vmor %vm614, %vm615
  %v617 = vsel %vm616, %v608, %v613
  %v618 = vmul.f32 %v598, %v617
  %v620 = vperm.slane %v581, 0
  %v622 = vmul.f32 %v618, %v620
  %v624 = vperm.slane %v582, 0
  %v626 = vadd.f32 %v622, %v624
  %vm627 = vcmp.gt.f32.partialorder %v626, 0.0
  %v629 = vperm.slane %v583, 0
  %v631 = vmul.f32 %v629, %v626
  %v632 = vsel %vm627, %v626, %v631
  %633 = vst [vmem:[%s6] sm:$0xff] %v632
  // Predicated region
  $region26: #{espnet_forward.30} parent=0 // pred_check
    _
  $region27: #{espnet_forward.30} parent=0 // pred_check_branch
    %635 = sbr.rel (0) target = $region29
  $region28: #{espnet_forward.30} parent=0 // pred_region
    _
  $region29: #{espnet_forward.30} parent=0 // pred_fallthru
    _
  // Predicated region
  $region30: #{espnet_forward.30} parent=0 // pred_check
    _
  $region31: #{espnet_forward.30} parent=0 // pred_check_branch
    %637 = sbr.rel (0) target = $region33
  $region32: #{espnet_forward.30} parent=0 // pred_region
    _
  $region33: #{espnet_forward.30} parent=0 // pred_fallthru
    _

// kernel: espnet_forward.32
$region0: #{espnet_forward.32}
  #allocation0 [shape = 'u32[]', space=smem, size = 0x4, offset = 0x4, fixed_abs, tag = 'smem constant byte address 0x4 - core index']
  #allocation1 [shape = 'u32[72,128]{1,0:T(1,128)}', space=vmem, size = 0x9000, scoped, tag = 'internal scratch']
  %s0 = inlined_call_operand.vmem [shape: f32[14,25], index: 0, kind: input, shape index: {}]
  %s1 = inlined_call_operand.vmem [shape: bf16[13,25,128], index: 1, kind: input, shape index: {}]
  %s2 = inlined_call_operand.vmem [shape: f32[8,13], index: 2, kind: input, shape index: {}]
  %s3 = inlined_call_operand.vmem [shape: f32[8,128], index: 3, kind: input, shape index: {}]
  %s4 = inlined_call_operand.vmem [shape: f32[1,128], index: 4, kind: input, shape index: {}]
  %s5 = inlined_call_operand.vmem [shape: f32[1,128], index: 5, kind: input, shape index: {}]
  %s6 = inlined_call_operand.vmem [shape: f32[1,128], index: 6, kind: input, shape index: {}]
  %s7 = inlined_call_operand.vmem [shape: f32[8,128], index: 7, kind: output, shape index: {}]
  %s8 = sld [smem:[#allocation0]]
  $region38: #{espnet_forward.32} parent=0
    _
  %s10 = ssub.s32 1, %s8
  %s11 = scalar_select 0, %s10, %s8
  // Predicated region
  $region2: #{espnet_forward.32} parent=0 // pred_check
    _
  $region3: #{espnet_forward.32} parent=0 // pred_check_branch
    %13 = sbr.rel (0) target = $region5
  $region4: #{espnet_forward.32} parent=0 // pred_region
    _
  $region5: #{espnet_forward.32} parent=0 // pred_fallthru
    _
  // Predicated region
  $region6: #{espnet_forward.32} parent=0 // pred_check
    _
  $region7: #{espnet_forward.32} parent=0 // pred_check_branch
    %15 = sbr.rel (0) target = $region9
  $region8: #{espnet_forward.32} parent=0 // pred_region
    _
  $region9: #{espnet_forward.32} parent=0 // pred_fallthru
    _
  // Predicated region
  $region10: #{espnet_forward.32} parent=0 // pred_check
    _
  $region11: #{espnet_forward.32} parent=0 // pred_check_branch
    %17 = sbr.rel (0) target = $region13
  $region12: #{espnet_forward.32} parent=0 // pred_region
    _
  $region13: #{espnet_forward.32} parent=0 // pred_fallthru
    _
  // Predicated region
  $region14: #{espnet_forward.32} parent=0 // pred_check
    _
  $region15: #{espnet_forward.32} parent=0 // pred_check_branch
    %19 = sbr.rel (0) target = $region17
  $region16: #{espnet_forward.32} parent=0 // pred_region
    _
  $region17: #{espnet_forward.32} parent=0 // pred_fallthru
    _
  // Predicated region
  $region18: #{espnet_forward.32} parent=0 // pred_check
    _
  $region19: #{espnet_forward.32} parent=0 // pred_check_branch
    %21 = sbr.rel (0) target = $region21
  $region20: #{espnet_forward.32} parent=0 // pred_region
    _
  $region21: #{espnet_forward.32} parent=0 // pred_fallthru
    _
  // Predicated region
  $region22: #{espnet_forward.32} parent=0 // pred_check
    _
  $region23: #{espnet_forward.32} parent=0 // pred_check_branch
    %23 = sbr.rel (0) target = $region25
  $region24: #{espnet_forward.32} parent=0 // pred_region
    _
  $region25: #{espnet_forward.32} parent=0 // pred_fallthru
    _
  // Predicated region
  $region26: #{espnet_forward.32} parent=0 // pred_check
    _
  $region27: #{espnet_forward.32} parent=0 // pred_check_branch
    %25 = sbr.rel (0) target = $region29
  $region28: #{espnet_forward.32} parent=0 // pred_region
    _
  $region29: #{espnet_forward.32} parent=0 // pred_fallthru
    _
  %v27 = vld [vmem:[%s0] sm:$0xff]
  %v28 = vld [vmem:[%s2] sm:$0xff]
  %30 = vset.pattern.permute.xlu0 0
  %31 = vperm.xlu0 %30, %v28
  %v32 = vpop.permute.xlu0 %31
  %v34 = vmul.f32 %v27, %v32
  %v35 = vpack.c.bf16 %v34, %v34
  %v36 = vld [vmem:[%s1] sm:$0xf]
  %v37 = vld [vmem:[%s1 + $0x4] sm:$0xf]
  %v38 = vld [vmem:[%s1 + $0x8] sm:$0xf]
  %v39 = vld [vmem:[%s1 + $0xc] sm:$0x1]
  %v40 = vld [vmem:[%s0 + $0x1] sm:$0xff]
  %41 = vset.pattern.permute.xlu0 1
  %42 = vperm.xlu0 %41, %v28
  %v43 = vpop.permute.xlu0 %42
  %v45 = vmul.f32 %v40, %v43
  %v46 = vpack.c.bf16 %v45, %v45
  %s47 = scalar_lea.vmem %s1, 16
  %v48 = vld [vmem:[%s47] sm:$0xf]
  %v49 = vld [vmem:[%s47 + $0x4] sm:$0xf]
  %v50 = vld [vmem:[%s47 + $0x8] sm:$0xf]
  %v51 = vld [vmem:[%s47 + $0xc] sm:$0x1]
  %v56 = vunpack.c.l.b16 %v48
  %v57 = vunpack.c.l.b16 %v49
  %v58 = vunpack.c.l.b16 %v50
  %v59 = vunpack.c.l.b16 %v51
  %v60 = vpack.c.b16 %v57, %v56
  %v61 = vpack.c.b16 %v59, %v58
  %vm63 = vcmask 203776
  %v65 = vsel %vm63, %v46, 0
  %vm67 = vcmask 1043456
  %vm68 = vcmask 1044480
  %v69 = vsel %vm67, 4294967295, 65535
  %v70 = vsel %vm68, %v69, 0
  %v72 = vand.u32 %v61, %v70
  %74 = vmatpush.bf16.msra.mxu0 0
  %75 = vmatpush.bf16.msra.mxu0 0
  %76 = vmatpush.bf16.msra.mxu0 0
  %77 = vmatpush.bf16.msra.mxu0 0
  %78 = vmatpush.bf16.msra.mxu0 0
  %79 = vmatpush.bf16.msra.mxu0 0
  %80 = vmatpush.bf16.msra.mxu0 %v72
  %81 = vmatpush.bf16.msra.mxu0 %v60
  %82 = vmatmul.bf16.gmra.mxu0 %v65
  %v83 = vpop.f32.mrf.mxu0
  %v84 = vadd.f32 0.0, %v83
  %v85 = vpop.f32.mrf.mxu0
  %86 = vdwg.mxu0
  %v91 = vunpack.c.l.b16 %v36
  %v92 = vunpack.c.l.b16 %v37
  %v93 = vunpack.c.l.b16 %v38
  %v94 = vunpack.c.l.b16 %v39
  %v95 = vpack.c.b16 %v92, %v91
  %v96 = vpack.c.b16 %v94, %v93
  %v99 = vsel %vm63, %v35, 0
  %v102 = vand.u32 %v96, %v70
  %104 = vmatpush.bf16.msra.mxu0 0
  %105 = vmatpush.bf16.msra.mxu0 0
  %106 = vmatpush.bf16.msra.mxu0 0
  %107 = vmatpush.bf16.msra.mxu0 0
  %108 = vmatpush.bf16.msra.mxu0 0
  %109 = vmatpush.bf16.msra.mxu0 0
  %110 = vmatpush.bf16.msra.mxu0 %v102
  %111 = vmatpush.bf16.msra.mxu0 %v95
  %112 = vmatmul.bf16.gmra.mxu0 %v99
  %v113 = vpop.f32.mrf.mxu0
  %v114 = vadd.f32 %v84, %v113
  %v115 = vpop.f32.mrf.mxu0
  %116 = vdwg.mxu0
  %v117 = vld [vmem:[%s0 + $0x2] sm:$0xff]
  %118 = vset.pattern.permute.xlu0 2
  %119 = vperm.xlu0 %118, %v28
  %v120 = vpop.permute.xlu0 %119
  %v122 = vmul.f32 %v117, %v120
  %v123 = vpack.c.bf16 %v122, %v122
  %s124 = scalar_lea.vmem %s1, 32
  %v125 = vld [vmem:[%s124] sm:$0xf]
  %v126 = vld [vmem:[%s124 + $0x4] sm:$0xf]
  %v127 = vld [vmem:[%s124 + $0x8] sm:$0xf]
  %v128 = vld [vmem:[%s124 + $0xc] sm:$0x1]
  %v133 = vunpack.c.l.b16 %v125
  %v134 = vunpack.c.l.b16 %v126
  %v135 = vunpack.c.l.b16 %v127
  %v136 = vunpack.c.l.b16 %v128
  %v137 = vpack.c.b16 %v134, %v133
  %v138 = vpack.c.b16 %v136, %v135
  %v141 = vsel %vm63, %v123, 0
  %v144 = vand.u32 %v138, %v70
  %146 = vmatpush.bf16.msra.mxu0 0
  %147 = vmatpush.bf16.msra.mxu0 0
  %148 = vmatpush.bf16.msra.mxu0 0
  %149 = vmatpush.bf16.msra.mxu0 0
  %150 = vmatpush.bf16.msra.mxu0 0
  %151 = vmatpush.bf16.msra.mxu0 0
  %152 = vmatpush.bf16.msra.mxu0 %v144
  %153 = vmatpush.bf16.msra.mxu0 %v137
  %154 = vmatmul.bf16.gmra.mxu0 %v141
  %v155 = vpop.f32.mrf.mxu0
  %v156 = vadd.f32 0.0, %v155
  %v157 = vpop.f32.mrf.mxu0
  %158 = vdwg.mxu0
  %v159 = vadd.f32 %v114, %v156
  %160 = vset.pattern.permute.xlu0 3
  %161 = vperm.xlu0 %160, %v28
  %v162 = vpop.permute.xlu0 %161
  %v164 = vmul.f32 %v117, %v162
  %v165 = vpack.c.bf16 %v164, %v164
  %s166 = scalar_lea.vmem %s1, 48
  %v167 = vld [vmem:[%s166] sm:$0xf]
  %v168 = vld [vmem:[%s166 + $0x4] sm:$0xf]
  %v169 = vld [vmem:[%s166 + $0x8] sm:$0xf]
  %v170 = vld [vmem:[%s166 + $0xc] sm:$0x1]
  %v175 = vunpack.c.l.b16 %v167
  %v176 = vunpack.c.l.b16 %v168
  %v177 = vunpack.c.l.b16 %v169
  %v178 = vunpack.c.l.b16 %v170
  %v179 = vpack.c.b16 %v176, %v175
  %v180 = vpack.c.b16 %v178, %v177
  %v183 = vsel %vm63, %v165, 0
  %v186 = vand.u32 %v180, %v70
  %188 = vmatpush.bf16.msra.mxu0 0
  %189 = vmatpush.bf16.msra.mxu0 0
  %190 = vmatpush.bf16.msra.mxu0 0
  %191 = vmatpush.bf16.msra.mxu0 0
  %192 = vmatpush.bf16.msra.mxu0 0
  %193 = vmatpush.bf16.msra.mxu0 0
  %194 = vmatpush.bf16.msra.mxu0 %v186
  %195 = vmatpush.bf16.msra.mxu0 %v179
  %196 = vmatmul.bf16.gmra.mxu0 %v183
  %v197 = vpop.f32.mrf.mxu0
  %v198 = vadd.f32 0.0, %v197
  %v199 = vpop.f32.mrf.mxu0
  %200 = vdwg.mxu0
  %v201 = vadd.f32 %v159, %v198
  %v202 = vld [vmem:[%s0 + $0x3] sm:$0xff]
  %203 = vset.pattern.permute.xlu0 4
  %204 = vperm.xlu0 %203, %v28
  %v205 = vpop.permute.xlu0 %204
  %v207 = vmul.f32 %v202, %v205
  %v208 = vpack.c.bf16 %v207, %v207
  %s209 = scalar_lea.vmem %s1, 64
  %v210 = vld [vmem:[%s209] sm:$0xf]
  %v211 = vld [vmem:[%s209 + $0x4] sm:$0xf]
  %v212 = vld [vmem:[%s209 + $0x8] sm:$0xf]
  %v213 = vld [vmem:[%s209 + $0xc] sm:$0x1]
  %v218 = vunpack.c.l.b16 %v210
  %v219 = vunpack.c.l.b16 %v211
  %v220 = vunpack.c.l.b16 %v212
  %v221 = vunpack.c.l.b16 %v213
  %v222 = vpack.c.b16 %v219, %v218
  %v223 = vpack.c.b16 %v221, %v220
  %v226 = vsel %vm63, %v208, 0
  %v229 = vand.u32 %v223, %v70
  %231 = vmatpush.bf16.msra.mxu0 0
  %232 = vmatpush.bf16.msra.mxu0 0
  %233 = vmatpush.bf16.msra.mxu0 0
  %234 = vmatpush.bf16.msra.mxu0 0
  %235 = vmatpush.bf16.msra.mxu0 0
  %236 = vmatpush.bf16.msra.mxu0 0
  %237 = vmatpush.bf16.msra.mxu0 %v229
  %238 = vmatpush.bf16.msra.mxu0 %v222
  %239 = vmatmul.bf16.gmra.mxu0 %v226
  %v240 = vpop.f32.mrf.mxu0
  %v241 = vadd.f32 0.0, %v240
  %v242 = vpop.f32.mrf.mxu0
  %243 = vdwg.mxu0
  %v244 = vadd.f32 %v201, %v241
  %v245 = vld [vmem:[%s0 + $0x4] sm:$0xff]
  %246 = vset.pattern.permute.xlu0 5
  %247 = vperm.xlu0 %246, %v28
  %v248 = vpop.permute.xlu0 %247
  %v250 = vmul.f32 %v245, %v248
  %v251 = vpack.c.bf16 %v250, %v250
  %s252 = scalar_lea.vmem %s1, 80
  %v253 = vld [vmem:[%s252] sm:$0xf]
  %v254 = vld [vmem:[%s252 + $0x4] sm:$0xf]
  %v255 = vld [vmem:[%s252 + $0x8] sm:$0xf]
  %v256 = vld [vmem:[%s252 + $0xc] sm:$0x1]
  %v261 = vunpack.c.l.b16 %v253
  %v262 = vunpack.c.l.b16 %v254
  %v263 = vunpack.c.l.b16 %v255
  %v264 = vunpack.c.l.b16 %v256
  %v265 = vpack.c.b16 %v262, %v261
  %v266 = vpack.c.b16 %v264, %v263
  %v269 = vsel %vm63, %v251, 0
  %v272 = vand.u32 %v266, %v70
  %274 = vmatpush.bf16.msra.mxu0 0
  %275 = vmatpush.bf16.msra.mxu0 0
  %276 = vmatpush.bf16.msra.mxu0 0
  %277 = vmatpush.bf16.msra.mxu0 0
  %278 = vmatpush.bf16.msra.mxu0 0
  %279 = vmatpush.bf16.msra.mxu0 0
  %280 = vmatpush.bf16.msra.mxu0 %v272
  %281 = vmatpush.bf16.msra.mxu0 %v265
  %282 = vmatmul.bf16.gmra.mxu0 %v269
  %v283 = vpop.f32.mrf.mxu0
  %v284 = vadd.f32 0.0, %v283
  %v285 = vpop.f32.mrf.mxu0
  %286 = vdwg.mxu0
  %v287 = vadd.f32 %v244, %v284
  %288 = vset.pattern.permute.xlu0 6
  %289 = vperm.xlu0 %288, %v28
  %v290 = vpop.permute.xlu0 %289
  %v292 = vmul.f32 %v245, %v290
  %v293 = vpack.c.bf16 %v292, %v292
  %s294 = scalar_lea.vmem %s1, 96
  %v295 = vld [vmem:[%s294] sm:$0xf]
  %v296 = vld [vmem:[%s294 + $0x4] sm:$0xf]
  %v297 = vld [vmem:[%s294 + $0x8] sm:$0xf]
  %v298 = vld [vmem:[%s294 + $0xc] sm:$0x1]
  %v303 = vunpack.c.l.b16 %v295
  %v304 = vunpack.c.l.b16 %v296
  %v305 = vunpack.c.l.b16 %v297
  %v306 = vunpack.c.l.b16 %v298
  %v307 = vpack.c.b16 %v304, %v303
  %v308 = vpack.c.b16 %v306, %v305
  %v311 = vsel %vm63, %v293, 0
  %v314 = vand.u32 %v308, %v70
  %316 = vmatpush.bf16.msra.mxu0 0
  %317 = vmatpush.bf16.msra.mxu0 0
  %318 = vmatpush.bf16.msra.mxu0 0
  %319 = vmatpush.bf16.msra.mxu0 0
  %320 = vmatpush.bf16.msra.mxu0 0
  %321 = vmatpush.bf16.msra.mxu0 0
  %322 = vmatpush.bf16.msra.mxu0 %v314
  %323 = vmatpush.bf16.msra.mxu0 %v307
  %324 = vmatmul.bf16.gmra.mxu0 %v311
  %v325 = vpop.f32.mrf.mxu0
  %v326 = vadd.f32 0.0, %v325
  %v327 = vpop.f32.mrf.mxu0
  %328 = vdwg.mxu0
  %v329 = vadd.f32 %v287, %v326
  %v330 = vld [vmem:[%s0 + $0x5] sm:$0xff]
  %331 = vset.pattern.permute.xlu0 7
  %332 = vperm.xlu0 %331, %v28
  %v333 = vpop.permute.xlu0 %332
  %v335 = vmul.f32 %v330, %v333
  %v336 = vpack.c.bf16 %v335, %v335
  %s337 = scalar_lea.vmem %s1, 112
  %v338 = vld [vmem:[%s337] sm:$0xf]
  %v339 = vld [vmem:[%s337 + $0x4] sm:$0xf]
  %v340 = vld [vmem:[%s337 + $0x8] sm:$0xf]
  %v341 = vld [vmem:[%s337 + $0xc] sm:$0x1]
  %v346 = vunpack.c.l.b16 %v338
  %v347 = vunpack.c.l.b16 %v339
  %v348 = vunpack.c.l.b16 %v340
  %v349 = vunpack.c.l.b16 %v341
  %v350 = vpack.c.b16 %v347, %v346
  %v351 = vpack.c.b16 %v349, %v348
  %v354 = vsel %vm63, %v336, 0
  %v357 = vand.u32 %v351, %v70
  %359 = vmatpush.bf16.msra.mxu0 0
  %360 = vmatpush.bf16.msra.mxu0 0
  %361 = vmatpush.bf16.msra.mxu0 0
  %362 = vmatpush.bf16.msra.mxu0 0
  %363 = vmatpush.bf16.msra.mxu0 0
  %364 = vmatpush.bf16.msra.mxu0 0
  %365 = vmatpush.bf16.msra.mxu0 %v357
  %366 = vmatpush.bf16.msra.mxu0 %v350
  %367 = vmatmul.bf16.gmra.mxu0 %v354
  %v368 = vpop.f32.mrf.mxu0
  %v369 = vadd.f32 0.0, %v368
  %v370 = vpop.f32.mrf.mxu0
  %371 = vdwg.mxu0
  %v372 = vadd.f32 %v329, %v369
  %v373 = vld [vmem:[%s0 + $0x6] sm:$0xff]
  %374 = vset.pattern.permute.xlu0 8
  %375 = vperm.xlu0 %374, %v28
  %v376 = vpop.permute.xlu0 %375
  %v378 = vmul.f32 %v373, %v376
  %v379 = vpack.c.bf16 %v378, %v378
  %s380 = scalar_lea.vmem %s1, 128
  %v381 = vld [vmem:[%s380] sm:$0xf]
  %v382 = vld [vmem:[%s380 + $0x4] sm:$0xf]
  %v383 = vld [vmem:[%s380 + $0x8] sm:$0xf]
  %v384 = vld [vmem:[%s380 + $0xc] sm:$0x1]
  %v389 = vunpack.c.l.b16 %v381
  %v390 = vunpack.c.l.b16 %v382
  %v391 = vunpack.c.l.b16 %v383
  %v392 = vunpack.c.l.b16 %v384
  %v393 = vpack.c.b16 %v390, %v389
  %v394 = vpack.c.b16 %v392, %v391
  %v397 = vsel %vm63, %v379, 0
  %v400 = vand.u32 %v394, %v70
  %402 = vmatpush.bf16.msra.mxu0 0
  %403 = vmatpush.bf16.msra.mxu0 0
  %404 = vmatpush.bf16.msra.mxu0 0
  %405 = vmatpush.bf16.msra.mxu0 0
  %406 = vmatpush.bf16.msra.mxu0 0
  %407 = vmatpush.bf16.msra.mxu0 0
  %408 = vmatpush.bf16.msra.mxu0 %v400
  %409 = vmatpush.bf16.msra.mxu0 %v393
  %410 = vmatmul.bf16.gmra.mxu0 %v397
  %v411 = vpop.f32.mrf.mxu0
  %v412 = vadd.f32 0.0, %v411
  %v413 = vpop.f32.mrf.mxu0
  %414 = vdwg.mxu0
  %v415 = vadd.f32 %v372, %v412
  %416 = vset.pattern.permute.xlu0 9
  %417 = vperm.xlu0 %416, %v28
  %v418 = vpop.permute.xlu0 %417
  %v420 = vmul.f32 %v202, %v418
  %v421 = vpack.c.bf16 %v420, %v420
  %s422 = scalar_lea.vmem %s1, 144
  %v423 = vld [vmem:[%s422] sm:$0xf]
  %v424 = vld [vmem:[%s422 + $0x4] sm:$0xf]
  %v425 = vld [vmem:[%s422 + $0x8] sm:$0xf]
  %v426 = vld [vmem:[%s422 + $0xc] sm:$0x1]
  %v431 = vunpack.c.l.b16 %v423
  %v432 = vunpack.c.l.b16 %v424
  %v433 = vunpack.c.l.b16 %v425
  %v434 = vunpack.c.l.b16 %v426
  %v435 = vpack.c.b16 %v432, %v431
  %v436 = vpack.c.b16 %v434, %v433
  %v439 = vsel %vm63, %v421, 0
  %v442 = vand.u32 %v436, %v70
  %444 = vmatpush.bf16.msra.mxu0 0
  %445 = vmatpush.bf16.msra.mxu0 0
  %446 = vmatpush.bf16.msra.mxu0 0
  %447 = vmatpush.bf16.msra.mxu0 0
  %448 = vmatpush.bf16.msra.mxu0 0
  %449 = vmatpush.bf16.msra.mxu0 0
  %450 = vmatpush.bf16.msra.mxu0 %v442
  %451 = vmatpush.bf16.msra.mxu0 %v435
  %452 = vmatmul.bf16.gmra.mxu0 %v439
  %v453 = vpop.f32.mrf.mxu0
  %v454 = vadd.f32 0.0, %v453
  %v455 = vpop.f32.mrf.mxu0
  %456 = vdwg.mxu0
  %v457 = vadd.f32 %v415, %v454
  %458 = vset.pattern.permute.xlu0 10
  %459 = vperm.xlu0 %458, %v28
  %v460 = vpop.permute.xlu0 %459
  %v462 = vmul.f32 %v202, %v460
  %v463 = vpack.c.bf16 %v462, %v462
  %s464 = scalar_lea.vmem %s1, 160
  %v465 = vld [vmem:[%s464] sm:$0xf]
  %v466 = vld [vmem:[%s464 + $0x4] sm:$0xf]
  %v467 = vld [vmem:[%s464 + $0x8] sm:$0xf]
  %v468 = vld [vmem:[%s464 + $0xc] sm:$0x1]
  %v473 = vunpack.c.l.b16 %v465
  %v474 = vunpack.c.l.b16 %v466
  %v475 = vunpack.c.l.b16 %v467
  %v476 = vunpack.c.l.b16 %v468
  %v477 = vpack.c.b16 %v474, %v473
  %v478 = vpack.c.b16 %v476, %v475
  %v481 = vsel %vm63, %v463, 0
  %v484 = vand.u32 %v478, %v70
  %486 = vmatpush.bf16.msra.mxu0 0
  %487 = vmatpush.bf16.msra.mxu0 0
  %488 = vmatpush.bf16.msra.mxu0 0
  %489 = vmatpush.bf16.msra.mxu0 0
  %490 = vmatpush.bf16.msra.mxu0 0
  %491 = vmatpush.bf16.msra.mxu0 0
  %492 = vmatpush.bf16.msra.mxu0 %v484
  %493 = vmatpush.bf16.msra.mxu0 %v477
  %494 = vmatmul.bf16.gmra.mxu0 %v481
  %v495 = vpop.f32.mrf.mxu0
  %v496 = vadd.f32 0.0, %v495
  %v497 = vpop.f32.mrf.mxu0
  %498 = vdwg.mxu0
  %v499 = vadd.f32 %v457, %v496
  %500 = vset.pattern.permute.xlu0 11
  %501 = vperm.xlu0 %500, %v28
  %v502 = vpop.permute.xlu0 %501
  %v504 = vmul.f32 %v202, %v502
  %v505 = vpack.c.bf16 %v504, %v504
  %s506 = scalar_lea.vmem %s1, 176
  %v507 = vld [vmem:[%s506] sm:$0xf]
  %v508 = vld [vmem:[%s506 + $0x4] sm:$0xf]
  %v509 = vld [vmem:[%s506 + $0x8] sm:$0xf]
  %v510 = vld [vmem:[%s506 + $0xc] sm:$0x1]
  %v515 = vunpack.c.l.b16 %v507
  %v516 = vunpack.c.l.b16 %v508
  %v517 = vunpack.c.l.b16 %v509
  %v518 = vunpack.c.l.b16 %v510
  %v519 = vpack.c.b16 %v516, %v515
  %v520 = vpack.c.b16 %v518, %v517
  %v523 = vsel %vm63, %v505, 0
  %v526 = vand.u32 %v520, %v70
  %528 = vmatpush.bf16.msra.mxu0 0
  %529 = vmatpush.bf16.msra.mxu0 0
  %530 = vmatpush.bf16.msra.mxu0 0
  %531 = vmatpush.bf16.msra.mxu0 0
  %532 = vmatpush.bf16.msra.mxu0 0
  %533 = vmatpush.bf16.msra.mxu0 0
  %534 = vmatpush.bf16.msra.mxu0 %v526
  %535 = vmatpush.bf16.msra.mxu0 %v519
  %536 = vmatmul.bf16.gmra.mxu0 %v523
  %v537 = vpop.f32.mrf.mxu0
  %v538 = vadd.f32 0.0, %v537
  %v539 = vpop.f32.mrf.mxu0
  %540 = vdwg.mxu0
  %v541 = vadd.f32 %v499, %v538
  %542 = vset.pattern.permute.xlu0 12
  %543 = vperm.xlu0 %542, %v28
  %v544 = vpop.permute.xlu0 %543
  %v546 = vmul.f32 %v202, %v544
  %v547 = vpack.c.bf16 %v546, %v546
  %s548 = scalar_lea.vmem %s1, 192
  %v549 = vld [vmem:[%s548] sm:$0xf]
  %v550 = vld [vmem:[%s548 + $0x4] sm:$0xf]
  %v551 = vld [vmem:[%s548 + $0x8] sm:$0xf]
  %v552 = vld [vmem:[%s548 + $0xc] sm:$0x1]
  %v557 = vunpack.c.l.b16 %v549
  %v558 = vunpack.c.l.b16 %v550
  %v559 = vunpack.c.l.b16 %v551
  %v560 = vunpack.c.l.b16 %v552
  %v561 = vpack.c.b16 %v558, %v557
  %v562 = vpack.c.b16 %v560, %v559
  %v565 = vsel %vm63, %v547, 0
  %v568 = vand.u32 %v562, %v70
  %570 = vmatpush.bf16.msra.mxu0 0
  %571 = vmatpush.bf16.msra.mxu0 0
  %572 = vmatpush.bf16.msra.mxu0 0
  %573 = vmatpush.bf16.msra.mxu0 0
  %574 = vmatpush.bf16.msra.mxu0 0
  %575 = vmatpush.bf16.msra.mxu0 0
  %576 = vmatpush.bf16.msra.mxu0 %v568
  %577 = vmatpush.bf16.msra.mxu0 %v561
  %578 = vmatmul.bf16.gmra.mxu0 %v565
  %v579 = vpop.f32.mrf.mxu0
  %v580 = vadd.f32 0.0, %v579
  %v581 = vpop.f32.mrf.mxu0
  %582 = vdwg.mxu0
  %v583 = vadd.f32 %v541, %v580
  %v584 = vld [vmem:[%s3] sm:$0xff]
  %v585 = vadd.f32 %v583, %v584
  %v586 = vld [vmem:[%s4] sm:$0x1]
  %v587 = vld [vmem:[%s5] sm:$0x1]
  %v588 = vld [vmem:[%s6] sm:$0x1]
  %v589 = vrot.slane %v585, 4
  %v590 = vadd.f32 %v585, %v589
  %v591 = vrot.slane %v590, 2
  %v592 = vadd.f32 %v590, %v591
  %v593 = vrot.slane %v592, 1
  %v594 = vadd.f32 %v592, %v593
  %v595 = vrcp.pop 8.0
  %v596 = vmul.f32 8.0, %v595
  %v597 = vsub.f32 1.0, %v596
  %v598 = vmul.f32 %v595, %v597
  %v599 = vadd.f32 %v595, %v598
  %vm600 = vweird.f32 %v595
  %v601 = vsel %vm600, %v595, %v599
  %v602 = vmul.f32 %v594, %v601
  %v603 = vsub.f32 %v585, %v602
  %v604 = vmul.f32 %v603, %v603
  %v605 = vrot.slane %v604, 4
  %v606 = vadd.f32 %v604, %v605
  %v607 = vrot.slane %v606, 2
  %v608 = vadd.f32 %v606, %v607
  %v609 = vrot.slane %v608, 1
  %v610 = vadd.f32 %v608, %v609
  %v611 = vmul.f32 %v610, %v601
  %v612 = vadd.f32 %v611, 1e-05
  %v613 = vrsqrt.pop %v612
  %v614 = vmul.f32 %v613, %v612
  %v615 = vmul.f32 %v614, %v613
  %v616 = vmul.f32 0.5, %v615
  %v617 = vsub.f32 1.5, %v616
  %v618 = vmul.f32 %v613, %v617
  %vm619 = vweird.f32 %v612
  %vm620 = vweird.f32 %v613
  %vm621 = vmor %vm619, %vm620
  %v622 = vsel %vm621, %v613, %v618
  %v623 = vmul.f32 %v603, %v622
  %v625 = vperm.slane %v586, 0
  %v627 = vmul.f32 %v623, %v625
  %v629 = vperm.slane %v587, 0
  %v631 = vadd.f32 %v627, %v629
  %vm632 = vcmp.gt.f32.partialorder %v631, 0.0
  %v634 = vperm.slane %v588, 0
  %v636 = vmul.f32 %v634, %v631
  %v637 = vsel %vm632, %v631, %v636
  %638 = vst [vmem:[%s7] sm:$0xff] %v637
  // Predicated region
  $region30: #{espnet_forward.32} parent=0 // pred_check
    _
  $region31: #{espnet_forward.32} parent=0 // pred_check_branch
    %640 = sbr.rel (0) target = $region33
  $region32: #{espnet_forward.32} parent=0 // pred_region
    _
  $region33: #{espnet_forward.32} parent=0 // pred_fallthru
    _
  // Predicated region
  $region34: #{espnet_forward.32} parent=0 // pred_check
    _
  $region35: #{espnet_forward.32} parent=0 // pred_check_branch
    %642 = sbr.rel (0) target = $region37
  $region36: #{espnet_forward.32} parent=0 // pred_region
    _
  $region37: #{espnet_forward.32} parent=0 // pred_fallthru
    _

// kernel: espnet_forward.38
$region0: #{espnet_forward.38}
  #allocation0 [shape = 'u32[]', space=smem, size = 0x4, offset = 0x4, fixed_abs, tag = 'smem constant byte address 0x4 - core index']
  #allocation1 [shape = 'u32[72,128]{1,0:T(1,128)}', space=vmem, size = 0x9000, scoped, tag = 'internal scratch']
  %s0 = inlined_call_operand.vmem [shape: f32[16,2], index: 0, kind: input, shape index: {}]
  %s1 = inlined_call_operand.vmem [shape: f32[2,20], index: 1, kind: input, shape index: {}]
  %s2 = inlined_call_operand.vmem [shape: f32[16,20], index: 2, kind: output, shape index: {}]
  %s3 = sld [smem:[#allocation0]]
  $region18: #{espnet_forward.38} parent=0
    _
  %s5 = ssub.s32 1, %s3
  %s6 = scalar_select 0, %s5, %s3
  // Predicated region
  $region2: #{espnet_forward.38} parent=0 // pred_check
    _
  $region3: #{espnet_forward.38} parent=0 // pred_check_branch
    %8 = sbr.rel (0) target = $region5
  $region4: #{espnet_forward.38} parent=0 // pred_region
    _
  $region5: #{espnet_forward.38} parent=0 // pred_fallthru
    _
  // Predicated region
  $region6: #{espnet_forward.38} parent=0 // pred_check
    _
  $region7: #{espnet_forward.38} parent=0 // pred_check_branch
    %10 = sbr.rel (0) target = $region9
  $region8: #{espnet_forward.38} parent=0 // pred_region
    _
  $region9: #{espnet_forward.38} parent=0 // pred_fallthru
    _
  %v11 = vld [vmem:[%s0] sm:$0xff]
  %v12 = vld [vmem:[%s0 + $0x8] sm:$0xff]
  %v13 = vld [vmem:[%s1] sm:$0x3]
  %vm14 = vcmask 15360
  %v16 = vsel %vm14, %v11, 0
  %v19 = vsel %vm14, %v12, 0
  %vm21 = vcmask 1041408
  %v23 = vsel %vm21, %v13, 0
  %25 = vmatpush.msra.mxu0 0.0
  %26 = vmatpush.msra.mxu0 0.0
  %27 = vmatpush.msra.mxu0 0.0
  %28 = vmatpush.msra.mxu0 0.0
  %29 = vmatpush.msra.mxu0 0.0
  %30 = vmatpush.msra.mxu0 0.0
  %31 = vmatpush.msra.mxu0 0.0
  %32 = vmatpush.msra.mxu0 0.0
  %33 = vmatpush.msra.mxu0 0.0
  %34 = vmatpush.msra.mxu0 0.0
  %35 = vmatpush.msra.mxu0 0.0
  %36 = vmatpush.msra.mxu0 0.0
  %37 = vmatpush.msra.mxu0 0.0
  %38 = vmatpush.msra.mxu0 0.0
  %39 = vmatpush.msra.mxu0 0.0
  %40 = vmatpush.msra.mxu0 %v23
  %41 = vmatmul.f32.gmra.mxu0 %v16
  %v42 = vpop.f32.mrf.mxu0
  %v43 = vadd.f32 0.0, %v42
  %44 = vmatmul.f32.gmra.mxu0 %v19
  %v45 = vpop.f32.mrf.mxu0
  %v46 = vadd.f32 0.0, %v45
  %47 = vdwg.mxu0
  %vm48 = vcmask 162816
  %49 = vst.msk [vmem:[%s2] sm:$0xff] %vm48, %v43
  %50 = vst.msk [vmem:[%s2 + $0x8] sm:$0xff] %vm48, %v46
  // Predicated region
  $region10: #{espnet_forward.38} parent=0 // pred_check
    _
  $region11: #{espnet_forward.38} parent=0 // pred_check_branch
    %52 = sbr.rel (0) target = $region13
  $region12: #{espnet_forward.38} parent=0 // pred_region
    _
  $region13: #{espnet_forward.38} parent=0 // pred_fallthru
    _
  // Predicated region
  $region14: #{espnet_forward.38} parent=0 // pred_check
    _
  $region15: #{espnet_forward.38} parent=0 // pred_check_branch
    %54 = sbr.rel (0) target = $region17
  $region16: #{espnet_forward.38} parent=0 // pred_region
    _
  $region17: #{espnet_forward.38} parent=0 // pred_fallthru
    _

// kernel: espnet_forward.39
$region0: #{espnet_forward.39}
  #allocation0 [shape = 'u32[]', space=smem, size = 0x4, offset = 0x4, fixed_abs, tag = 'smem constant byte address 0x4 - core index']
  #allocation1 [shape = 'u32[72,128]{1,0:T(1,128)}', space=vmem, size = 0x9000, scoped, tag = 'internal scratch']
  %s0 = inlined_call_operand.vmem [shape: f32[16,2], index: 0, kind: input, shape index: {}]
  %s1 = inlined_call_operand.vmem [shape: f32[2,160], index: 1, kind: input, shape index: {}]
  %s2 = inlined_call_operand.vmem [shape: f32[16,160], index: 2, kind: output, shape index: {}]
  %s3 = sld [smem:[#allocation0]]
  $region18: #{espnet_forward.39} parent=0
    _
  %s5 = ssub.s32 1, %s3
  %s6 = scalar_select 0, %s5, %s3
  // Predicated region
  $region2: #{espnet_forward.39} parent=0 // pred_check
    _
  $region3: #{espnet_forward.39} parent=0 // pred_check_branch
    %8 = sbr.rel (0) target = $region5
  $region4: #{espnet_forward.39} parent=0 // pred_region
    _
  $region5: #{espnet_forward.39} parent=0 // pred_fallthru
    _
  // Predicated region
  $region6: #{espnet_forward.39} parent=0 // pred_check
    _
  $region7: #{espnet_forward.39} parent=0 // pred_check_branch
    %10 = sbr.rel (0) target = $region9
  $region8: #{espnet_forward.39} parent=0 // pred_region
    _
  $region9: #{espnet_forward.39} parent=0 // pred_fallthru
    _
  %v11 = vld [vmem:[%s0] sm:$0xff]
  %v12 = vld [vmem:[%s0 + $0x8] sm:$0xff]
  %v13 = vld [vmem:[%s1] sm:$0xf]
  %15 = vst [vmem:[#allocation1] ss:$4 sm:$0xff] %v13
  %v16 = vld.sshfl [vmem:[#allocation1] sm:$0xff pattern:$0x73625140]
  %v17 = vld.sshfl [vmem:[#allocation1 + $0x8] sm:$0xff pattern:$0x73625140]
  %vm18 = vcmask 15360
  %v20 = vsel %vm18, %v11, 0
  %v23 = vsel %vm18, %v12, 0
  %vm25 = vcmask 1041408
  %v26 = vsel %vm25, %v16, 0
  %v28 = vsel %vm25, %v17, 0
  %30 = vmatpush.msra.mxu0 0.0
  %31 = vmatpush.msra.mxu0 0.0
  %32 = vmatpush.msra.mxu0 0.0
  %33 = vmatpush.msra.mxu0 0.0
  %34 = vmatpush.msra.mxu0 0.0
  %35 = vmatpush.msra.mxu0 0.0
  %36 = vmatpush.msra.mxu0 0.0
  %37 = vmatpush.msra.mxu0 0.0
  %38 = vmatpush.msra.mxu0 0.0
  %39 = vmatpush.msra.mxu0 0.0
  %40 = vmatpush.msra.mxu0 0.0
  %41 = vmatpush.msra.mxu0 0.0
  %42 = vmatpush.msra.mxu0 0.0
  %43 = vmatpush.msra.mxu0 0.0
  %44 = vmatpush.msra.mxu0 0.0
  %45 = vmatpush.msra.mxu0 %v26
  %46 = vmatmul.f32.gmra.mxu0 %v20
  %v47 = vpop.f32.mrf.mxu0
  %v48 = vadd.f32 0.0, %v47
  %49 = vmatmul.f32.gmra.mxu0 %v23
  %v50 = vpop.f32.mrf.mxu0
  %v51 = vadd.f32 0.0, %v50
  %52 = vdwg.mxu0
  %53 = vmatpush.msra.mxu0 0.0
  %54 = vmatpush.msra.mxu0 0.0
  %55 = vmatpush.msra.mxu0 0.0
  %56 = vmatpush.msra.mxu0 0.0
  %57 = vmatpush.msra.mxu0 0.0
  %58 = vmatpush.msra.mxu0 0.0
  %59 = vmatpush.msra.mxu0 0.0
  %60 = vmatpush.msra.mxu0 0.0
  %61 = vmatpush.msra.mxu0 0.0
  %62 = vmatpush.msra.mxu0 0.0
  %63 = vmatpush.msra.mxu0 0.0
  %64 = vmatpush.msra.mxu0 0.0
  %65 = vmatpush.msra.mxu0 0.0
  %66 = vmatpush.msra.mxu0 0.0
  %67 = vmatpush.msra.mxu0 0.0
  %68 = vmatpush.msra.mxu0 %v28
  %69 = vmatmul.f32.gmra.mxu0 %v20
  %v70 = vpop.f32.mrf.mxu0
  %v71 = vadd.f32 0.0, %v70
  %72 = vmatmul.f32.gmra.mxu0 %v23
  %v73 = vpop.f32.mrf.mxu0
  %v74 = vadd.f32 0.0, %v73
  %75 = vdwg.mxu0
  %76 = vst [vmem:[%s2] sm:$0xff] %v48
  %vm77 = vcmask 261120
  %78 = vst.msk [vmem:[%s2 + $0x8] sm:$0xff] %vm77, %v71
  %79 = vst [vmem:[%s2 + $0x10] sm:$0xff] %v51
  %80 = vst.msk [vmem:[%s2 + $0x18] sm:$0xff] %vm77, %v74
  // Predicated region
  $region10: #{espnet_forward.39} parent=0 // pred_check
    _
  $region11: #{espnet_forward.39} parent=0 // pred_check_branch
    %82 = sbr.rel (0) target = $region13
  $region12: #{espnet_forward.39} parent=0 // pred_region
    _
  $region13: #{espnet_forward.39} parent=0 // pred_fallthru
    _
  // Predicated region
  $region14: #{espnet_forward.39} parent=0 // pred_check
    _
  $region15: #{espnet_forward.39} parent=0 // pred_check_branch
    %84 = sbr.rel (0) target = $region17
  $region16: #{espnet_forward.39} parent=0 // pred_region
    _
  $region17: #{espnet_forward.39} parent=0 // pred_fallthru
    _

</llo_original>
